<compile_context>
chip_gen: v6e
topology: v6e:2x2x1
jax: 0.10.0
libtpu: 0.0.40
codegen_flags: <defaults>
</compile_context>

<pallas_src>
import functools

import jax
import jax.numpy as jnp
from jax import lax
from jax.experimental import pallas as pl
from jax.experimental.pallas import tpu as pltpu

_LANE = 128
_SUBLANE = 8
_VMEM_LIMIT = 32 * 1024 * 1024   # v7x-safe scoped-VMEM request (64 MiB physical)


def _round_up(x, m):
    return (x + m - 1) // m * m


def _largest_divisor(n, limit, multiple=1):
    """Largest d <= limit with d % multiple == 0 and n % d == 0 (>= 1)."""
    best = multiple if (multiple <= n and n % multiple == 0) else 1
    d = multiple
    limit = min(n, limit)
    while d <= limit:
        if n % d == 0:
            best = d
        d += multiple
    return best


def _pad_channels(c):
    """Lane-pad only when it is (nearly) free; small channel counts stay compact."""
    lane_pad = _round_up(c, _LANE)
    if lane_pad == c or (c >= _LANE and lane_pad - c <= c // 8):
        return lane_pad
    return _round_up(c, _SUBLANE)


# ----------------------------------------------------------------------------
# Pallas kernel: fused 3x3 stride-2 conv (+ bias + ReLU), K-fused single dot
# ----------------------------------------------------------------------------
def _conv3x3_s2_kernel(ee_ref, eo_ref, oe_ref, oo_ref, eeh_ref, eoh_ref,
                       w_ref, b_ref, o_ref):
    """Parity views of the padded input for one (batch, time-tile) step.

    ee/eo/oe/oo: (1, th, w_out+1, c_in) even/odd (row, col) parity blocks, bf16.
    eeh/eoh:     (1, 1,  w_out+1, c_in) halo row (parity row index t*th + th).
    w_ref: (9*c_in, c_out) weights, row k*c_in + c with tap k = kh*3 + kw (bf16).
    b_ref: (1, c_out) f32.    o_ref: (1, th, w_out, c_out) bf16.
    """
    _, th, w_out, c_out = o_ref.shape
    c_in = ee_ref.shape[-1]

    # Even-row parity arrays need th+1 rows (kh = 0 and kh = 2 taps); append the
    # single halo row.  Odd-row parity arrays (kh = 1) need exactly th rows.
    ee = jnp.concatenate([ee_ref[0, :, :, :], eeh_ref[0, :, :, :]], axis=0)
    eo = jnp.concatenate([eo_ref[0, :, :, :], eoh_ref[0, :, :, :]], axis=0)
    oe = oe_ref[0, :, :, :]
    oo = oo_ref[0, :, :, :]

    # Tap k = kh*3 + kw.  Output (i, j) reads padded pixel (2i+kh, 2j+kw):
    #   even padded row 2i+kh -> ee/eo row i (+1 for kh=2); odd -> oe/oo row i;
    #   even padded col 2j+kw -> *e col j (+1 for kw=2);   odd -> *o col j.
    taps = [
        ee[0:th, 0:w_out, :],          # (0, 0)
        eo[0:th, 0:w_out, :],          # (0, 1)
        ee[0:th, 1:w_out + 1, :],      # (0, 2)
        oe[0:th, 0:w_out, :],          # (1, 0)
        oo[0:th, 0:w_out, :],          # (1, 1)
        oe[0:th, 1:w_out + 1, :],      # (1, 2)
        ee[1:th + 1, 0:w_out, :],      # (2, 0)
        eo[1:th + 1, 0:w_out, :],      # (2, 1)
        ee[1:th + 1, 1:w_out + 1, :],  # (2, 2)
    ]
    # K-fused im2col patch: one MXU dot over K = 9*c_in (no per-tap f32
    # accumulator read-modify-write).
    patch = jnp.concatenate(taps, axis=-1).reshape(th * w_out, 9 * c_in)
    acc = jnp.dot(patch, w_ref[...], preferred_element_type=jnp.float32)
    acc = jnp.maximum(acc + b_ref[...], 0.0)
    o_ref[0] = acc.reshape(th, w_out, c_out).astype(o_ref.dtype)


def conv3x3_s2_relu(x_nhwc, w_packed, b_row):
    """x: (B,H,W,Cin) bf16, w_packed: (9*Cin, Cout) bf16, b_row: (1, Cout) f32
    -> (B, H_out, W_out, Cout) bf16, causal time pad (2,0), freq pad (0,1)."""
    B, H, W, C = x_nhwc.shape
    kc, c_out = w_packed.shape
    assert kc == 9 * C, (kc, C)

    h_out = (H + 2 - 3) // 2 + 1          # causal left pad 2 on time
    w_out = (W + 1 - 3) // 2 + 1          # SAME pad (0, 1) on frequency
    hp, wp = 2 * h_out + 2, 2 * w_out + 2  # even extents for the parity split
    xp = jnp.pad(x_nhwc, ((0, 0), (2, hp - H - 2), (0, wp - W), (0, 0)))

    # Even/odd parity views: every tap of the stride-2 conv becomes a contiguous
    # (non-strided) slice inside the kernel.
    ee = xp[:, 0::2, 0::2, :]
    eo = xp[:, 0::2, 1::2, :]
    oe = xp[:, 1::2, 0::2, :]
    oo = xp[:, 1::2, 1::2, :]              # each (B, h_out+1, w_out+1, C)

    # Time-tile size: bounds per-step VMEM (independent of sequence length) and
    # gives a second parallel grid axis.
    t_limit = max(1, min(48, 4096 // max(1, w_out + 1)))
    th = _largest_divisor(h_out, t_limit)
    n_t = h_out // th

    main = pl.BlockSpec((1, th, w_out + 1, C), lambda b, t: (b, t, 0, 0))
    # Halo row: parity row index t*th + th (block size 1 => element index).
    halo = pl.BlockSpec((1, 1, w_out + 1, C), lambda b, t: (b, (t + 1) * th, 0, 0))

    return pl.pallas_call(
        _conv3x3_s2_kernel,
        out_shape=jax.ShapeDtypeStruct((B, h_out, w_out, c_out), jnp.bfloat16),
        grid=(B, n_t),
        in_specs=[main, main, main, main, halo, halo,
                  pl.BlockSpec((9 * C, c_out), lambda b, t: (0, 0)),
                  pl.BlockSpec((1, c_out), lambda b, t: (0, 0))],
        out_specs=pl.BlockSpec((1, th, w_out, c_out), lambda b, t: (b, t, 0, 0)),
        compiler_params=pltpu.CompilerParams(
            dimension_semantics=("parallel", "parallel"),
            vmem_limit_bytes=_VMEM_LIMIT),
    )(ee, eo, oe, oo, ee, eo, w_packed, b_row)


# ----------------------------------------------------------------------------
# Pallas kernel: tiled GEMM + bias (+ ReLU) for the linear projection
# ----------------------------------------------------------------------------
def _gemm_bias_act_kernel(x_ref, w_ref, b_ref, o_ref, *, apply_relu):
    acc = jnp.dot(x_ref[...], w_ref[...], preferred_element_type=jnp.float32)
    acc = acc + b_ref[...]
    if apply_relu:
        acc = jnp.maximum(acc, 0.0)
    o_ref[...] = acc.astype(o_ref.dtype)


def gemm_bias_act(x, w, b_row, n_out, *, apply_relu=False, out_dtype=jnp.float32):
    """y = act(x @ w + b).  w: (K, n_pad) bf16 pre-padded to n_pad % 128 == 0,
    b_row: (1, n_pad) f32.  Weight block stays VMEM-resident (single N block or
    N-outer grid ordering), row tile is a divisor of M when possible."""
    M, K = x.shape
    K2, n_pad = w.shape
    assert K == K2, (K, K2)
    assert n_pad % _LANE == 0

    x = x.astype(jnp.bfloat16)
    m_pad = _round_up(M, _SUBLANE)
    if m_pad != M:                                  # only for M % 8 != 0
        x = jnp.pad(x, ((0, m_pad - M), (0, 0)))

    # Row tile: divisor of m_pad, capped so the x block stays <= ~8 MiB.
    max_tm = int(max(_SUBLANE, min(512, (8 << 20) // max(1, 2 * K))))
    max_tm = max(_SUBLANE, (max_tm // _SUBLANE) * _SUBLANE)
    tm = _largest_divisor(m_pad, max_tm, multiple=_SUBLANE)

    # Weight residency: whole weight in VMEM when it fits comfortably,
    # otherwise lane-dense N tiles streamed exactly once (N is the OUTER axis).
    if 2 * K * n_pad <= (12 << 20):
        tn = n_pad
    else:
        tn = 256 if n_pad % 256 == 0 else _LANE

    # TODO(synk): for very large in-features add a K grid axis + f32 scratch
    # accumulator (pl.when init/finalize) to keep per-step blocks small.
    out = pl.pallas_call(
        functools.partial(_gemm_bias_act_kernel, apply_relu=apply_relu),
        out_shape=jax.ShapeDtypeStruct((m_pad, n_pad), out_dtype),
        grid=(n_pad // tn, m_pad // tm),            # j outer, i inner
        in_specs=[pl.BlockSpec((tm, K), lambda j, i: (i, 0)),
                  pl.BlockSpec((K, tn), lambda j, i: (0, j)),
                  pl.BlockSpec((1, tn), lambda j, i: (0, j))],
        out_specs=pl.BlockSpec((tm, tn), lambda j, i: (i, j)),
        compiler_params=pltpu.CompilerParams(
            dimension_semantics=("parallel", "parallel"),
            vmem_limit_bytes=_VMEM_LIMIT),
    )(x, w, b_row)
    return out[:M, :n_out]


# ----------------------------------------------------------------------------
# One-time weight packing (hoisted out of the jitted forward)
# ----------------------------------------------------------------------------
def _pack_conv_weights(w_oihw, bias, c_in_pad, c_out_pad):
    c_out, c_in, kh, kw = w_oihw.shape
    assert (kh, kw) == (3, 3)
    w = jnp.transpose(w_oihw, (2, 3, 1, 0)).reshape(9, c_in, c_out)   # tap-major
    w_full = jnp.zeros((9, c_in_pad, c_out_pad), jnp.float32)
    w_full = w_full.at[:, :c_in, :c_out].set(w)
    w_full = w_full.reshape(9 * c_in_pad, c_out_pad)
    # Padded weight columns / bias entries are exactly zero, so padded output
    # channels stay zero through bias+ReLU and the next layer's contraction.
    b_full = jnp.zeros((1, c_out_pad), jnp.float32).at[0, :c_out].set(bias)
    return w_full.astype(jnp.bfloat16), b_full


def _pack_linear_weights(wl, bl, c1, c1_pad, f_out):
    """PyTorch linear weight (hidden, c1*f_out) with channel-major features
    (index c*f_out + f) -> (f_out*c1_pad, n_pad) matching the NHWC activation
    flattened freq-major over padded channels (no activation transpose)."""
    hidden, in_feat = wl.shape
    assert in_feat == c1 * f_out, (in_feat, c1, f_out)
    n_pad = _round_up(hidden, _LANE)
    w = wl.reshape(hidden, c1, f_out).transpose(2, 1, 0)          # (f, c, hidden)
    w_full = jnp.zeros((f_out, c1_pad, hidden), jnp.float32).at[:, :c1, :].set(w)
    w_full = w_full.reshape(f_out * c1_pad, hidden)
    if n_pad != hidden:
        w_full = jnp.pad(w_full, ((0, 0), (0, n_pad - hidden)))
    b_row = jnp.zeros((1, n_pad), jnp.float32).at[0, :hidden].set(bl)
    return w_full.astype(jnp.bfloat16), b_row


def pack_params(params, input_dim):
    """Call once at parameter-load time (not inside the per-call forward)."""
    c0, cin = params["w1"].shape[0], params["w1"].shape[1]
    c1 = params["w2"].shape[0]
    cin_pad = _pad_channels(cin)
    c0_pad = _pad_channels(c0)
    c1_pad = _pad_channels(c1)
    f_out = input_dim // 4
    w1, b1 = _pack_conv_weights(params["w1"], params["b1"], cin_pad, c0_pad)
    w2, b2 = _pack_conv_weights(params["w2"], params["b2"], c0_pad, c1_pad)
    wl, bl = _pack_linear_weights(params["wl"], params["bl"], c1, c1_pad, f_out)
    return {"w1": w1, "b1": b1, "w2": w2, "b2": b2, "wl": wl, "bl": bl}


# ----------------------------------------------------------------------------
# Conv2dSubsampling forward (sub_layers=2)
# ----------------------------------------------------------------------------
def conv2d_subsampling_forward(x_btf, packed, *, hidden_size):
    """x_btf: (B, T, F) spectrogram -> (B, T // 4, hidden_size)."""
    cin_pad = packed["w1"].shape[0] // 9
    x = x_btf[..., None].astype(jnp.bfloat16)                      # (B,T,F,1) NHWC
    if cin_pad > 1:
        x = jnp.pad(x, ((0, 0), (0, 0), (0, 0), (0, cin_pad - 1)))
    x = conv3x3_s2_relu(x, packed["w1"], packed["b1"])             # (B, T/2, F/2, c0p)
    x = conv3x3_s2_relu(x, packed["w2"], packed["b2"])             # (B, T/4, F/4, c1p)
    B, Ts, Fs, Cp = x.shape
    x = x.reshape(B * Ts, Fs * Cp)                                 # free reshape
    y = gemm_bias_act(x, packed["wl"], packed["bl"], hidden_size)
    return y.reshape(B, Ts, hidden_size)   # proj_dropout == identity at inference


# ----------------------------------------------------------------------------
# Pure-JAX reference (lax conv, f32) for correctness checking
# ----------------------------------------------------------------------------
def reference_forward(x_btf, params):
    def same_pad(x_nchw):   # time: causal left pad 2; freq: SAME (0, 1)
        return jnp.pad(x_nchw, ((0, 0), (0, 0), (2, 0), (0, 1)))

    def conv(x, w, b):
        y = lax.conv_general_dilated(
            same_pad(x), w, window_strides=(2, 2), padding="VALID",
            dimension_numbers=("NCHW", "OIHW", "NCHW"))
        return jnp.maximum(y + b[None, :, None, None], 0.0)

    x = x_btf[:, None, :, :]
    x = conv(x, params["w1"], params["b1"])
    x = conv(x, params["w2"], params["b2"])
    B, C, Ts, Fs = x.shape
    x = x.transpose(0, 2, 1, 3).reshape(B, Ts, C * Fs)
    return x @ params["wl"].T + params["bl"]


# ----------------------------------------------------------------------------
# Deterministic parameter init + driver
# ----------------------------------------------------------------------------
def init_params(key, input_channels, conv_hidden, input_dim, hidden_size):
    c0, c1 = conv_hidden
    in_feat = c1 * (input_dim // 4)
    ks = jax.random.split(key, 6)
    s = 0.1
    return {
        "w1": s * jax.random.normal(ks[0], (c0, input_channels, 3, 3), jnp.float32),
        "b1": s * jax.random.normal(ks[1], (c0,), jnp.float32),
        "w2": s * jax.random.normal(ks[2], (c1, c0, 3, 3), jnp.float32),
        "b2": s * jax.random.normal(ks[3], (c1,), jnp.float32),
        "wl": s * jax.random.normal(ks[4], (hidden_size, in_feat), jnp.float32),
        "bl": s * jax.random.normal(ks[5], (hidden_size,), jnp.float32),
    }


if __name__ == "__main__":
    # Small shapes consistent with the module: (batch, time, d_input).
    # T=128 makes conv1 use 2 time tiles, exercising the halo / h-tiling path.
    B, T, F = 2, 128, 32
    conv_hidden = (8, 8)
    hidden_size = 32

    key = jax.random.PRNGKey(0)
    k_x, k_p = jax.random.split(key)
    x = jax.random.normal(k_x, (B, T, F), jnp.float32)
    params = init_params(k_p, input_channels=1, conv_hidden=conv_hidden,
                         input_dim=F, hidden_size=hidden_size)

    packed = pack_params(params, input_dim=F)      # one-time packing, outside jit
    fwd = jax.jit(functools.partial(conv2d_subsampling_forward,
                                    hidden_size=hidden_size))
    out = jax.block_until_ready(fwd(x, packed))
    assert out.shape == (B, T // 4, hidden_size), out.shape

    ref = jax.block_until_ready(reference_forward(x, params))
    max_err = float(jnp.max(jnp.abs(out - ref)))
    # Kernel path uses bf16 operands / bf16 intermediate activations with f32
    # accumulation; reference is pure f32, hence the loose tolerance.
    assert jnp.allclose(out, ref, rtol=3e-2, atol=3e-2), max_err

    print("KERNEL_OK")
</pallas_src>

<mosaic_0001>
module attributes {stable_mosaic.version = 11 : i64} {
  func.func @_conv3x3_s2_kernel(%arg0: i32, %arg1: i32, %arg2: memref<1x32x17x8xbf16, #tpu.memory_space<vmem>>, %arg3: memref<1x32x17x8xbf16, #tpu.memory_space<vmem>>, %arg4: memref<1x32x17x8xbf16, #tpu.memory_space<vmem>>, %arg5: memref<1x32x17x8xbf16, #tpu.memory_space<vmem>>, %arg6: memref<1x1x17x8xbf16, #tpu.memory_space<vmem>>, %arg7: memref<1x1x17x8xbf16, #tpu.memory_space<vmem>>, %arg8: memref<72x8xbf16, #tpu.memory_space<vmem>>, %arg9: memref<1x8xf32, #tpu.memory_space<vmem>>, %arg10: memref<1x32x16x8xbf16, #tpu.memory_space<vmem>>) attributes {dimension_semantics = [#tpu.dimension_semantics<parallel>, #tpu.dimension_semantics<parallel>], iteration_bounds = array<i64: 2, 2>, scalar_prefetch = 0 : i64, scratch_operands = 0 : i64, tpu.core_type = #tpu.core_type<tc>, window_params = [{transform_indices = @transform_0, window_bounds = array<i64: 1, 32, 17, 8>}, {transform_indices = @transform_1, window_bounds = array<i64: 1, 32, 17, 8>}, {transform_indices = @transform_2, window_bounds = array<i64: 1, 32, 17, 8>}, {transform_indices = @transform_3, window_bounds = array<i64: 1, 32, 17, 8>}, {transform_indices = @transform_4, window_bounds = array<i64: 1, 1, 17, 8>}, {transform_indices = @transform_5, window_bounds = array<i64: 1, 1, 17, 8>}, {pipeline_mode = #tpu.pipeline_mode<synchronous>, transform_indices = @transform_6, window_bounds = array<i64: 72, 8>}, {pipeline_mode = #tpu.pipeline_mode<synchronous>, transform_indices = @transform_7, window_bounds = array<i64: 1, 8>}, {transform_indices = @transform_8, window_bounds = array<i64: 1, 32, 16, 8>}]} {
    %c0 = arith.constant 0 : index
    %c0_0 = arith.constant 0 : index
    %c0_1 = arith.constant 0 : index
    %c0_2 = arith.constant 0 : index
    %0 = vector.load %arg2[%c0, %c0_0, %c0_1, %c0_2] : memref<1x32x17x8xbf16, #tpu.memory_space<vmem>>, vector<1x32x17x8xbf16>
    %1 = vector.shape_cast %0 : vector<1x32x17x8xbf16> to vector<32x17x8xbf16>
    %c0_3 = arith.constant 0 : index
    %c0_4 = arith.constant 0 : index
    %c0_5 = arith.constant 0 : index
    %c0_6 = arith.constant 0 : index
    %2 = vector.load %arg6[%c0_3, %c0_4, %c0_5, %c0_6] : memref<1x1x17x8xbf16, #tpu.memory_space<vmem>>, vector<1x1x17x8xbf16>
    %3 = vector.shape_cast %2 : vector<1x1x17x8xbf16> to vector<1x17x8xbf16>
    %4 = tpu.concatenate %1, %3 in 0 : vector<32x17x8xbf16>, vector<1x17x8xbf16> -> vector<33x17x8xbf16>
    %c0_7 = arith.constant 0 : index
    %c0_8 = arith.constant 0 : index
    %c0_9 = arith.constant 0 : index
    %c0_10 = arith.constant 0 : index
    %5 = vector.load %arg3[%c0_7, %c0_8, %c0_9, %c0_10] : memref<1x32x17x8xbf16, #tpu.memory_space<vmem>>, vector<1x32x17x8xbf16>
    %6 = vector.shape_cast %5 : vector<1x32x17x8xbf16> to vector<32x17x8xbf16>
    %c0_11 = arith.constant 0 : index
    %c0_12 = arith.constant 0 : index
    %c0_13 = arith.constant 0 : index
    %c0_14 = arith.constant 0 : index
    %7 = vector.load %arg7[%c0_11, %c0_12, %c0_13, %c0_14] : memref<1x1x17x8xbf16, #tpu.memory_space<vmem>>, vector<1x1x17x8xbf16>
    %8 = vector.shape_cast %7 : vector<1x1x17x8xbf16> to vector<1x17x8xbf16>
    %9 = tpu.concatenate %6, %8 in 0 : vector<32x17x8xbf16>, vector<1x17x8xbf16> -> vector<33x17x8xbf16>
    %c0_15 = arith.constant 0 : index
    %c0_16 = arith.constant 0 : index
    %c0_17 = arith.constant 0 : index
    %c0_18 = arith.constant 0 : index
    %10 = vector.load %arg4[%c0_15, %c0_16, %c0_17, %c0_18] : memref<1x32x17x8xbf16, #tpu.memory_space<vmem>>, vector<1x32x17x8xbf16>
    %11 = vector.shape_cast %10 : vector<1x32x17x8xbf16> to vector<32x17x8xbf16>
    %c0_19 = arith.constant 0 : index
    %c0_20 = arith.constant 0 : index
    %c0_21 = arith.constant 0 : index
    %c0_22 = arith.constant 0 : index
    %12 = vector.load %arg5[%c0_19, %c0_20, %c0_21, %c0_22] : memref<1x32x17x8xbf16, #tpu.memory_space<vmem>>, vector<1x32x17x8xbf16>
    %13 = vector.shape_cast %12 : vector<1x32x17x8xbf16> to vector<32x17x8xbf16>
    %14 = vector.extract_strided_slice %4 {offsets = [0, 0, 0], sizes = [32, 16, 8], strides = [1, 1, 1]} : vector<33x17x8xbf16> to vector<32x16x8xbf16>
    %15 = vector.extract_strided_slice %9 {offsets = [0, 0, 0], sizes = [32, 16, 8], strides = [1, 1, 1]} : vector<33x17x8xbf16> to vector<32x16x8xbf16>
    %16 = vector.extract_strided_slice %4 {offsets = [0, 1, 0], sizes = [32, 16, 8], strides = [1, 1, 1]} : vector<33x17x8xbf16> to vector<32x16x8xbf16>
    %17 = vector.extract_strided_slice %11 {offsets = [0, 0, 0], sizes = [32, 16, 8], strides = [1, 1, 1]} : vector<32x17x8xbf16> to vector<32x16x8xbf16>
    %18 = vector.extract_strided_slice %13 {offsets = [0, 0, 0], sizes = [32, 16, 8], strides = [1, 1, 1]} : vector<32x17x8xbf16> to vector<32x16x8xbf16>
    %19 = vector.extract_strided_slice %11 {offsets = [0, 1, 0], sizes = [32, 16, 8], strides = [1, 1, 1]} : vector<32x17x8xbf16> to vector<32x16x8xbf16>
    %20 = vector.extract_strided_slice %4 {offsets = [1, 0, 0], sizes = [32, 16, 8], strides = [1, 1, 1]} : vector<33x17x8xbf16> to vector<32x16x8xbf16>
    %21 = vector.extract_strided_slice %9 {offsets = [1, 0, 0], sizes = [32, 16, 8], strides = [1, 1, 1]} : vector<33x17x8xbf16> to vector<32x16x8xbf16>
    %22 = vector.extract_strided_slice %4 {offsets = [1, 1, 0], sizes = [32, 16, 8], strides = [1, 1, 1]} : vector<33x17x8xbf16> to vector<32x16x8xbf16>
    %23 = tpu.concatenate %14, %15, %16, %17, %18, %19, %20, %21, %22 in 2 : vector<32x16x8xbf16>, vector<32x16x8xbf16>, vector<32x16x8xbf16>, vector<32x16x8xbf16>, vector<32x16x8xbf16>, vector<32x16x8xbf16>, vector<32x16x8xbf16>, vector<32x16x8xbf16>, vector<32x16x8xbf16> -> vector<32x16x72xbf16>
    %24 = vector.shape_cast %23 : vector<32x16x72xbf16> to vector<512x72xbf16>
    %c0_23 = arith.constant 0 : index
    %c0_24 = arith.constant 0 : index
    %25 = vector.load %arg8[%c0_23, %c0_24] : memref<72x8xbf16, #tpu.memory_space<vmem>>, vector<72x8xbf16>
    %cst = arith.constant dense<0.000000e+00> : vector<512x8xf32>
    %26 = tpu.matmul %24, %25, %cst {dimension_numbers = #tpu.dot_dimension_numbers<[1], [0], [0], [1], [0, 0, 1, 1], [], []>} : vector<512x72xbf16>, vector<72x8xbf16>, vector<512x8xf32> -> vector<512x8xf32>
    %c0_25 = arith.constant 0 : index
    %c0_26 = arith.constant 0 : index
    %27 = vector.load %arg9[%c0_25, %c0_26] : memref<1x8xf32, #tpu.memory_space<vmem>>, vector<1x8xf32>
    %28 = vector.broadcast %27 : vector<1x8xf32> to vector<512x8xf32>
    %29 = arith.addf %26, %28 : vector<512x8xf32>
    %cst_27 = arith.constant 0.000000e+00 : f32
    %30 = vector.broadcast %cst_27 : f32 to vector<512x8xf32>
    %31 = arith.maximumf %29, %30 : vector<512x8xf32>
    %32 = vector.shape_cast %31 : vector<512x8xf32> to vector<32x16x8xf32>
    %33 = arith.truncf %32 : vector<32x16x8xf32> to vector<32x16x8xbf16>
    %c0_28 = arith.constant 0 : index
    %c0_29 = arith.constant 0 : index
    %c0_30 = arith.constant 0 : index
    %c0_31 = arith.constant 0 : index
    %34 = vector.load %arg10[%c0_28, %c0_29, %c0_30, %c0_31] : memref<1x32x16x8xbf16, #tpu.memory_space<vmem>>, vector<1x32x16x8xbf16>
    %35 = vector.shape_cast %34 : vector<1x32x16x8xbf16> to vector<32x16x8xbf16>
    %36 = vector.shape_cast %33 : vector<32x16x8xbf16> to vector<1x32x16x8xbf16>
    tpu.vector_store %arg10[%c0_28, %c0_29, %c0_30, %c0_31], %36 {strides = array<i32>} : memref<1x32x16x8xbf16, #tpu.memory_space<vmem>>, vector<1x32x16x8xbf16>,
    return
  }
  func.func @transform_0(%arg0: i32, %arg1: i32) -> (i32, i32, i32, i32) {
    %c0_i32 = arith.constant 0 : i32
    %c0_i32_0 = arith.constant 0 : i32
    %c0_i32_1 = arith.constant 0 : i32
    return %arg0, %arg1, %c0_i32, %c0_i32_0 : i32, i32, i32, i32
  }
  func.func @transform_1(%arg0: i32, %arg1: i32) -> (i32, i32, i32, i32) {
    %c0_i32 = arith.constant 0 : i32
    %c0_i32_0 = arith.constant 0 : i32
    %c0_i32_1 = arith.constant 0 : i32
    return %arg0, %arg1, %c0_i32, %c0_i32_0 : i32, i32, i32, i32
  }
  func.func @transform_2(%arg0: i32, %arg1: i32) -> (i32, i32, i32, i32) {
    %c0_i32 = arith.constant 0 : i32
    %c0_i32_0 = arith.constant 0 : i32
    %c0_i32_1 = arith.constant 0 : i32
    return %arg0, %arg1, %c0_i32, %c0_i32_0 : i32, i32, i32, i32
  }
  func.func @transform_3(%arg0: i32, %arg1: i32) -> (i32, i32, i32, i32) {
    %c0_i32 = arith.constant 0 : i32
    %c0_i32_0 = arith.constant 0 : i32
    %c0_i32_1 = arith.constant 0 : i32
    return %arg0, %arg1, %c0_i32, %c0_i32_0 : i32, i32, i32, i32
  }
  func.func @transform_4(%arg0: i32, %arg1: i32) -> (i32, i32, i32, i32) {
    %c1_i32 = arith.constant 1 : i32
    %0 = arith.addi %arg1, %c1_i32 : i32
    %c32_i32 = arith.constant 32 : i32
    %1 = arith.muli %0, %c32_i32 : i32
    %c0_i32 = arith.constant 0 : i32
    %c0_i32_0 = arith.constant 0 : i32
    %c0_i32_1 = arith.constant 0 : i32
    return %arg0, %1, %c0_i32, %c0_i32_0 : i32, i32, i32, i32
  }
  func.func @transform_5(%arg0: i32, %arg1: i32) -> (i32, i32, i32, i32) {
    %c1_i32 = arith.constant 1 : i32
    %0 = arith.addi %arg1, %c1_i32 : i32
    %c32_i32 = arith.constant 32 : i32
    %1 = arith.muli %0, %c32_i32 : i32
    %c0_i32 = arith.constant 0 : i32
    %c0_i32_0 = arith.constant 0 : i32
    %c0_i32_1 = arith.constant 0 : i32
    return %arg0, %1, %c0_i32, %c0_i32_0 : i32, i32, i32, i32
  }
  func.func @transform_6(%arg0: i32, %arg1: i32) -> (i32, i32) {
    %c0_i32 = arith.constant 0 : i32
    %c0_i32_0 = arith.constant 0 : i32
    %c0_i32_1 = arith.constant 0 : i32
    return %c0_i32, %c0_i32_0 : i32, i32
  }
  func.func @transform_7(%arg0: i32, %arg1: i32) -> (i32, i32) {
    %c0_i32 = arith.constant 0 : i32
    %c0_i32_0 = arith.constant 0 : i32
    %c0_i32_1 = arith.constant 0 : i32
    return %c0_i32, %c0_i32_0 : i32, i32
  }
  func.func @transform_8(%arg0: i32, %arg1: i32) -> (i32, i32, i32, i32) {
    %c0_i32 = arith.constant 0 : i32
    %c0_i32_0 = arith.constant 0 : i32
    %c0_i32_1 = arith.constant 0 : i32
    return %arg0, %arg1, %c0_i32, %c0_i32_0 : i32, i32, i32, i32
  }
}

module attributes {stable_mosaic.version = 11 : i64} {
  func.func @_conv3x3_s2_kernel(%arg0: i32, %arg1: i32, %arg2: memref<1x32x9x8xbf16, #tpu.memory_space<vmem>>, %arg3: memref<1x32x9x8xbf16, #tpu.memory_space<vmem>>, %arg4: memref<1x32x9x8xbf16, #tpu.memory_space<vmem>>, %arg5: memref<1x32x9x8xbf16, #tpu.memory_space<vmem>>, %arg6: memref<1x1x9x8xbf16, #tpu.memory_space<vmem>>, %arg7: memref<1x1x9x8xbf16, #tpu.memory_space<vmem>>, %arg8: memref<72x8xbf16, #tpu.memory_space<vmem>>, %arg9: memref<1x8xf32, #tpu.memory_space<vmem>>, %arg10: memref<1x32x8x8xbf16, #tpu.memory_space<vmem>>) attributes {dimension_semantics = [#tpu.dimension_semantics<parallel>, #tpu.dimension_semantics<parallel>], iteration_bounds = array<i64: 2, 1>, scalar_prefetch = 0 : i64, scratch_operands = 0 : i64, tpu.core_type = #tpu.core_type<tc>, window_params = [{transform_indices = @transform_0, window_bounds = array<i64: 1, 32, 9, 8>}, {transform_indices = @transform_1, window_bounds = array<i64: 1, 32, 9, 8>}, {transform_indices = @transform_2, window_bounds = array<i64: 1, 32, 9, 8>}, {transform_indices = @transform_3, window_bounds = array<i64: 1, 32, 9, 8>}, {transform_indices = @transform_4, window_bounds = array<i64: 1, 1, 9, 8>}, {transform_indices = @transform_5, window_bounds = array<i64: 1, 1, 9, 8>}, {pipeline_mode = #tpu.pipeline_mode<synchronous>, transform_indices = @transform_6, window_bounds = array<i64: 72, 8>}, {pipeline_mode = #tpu.pipeline_mode<synchronous>, transform_indices = @transform_7, window_bounds = array<i64: 1, 8>}, {transform_indices = @transform_8, window_bounds = array<i64: 1, 32, 8, 8>}]} {
    %c0 = arith.constant 0 : index
    %c0_0 = arith.constant 0 : index
    %c0_1 = arith.constant 0 : index
    %c0_2 = arith.constant 0 : index
    %0 = vector.load %arg2[%c0, %c0_0, %c0_1, %c0_2] : memref<1x32x9x8xbf16, #tpu.memory_space<vmem>>, vector<1x32x9x8xbf16>
    %1 = vector.shape_cast %0 : vector<1x32x9x8xbf16> to vector<32x9x8xbf16>
    %c0_3 = arith.constant 0 : index
    %c0_4 = arith.constant 0 : index
    %c0_5 = arith.constant 0 : index
    %c0_6 = arith.constant 0 : index
    %2 = vector.load %arg6[%c0_3, %c0_4, %c0_5, %c0_6] : memref<1x1x9x8xbf16, #tpu.memory_space<vmem>>, vector<1x1x9x8xbf16>
    %3 = vector.shape_cast %2 : vector<1x1x9x8xbf16> to vector<1x9x8xbf16>
    %4 = tpu.concatenate %1, %3 in 0 : vector<32x9x8xbf16>, vector<1x9x8xbf16> -> vector<33x9x8xbf16>
    %c0_7 = arith.constant 0 : index
    %c0_8 = arith.constant 0 : index
    %c0_9 = arith.constant 0 : index
    %c0_10 = arith.constant 0 : index
    %5 = vector.load %arg3[%c0_7, %c0_8, %c0_9, %c0_10] : memref<1x32x9x8xbf16, #tpu.memory_space<vmem>>, vector<1x32x9x8xbf16>
    %6 = vector.shape_cast %5 : vector<1x32x9x8xbf16> to vector<32x9x8xbf16>
    %c0_11 = arith.constant 0 : index
    %c0_12 = arith.constant 0 : index
    %c0_13 = arith.constant 0 : index
    %c0_14 = arith.constant 0 : index
    %7 = vector.load %arg7[%c0_11, %c0_12, %c0_13, %c0_14] : memref<1x1x9x8xbf16, #tpu.memory_space<vmem>>, vector<1x1x9x8xbf16>
    %8 = vector.shape_cast %7 : vector<1x1x9x8xbf16> to vector<1x9x8xbf16>
    %9 = tpu.concatenate %6, %8 in 0 : vector<32x9x8xbf16>, vector<1x9x8xbf16> -> vector<33x9x8xbf16>
    %c0_15 = arith.constant 0 : index
    %c0_16 = arith.constant 0 : index
    %c0_17 = arith.constant 0 : index
    %c0_18 = arith.constant 0 : index
    %10 = vector.load %arg4[%c0_15, %c0_16, %c0_17, %c0_18] : memref<1x32x9x8xbf16, #tpu.memory_space<vmem>>, vector<1x32x9x8xbf16>
    %11 = vector.shape_cast %10 : vector<1x32x9x8xbf16> to vector<32x9x8xbf16>
    %c0_19 = arith.constant 0 : index
    %c0_20 = arith.constant 0 : index
    %c0_21 = arith.constant 0 : index
    %c0_22 = arith.constant 0 : index
    %12 = vector.load %arg5[%c0_19, %c0_20, %c0_21, %c0_22] : memref<1x32x9x8xbf16, #tpu.memory_space<vmem>>, vector<1x32x9x8xbf16>
    %13 = vector.shape_cast %12 : vector<1x32x9x8xbf16> to vector<32x9x8xbf16>
    %14 = vector.extract_strided_slice %4 {offsets = [0, 0, 0], sizes = [32, 8, 8], strides = [1, 1, 1]} : vector<33x9x8xbf16> to vector<32x8x8xbf16>
    %15 = vector.extract_strided_slice %9 {offsets = [0, 0, 0], sizes = [32, 8, 8], strides = [1, 1, 1]} : vector<33x9x8xbf16> to vector<32x8x8xbf16>
    %16 = vector.extract_strided_slice %4 {offsets = [0, 1, 0], sizes = [32, 8, 8], strides = [1, 1, 1]} : vector<33x9x8xbf16> to vector<32x8x8xbf16>
    %17 = vector.extract_strided_slice %11 {offsets = [0, 0, 0], sizes = [32, 8, 8], strides = [1, 1, 1]} : vector<32x9x8xbf16> to vector<32x8x8xbf16>
    %18 = vector.extract_strided_slice %13 {offsets = [0, 0, 0], sizes = [32, 8, 8], strides = [1, 1, 1]} : vector<32x9x8xbf16> to vector<32x8x8xbf16>
    %19 = vector.extract_strided_slice %11 {offsets = [0, 1, 0], sizes = [32, 8, 8], strides = [1, 1, 1]} : vector<32x9x8xbf16> to vector<32x8x8xbf16>
    %20 = vector.extract_strided_slice %4 {offsets = [1, 0, 0], sizes = [32, 8, 8], strides = [1, 1, 1]} : vector<33x9x8xbf16> to vector<32x8x8xbf16>
    %21 = vector.extract_strided_slice %9 {offsets = [1, 0, 0], sizes = [32, 8, 8], strides = [1, 1, 1]} : vector<33x9x8xbf16> to vector<32x8x8xbf16>
    %22 = vector.extract_strided_slice %4 {offsets = [1, 1, 0], sizes = [32, 8, 8], strides = [1, 1, 1]} : vector<33x9x8xbf16> to vector<32x8x8xbf16>
    %23 = tpu.concatenate %14, %15, %16, %17, %18, %19, %20, %21, %22 in 2 : vector<32x8x8xbf16>, vector<32x8x8xbf16>, vector<32x8x8xbf16>, vector<32x8x8xbf16>, vector<32x8x8xbf16>, vector<32x8x8xbf16>, vector<32x8x8xbf16>, vector<32x8x8xbf16>, vector<32x8x8xbf16> -> vector<32x8x72xbf16>
    %24 = vector.shape_cast %23 : vector<32x8x72xbf16> to vector<256x72xbf16>
    %c0_23 = arith.constant 0 : index
    %c0_24 = arith.constant 0 : index
    %25 = vector.load %arg8[%c0_23, %c0_24] : memref<72x8xbf16, #tpu.memory_space<vmem>>, vector<72x8xbf16>
    %cst = arith.constant dense<0.000000e+00> : vector<256x8xf32>
    %26 = tpu.matmul %24, %25, %cst {dimension_numbers = #tpu.dot_dimension_numbers<[1], [0], [0], [1], [0, 0, 1, 1], [], []>} : vector<256x72xbf16>, vector<72x8xbf16>, vector<256x8xf32> -> vector<256x8xf32>
    %c0_25 = arith.constant 0 : index
    %c0_26 = arith.constant 0 : index
    %27 = vector.load %arg9[%c0_25, %c0_26] : memref<1x8xf32, #tpu.memory_space<vmem>>, vector<1x8xf32>
    %28 = vector.broadcast %27 : vector<1x8xf32> to vector<256x8xf32>
    %29 = arith.addf %26, %28 : vector<256x8xf32>
    %cst_27 = arith.constant 0.000000e+00 : f32
    %30 = vector.broadcast %cst_27 : f32 to vector<256x8xf32>
    %31 = arith.maximumf %29, %30 : vector<256x8xf32>
    %32 = vector.shape_cast %31 : vector<256x8xf32> to vector<32x8x8xf32>
    %33 = arith.truncf %32 : vector<32x8x8xf32> to vector<32x8x8xbf16>
    %c0_28 = arith.constant 0 : index
    %c0_29 = arith.constant 0 : index
    %c0_30 = arith.constant 0 : index
    %c0_31 = arith.constant 0 : index
    %34 = vector.load %arg10[%c0_28, %c0_29, %c0_30, %c0_31] : memref<1x32x8x8xbf16, #tpu.memory_space<vmem>>, vector<1x32x8x8xbf16>
    %35 = vector.shape_cast %34 : vector<1x32x8x8xbf16> to vector<32x8x8xbf16>
    %36 = vector.shape_cast %33 : vector<32x8x8xbf16> to vector<1x32x8x8xbf16>
    tpu.vector_store %arg10[%c0_28, %c0_29, %c0_30, %c0_31], %36 {strides = array<i32>} : memref<1x32x8x8xbf16, #tpu.memory_space<vmem>>, vector<1x32x8x8xbf16>,
    return
  }
  func.func @transform_0(%arg0: i32, %arg1: i32) -> (i32, i32, i32, i32) {
    %c0_i32 = arith.constant 0 : i32
    %c0_i32_0 = arith.constant 0 : i32
    %c0_i32_1 = arith.constant 0 : i32
    return %arg0, %arg1, %c0_i32, %c0_i32_0 : i32, i32, i32, i32
  }
  func.func @transform_1(%arg0: i32, %arg1: i32) -> (i32, i32, i32, i32) {
    %c0_i32 = arith.constant 0 : i32
    %c0_i32_0 = arith.constant 0 : i32
    %c0_i32_1 = arith.constant 0 : i32
    return %arg0, %arg1, %c0_i32, %c0_i32_0 : i32, i32, i32, i32
  }
  func.func @transform_2(%arg0: i32, %arg1: i32) -> (i32, i32, i32, i32) {
    %c0_i32 = arith.constant 0 : i32
    %c0_i32_0 = arith.constant 0 : i32
    %c0_i32_1 = arith.constant 0 : i32
    return %arg0, %arg1, %c0_i32, %c0_i32_0 : i32, i32, i32, i32
  }
  func.func @transform_3(%arg0: i32, %arg1: i32) -> (i32, i32, i32, i32) {
    %c0_i32 = arith.constant 0 : i32
    %c0_i32_0 = arith.constant 0 : i32
    %c0_i32_1 = arith.constant 0 : i32
    return %arg0, %arg1, %c0_i32, %c0_i32_0 : i32, i32, i32, i32
  }
  func.func @transform_4(%arg0: i32, %arg1: i32) -> (i32, i32, i32, i32) {
    %c1_i32 = arith.constant 1 : i32
    %0 = arith.addi %arg1, %c1_i32 : i32
    %c32_i32 = arith.constant 32 : i32
    %1 = arith.muli %0, %c32_i32 : i32
    %c0_i32 = arith.constant 0 : i32
    %c0_i32_0 = arith.constant 0 : i32
    %c0_i32_1 = arith.constant 0 : i32
    return %arg0, %1, %c0_i32, %c0_i32_0 : i32, i32, i32, i32
  }
  func.func @transform_5(%arg0: i32, %arg1: i32) -> (i32, i32, i32, i32) {
    %c1_i32 = arith.constant 1 : i32
    %0 = arith.addi %arg1, %c1_i32 : i32
    %c32_i32 = arith.constant 32 : i32
    %1 = arith.muli %0, %c32_i32 : i32
    %c0_i32 = arith.constant 0 : i32
    %c0_i32_0 = arith.constant 0 : i32
    %c0_i32_1 = arith.constant 0 : i32
    return %arg0, %1, %c0_i32, %c0_i32_0 : i32, i32, i32, i32
  }
  func.func @transform_6(%arg0: i32, %arg1: i32) -> (i32, i32) {
    %c0_i32 = arith.constant 0 : i32
    %c0_i32_0 = arith.constant 0 : i32
    %c0_i32_1 = arith.constant 0 : i32
    return %c0_i32, %c0_i32_0 : i32, i32
  }
  func.func @transform_7(%arg0: i32, %arg1: i32) -> (i32, i32) {
    %c0_i32 = arith.constant 0 : i32
    %c0_i32_0 = arith.constant 0 : i32
    %c0_i32_1 = arith.constant 0 : i32
    return %c0_i32, %c0_i32_0 : i32, i32
  }
  func.func @transform_8(%arg0: i32, %arg1: i32) -> (i32, i32, i32, i32) {
    %c0_i32 = arith.constant 0 : i32
    %c0_i32_0 = arith.constant 0 : i32
    %c0_i32_1 = arith.constant 0 : i32
    return %arg0, %arg1, %c0_i32, %c0_i32_0 : i32, i32, i32, i32
  }
}

module attributes {stable_mosaic.version = 11 : i64} {
  func.func @_gemm_bias_act_kernel(%arg0: i32, %arg1: i32, %arg2: memref<64x64xbf16, #tpu.memory_space<vmem>>, %arg3: memref<64x128xbf16, #tpu.memory_space<vmem>>, %arg4: memref<1x128xf32, #tpu.memory_space<vmem>>, %arg5: memref<64x128xf32, #tpu.memory_space<vmem>>) attributes {dimension_semantics = [#tpu.dimension_semantics<parallel>, #tpu.dimension_semantics<parallel>], iteration_bounds = array<i64: 1, 1>, scalar_prefetch = 0 : i64, scratch_operands = 0 : i64, tpu.core_type = #tpu.core_type<tc>, window_params = [{transform_indices = @transform_0, window_bounds = array<i64: 64, 64>}, {transform_indices = @transform_1, window_bounds = array<i64: 64, 128>}, {transform_indices = @transform_2, window_bounds = array<i64: 1, 128>}, {transform_indices = @transform_3, window_bounds = array<i64: 64, 128>}]} {
    %c0 = arith.constant 0 : index
    %c0_0 = arith.constant 0 : index
    %0 = vector.load %arg2[%c0, %c0_0] : memref<64x64xbf16, #tpu.memory_space<vmem>>, vector<64x64xbf16>
    %c0_1 = arith.constant 0 : index
    %c0_2 = arith.constant 0 : index
    %1 = vector.load %arg3[%c0_1, %c0_2] : memref<64x128xbf16, #tpu.memory_space<vmem>>, vector<64x128xbf16>
    %cst = arith.constant dense<0.000000e+00> : vector<64x128xf32>
    %2 = tpu.matmul %0, %1, %cst {dimension_numbers = #tpu.dot_dimension_numbers<[1], [0], [0], [1], [0, 0, 1, 1], [], []>} : vector<64x64xbf16>, vector<64x128xbf16>, vector<64x128xf32> -> vector<64x128xf32>
    %c0_3 = arith.constant 0 : index
    %c0_4 = arith.constant 0 : index
    %3 = vector.load %arg4[%c0_3, %c0_4] : memref<1x128xf32, #tpu.memory_space<vmem>>, vector<1x128xf32>
    %4 = vector.broadcast %3 : vector<1x128xf32> to vector<64x128xf32>
    %5 = arith.addf %2, %4 : vector<64x128xf32>
    %c0_5 = arith.constant 0 : index
    %c0_6 = arith.constant 0 : index
    %6 = vector.load %arg5[%c0_5, %c0_6] : memref<64x128xf32, #tpu.memory_space<vmem>>, vector<64x128xf32>
    tpu.vector_store %arg5[%c0_5, %c0_6], %5 {strides = array<i32>} : memref<64x128xf32, #tpu.memory_space<vmem>>, vector<64x128xf32>,
    return
  }
  func.func @transform_0(%arg0: i32, %arg1: i32) -> (i32, i32) {
    %c0_i32 = arith.constant 0 : i32
    %c0_i32_0 = arith.constant 0 : i32
    return %arg1, %c0_i32 : i32, i32
  }
  func.func @transform_1(%arg0: i32, %arg1: i32) -> (i32, i32) {
    %c0_i32 = arith.constant 0 : i32
    %c0_i32_0 = arith.constant 0 : i32
    return %c0_i32, %arg0 : i32, i32
  }
  func.func @transform_2(%arg0: i32, %arg1: i32) -> (i32, i32) {
    %c0_i32 = arith.constant 0 : i32
    %c0_i32_0 = arith.constant 0 : i32
    return %c0_i32, %arg0 : i32, i32
  }
  func.func @transform_3(%arg0: i32, %arg1: i32) -> (i32, i32) {
    %c0_i32 = arith.constant 0 : i32
    return %arg1, %arg0 : i32, i32
  }
}

</mosaic_0001>

<llo_original>
// kernel: conv2d_subsampling_forward.3
$region0: #{conv2d_subsampling_forward.3}
  #allocation0 [shape = 'u32[]', space=smem, size = 0x4, offset = 0x4, fixed_abs, tag = 'smem constant byte address 0x4 - core index']
  #allocation1 [shape = 'u32[144,128]{1,0:T(1,128)}', space=vmem, size = 0x12000, scoped, tag = 'internal scratch']
  %s0 = inlined_call_operand.vmem [shape: bf16[2,65,17,8], index: 0, kind: input, shape index: {}, may-alias: {0,4}]
  %s1 = inlined_call_operand.vmem [shape: bf16[2,65,17,8], index: 1, kind: input, shape index: {}, may-alias: {1,5}]
  %s2 = inlined_call_operand.vmem [shape: bf16[2,65,17,8], index: 2, kind: input, shape index: {}]
  %s3 = inlined_call_operand.vmem [shape: bf16[2,65,17,8], index: 3, kind: input, shape index: {}]
  %s4 = inlined_call_operand.vmem [shape: bf16[2,65,17,8], index: 4, kind: input, shape index: {}, may-alias: {0,4}]
  %s5 = inlined_call_operand.vmem [shape: bf16[2,65,17,8], index: 5, kind: input, shape index: {}, may-alias: {1,5}]
  %s6 = inlined_call_operand.vmem [shape: bf16[72,8], index: 6, kind: input, shape index: {}]
  %s7 = inlined_call_operand.vmem [shape: f32[1,8], index: 7, kind: input, shape index: {}]
  %s8 = inlined_call_operand.vmem [shape: bf16[2,64,16,8], index: 8, kind: output, shape index: {}]
  %s9 = sld [smem:[#allocation0]]
  $region65: #{conv2d_subsampling_forward.3} parent=0
    _
  %s11 = ssub.s32 1, %s9
  %s12 = scalar_select 0, %s11, %s9
  loop: start=0, step=1, limit=6
  $region2: #{conv2d_subsampling_forward.3} parent=0 // loop_pre_header
    _
  $region3: #{conv2d_subsampling_forward.3} parent=0 // loop_header
    %s14 = sphi 0, %s18
    %p15 = scmp.ge.s32.totalorder %s14, 6
    %s21 = sphi 0, %s33
    %s22 = sphi 0, %s29
    %s23 = sphi 0, %s21
    %s24 = sphi 0, %s22
    %s25 = sphi 0, %s23
    %s26 = sphi 0, %s24
    %s38 = sphi 0, %s40
    %s41 = sphi 0, %s38
    %s42 = sphi 0, %s41
    %s58 = sphi 0, %s42
    %s66 = sphi 0, %s68
    %s69 = sphi 0, %s66
    %s70 = sphi 0, %s69
    %s86 = sphi 0, %s70
    %s94 = sphi 0, %s96
    %s97 = sphi 0, %s94
    %s98 = sphi 0, %s97
    %s114 = sphi 0, %s98
    %s122 = sphi 0, %s124
    %s125 = sphi 0, %s122
    %s126 = sphi 0, %s125
    %s142 = sphi 0, %s126
    %s154 = sphi 0, %s156
    %s157 = sphi 0, %s154
    %s158 = sphi 0, %s157
    %s174 = sphi 0, %s158
    %s186 = sphi 0, %s188
    %s189 = sphi 0, %s186
    %s190 = sphi 0, %s189
    %s206 = sphi 0, %s190
    %s210 = sphi 0, %s210
    %s212 = sphi 0, %s210
    %s213 = sphi 0, %s212
    %s227 = sphi 0, %s213
    %s231 = sphi 0, %s231
    %s233 = sphi 0, %s231
    %s234 = sphi 0, %s233
    %s248 = sphi 0, %s234
    %s256 = sphi 0, %s258
    %s259 = sphi 0, %s256
    %s260 = sphi 0, %s259
    %s276 = sphi 0, %s260
  $region4: #{conv2d_subsampling_forward.3} parent=0 // loop_header_branch
    %17 = sbr.rel (%p15) target = $region8
  $region5: #{conv2d_subsampling_forward.3} parent=0 // loop_body
    %s19 = ssub.s32 %s14, 1
    %s20 = ssub.s32 %s14, 2
    %s27 = sadd.s32 1, %s22
    %p28 = scmp.ge.s32.totalorder %s27, 2
    %s29 = scalar_select %p28, 0, %s27
    %s30 = sadd.s32 1, %s21
    %s31 = scalar_select %p28, %s30, %s21
    %p32 = scmp.ge.s32.totalorder %s31, 2
    %s33 = scalar_select %p32, 0, %s31
    %s34 = ssub.s32 %s21, %s33
    %s35 = ssub.s32 %s22, %s29
    %s36 = sor.u32 %s34, %s35
    %p37 = scmp.eq.s32.totalorder %s36, 0
    %s39 = sadd.s32 %s38, 1
    %s40 = scalar_select %p37, %s38, %s39
    %p43 = pneg %p37
    %p44 = scmp.eq.s32.totalorder %s14, 3
    %p45 = por %p43, %p44
    %p46 = scmp.ne.s32.totalorder %s38, %s41
    %p47 = scmp.eq.s32.totalorder %s14, 0
    %p48 = por %p46, %p47
    %p49 = scmp.ne.s32.totalorder %s38, %s41
    %p50 = scmp.eq.s32.totalorder %s19, 3
    %p51 = por %p49, %p50
    %p52 = scmp.ne.s32.totalorder %s41, %s42
    %p53 = scmp.eq.s32.totalorder %s19, 0
    %p54 = por %p52, %p53
    %p55 = scmp.ne.s32.totalorder %s41, %s42
    %p56 = scmp.eq.s32.totalorder %s20, 3
    %p57 = por %p55, %p56
    %p59 = scmp.ne.s32.totalorder %s42, %s58
    %p60 = scmp.eq.s32.totalorder %s20, 0
    %p61 = por %p59, %p60
    %s62 = ssub.s32 %s21, %s33
    %s63 = ssub.s32 %s22, %s29
    %s64 = sor.u32 %s62, %s63
    %p65 = scmp.eq.s32.totalorder %s64, 0
    %s67 = sadd.s32 %s66, 1
    %s68 = scalar_select %p65, %s66, %s67
    %p71 = pneg %p65
    %p72 = scmp.eq.s32.totalorder %s14, 3
    %p73 = por %p71, %p72
    %p74 = scmp.ne.s32.totalorder %s66, %s69
    %p75 = scmp.eq.s32.totalorder %s14, 0
    %p76 = por %p74, %p75
    %p77 = scmp.ne.s32.totalorder %s66, %s69
    %p78 = scmp.eq.s32.totalorder %s19, 3
    %p79 = por %p77, %p78
    %p80 = scmp.ne.s32.totalorder %s69, %s70
    %p81 = scmp.eq.s32.totalorder %s19, 0
    %p82 = por %p80, %p81
    %p83 = scmp.ne.s32.totalorder %s69, %s70
    %p84 = scmp.eq.s32.totalorder %s20, 3
    %p85 = por %p83, %p84
    %p87 = scmp.ne.s32.totalorder %s70, %s86
    %p88 = scmp.eq.s32.totalorder %s20, 0
    %p89 = por %p87, %p88
    %s90 = ssub.s32 %s21, %s33
    %s91 = ssub.s32 %s22, %s29
    %s92 = sor.u32 %s90, %s91
    %p93 = scmp.eq.s32.totalorder %s92, 0
    %s95 = sadd.s32 %s94, 1
    %s96 = scalar_select %p93, %s94, %s95
    %p99 = pneg %p93
    %p100 = scmp.eq.s32.totalorder %s14, 3
    %p101 = por %p99, %p100
    %p102 = scmp.ne.s32.totalorder %s94, %s97
    %p103 = scmp.eq.s32.totalorder %s14, 0
    %p104 = por %p102, %p103
    %p105 = scmp.ne.s32.totalorder %s94, %s97
    %p106 = scmp.eq.s32.totalorder %s19, 3
    %p107 = por %p105, %p106
    %p108 = scmp.ne.s32.totalorder %s97, %s98
    %p109 = scmp.eq.s32.totalorder %s19, 0
    %p110 = por %p108, %p109
    %p111 = scmp.ne.s32.totalorder %s97, %s98
    %p112 = scmp.eq.s32.totalorder %s20, 3
    %p113 = por %p111, %p112
    %p115 = scmp.ne.s32.totalorder %s98, %s114
    %p116 = scmp.eq.s32.totalorder %s20, 0
    %p117 = por %p115, %p116
    %s118 = ssub.s32 %s21, %s33
    %s119 = ssub.s32 %s22, %s29
    %s120 = sor.u32 %s118, %s119
    %p121 = scmp.eq.s32.totalorder %s120, 0
    %s123 = sadd.s32 %s122, 1
    %s124 = scalar_select %p121, %s122, %s123
    %p127 = pneg %p121
    %p128 = scmp.eq.s32.totalorder %s14, 3
    %p129 = por %p127, %p128
    %p130 = scmp.ne.s32.totalorder %s122, %s125
    %p131 = scmp.eq.s32.totalorder %s14, 0
    %p132 = por %p130, %p131
    %p133 = scmp.ne.s32.totalorder %s122, %s125
    %p134 = scmp.eq.s32.totalorder %s19, 3
    %p135 = por %p133, %p134
    %p136 = scmp.ne.s32.totalorder %s125, %s126
    %p137 = scmp.eq.s32.totalorder %s19, 0
    %p138 = por %p136, %p137
    %p139 = scmp.ne.s32.totalorder %s125, %s126
    %p140 = scmp.eq.s32.totalorder %s20, 3
    %p141 = por %p139, %p140
    %p143 = scmp.ne.s32.totalorder %s126, %s142
    %p144 = scmp.eq.s32.totalorder %s20, 0
    %p145 = por %p143, %p144
    %s146 = sadd.s32 %s22, 1
    %s147 = smul.u32 %s146, 32
    %s148 = sadd.s32 %s29, 1
    %s149 = smul.u32 %s148, 32
    %s150 = ssub.s32 %s21, %s33
    %s151 = ssub.s32 %s147, %s149
    %s152 = sor.u32 %s150, %s151
    %p153 = scmp.eq.s32.totalorder %s152, 0
    %s155 = sadd.s32 %s154, 1
    %s156 = scalar_select %p153, %s154, %s155
    %p159 = pneg %p153
    %p160 = scmp.eq.s32.totalorder %s14, 3
    %p161 = por %p159, %p160
    %p162 = scmp.ne.s32.totalorder %s154, %s157
    %p163 = scmp.eq.s32.totalorder %s14, 0
    %p164 = por %p162, %p163
    %p165 = scmp.ne.s32.totalorder %s154, %s157
    %p166 = scmp.eq.s32.totalorder %s19, 3
    %p167 = por %p165, %p166
    %p168 = scmp.ne.s32.totalorder %s157, %s158
    %p169 = scmp.eq.s32.totalorder %s19, 0
    %p170 = por %p168, %p169
    %p171 = scmp.ne.s32.totalorder %s157, %s158
    %p172 = scmp.eq.s32.totalorder %s20, 3
    %p173 = por %p171, %p172
    %p175 = scmp.ne.s32.totalorder %s158, %s174
    %p176 = scmp.eq.s32.totalorder %s20, 0
    %p177 = por %p175, %p176
    %s178 = sadd.s32 %s22, 1
    %s179 = smul.u32 %s178, 32
    %s180 = sadd.s32 %s29, 1
    %s181 = smul.u32 %s180, 32
    %s182 = ssub.s32 %s21, %s33
    %s183 = ssub.s32 %s179, %s181
    %s184 = sor.u32 %s182, %s183
    %p185 = scmp.eq.s32.totalorder %s184, 0
    %s187 = sadd.s32 %s186, 1
    %s188 = scalar_select %p185, %s186, %s187
    %p191 = pneg %p185
    %p192 = scmp.eq.s32.totalorder %s14, 3
    %p193 = por %p191, %p192
    %p194 = scmp.ne.s32.totalorder %s186, %s189
    %p195 = scmp.eq.s32.totalorder %s14, 0
    %p196 = por %p194, %p195
    %p197 = scmp.ne.s32.totalorder %s186, %s189
    %p198 = scmp.eq.s32.totalorder %s19, 3
    %p199 = por %p197, %p198
    %p200 = scmp.ne.s32.totalorder %s189, %s190
    %p201 = scmp.eq.s32.totalorder %s19, 0
    %p202 = por %p200, %p201
    %p203 = scmp.ne.s32.totalorder %s189, %s190
    %p204 = scmp.eq.s32.totalorder %s20, 3
    %p205 = por %p203, %p204
    %p207 = scmp.ne.s32.totalorder %s190, %s206
    %p208 = scmp.eq.s32.totalorder %s20, 0
    %p209 = por %p207, %p208
    %s211 = sadd.s32 %s210, 1
    %p214 = scmp.eq.s32.totalorder %s14, 3
    %p215 = scmp.ne.s32.totalorder %s210, %s212
    %p216 = scmp.eq.s32.totalorder %s14, 0
    %p217 = por %p215, %p216
    %p218 = scmp.ne.s32.totalorder %s210, %s212
    %p219 = scmp.eq.s32.totalorder %s19, 3
    %p220 = por %p218, %p219
    %p221 = scmp.ne.s32.totalorder %s212, %s213
    %p222 = scmp.eq.s32.totalorder %s19, 0
    %p223 = por %p221, %p222
    %p224 = scmp.ne.s32.totalorder %s212, %s213
    %p225 = scmp.eq.s32.totalorder %s20, 3
    %p226 = por %p224, %p225
    %p228 = scmp.ne.s32.totalorder %s213, %s227
    %p229 = scmp.eq.s32.totalorder %s20, 0
    %p230 = por %p228, %p229
    %s232 = sadd.s32 %s231, 1
    %p235 = scmp.eq.s32.totalorder %s14, 3
    %p236 = scmp.ne.s32.totalorder %s231, %s233
    %p237 = scmp.eq.s32.totalorder %s14, 0
    %p238 = por %p236, %p237
    %p239 = scmp.ne.s32.totalorder %s231, %s233
    %p240 = scmp.eq.s32.totalorder %s19, 3
    %p241 = por %p239, %p240
    %p242 = scmp.ne.s32.totalorder %s233, %s234
    %p243 = scmp.eq.s32.totalorder %s19, 0
    %p244 = por %p242, %p243
    %p245 = scmp.ne.s32.totalorder %s233, %s234
    %p246 = scmp.eq.s32.totalorder %s20, 3
    %p247 = por %p245, %p246
    %p249 = scmp.ne.s32.totalorder %s234, %s248
    %p250 = scmp.eq.s32.totalorder %s20, 0
    %p251 = por %p249, %p250
    %s252 = ssub.s32 %s21, %s33
    %s253 = ssub.s32 %s22, %s29
    %s254 = sor.u32 %s252, %s253
    %p255 = scmp.eq.s32.totalorder %s254, 0
    %s257 = sadd.s32 %s256, 1
    %s258 = scalar_select %p255, %s256, %s257
    %p261 = pneg %p255
    %p262 = scmp.eq.s32.totalorder %s14, 3
    %p263 = por %p261, %p262
    %p264 = scmp.ne.s32.totalorder %s256, %s259
    %p265 = scmp.eq.s32.totalorder %s14, 0
    %p266 = por %p264, %p265
    %p267 = scmp.ne.s32.totalorder %s256, %s259
    %p268 = scmp.eq.s32.totalorder %s19, 3
    %p269 = por %p267, %p268
    %p270 = scmp.ne.s32.totalorder %s259, %s260
    %p271 = scmp.eq.s32.totalorder %s19, 0
    %p272 = por %p270, %p271
    %p273 = scmp.ne.s32.totalorder %s259, %s260
    %p274 = scmp.eq.s32.totalorder %s20, 3
    %p275 = por %p273, %p274
    %p277 = scmp.ne.s32.totalorder %s260, %s276
    %p278 = scmp.eq.s32.totalorder %s20, 0
    %p279 = por %p277, %p278
    %p280 = scmp.le.s32.totalorder 1, %s14
    %p281 = scmp.lt.s32.totalorder %s14, 5
    %p282 = pnand %p280, %p281
    %p283 = pneg %p282
    // Predicated region
    $region9: #{conv2d_subsampling_forward.3} parent=5 // pred_check
      _
    $region10: #{conv2d_subsampling_forward.3} parent=5 // pred_check_branch
      %285 = sbr.rel (%p282) target = $region12
    $region11: #{conv2d_subsampling_forward.3} parent=5 // pred_region
      %s286 = ssub.s32 %s14, 1
      // Predicated region
      $region13: #{conv2d_subsampling_forward.3} parent=11 // pred_check
        %p287 = pneg %p223
      $region14: #{conv2d_subsampling_forward.3} parent=11 // pred_check_branch
        %289 = sbr.rel (%p287) target = $region16
      $region15: #{conv2d_subsampling_forward.3} parent=11 // pred_region
        _
      $region16: #{conv2d_subsampling_forward.3} parent=11 // pred_fallthru
        _
      // Predicated region
      $region17: #{conv2d_subsampling_forward.3} parent=11 // pred_check
        %p290 = pneg %p244
      $region18: #{conv2d_subsampling_forward.3} parent=11 // pred_check_branch
        %292 = sbr.rel (%p290) target = $region20
      $region19: #{conv2d_subsampling_forward.3} parent=11 // pred_region
        _
      $region20: #{conv2d_subsampling_forward.3} parent=11 // pred_fallthru
        _
    $region12: #{conv2d_subsampling_forward.3} parent=5 // pred_fallthru
      _
    %p293 = scmp.lt.s32.totalorder %s14, 4
    // Predicated region
    $region21: #{conv2d_subsampling_forward.3} parent=5 // pred_check
      %p294 = pneg %p293
    $region22: #{conv2d_subsampling_forward.3} parent=5 // pred_check_branch
      %296 = sbr.rel (%p294) target = $region24
    $region23: #{conv2d_subsampling_forward.3} parent=5 // pred_region
      // Predicated region
      $region25: #{conv2d_subsampling_forward.3} parent=23 // pred_check
        %p297 = pneg %p48
      $region26: #{conv2d_subsampling_forward.3} parent=23 // pred_check_branch
        %299 = sbr.rel (%p297) target = $region28
      $region27: #{conv2d_subsampling_forward.3} parent=23 // pred_region
        %s300 = smul.u32 32, %s22
        %s301 = ssub.s32 65, %s300
        %p302 = scmp.lt.s32.totalorder %s301, 32
        %s303 = scalar_select %p302, %s301, 32
        %s304 = smul.u32 64, %s303
        %s305 = smul.u32 %s304, 3
        %p306 = scmp.lt.s32.totalorder %s21, 1
        %s307 = scalar_select %p306, %s21, 1
        %p308 = scmp.lt.s32.totalorder %s300, 64
        %s309 = scalar_select %p308, %s300, 64
        %s310 = smul.addr %s309, 3
        %s311 = smul.addr %s307, 195
        %s312 = sadd.s32 %s310, %s311
        %s313 = smul.addr %s312, 4
        %s314 = scalar_lea.vmem %s0, %s313
        %s315 = smul.u32 32, %s22
        %s316 = ssub.s32 65, %s315
        %p317 = scmp.lt.s32.totalorder %s316, 32
        %s318 = scalar_select %p317, %s316, 32
        %s319 = smul.u32 64, %s318
        %s320 = smul.u32 %s319, 3
      $region28: #{conv2d_subsampling_forward.3} parent=23 // pred_fallthru
        _
      // Predicated region
      $region29: #{conv2d_subsampling_forward.3} parent=23 // pred_check
        %p321 = pneg %p76
      $region30: #{conv2d_subsampling_forward.3} parent=23 // pred_check_branch
        %323 = sbr.rel (%p321) target = $region32
      $region31: #{conv2d_subsampling_forward.3} parent=23 // pred_region
        %s324 = smul.u32 32, %s22
        %s325 = ssub.s32 65, %s324
        %p326 = scmp.lt.s32.totalorder %s325, 32
        %s327 = scalar_select %p326, %s325, 32
        %s328 = smul.u32 64, %s327
        %s329 = smul.u32 %s328, 3
        %p330 = scmp.lt.s32.totalorder %s21, 1
        %s331 = scalar_select %p330, %s21, 1
        %p332 = scmp.lt.s32.totalorder %s324, 64
        %s333 = scalar_select %p332, %s324, 64
        %s334 = smul.addr %s333, 3
        %s335 = smul.addr %s331, 195
        %s336 = sadd.s32 %s334, %s335
        %s337 = smul.addr %s336, 4
        %s338 = scalar_lea.vmem %s1, %s337
        %s339 = smul.u32 32, %s22
        %s340 = ssub.s32 65, %s339
        %p341 = scmp.lt.s32.totalorder %s340, 32
        %s342 = scalar_select %p341, %s340, 32
        %s343 = smul.u32 64, %s342
        %s344 = smul.u32 %s343, 3
      $region32: #{conv2d_subsampling_forward.3} parent=23 // pred_fallthru
        _
      // Predicated region
      $region33: #{conv2d_subsampling_forward.3} parent=23 // pred_check
        %p345 = pneg %p104
      $region34: #{conv2d_subsampling_forward.3} parent=23 // pred_check_branch
        %347 = sbr.rel (%p345) target = $region36
      $region35: #{conv2d_subsampling_forward.3} parent=23 // pred_region
        %s348 = smul.u32 32, %s22
        %s349 = ssub.s32 65, %s348
        %p350 = scmp.lt.s32.totalorder %s349, 32
        %s351 = scalar_select %p350, %s349, 32
        %s352 = smul.u32 64, %s351
        %s353 = smul.u32 %s352, 3
        %p354 = scmp.lt.s32.totalorder %s21, 1
        %s355 = scalar_select %p354, %s21, 1
        %p356 = scmp.lt.s32.totalorder %s348, 64
        %s357 = scalar_select %p356, %s348, 64
        %s358 = smul.addr %s357, 3
        %s359 = smul.addr %s355, 195
        %s360 = sadd.s32 %s358, %s359
        %s361 = smul.addr %s360, 4
        %s362 = scalar_lea.vmem %s2, %s361
        %s363 = smul.u32 32, %s22
        %s364 = ssub.s32 65, %s363
        %p365 = scmp.lt.s32.totalorder %s364, 32
        %s366 = scalar_select %p365, %s364, 32
        %s367 = smul.u32 64, %s366
        %s368 = smul.u32 %s367, 3
      $region36: #{conv2d_subsampling_forward.3} parent=23 // pred_fallthru
        _
      // Predicated region
      $region37: #{conv2d_subsampling_forward.3} parent=23 // pred_check
        %p369 = pneg %p132
      $region38: #{conv2d_subsampling_forward.3} parent=23 // pred_check_branch
        %371 = sbr.rel (%p369) target = $region40
      $region39: #{conv2d_subsampling_forward.3} parent=23 // pred_region
        %s372 = smul.u32 32, %s22
        %s373 = ssub.s32 65, %s372
        %p374 = scmp.lt.s32.totalorder %s373, 32
        %s375 = scalar_select %p374, %s373, 32
        %s376 = smul.u32 64, %s375
        %s377 = smul.u32 %s376, 3
        %p378 = scmp.lt.s32.totalorder %s21, 1
        %s379 = scalar_select %p378, %s21, 1
        %p380 = scmp.lt.s32.totalorder %s372, 64
        %s381 = scalar_select %p380, %s372, 64
        %s382 = smul.addr %s381, 3
        %s383 = smul.addr %s379, 195
        %s384 = sadd.s32 %s382, %s383
        %s385 = smul.addr %s384, 4
        %s386 = scalar_lea.vmem %s3, %s385
        %s387 = smul.u32 32, %s22
        %s388 = ssub.s32 65, %s387
        %p389 = scmp.lt.s32.totalorder %s388, 32
        %s390 = scalar_select %p389, %s388, 32
        %s391 = smul.u32 64, %s390
        %s392 = smul.u32 %s391, 3
      $region40: #{conv2d_subsampling_forward.3} parent=23 // pred_fallthru
        _
      // Predicated region
      $region41: #{conv2d_subsampling_forward.3} parent=23 // pred_check
        %p393 = pneg %p164
      $region42: #{conv2d_subsampling_forward.3} parent=23 // pred_check_branch
        %395 = sbr.rel (%p393) target = $region44
      $region43: #{conv2d_subsampling_forward.3} parent=23 // pred_region
        %s396 = sadd.s32 %s22, 1
        %s397 = smul.u32 %s396, 32
        %p398 = scmp.lt.s32.totalorder %s21, 1
        %s399 = scalar_select %p398, %s21, 1
        %p400 = scmp.lt.s32.totalorder %s397, 64
        %s401 = scalar_select %p400, %s397, 64
        %s402 = smul.addr %s401, 3
        %s403 = smul.addr %s399, 195
        %s404 = sadd.s32 %s402, %s403
        %s405 = smul.addr %s404, 4
        %s406 = scalar_lea.vmem %s4, %s405
        %s407 = sadd.s32 %s22, 1
        %s408 = smul.u32 %s407, 32
      $region44: #{conv2d_subsampling_forward.3} parent=23 // pred_fallthru
        _
      // Predicated region
      $region45: #{conv2d_subsampling_forward.3} parent=23 // pred_check
        %p409 = pneg %p196
      $region46: #{conv2d_subsampling_forward.3} parent=23 // pred_check_branch
        %411 = sbr.rel (%p409) target = $region48
      $region47: #{conv2d_subsampling_forward.3} parent=23 // pred_region
        %s412 = sadd.s32 %s22, 1
        %s413 = smul.u32 %s412, 32
        %p414 = scmp.lt.s32.totalorder %s21, 1
        %s415 = scalar_select %p414, %s21, 1
        %p416 = scmp.lt.s32.totalorder %s413, 64
        %s417 = scalar_select %p416, %s413, 64
        %s418 = smul.addr %s417, 3
        %s419 = smul.addr %s415, 195
        %s420 = sadd.s32 %s418, %s419
        %s421 = smul.addr %s420, 4
        %s422 = scalar_lea.vmem %s5, %s421
        %s423 = sadd.s32 %s22, 1
        %s424 = smul.u32 %s423, 32
      $region48: #{conv2d_subsampling_forward.3} parent=23 // pred_fallthru
        _
    $region24: #{conv2d_subsampling_forward.3} parent=5 // pred_fallthru
      _
    %p425 = scmp.le.s32.totalorder 1, %s14
    %p426 = scmp.lt.s32.totalorder %s14, 5
    %p427 = pnand %p425, %p426
    %p428 = pneg %p427
    // Predicated region
    $region49: #{conv2d_subsampling_forward.3} parent=5 // pred_check
      _
    $region50: #{conv2d_subsampling_forward.3} parent=5 // pred_check_branch
      %430 = sbr.rel (%p427) target = $region52
    $region51: #{conv2d_subsampling_forward.3} parent=5 // pred_region
      %s431 = ssub.s32 %s14, 1
      %s432 = smul.u32 32, %s24
      %s433 = ssub.s32 65, %s432
      %p434 = scmp.lt.s32.totalorder %s433, 32
      %s435 = scalar_select %p434, %s433, 32
      %s436 = smul.u32 64, %s435
      %s437 = smul.u32 %s436, 3
      %p438 = scmp.lt.s32.totalorder %s23, 1
      %s439 = scalar_select %p438, %s23, 1
      %p440 = scmp.lt.s32.totalorder %s432, 64
      %s441 = scalar_select %p440, %s432, 64
      %s442 = smul.addr %s441, 3
      %s443 = smul.addr %s439, 195
      %s444 = sadd.s32 %s442, %s443
      %s445 = smul.addr %s444, 4
      %s446 = scalar_lea.vmem %s0, %s445
      %p447 = pneg %p54
      %p448 = pneg %p51
      %s449 = smul.u32 32, %s24
      %s450 = ssub.s32 65, %s449
      %p451 = scmp.lt.s32.totalorder %s450, 32
      %s452 = scalar_select %p451, %s450, 32
      %s453 = smul.u32 64, %s452
      %s454 = smul.u32 %s453, 3
      %p455 = scmp.lt.s32.totalorder %s23, 1
      %s456 = scalar_select %p455, %s23, 1
      %p457 = scmp.lt.s32.totalorder %s449, 64
      %s458 = scalar_select %p457, %s449, 64
      %s459 = smul.addr %s458, 3
      %s460 = smul.addr %s456, 195
      %s461 = sadd.s32 %s459, %s460
      %s462 = smul.addr %s461, 4
      %s463 = scalar_lea.vmem %s1, %s462
      %p464 = pneg %p82
      %p465 = pneg %p79
      %s466 = smul.u32 32, %s24
      %s467 = ssub.s32 65, %s466
      %p468 = scmp.lt.s32.totalorder %s467, 32
      %s469 = scalar_select %p468, %s467, 32
      %s470 = smul.u32 64, %s469
      %s471 = smul.u32 %s470, 3
      %p472 = scmp.lt.s32.totalorder %s23, 1
      %s473 = scalar_select %p472, %s23, 1
      %p474 = scmp.lt.s32.totalorder %s466, 64
      %s475 = scalar_select %p474, %s466, 64
      %s476 = smul.addr %s475, 3
      %s477 = smul.addr %s473, 195
      %s478 = sadd.s32 %s476, %s477
      %s479 = smul.addr %s478, 4
      %s480 = scalar_lea.vmem %s2, %s479
      %p481 = pneg %p110
      %p482 = pneg %p107
      %s483 = smul.u32 32, %s24
      %s484 = ssub.s32 65, %s483
      %p485 = scmp.lt.s32.totalorder %s484, 32
      %s486 = scalar_select %p485, %s484, 32
      %s487 = smul.u32 64, %s486
      %s488 = smul.u32 %s487, 3
      %p489 = scmp.lt.s32.totalorder %s23, 1
      %s490 = scalar_select %p489, %s23, 1
      %p491 = scmp.lt.s32.totalorder %s483, 64
      %s492 = scalar_select %p491, %s483, 64
      %s493 = smul.addr %s492, 3
      %s494 = smul.addr %s490, 195
      %s495 = sadd.s32 %s493, %s494
      %s496 = smul.addr %s495, 4
      %s497 = scalar_lea.vmem %s3, %s496
      %p498 = pneg %p138
      %p499 = pneg %p135
      %s500 = sadd.s32 %s24, 1
      %s501 = smul.u32 %s500, 32
      %p502 = scmp.lt.s32.totalorder %s23, 1
      %s503 = scalar_select %p502, %s23, 1
      %p504 = scmp.lt.s32.totalorder %s501, 64
      %s505 = scalar_select %p504, %s501, 64
      %s506 = smul.addr %s505, 3
      %s507 = smul.addr %s503, 195
      %s508 = sadd.s32 %s506, %s507
      %s509 = smul.addr %s508, 4
      %s510 = scalar_lea.vmem %s4, %s509
      %p511 = pneg %p170
      %p512 = pneg %p167
      %s513 = sadd.s32 %s24, 1
      %s514 = smul.u32 %s513, 32
      %p515 = scmp.lt.s32.totalorder %s23, 1
      %s516 = scalar_select %p515, %s23, 1
      %p517 = scmp.lt.s32.totalorder %s514, 64
      %s518 = scalar_select %p517, %s514, 64
      %s519 = smul.addr %s518, 3
      %s520 = smul.addr %s516, 195
      %s521 = sadd.s32 %s519, %s520
      %s522 = smul.addr %s521, 4
      %s523 = scalar_lea.vmem %s5, %s522
      %p524 = pneg %p202
      %p525 = pneg %p199
      %p526 = pneg %p223
      %p527 = pneg %p220
      %p528 = pneg %p244
      %p529 = pneg %p241
      %p530 = pneg %p272
      %p531 = pneg %p269
      %s532 = smul.u32 32, %s24
      %p533 = scmp.lt.s32.totalorder %s23, 1
      %s534 = scalar_select %p533, %s23, 1
      %p535 = scmp.lt.s32.totalorder %s532, 63
      %s536 = scalar_select %p535, %s532, 63
      %s537 = smul.addr %s536, 2
      %s538 = smul.addr %s534, 128
      %s539 = sadd.s32 %s537, %s538
      %s540 = smul.addr %s539, 4
      %s541 = scalar_lea.vmem %s8, %s540
      %s542 = smul.u32 32, %s24
      %s543 = ssub.s32 65, %s542
      %p544 = scmp.lt.s32.totalorder %s543, 32
      %s545 = scalar_select %p544, %s543, 32
      %s546 = smul.u32 64, %s545
      %s547 = smul.u32 %s546, 3
      %p548 = scmp.lt.s32.totalorder %s23, 1
      %s549 = scalar_select %p548, %s23, 1
      %p550 = scmp.lt.s32.totalorder %s542, 64
      %s551 = scalar_select %p550, %s542, 64
      %s552 = smul.addr %s551, 3
      %s553 = smul.addr %s549, 195
      %s554 = sadd.s32 %s552, %s553
      %s555 = smul.addr %s554, 4
      %s556 = scalar_lea.vmem %s0, %s555
      %s557 = smul.u32 32, %s24
      %s558 = ssub.s32 65, %s557
      %p559 = scmp.lt.s32.totalorder %s558, 32
      %s560 = scalar_select %p559, %s558, 32
      %s561 = smul.u32 64, %s560
      %s562 = smul.u32 %s561, 3
      %s563 = smul.u32 32, %s24
      %s564 = ssub.s32 65, %s563
      %p565 = scmp.lt.s32.totalorder %s564, 32
      %s566 = scalar_select %p565, %s564, 32
      %s567 = smul.u32 64, %s566
      %s568 = smul.u32 %s567, 3
      %p569 = scmp.lt.s32.totalorder %s23, 1
      %s570 = scalar_select %p569, %s23, 1
      %p571 = scmp.lt.s32.totalorder %s563, 64
      %s572 = scalar_select %p571, %s563, 64
      %s573 = smul.addr %s572, 3
      %s574 = smul.addr %s570, 195
      %s575 = sadd.s32 %s573, %s574
      %s576 = smul.addr %s575, 4
      %s577 = scalar_lea.vmem %s1, %s576
      %s578 = smul.u32 32, %s24
      %s579 = ssub.s32 65, %s578
      %p580 = scmp.lt.s32.totalorder %s579, 32
      %s581 = scalar_select %p580, %s579, 32
      %s582 = smul.u32 64, %s581
      %s583 = smul.u32 %s582, 3
      %s584 = smul.u32 32, %s24
      %s585 = ssub.s32 65, %s584
      %p586 = scmp.lt.s32.totalorder %s585, 32
      %s587 = scalar_select %p586, %s585, 32
      %s588 = smul.u32 64, %s587
      %s589 = smul.u32 %s588, 3
      %p590 = scmp.lt.s32.totalorder %s23, 1
      %s591 = scalar_select %p590, %s23, 1
      %p592 = scmp.lt.s32.totalorder %s584, 64
      %s593 = scalar_select %p592, %s584, 64
      %s594 = smul.addr %s593, 3
      %s595 = smul.addr %s591, 195
      %s596 = sadd.s32 %s594, %s595
      %s597 = smul.addr %s596, 4
      %s598 = scalar_lea.vmem %s2, %s597
      %s599 = smul.u32 32, %s24
      %s600 = ssub.s32 65, %s599
      %p601 = scmp.lt.s32.totalorder %s600, 32
      %s602 = scalar_select %p601, %s600, 32
      %s603 = smul.u32 64, %s602
      %s604 = smul.u32 %s603, 3
      %s605 = smul.u32 32, %s24
      %s606 = ssub.s32 65, %s605
      %p607 = scmp.lt.s32.totalorder %s606, 32
      %s608 = scalar_select %p607, %s606, 32
      %s609 = smul.u32 64, %s608
      %s610 = smul.u32 %s609, 3
      %p611 = scmp.lt.s32.totalorder %s23, 1
      %s612 = scalar_select %p611, %s23, 1
      %p613 = scmp.lt.s32.totalorder %s605, 64
      %s614 = scalar_select %p613, %s605, 64
      %s615 = smul.addr %s614, 3
      %s616 = smul.addr %s612, 195
      %s617 = sadd.s32 %s615, %s616
      %s618 = smul.addr %s617, 4
      %s619 = scalar_lea.vmem %s3, %s618
      %s620 = smul.u32 32, %s24
      %s621 = ssub.s32 65, %s620
      %p622 = scmp.lt.s32.totalorder %s621, 32
      %s623 = scalar_select %p622, %s621, 32
      %s624 = smul.u32 64, %s623
      %s625 = smul.u32 %s624, 3
      %s626 = sadd.s32 %s24, 1
      %s627 = smul.u32 %s626, 32
      %p628 = scmp.lt.s32.totalorder %s23, 1
      %s629 = scalar_select %p628, %s23, 1
      %p630 = scmp.lt.s32.totalorder %s627, 64
      %s631 = scalar_select %p630, %s627, 64
      %s632 = smul.addr %s631, 3
      %s633 = smul.addr %s629, 195
      %s634 = sadd.s32 %s632, %s633
      %s635 = smul.addr %s634, 4
      %s636 = scalar_lea.vmem %s4, %s635
      %s637 = sadd.s32 %s24, 1
      %s638 = smul.u32 %s637, 32
      %s639 = sadd.s32 %s24, 1
      %s640 = smul.u32 %s639, 32
      %p641 = scmp.lt.s32.totalorder %s23, 1
      %s642 = scalar_select %p641, %s23, 1
      %p643 = scmp.lt.s32.totalorder %s640, 64
      %s644 = scalar_select %p643, %s640, 64
      %s645 = smul.addr %s644, 3
      %s646 = smul.addr %s642, 195
      %s647 = sadd.s32 %s645, %s646
      %s648 = smul.addr %s647, 4
      %s649 = scalar_lea.vmem %s5, %s648
      %s650 = sadd.s32 %s24, 1
      %s651 = smul.u32 %s650, 32
      %s652 = smul.u32 32, %s24
      %p653 = scmp.lt.s32.totalorder %s23, 1
      %s654 = scalar_select %p653, %s23, 1
      %p655 = scmp.lt.s32.totalorder %s652, 63
      %s656 = scalar_select %p655, %s652, 63
      %s657 = smul.addr %s656, 2
      %s658 = smul.addr %s654, 128
      %s659 = sadd.s32 %s657, %s658
      %s660 = smul.addr %s659, 4
      %s661 = scalar_lea.vmem %s8, %s660
      %s662 = smul.u32 32, %s24
      %v664 = vld [vmem:[%s556] sm:$0xf]
      %v665 = vld [vmem:[%s556 + $0x4] sm:$0xf]
      %v666 = vld [vmem:[%s556 + $0x8] sm:$0x1]
      %v667 = vld [vmem:[%s556 + $0xc] sm:$0xf]
      %v668 = vld [vmem:[%s556 + $0x10] sm:$0xf]
      %v669 = vld [vmem:[%s556 + $0x14] sm:$0x1]
      %v670 = vld [vmem:[%s556 + $0x18] sm:$0xf]
      %v671 = vld [vmem:[%s556 + $0x1c] sm:$0xf]
      %v672 = vld [vmem:[%s556 + $0x20] sm:$0x1]
      %v673 = vld [vmem:[%s556 + $0x24] sm:$0xf]
      %v674 = vld [vmem:[%s556 + $0x28] sm:$0xf]
      %v675 = vld [vmem:[%s556 + $0x2c] sm:$0x1]
      %v676 = vld [vmem:[%s556 + $0x30] sm:$0xf]
      %v677 = vld [vmem:[%s556 + $0x34] sm:$0xf]
      %v678 = vld [vmem:[%s556 + $0x38] sm:$0x1]
      %v679 = vld [vmem:[%s556 + $0x3c] sm:$0xf]
      %v680 = vld [vmem:[%s556 + $0x40] sm:$0xf]
      %v681 = vld [vmem:[%s556 + $0x44] sm:$0x1]
      %v682 = vld [vmem:[%s556 + $0x48] sm:$0xf]
      %v683 = vld [vmem:[%s556 + $0x4c] sm:$0xf]
      %v684 = vld [vmem:[%s556 + $0x50] sm:$0x1]
      %v685 = vld [vmem:[%s556 + $0x54] sm:$0xf]
      %v686 = vld [vmem:[%s556 + $0x58] sm:$0xf]
      %v687 = vld [vmem:[%s556 + $0x5c] sm:$0x1]
      %v688 = vld [vmem:[%s556 + $0x60] sm:$0xf]
      %v689 = vld [vmem:[%s556 + $0x64] sm:$0xf]
      %v690 = vld [vmem:[%s556 + $0x68] sm:$0x1]
      %v691 = vld [vmem:[%s556 + $0x6c] sm:$0xf]
      %v692 = vld [vmem:[%s556 + $0x70] sm:$0xf]
      %v693 = vld [vmem:[%s556 + $0x74] sm:$0x1]
      %v694 = vld [vmem:[%s556 + $0x78] sm:$0xf]
      %v695 = vld [vmem:[%s556 + $0x7c] sm:$0xf]
      %v696 = vld [vmem:[%s556 + $0x80] sm:$0x1]
      %v697 = vld [vmem:[%s556 + $0x84] sm:$0xf]
      %v698 = vld [vmem:[%s556 + $0x88] sm:$0xf]
      %v699 = vld [vmem:[%s556 + $0x8c] sm:$0x1]
      %v700 = vld [vmem:[%s556 + $0x90] sm:$0xf]
      %v701 = vld [vmem:[%s556 + $0x94] sm:$0xf]
      %v702 = vld [vmem:[%s556 + $0x98] sm:$0x1]
      %v703 = vld [vmem:[%s556 + $0x9c] sm:$0xf]
      %v704 = vld [vmem:[%s556 + $0xa0] sm:$0xf]
      %v705 = vld [vmem:[%s556 + $0xa4] sm:$0x1]
      %v706 = vld [vmem:[%s556 + $0xa8] sm:$0xf]
      %v707 = vld [vmem:[%s556 + $0xac] sm:$0xf]
      %v708 = vld [vmem:[%s556 + $0xb0] sm:$0x1]
      %v709 = vld [vmem:[%s556 + $0xb4] sm:$0xf]
      %v710 = vld [vmem:[%s556 + $0xb8] sm:$0xf]
      %v711 = vld [vmem:[%s556 + $0xbc] sm:$0x1]
      %v712 = vld [vmem:[%s556 + $0xc0] sm:$0xf]
      %v713 = vld [vmem:[%s556 + $0xc4] sm:$0xf]
      %v714 = vld [vmem:[%s556 + $0xc8] sm:$0x1]
      %v715 = vld [vmem:[%s556 + $0xcc] sm:$0xf]
      %v716 = vld [vmem:[%s556 + $0xd0] sm:$0xf]
      %v717 = vld [vmem:[%s556 + $0xd4] sm:$0x1]
      %v718 = vld [vmem:[%s556 + $0xd8] sm:$0xf]
      %v719 = vld [vmem:[%s556 + $0xdc] sm:$0xf]
      %v720 = vld [vmem:[%s556 + $0xe0] sm:$0x1]
      %v721 = vld [vmem:[%s556 + $0xe4] sm:$0xf]
      %v722 = vld [vmem:[%s556 + $0xe8] sm:$0xf]
      %v723 = vld [vmem:[%s556 + $0xec] sm:$0x1]
      %v724 = vld [vmem:[%s556 + $0xf0] sm:$0xf]
      %v725 = vld [vmem:[%s556 + $0xf4] sm:$0xf]
      %v726 = vld [vmem:[%s556 + $0xf8] sm:$0x1]
      %v727 = vld [vmem:[%s556 + $0xfc] sm:$0xf]
      %v728 = vld [vmem:[%s556 + $0x100] sm:$0xf]
      %v729 = vld [vmem:[%s556 + $0x104] sm:$0x1]
      %v730 = vld [vmem:[%s556 + $0x108] sm:$0xf]
      %v731 = vld [vmem:[%s556 + $0x10c] sm:$0xf]
      %v732 = vld [vmem:[%s556 + $0x110] sm:$0x1]
      %v733 = vld [vmem:[%s556 + $0x114] sm:$0xf]
      %v734 = vld [vmem:[%s556 + $0x118] sm:$0xf]
      %v735 = vld [vmem:[%s556 + $0x11c] sm:$0x1]
      %v736 = vld [vmem:[%s556 + $0x120] sm:$0xf]
      %v737 = vld [vmem:[%s556 + $0x124] sm:$0xf]
      %v738 = vld [vmem:[%s556 + $0x128] sm:$0x1]
      %v739 = vld [vmem:[%s556 + $0x12c] sm:$0xf]
      %v740 = vld [vmem:[%s556 + $0x130] sm:$0xf]
      %v741 = vld [vmem:[%s556 + $0x134] sm:$0x1]
      %v742 = vld [vmem:[%s556 + $0x138] sm:$0xf]
      %v743 = vld [vmem:[%s556 + $0x13c] sm:$0xf]
      %v744 = vld [vmem:[%s556 + $0x140] sm:$0x1]
      %v745 = vld [vmem:[%s556 + $0x144] sm:$0xf]
      %v746 = vld [vmem:[%s556 + $0x148] sm:$0xf]
      %v747 = vld [vmem:[%s556 + $0x14c] sm:$0x1]
      %v748 = vld [vmem:[%s556 + $0x150] sm:$0xf]
      %v749 = vld [vmem:[%s556 + $0x154] sm:$0xf]
      %v750 = vld [vmem:[%s556 + $0x158] sm:$0x1]
      %v751 = vld [vmem:[%s556 + $0x15c] sm:$0xf]
      %v752 = vld [vmem:[%s556 + $0x160] sm:$0xf]
      %v753 = vld [vmem:[%s556 + $0x164] sm:$0x1]
      %v754 = vld [vmem:[%s556 + $0x168] sm:$0xf]
      %v755 = vld [vmem:[%s556 + $0x16c] sm:$0xf]
      %v756 = vld [vmem:[%s556 + $0x170] sm:$0x1]
      %v757 = vld [vmem:[%s556 + $0x174] sm:$0xf]
      %v758 = vld [vmem:[%s556 + $0x178] sm:$0xf]
      %v759 = vld [vmem:[%s556 + $0x17c] sm:$0x1]
      %v760 = vld [vmem:[%s636] sm:$0xf]
      %v761 = vld [vmem:[%s636 + $0x4] sm:$0xf]
      %v762 = vld [vmem:[%s636 + $0x8] sm:$0x1]
      %v763 = vld [vmem:[%s577] sm:$0xf]
      %v764 = vld [vmem:[%s577 + $0x4] sm:$0xf]
      %v765 = vld [vmem:[%s577 + $0xc] sm:$0xf]
      %v766 = vld [vmem:[%s577 + $0x10] sm:$0xf]
      %v767 = vld [vmem:[%s577 + $0x18] sm:$0xf]
      %v768 = vld [vmem:[%s577 + $0x1c] sm:$0xf]
      %v769 = vld [vmem:[%s577 + $0x24] sm:$0xf]
      %v770 = vld [vmem:[%s577 + $0x28] sm:$0xf]
      %v771 = vld [vmem:[%s577 + $0x30] sm:$0xf]
      %v772 = vld [vmem:[%s577 + $0x34] sm:$0xf]
      %v773 = vld [vmem:[%s577 + $0x3c] sm:$0xf]
      %v774 = vld [vmem:[%s577 + $0x40] sm:$0xf]
      %v775 = vld [vmem:[%s577 + $0x48] sm:$0xf]
      %v776 = vld [vmem:[%s577 + $0x4c] sm:$0xf]
      %v777 = vld [vmem:[%s577 + $0x54] sm:$0xf]
      %v778 = vld [vmem:[%s577 + $0x58] sm:$0xf]
      %v779 = vld [vmem:[%s577 + $0x60] sm:$0xf]
      %v780 = vld [vmem:[%s577 + $0x64] sm:$0xf]
      %v781 = vld [vmem:[%s577 + $0x6c] sm:$0xf]
      %v782 = vld [vmem:[%s577 + $0x70] sm:$0xf]
      %v783 = vld [vmem:[%s577 + $0x78] sm:$0xf]
      %v784 = vld [vmem:[%s577 + $0x7c] sm:$0xf]
      %v785 = vld [vmem:[%s577 + $0x84] sm:$0xf]
      %v786 = vld [vmem:[%s577 + $0x88] sm:$0xf]
      %v787 = vld [vmem:[%s577 + $0x90] sm:$0xf]
      %v788 = vld [vmem:[%s577 + $0x94] sm:$0xf]
      %v789 = vld [vmem:[%s577 + $0x9c] sm:$0xf]
      %v790 = vld [vmem:[%s577 + $0xa0] sm:$0xf]
      %v791 = vld [vmem:[%s577 + $0xa8] sm:$0xf]
      %v792 = vld [vmem:[%s577 + $0xac] sm:$0xf]
      %v793 = vld [vmem:[%s577 + $0xb4] sm:$0xf]
      %v794 = vld [vmem:[%s577 + $0xb8] sm:$0xf]
      %v795 = vld [vmem:[%s577 + $0xc0] sm:$0xf]
      %v796 = vld [vmem:[%s577 + $0xc4] sm:$0xf]
      %v797 = vld [vmem:[%s577 + $0xcc] sm:$0xf]
      %v798 = vld [vmem:[%s577 + $0xd0] sm:$0xf]
      %v799 = vld [vmem:[%s577 + $0xd8] sm:$0xf]
      %v800 = vld [vmem:[%s577 + $0xdc] sm:$0xf]
      %v801 = vld [vmem:[%s577 + $0xe4] sm:$0xf]
      %v802 = vld [vmem:[%s577 + $0xe8] sm:$0xf]
      %v803 = vld [vmem:[%s577 + $0xf0] sm:$0xf]
      %v804 = vld [vmem:[%s577 + $0xf4] sm:$0xf]
      %v805 = vld [vmem:[%s577 + $0xfc] sm:$0xf]
      %v806 = vld [vmem:[%s577 + $0x100] sm:$0xf]
      %v807 = vld [vmem:[%s577 + $0x108] sm:$0xf]
      %v808 = vld [vmem:[%s577 + $0x10c] sm:$0xf]
      %v809 = vld [vmem:[%s577 + $0x114] sm:$0xf]
      %v810 = vld [vmem:[%s577 + $0x118] sm:$0xf]
      %v811 = vld [vmem:[%s577 + $0x120] sm:$0xf]
      %v812 = vld [vmem:[%s577 + $0x124] sm:$0xf]
      %v813 = vld [vmem:[%s577 + $0x12c] sm:$0xf]
      %v814 = vld [vmem:[%s577 + $0x130] sm:$0xf]
      %v815 = vld [vmem:[%s577 + $0x138] sm:$0xf]
      %v816 = vld [vmem:[%s577 + $0x13c] sm:$0xf]
      %v817 = vld [vmem:[%s577 + $0x144] sm:$0xf]
      %v818 = vld [vmem:[%s577 + $0x148] sm:$0xf]
      %v819 = vld [vmem:[%s577 + $0x150] sm:$0xf]
      %v820 = vld [vmem:[%s577 + $0x154] sm:$0xf]
      %v821 = vld [vmem:[%s577 + $0x15c] sm:$0xf]
      %v822 = vld [vmem:[%s577 + $0x160] sm:$0xf]
      %v823 = vld [vmem:[%s577 + $0x168] sm:$0xf]
      %v824 = vld [vmem:[%s577 + $0x16c] sm:$0xf]
      %v825 = vld [vmem:[%s577 + $0x174] sm:$0xf]
      %v826 = vld [vmem:[%s577 + $0x178] sm:$0xf]
      %v827 = vld [vmem:[%s649] sm:$0xf]
      %v828 = vld [vmem:[%s649 + $0x4] sm:$0xf]
      %v829 = vld [vmem:[%s598] sm:$0xf]
      %v830 = vld [vmem:[%s598 + $0x4] sm:$0xf]
      %v831 = vld [vmem:[%s598 + $0x8] sm:$0x1]
      %v832 = vld [vmem:[%s598 + $0xc] sm:$0xf]
      %v833 = vld [vmem:[%s598 + $0x10] sm:$0xf]
      %v834 = vld [vmem:[%s598 + $0x14] sm:$0x1]
      %v835 = vld [vmem:[%s598 + $0x18] sm:$0xf]
      %v836 = vld [vmem:[%s598 + $0x1c] sm:$0xf]
      %v837 = vld [vmem:[%s598 + $0x20] sm:$0x1]
      %v838 = vld [vmem:[%s598 + $0x24] sm:$0xf]
      %v839 = vld [vmem:[%s598 + $0x28] sm:$0xf]
      %v840 = vld [vmem:[%s598 + $0x2c] sm:$0x1]
      %v841 = vld [vmem:[%s598 + $0x30] sm:$0xf]
      %v842 = vld [vmem:[%s598 + $0x34] sm:$0xf]
      %v843 = vld [vmem:[%s598 + $0x38] sm:$0x1]
      %v844 = vld [vmem:[%s598 + $0x3c] sm:$0xf]
      %v845 = vld [vmem:[%s598 + $0x40] sm:$0xf]
      %v846 = vld [vmem:[%s598 + $0x44] sm:$0x1]
      %v847 = vld [vmem:[%s598 + $0x48] sm:$0xf]
      %v848 = vld [vmem:[%s598 + $0x4c] sm:$0xf]
      %v849 = vld [vmem:[%s598 + $0x50] sm:$0x1]
      %v850 = vld [vmem:[%s598 + $0x54] sm:$0xf]
      %v851 = vld [vmem:[%s598 + $0x58] sm:$0xf]
      %v852 = vld [vmem:[%s598 + $0x5c] sm:$0x1]
      %v853 = vld [vmem:[%s598 + $0x60] sm:$0xf]
      %v854 = vld [vmem:[%s598 + $0x64] sm:$0xf]
      %v855 = vld [vmem:[%s598 + $0x68] sm:$0x1]
      %v856 = vld [vmem:[%s598 + $0x6c] sm:$0xf]
      %v857 = vld [vmem:[%s598 + $0x70] sm:$0xf]
      %v858 = vld [vmem:[%s598 + $0x74] sm:$0x1]
      %v859 = vld [vmem:[%s598 + $0x78] sm:$0xf]
      %v860 = vld [vmem:[%s598 + $0x7c] sm:$0xf]
      %v861 = vld [vmem:[%s598 + $0x80] sm:$0x1]
      %v862 = vld [vmem:[%s598 + $0x84] sm:$0xf]
      %v863 = vld [vmem:[%s598 + $0x88] sm:$0xf]
      %v864 = vld [vmem:[%s598 + $0x8c] sm:$0x1]
      %v865 = vld [vmem:[%s598 + $0x90] sm:$0xf]
      %v866 = vld [vmem:[%s598 + $0x94] sm:$0xf]
      %v867 = vld [vmem:[%s598 + $0x98] sm:$0x1]
      %v868 = vld [vmem:[%s598 + $0x9c] sm:$0xf]
      %v869 = vld [vmem:[%s598 + $0xa0] sm:$0xf]
      %v870 = vld [vmem:[%s598 + $0xa4] sm:$0x1]
      %v871 = vld [vmem:[%s598 + $0xa8] sm:$0xf]
      %v872 = vld [vmem:[%s598 + $0xac] sm:$0xf]
      %v873 = vld [vmem:[%s598 + $0xb0] sm:$0x1]
      %v874 = vld [vmem:[%s598 + $0xb4] sm:$0xf]
      %v875 = vld [vmem:[%s598 + $0xb8] sm:$0xf]
      %v876 = vld [vmem:[%s598 + $0xbc] sm:$0x1]
      %v877 = vld [vmem:[%s598 + $0xc0] sm:$0xf]
      %v878 = vld [vmem:[%s598 + $0xc4] sm:$0xf]
      %v879 = vld [vmem:[%s598 + $0xc8] sm:$0x1]
      %v880 = vld [vmem:[%s598 + $0xcc] sm:$0xf]
      %v881 = vld [vmem:[%s598 + $0xd0] sm:$0xf]
      %v882 = vld [vmem:[%s598 + $0xd4] sm:$0x1]
      %v883 = vld [vmem:[%s598 + $0xd8] sm:$0xf]
      %v884 = vld [vmem:[%s598 + $0xdc] sm:$0xf]
      %v885 = vld [vmem:[%s598 + $0xe0] sm:$0x1]
      %v886 = vld [vmem:[%s598 + $0xe4] sm:$0xf]
      %v887 = vld [vmem:[%s598 + $0xe8] sm:$0xf]
      %v888 = vld [vmem:[%s598 + $0xec] sm:$0x1]
      %v889 = vld [vmem:[%s598 + $0xf0] sm:$0xf]
      %v890 = vld [vmem:[%s598 + $0xf4] sm:$0xf]
      %v891 = vld [vmem:[%s598 + $0xf8] sm:$0x1]
      %v892 = vld [vmem:[%s598 + $0xfc] sm:$0xf]
      %v893 = vld [vmem:[%s598 + $0x100] sm:$0xf]
      %v894 = vld [vmem:[%s598 + $0x104] sm:$0x1]
      %v895 = vld [vmem:[%s598 + $0x108] sm:$0xf]
      %v896 = vld [vmem:[%s598 + $0x10c] sm:$0xf]
      %v897 = vld [vmem:[%s598 + $0x110] sm:$0x1]
      %v898 = vld [vmem:[%s598 + $0x114] sm:$0xf]
      %v899 = vld [vmem:[%s598 + $0x118] sm:$0xf]
      %v900 = vld [vmem:[%s598 + $0x11c] sm:$0x1]
      %v901 = vld [vmem:[%s598 + $0x120] sm:$0xf]
      %v902 = vld [vmem:[%s598 + $0x124] sm:$0xf]
      %v903 = vld [vmem:[%s598 + $0x128] sm:$0x1]
      %v904 = vld [vmem:[%s598 + $0x12c] sm:$0xf]
      %v905 = vld [vmem:[%s598 + $0x130] sm:$0xf]
      %v906 = vld [vmem:[%s598 + $0x134] sm:$0x1]
      %v907 = vld [vmem:[%s598 + $0x138] sm:$0xf]
      %v908 = vld [vmem:[%s598 + $0x13c] sm:$0xf]
      %v909 = vld [vmem:[%s598 + $0x140] sm:$0x1]
      %v910 = vld [vmem:[%s598 + $0x144] sm:$0xf]
      %v911 = vld [vmem:[%s598 + $0x148] sm:$0xf]
      %v912 = vld [vmem:[%s598 + $0x14c] sm:$0x1]
      %v913 = vld [vmem:[%s598 + $0x150] sm:$0xf]
      %v914 = vld [vmem:[%s598 + $0x154] sm:$0xf]
      %v915 = vld [vmem:[%s598 + $0x158] sm:$0x1]
      %v916 = vld [vmem:[%s598 + $0x15c] sm:$0xf]
      %v917 = vld [vmem:[%s598 + $0x160] sm:$0xf]
      %v918 = vld [vmem:[%s598 + $0x164] sm:$0x1]
      %v919 = vld [vmem:[%s598 + $0x168] sm:$0xf]
      %v920 = vld [vmem:[%s598 + $0x16c] sm:$0xf]
      %v921 = vld [vmem:[%s598 + $0x170] sm:$0x1]
      %v922 = vld [vmem:[%s598 + $0x174] sm:$0xf]
      %v923 = vld [vmem:[%s598 + $0x178] sm:$0xf]
      %v924 = vld [vmem:[%s598 + $0x17c] sm:$0x1]
      %v925 = vld [vmem:[%s619] sm:$0xf]
      %v926 = vld [vmem:[%s619 + $0x4] sm:$0xf]
      %v927 = vld [vmem:[%s619 + $0xc] sm:$0xf]
      %v928 = vld [vmem:[%s619 + $0x10] sm:$0xf]
      %v929 = vld [vmem:[%s619 + $0x18] sm:$0xf]
      %v930 = vld [vmem:[%s619 + $0x1c] sm:$0xf]
      %v931 = vld [vmem:[%s619 + $0x24] sm:$0xf]
      %v932 = vld [vmem:[%s619 + $0x28] sm:$0xf]
      %v933 = vld [vmem:[%s619 + $0x30] sm:$0xf]
      %v934 = vld [vmem:[%s619 + $0x34] sm:$0xf]
      %v935 = vld [vmem:[%s619 + $0x3c] sm:$0xf]
      %v936 = vld [vmem:[%s619 + $0x40] sm:$0xf]
      %v937 = vld [vmem:[%s619 + $0x48] sm:$0xf]
      %v938 = vld [vmem:[%s619 + $0x4c] sm:$0xf]
      %v939 = vld [vmem:[%s619 + $0x54] sm:$0xf]
      %v940 = vld [vmem:[%s619 + $0x58] sm:$0xf]
      %v941 = vld [vmem:[%s619 + $0x60] sm:$0xf]
      %v942 = vld [vmem:[%s619 + $0x64] sm:$0xf]
      %v943 = vld [vmem:[%s619 + $0x6c] sm:$0xf]
      %v944 = vld [vmem:[%s619 + $0x70] sm:$0xf]
      %v945 = vld [vmem:[%s619 + $0x78] sm:$0xf]
      %v946 = vld [vmem:[%s619 + $0x7c] sm:$0xf]
      %v947 = vld [vmem:[%s619 + $0x84] sm:$0xf]
      %v948 = vld [vmem:[%s619 + $0x88] sm:$0xf]
      %v949 = vld [vmem:[%s619 + $0x90] sm:$0xf]
      %v950 = vld [vmem:[%s619 + $0x94] sm:$0xf]
      %v951 = vld [vmem:[%s619 + $0x9c] sm:$0xf]
      %v952 = vld [vmem:[%s619 + $0xa0] sm:$0xf]
      %v953 = vld [vmem:[%s619 + $0xa8] sm:$0xf]
      %v954 = vld [vmem:[%s619 + $0xac] sm:$0xf]
      %v955 = vld [vmem:[%s619 + $0xb4] sm:$0xf]
      %v956 = vld [vmem:[%s619 + $0xb8] sm:$0xf]
      %v957 = vld [vmem:[%s619 + $0xc0] sm:$0xf]
      %v958 = vld [vmem:[%s619 + $0xc4] sm:$0xf]
      %v959 = vld [vmem:[%s619 + $0xcc] sm:$0xf]
      %v960 = vld [vmem:[%s619 + $0xd0] sm:$0xf]
      %v961 = vld [vmem:[%s619 + $0xd8] sm:$0xf]
      %v962 = vld [vmem:[%s619 + $0xdc] sm:$0xf]
      %v963 = vld [vmem:[%s619 + $0xe4] sm:$0xf]
      %v964 = vld [vmem:[%s619 + $0xe8] sm:$0xf]
      %v965 = vld [vmem:[%s619 + $0xf0] sm:$0xf]
      %v966 = vld [vmem:[%s619 + $0xf4] sm:$0xf]
      %v967 = vld [vmem:[%s619 + $0xfc] sm:$0xf]
      %v968 = vld [vmem:[%s619 + $0x100] sm:$0xf]
      %v969 = vld [vmem:[%s619 + $0x108] sm:$0xf]
      %v970 = vld [vmem:[%s619 + $0x10c] sm:$0xf]
      %v971 = vld [vmem:[%s619 + $0x114] sm:$0xf]
      %v972 = vld [vmem:[%s619 + $0x118] sm:$0xf]
      %v973 = vld [vmem:[%s619 + $0x120] sm:$0xf]
      %v974 = vld [vmem:[%s619 + $0x124] sm:$0xf]
      %v975 = vld [vmem:[%s619 + $0x12c] sm:$0xf]
      %v976 = vld [vmem:[%s619 + $0x130] sm:$0xf]
      %v977 = vld [vmem:[%s619 + $0x138] sm:$0xf]
      %v978 = vld [vmem:[%s619 + $0x13c] sm:$0xf]
      %v979 = vld [vmem:[%s619 + $0x144] sm:$0xf]
      %v980 = vld [vmem:[%s619 + $0x148] sm:$0xf]
      %v981 = vld [vmem:[%s619 + $0x150] sm:$0xf]
      %v982 = vld [vmem:[%s619 + $0x154] sm:$0xf]
      %v983 = vld [vmem:[%s619 + $0x15c] sm:$0xf]
      %v984 = vld [vmem:[%s619 + $0x160] sm:$0xf]
      %v985 = vld [vmem:[%s619 + $0x168] sm:$0xf]
      %v986 = vld [vmem:[%s619 + $0x16c] sm:$0xf]
      %v987 = vld [vmem:[%s619 + $0x174] sm:$0xf]
      %v988 = vld [vmem:[%s619 + $0x178] sm:$0xf]
      %v1053 = vunpack.c.l.b16 %v664
      %v1054 = vunpack.c.l.b16 %v665
      %v1055 = vunpack.c.l.b16 %v667
      %v1056 = vunpack.c.l.b16 %v668
      %v1057 = vunpack.c.l.b16 %v670
      %v1058 = vunpack.c.l.b16 %v671
      %v1059 = vunpack.c.l.b16 %v673
      %v1060 = vunpack.c.l.b16 %v674
      %v1061 = vunpack.c.l.b16 %v676
      %v1062 = vunpack.c.l.b16 %v677
      %v1063 = vunpack.c.l.b16 %v679
      %v1064 = vunpack.c.l.b16 %v680
      %v1065 = vunpack.c.l.b16 %v682
      %v1066 = vunpack.c.l.b16 %v683
      %v1067 = vunpack.c.l.b16 %v685
      %v1068 = vunpack.c.l.b16 %v686
      %v1069 = vunpack.c.l.b16 %v688
      %v1070 = vunpack.c.l.b16 %v689
      %v1071 = vunpack.c.l.b16 %v691
      %v1072 = vunpack.c.l.b16 %v692
      %v1073 = vunpack.c.l.b16 %v694
      %v1074 = vunpack.c.l.b16 %v695
      %v1075 = vunpack.c.l.b16 %v697
      %v1076 = vunpack.c.l.b16 %v698
      %v1077 = vunpack.c.l.b16 %v700
      %v1078 = vunpack.c.l.b16 %v701
      %v1079 = vunpack.c.l.b16 %v703
      %v1080 = vunpack.c.l.b16 %v704
      %v1081 = vunpack.c.l.b16 %v706
      %v1082 = vunpack.c.l.b16 %v707
      %v1083 = vunpack.c.l.b16 %v709
      %v1084 = vunpack.c.l.b16 %v710
      %v1085 = vunpack.c.l.b16 %v712
      %v1086 = vunpack.c.l.b16 %v713
      %v1087 = vunpack.c.l.b16 %v715
      %v1088 = vunpack.c.l.b16 %v716
      %v1089 = vunpack.c.l.b16 %v718
      %v1090 = vunpack.c.l.b16 %v719
      %v1091 = vunpack.c.l.b16 %v721
      %v1092 = vunpack.c.l.b16 %v722
      %v1093 = vunpack.c.l.b16 %v724
      %v1094 = vunpack.c.l.b16 %v725
      %v1095 = vunpack.c.l.b16 %v727
      %v1096 = vunpack.c.l.b16 %v728
      %v1097 = vunpack.c.l.b16 %v730
      %v1098 = vunpack.c.l.b16 %v731
      %v1099 = vunpack.c.l.b16 %v733
      %v1100 = vunpack.c.l.b16 %v734
      %v1101 = vunpack.c.l.b16 %v736
      %v1102 = vunpack.c.l.b16 %v737
      %v1103 = vunpack.c.l.b16 %v739
      %v1104 = vunpack.c.l.b16 %v740
      %v1105 = vunpack.c.l.b16 %v742
      %v1106 = vunpack.c.l.b16 %v743
      %v1107 = vunpack.c.l.b16 %v745
      %v1108 = vunpack.c.l.b16 %v746
      %v1109 = vunpack.c.l.b16 %v748
      %v1110 = vunpack.c.l.b16 %v749
      %v1111 = vunpack.c.l.b16 %v751
      %v1112 = vunpack.c.l.b16 %v752
      %v1113 = vunpack.c.l.b16 %v754
      %v1114 = vunpack.c.l.b16 %v755
      %v1115 = vunpack.c.l.b16 %v757
      %v1116 = vunpack.c.l.b16 %v758
      %v1117 = vpack.c.b16 %v1054, %v1053
      %v1118 = vpack.c.b16 %v1056, %v1055
      %v1119 = vpack.c.b16 %v1058, %v1057
      %v1120 = vpack.c.b16 %v1060, %v1059
      %v1121 = vpack.c.b16 %v1062, %v1061
      %v1122 = vpack.c.b16 %v1064, %v1063
      %v1123 = vpack.c.b16 %v1066, %v1065
      %v1124 = vpack.c.b16 %v1068, %v1067
      %v1125 = vpack.c.b16 %v1070, %v1069
      %v1126 = vpack.c.b16 %v1072, %v1071
      %v1127 = vpack.c.b16 %v1074, %v1073
      %v1128 = vpack.c.b16 %v1076, %v1075
      %v1129 = vpack.c.b16 %v1078, %v1077
      %v1130 = vpack.c.b16 %v1080, %v1079
      %v1131 = vpack.c.b16 %v1082, %v1081
      %v1132 = vpack.c.b16 %v1084, %v1083
      %v1133 = vpack.c.b16 %v1086, %v1085
      %v1134 = vpack.c.b16 %v1088, %v1087
      %v1135 = vpack.c.b16 %v1090, %v1089
      %v1136 = vpack.c.b16 %v1092, %v1091
      %v1137 = vpack.c.b16 %v1094, %v1093
      %v1138 = vpack.c.b16 %v1096, %v1095
      %v1139 = vpack.c.b16 %v1098, %v1097
      %v1140 = vpack.c.b16 %v1100, %v1099
      %v1141 = vpack.c.b16 %v1102, %v1101
      %v1142 = vpack.c.b16 %v1104, %v1103
      %v1143 = vpack.c.b16 %v1106, %v1105
      %v1144 = vpack.c.b16 %v1108, %v1107
      %v1145 = vpack.c.b16 %v1110, %v1109
      %v1146 = vpack.c.b16 %v1112, %v1111
      %v1147 = vpack.c.b16 %v1114, %v1113
      %v1148 = vpack.c.b16 %v1116, %v1115
      %v1213 = vunpack.c.l.b16 %v763
      %v1214 = vunpack.c.l.b16 %v764
      %v1215 = vunpack.c.l.b16 %v765
      %v1216 = vunpack.c.l.b16 %v766
      %v1217 = vunpack.c.l.b16 %v767
      %v1218 = vunpack.c.l.b16 %v768
      %v1219 = vunpack.c.l.b16 %v769
      %v1220 = vunpack.c.l.b16 %v770
      %v1221 = vunpack.c.l.b16 %v771
      %v1222 = vunpack.c.l.b16 %v772
      %v1223 = vunpack.c.l.b16 %v773
      %v1224 = vunpack.c.l.b16 %v774
      %v1225 = vunpack.c.l.b16 %v775
      %v1226 = vunpack.c.l.b16 %v776
      %v1227 = vunpack.c.l.b16 %v777
      %v1228 = vunpack.c.l.b16 %v778
      %v1229 = vunpack.c.l.b16 %v779
      %v1230 = vunpack.c.l.b16 %v780
      %v1231 = vunpack.c.l.b16 %v781
      %v1232 = vunpack.c.l.b16 %v782
      %v1233 = vunpack.c.l.b16 %v783
      %v1234 = vunpack.c.l.b16 %v784
      %v1235 = vunpack.c.l.b16 %v785
      %v1236 = vunpack.c.l.b16 %v786
      %v1237 = vunpack.c.l.b16 %v787
      %v1238 = vunpack.c.l.b16 %v788
      %v1239 = vunpack.c.l.b16 %v789
      %v1240 = vunpack.c.l.b16 %v790
      %v1241 = vunpack.c.l.b16 %v791
      %v1242 = vunpack.c.l.b16 %v792
      %v1243 = vunpack.c.l.b16 %v793
      %v1244 = vunpack.c.l.b16 %v794
      %v1245 = vunpack.c.l.b16 %v795
      %v1246 = vunpack.c.l.b16 %v796
      %v1247 = vunpack.c.l.b16 %v797
      %v1248 = vunpack.c.l.b16 %v798
      %v1249 = vunpack.c.l.b16 %v799
      %v1250 = vunpack.c.l.b16 %v800
      %v1251 = vunpack.c.l.b16 %v801
      %v1252 = vunpack.c.l.b16 %v802
      %v1253 = vunpack.c.l.b16 %v803
      %v1254 = vunpack.c.l.b16 %v804
      %v1255 = vunpack.c.l.b16 %v805
      %v1256 = vunpack.c.l.b16 %v806
      %v1257 = vunpack.c.l.b16 %v807
      %v1258 = vunpack.c.l.b16 %v808
      %v1259 = vunpack.c.l.b16 %v809
      %v1260 = vunpack.c.l.b16 %v810
      %v1261 = vunpack.c.l.b16 %v811
      %v1262 = vunpack.c.l.b16 %v812
      %v1263 = vunpack.c.l.b16 %v813
      %v1264 = vunpack.c.l.b16 %v814
      %v1265 = vunpack.c.l.b16 %v815
      %v1266 = vunpack.c.l.b16 %v816
      %v1267 = vunpack.c.l.b16 %v817
      %v1268 = vunpack.c.l.b16 %v818
      %v1269 = vunpack.c.l.b16 %v819
      %v1270 = vunpack.c.l.b16 %v820
      %v1271 = vunpack.c.l.b16 %v821
      %v1272 = vunpack.c.l.b16 %v822
      %v1273 = vunpack.c.l.b16 %v823
      %v1274 = vunpack.c.l.b16 %v824
      %v1275 = vunpack.c.l.b16 %v825
      %v1276 = vunpack.c.l.b16 %v826
      %v1277 = vpack.c.b16 %v1214, %v1213
      %v1278 = vpack.c.b16 %v1216, %v1215
      %v1279 = vpack.c.b16 %v1218, %v1217
      %v1280 = vpack.c.b16 %v1220, %v1219
      %v1281 = vpack.c.b16 %v1222, %v1221
      %v1282 = vpack.c.b16 %v1224, %v1223
      %v1283 = vpack.c.b16 %v1226, %v1225
      %v1284 = vpack.c.b16 %v1228, %v1227
      %v1285 = vpack.c.b16 %v1230, %v1229
      %v1286 = vpack.c.b16 %v1232, %v1231
      %v1287 = vpack.c.b16 %v1234, %v1233
      %v1288 = vpack.c.b16 %v1236, %v1235
      %v1289 = vpack.c.b16 %v1238, %v1237
      %v1290 = vpack.c.b16 %v1240, %v1239
      %v1291 = vpack.c.b16 %v1242, %v1241
      %v1292 = vpack.c.b16 %v1244, %v1243
      %v1293 = vpack.c.b16 %v1246, %v1245
      %v1294 = vpack.c.b16 %v1248, %v1247
      %v1295 = vpack.c.b16 %v1250, %v1249
      %v1296 = vpack.c.b16 %v1252, %v1251
      %v1297 = vpack.c.b16 %v1254, %v1253
      %v1298 = vpack.c.b16 %v1256, %v1255
      %v1299 = vpack.c.b16 %v1258, %v1257
      %v1300 = vpack.c.b16 %v1260, %v1259
      %v1301 = vpack.c.b16 %v1262, %v1261
      %v1302 = vpack.c.b16 %v1264, %v1263
      %v1303 = vpack.c.b16 %v1266, %v1265
      %v1304 = vpack.c.b16 %v1268, %v1267
      %v1305 = vpack.c.b16 %v1270, %v1269
      %v1306 = vpack.c.b16 %v1272, %v1271
      %v1307 = vpack.c.b16 %v1274, %v1273
      %v1308 = vpack.c.b16 %v1276, %v1275
      %1309 = vrot.lane.b32.xlu0 %v1277, 8
      %v1310 = vpop.permute.xlu0 %1309
      %1311 = vrot.lane.b32.xlu0 %v1278, 8
      %v1312 = vpop.permute.xlu0 %1311
      %1313 = vrot.lane.b32.xlu0 %v1279, 8
      %v1314 = vpop.permute.xlu0 %1313
      %1315 = vrot.lane.b32.xlu0 %v1280, 8
      %v1316 = vpop.permute.xlu0 %1315
      %1317 = vrot.lane.b32.xlu0 %v1281, 8
      %v1318 = vpop.permute.xlu0 %1317
      %1319 = vrot.lane.b32.xlu0 %v1282, 8
      %v1320 = vpop.permute.xlu0 %1319
      %1321 = vrot.lane.b32.xlu0 %v1283, 8
      %v1322 = vpop.permute.xlu0 %1321
      %1323 = vrot.lane.b32.xlu0 %v1284, 8
      %v1324 = vpop.permute.xlu0 %1323
      %1325 = vrot.lane.b32.xlu0 %v1285, 8
      %v1326 = vpop.permute.xlu0 %1325
      %1327 = vrot.lane.b32.xlu0 %v1286, 8
      %v1328 = vpop.permute.xlu0 %1327
      %1329 = vrot.lane.b32.xlu0 %v1287, 8
      %v1330 = vpop.permute.xlu0 %1329
      %1331 = vrot.lane.b32.xlu0 %v1288, 8
      %v1332 = vpop.permute.xlu0 %1331
      %1333 = vrot.lane.b32.xlu0 %v1289, 8
      %v1334 = vpop.permute.xlu0 %1333
      %1335 = vrot.lane.b32.xlu0 %v1290, 8
      %v1336 = vpop.permute.xlu0 %1335
      %1337 = vrot.lane.b32.xlu0 %v1291, 8
      %v1338 = vpop.permute.xlu0 %1337
      %1339 = vrot.lane.b32.xlu0 %v1292, 8
      %v1340 = vpop.permute.xlu0 %1339
      %1341 = vrot.lane.b32.xlu0 %v1293, 8
      %v1342 = vpop.permute.xlu0 %1341
      %1343 = vrot.lane.b32.xlu0 %v1294, 8
      %v1344 = vpop.permute.xlu0 %1343
      %1345 = vrot.lane.b32.xlu0 %v1295, 8
      %v1346 = vpop.permute.xlu0 %1345
      %1347 = vrot.lane.b32.xlu0 %v1296, 8
      %v1348 = vpop.permute.xlu0 %1347
      %1349 = vrot.lane.b32.xlu0 %v1297, 8
      %v1350 = vpop.permute.xlu0 %1349
      %1351 = vrot.lane.b32.xlu0 %v1298, 8
      %v1352 = vpop.permute.xlu0 %1351
      %1353 = vrot.lane.b32.xlu0 %v1299, 8
      %v1354 = vpop.permute.xlu0 %1353
      %1355 = vrot.lane.b32.xlu0 %v1300, 8
      %v1356 = vpop.permute.xlu0 %1355
      %1357 = vrot.lane.b32.xlu0 %v1301, 8
      %v1358 = vpop.permute.xlu0 %1357
      %1359 = vrot.lane.b32.xlu0 %v1302, 8
      %v1360 = vpop.permute.xlu0 %1359
      %1361 = vrot.lane.b32.xlu0 %v1303, 8
      %v1362 = vpop.permute.xlu0 %1361
      %1363 = vrot.lane.b32.xlu0 %v1304, 8
      %v1364 = vpop.permute.xlu0 %1363
      %1365 = vrot.lane.b32.xlu0 %v1305, 8
      %v1366 = vpop.permute.xlu0 %1365
      %1367 = vrot.lane.b32.xlu0 %v1306, 8
      %v1368 = vpop.permute.xlu0 %1367
      %1369 = vrot.lane.b32.xlu0 %v1307, 8
      %v1370 = vpop.permute.xlu0 %1369
      %1371 = vrot.lane.b32.xlu0 %v1308, 8
      %v1372 = vpop.permute.xlu0 %1371
      %v1405 = vunpack.c.l.b16 %v666
      %v1406 = vunpack.c.l.b16 %v669
      %v1407 = vunpack.c.l.b16 %v672
      %v1408 = vunpack.c.l.b16 %v675
      %v1409 = vunpack.c.l.b16 %v678
      %v1410 = vunpack.c.l.b16 %v681
      %v1411 = vunpack.c.l.b16 %v684
      %v1412 = vunpack.c.l.b16 %v687
      %v1413 = vunpack.c.l.b16 %v690
      %v1414 = vunpack.c.l.b16 %v693
      %v1415 = vunpack.c.l.b16 %v696
      %v1416 = vunpack.c.l.b16 %v699
      %v1417 = vunpack.c.l.b16 %v702
      %v1418 = vunpack.c.l.b16 %v705
      %v1419 = vunpack.c.l.b16 %v708
      %v1420 = vunpack.c.l.b16 %v711
      %v1421 = vunpack.c.l.b16 %v714
      %v1422 = vunpack.c.l.b16 %v717
      %v1423 = vunpack.c.l.b16 %v720
      %v1424 = vunpack.c.l.b16 %v723
      %v1425 = vunpack.c.l.b16 %v726
      %v1426 = vunpack.c.l.b16 %v729
      %v1427 = vunpack.c.l.b16 %v732
      %v1428 = vunpack.c.l.b16 %v735
      %v1429 = vunpack.c.l.b16 %v738
      %v1430 = vunpack.c.l.b16 %v741
      %v1431 = vunpack.c.l.b16 %v744
      %v1432 = vunpack.c.l.b16 %v747
      %v1433 = vunpack.c.l.b16 %v750
      %v1434 = vunpack.c.l.b16 %v753
      %v1435 = vunpack.c.l.b16 %v756
      %v1436 = vunpack.c.l.b16 %v759
      %v1437 = vpack.c.b16 %v1405, %v1405
      %v1438 = vpack.c.b16 %v1406, %v1406
      %v1439 = vpack.c.b16 %v1407, %v1407
      %v1440 = vpack.c.b16 %v1408, %v1408
      %v1441 = vpack.c.b16 %v1409, %v1409
      %v1442 = vpack.c.b16 %v1410, %v1410
      %v1443 = vpack.c.b16 %v1411, %v1411
      %v1444 = vpack.c.b16 %v1412, %v1412
      %v1445 = vpack.c.b16 %v1413, %v1413
      %v1446 = vpack.c.b16 %v1414, %v1414
      %v1447 = vpack.c.b16 %v1415, %v1415
      %v1448 = vpack.c.b16 %v1416, %v1416
      %v1449 = vpack.c.b16 %v1417, %v1417
      %v1450 = vpack.c.b16 %v1418, %v1418
      %v1451 = vpack.c.b16 %v1419, %v1419
      %v1452 = vpack.c.b16 %v1420, %v1420
      %v1453 = vpack.c.b16 %v1421, %v1421
      %v1454 = vpack.c.b16 %v1422, %v1422
      %v1455 = vpack.c.b16 %v1423, %v1423
      %v1456 = vpack.c.b16 %v1424, %v1424
      %v1457 = vpack.c.b16 %v1425, %v1425
      %v1458 = vpack.c.b16 %v1426, %v1426
      %v1459 = vpack.c.b16 %v1427, %v1427
      %v1460 = vpack.c.b16 %v1428, %v1428
      %v1461 = vpack.c.b16 %v1429, %v1429
      %v1462 = vpack.c.b16 %v1430, %v1430
      %v1463 = vpack.c.b16 %v1431, %v1431
      %v1464 = vpack.c.b16 %v1432, %v1432
      %v1465 = vpack.c.b16 %v1433, %v1433
      %v1466 = vpack.c.b16 %v1434, %v1434
      %v1467 = vpack.c.b16 %v1435, %v1435
      %v1468 = vpack.c.b16 %v1436, %v1436
      %vm1469 = vsmask.f32 7424
      %v1471 = vshrl.u32 %v1117, 16
      %v1473 = vshll.u32 %v1117, 16
      %v1475 = vrot.slane %v1473, 1
      %v1476 = vor.u32 %v1471, %v1475
      %v1478 = vshll.u32 %v1437, 16
      %v1480 = vrot.slane %v1478, 1
      %v1481 = vsel %vm1469, %v1476, %v1480
      %v1483 = vshrl.u32 %v1118, 16
      %v1485 = vshll.u32 %v1118, 16
      %v1487 = vrot.slane %v1485, 1
      %v1488 = vor.u32 %v1483, %v1487
      %v1490 = vshll.u32 %v1438, 16
      %v1492 = vrot.slane %v1490, 1
      %v1493 = vsel %vm1469, %v1488, %v1492
      %v1495 = vshrl.u32 %v1119, 16
      %v1497 = vshll.u32 %v1119, 16
      %v1499 = vrot.slane %v1497, 1
      %v1500 = vor.u32 %v1495, %v1499
      %v1502 = vshll.u32 %v1439, 16
      %v1504 = vrot.slane %v1502, 1
      %v1505 = vsel %vm1469, %v1500, %v1504
      %v1507 = vshrl.u32 %v1120, 16
      %v1509 = vshll.u32 %v1120, 16
      %v1511 = vrot.slane %v1509, 1
      %v1512 = vor.u32 %v1507, %v1511
      %v1514 = vshll.u32 %v1440, 16
      %v1516 = vrot.slane %v1514, 1
      %v1517 = vsel %vm1469, %v1512, %v1516
      %v1519 = vshrl.u32 %v1121, 16
      %v1521 = vshll.u32 %v1121, 16
      %v1523 = vrot.slane %v1521, 1
      %v1524 = vor.u32 %v1519, %v1523
      %v1526 = vshll.u32 %v1441, 16
      %v1528 = vrot.slane %v1526, 1
      %v1529 = vsel %vm1469, %v1524, %v1528
      %v1531 = vshrl.u32 %v1122, 16
      %v1533 = vshll.u32 %v1122, 16
      %v1535 = vrot.slane %v1533, 1
      %v1536 = vor.u32 %v1531, %v1535
      %v1538 = vshll.u32 %v1442, 16
      %v1540 = vrot.slane %v1538, 1
      %v1541 = vsel %vm1469, %v1536, %v1540
      %v1543 = vshrl.u32 %v1123, 16
      %v1545 = vshll.u32 %v1123, 16
      %v1547 = vrot.slane %v1545, 1
      %v1548 = vor.u32 %v1543, %v1547
      %v1550 = vshll.u32 %v1443, 16
      %v1552 = vrot.slane %v1550, 1
      %v1553 = vsel %vm1469, %v1548, %v1552
      %v1555 = vshrl.u32 %v1124, 16
      %v1557 = vshll.u32 %v1124, 16
      %v1559 = vrot.slane %v1557, 1
      %v1560 = vor.u32 %v1555, %v1559
      %v1562 = vshll.u32 %v1444, 16
      %v1564 = vrot.slane %v1562, 1
      %v1565 = vsel %vm1469, %v1560, %v1564
      %v1567 = vshrl.u32 %v1125, 16
      %v1569 = vshll.u32 %v1125, 16
      %v1571 = vrot.slane %v1569, 1
      %v1572 = vor.u32 %v1567, %v1571
      %v1574 = vshll.u32 %v1445, 16
      %v1576 = vrot.slane %v1574, 1
      %v1577 = vsel %vm1469, %v1572, %v1576
      %v1579 = vshrl.u32 %v1126, 16
      %v1581 = vshll.u32 %v1126, 16
      %v1583 = vrot.slane %v1581, 1
      %v1584 = vor.u32 %v1579, %v1583
      %v1586 = vshll.u32 %v1446, 16
      %v1588 = vrot.slane %v1586, 1
      %v1589 = vsel %vm1469, %v1584, %v1588
      %v1591 = vshrl.u32 %v1127, 16
      %v1593 = vshll.u32 %v1127, 16
      %v1595 = vrot.slane %v1593, 1
      %v1596 = vor.u32 %v1591, %v1595
      %v1598 = vshll.u32 %v1447, 16
      %v1600 = vrot.slane %v1598, 1
      %v1601 = vsel %vm1469, %v1596, %v1600
      %v1603 = vshrl.u32 %v1128, 16
      %v1605 = vshll.u32 %v1128, 16
      %v1607 = vrot.slane %v1605, 1
      %v1608 = vor.u32 %v1603, %v1607
      %v1610 = vshll.u32 %v1448, 16
      %v1612 = vrot.slane %v1610, 1
      %v1613 = vsel %vm1469, %v1608, %v1612
      %v1615 = vshrl.u32 %v1129, 16
      %v1617 = vshll.u32 %v1129, 16
      %v1619 = vrot.slane %v1617, 1
      %v1620 = vor.u32 %v1615, %v1619
      %v1622 = vshll.u32 %v1449, 16
      %v1624 = vrot.slane %v1622, 1
      %v1625 = vsel %vm1469, %v1620, %v1624
      %v1627 = vshrl.u32 %v1130, 16
      %v1629 = vshll.u32 %v1130, 16
      %v1631 = vrot.slane %v1629, 1
      %v1632 = vor.u32 %v1627, %v1631
      %v1634 = vshll.u32 %v1450, 16
      %v1636 = vrot.slane %v1634, 1
      %v1637 = vsel %vm1469, %v1632, %v1636
      %v1639 = vshrl.u32 %v1131, 16
      %v1641 = vshll.u32 %v1131, 16
      %v1643 = vrot.slane %v1641, 1
      %v1644 = vor.u32 %v1639, %v1643
      %v1646 = vshll.u32 %v1451, 16
      %v1648 = vrot.slane %v1646, 1
      %v1649 = vsel %vm1469, %v1644, %v1648
      %v1651 = vshrl.u32 %v1132, 16
      %v1653 = vshll.u32 %v1132, 16
      %v1655 = vrot.slane %v1653, 1
      %v1656 = vor.u32 %v1651, %v1655
      %v1658 = vshll.u32 %v1452, 16
      %v1660 = vrot.slane %v1658, 1
      %v1661 = vsel %vm1469, %v1656, %v1660
      %v1663 = vshrl.u32 %v1133, 16
      %v1665 = vshll.u32 %v1133, 16
      %v1667 = vrot.slane %v1665, 1
      %v1668 = vor.u32 %v1663, %v1667
      %v1670 = vshll.u32 %v1453, 16
      %v1672 = vrot.slane %v1670, 1
      %v1673 = vsel %vm1469, %v1668, %v1672
      %v1675 = vshrl.u32 %v1134, 16
      %v1677 = vshll.u32 %v1134, 16
      %v1679 = vrot.slane %v1677, 1
      %v1680 = vor.u32 %v1675, %v1679
      %v1682 = vshll.u32 %v1454, 16
      %v1684 = vrot.slane %v1682, 1
      %v1685 = vsel %vm1469, %v1680, %v1684
      %v1687 = vshrl.u32 %v1135, 16
      %v1689 = vshll.u32 %v1135, 16
      %v1691 = vrot.slane %v1689, 1
      %v1692 = vor.u32 %v1687, %v1691
      %v1694 = vshll.u32 %v1455, 16
      %v1696 = vrot.slane %v1694, 1
      %v1697 = vsel %vm1469, %v1692, %v1696
      %v1699 = vshrl.u32 %v1136, 16
      %v1701 = vshll.u32 %v1136, 16
      %v1703 = vrot.slane %v1701, 1
      %v1704 = vor.u32 %v1699, %v1703
      %v1706 = vshll.u32 %v1456, 16
      %v1708 = vrot.slane %v1706, 1
      %v1709 = vsel %vm1469, %v1704, %v1708
      %v1711 = vshrl.u32 %v1137, 16
      %v1713 = vshll.u32 %v1137, 16
      %v1715 = vrot.slane %v1713, 1
      %v1716 = vor.u32 %v1711, %v1715
      %v1718 = vshll.u32 %v1457, 16
      %v1720 = vrot.slane %v1718, 1
      %v1721 = vsel %vm1469, %v1716, %v1720
      %v1723 = vshrl.u32 %v1138, 16
      %v1725 = vshll.u32 %v1138, 16
      %v1727 = vrot.slane %v1725, 1
      %v1728 = vor.u32 %v1723, %v1727
      %v1730 = vshll.u32 %v1458, 16
      %v1732 = vrot.slane %v1730, 1
      %v1733 = vsel %vm1469, %v1728, %v1732
      %v1735 = vshrl.u32 %v1139, 16
      %v1737 = vshll.u32 %v1139, 16
      %v1739 = vrot.slane %v1737, 1
      %v1740 = vor.u32 %v1735, %v1739
      %v1742 = vshll.u32 %v1459, 16
      %v1744 = vrot.slane %v1742, 1
      %v1745 = vsel %vm1469, %v1740, %v1744
      %v1747 = vshrl.u32 %v1140, 16
      %v1749 = vshll.u32 %v1140, 16
      %v1751 = vrot.slane %v1749, 1
      %v1752 = vor.u32 %v1747, %v1751
      %v1754 = vshll.u32 %v1460, 16
      %v1756 = vrot.slane %v1754, 1
      %v1757 = vsel %vm1469, %v1752, %v1756
      %v1759 = vshrl.u32 %v1141, 16
      %v1761 = vshll.u32 %v1141, 16
      %v1763 = vrot.slane %v1761, 1
      %v1764 = vor.u32 %v1759, %v1763
      %v1766 = vshll.u32 %v1461, 16
      %v1768 = vrot.slane %v1766, 1
      %v1769 = vsel %vm1469, %v1764, %v1768
      %v1771 = vshrl.u32 %v1142, 16
      %v1773 = vshll.u32 %v1142, 16
      %v1775 = vrot.slane %v1773, 1
      %v1776 = vor.u32 %v1771, %v1775
      %v1778 = vshll.u32 %v1462, 16
      %v1780 = vrot.slane %v1778, 1
      %v1781 = vsel %vm1469, %v1776, %v1780
      %v1783 = vshrl.u32 %v1143, 16
      %v1785 = vshll.u32 %v1143, 16
      %v1787 = vrot.slane %v1785, 1
      %v1788 = vor.u32 %v1783, %v1787
      %v1790 = vshll.u32 %v1463, 16
      %v1792 = vrot.slane %v1790, 1
      %v1793 = vsel %vm1469, %v1788, %v1792
      %v1795 = vshrl.u32 %v1144, 16
      %v1797 = vshll.u32 %v1144, 16
      %v1799 = vrot.slane %v1797, 1
      %v1800 = vor.u32 %v1795, %v1799
      %v1802 = vshll.u32 %v1464, 16
      %v1804 = vrot.slane %v1802, 1
      %v1805 = vsel %vm1469, %v1800, %v1804
      %v1807 = vshrl.u32 %v1145, 16
      %v1809 = vshll.u32 %v1145, 16
      %v1811 = vrot.slane %v1809, 1
      %v1812 = vor.u32 %v1807, %v1811
      %v1814 = vshll.u32 %v1465, 16
      %v1816 = vrot.slane %v1814, 1
      %v1817 = vsel %vm1469, %v1812, %v1816
      %v1819 = vshrl.u32 %v1146, 16
      %v1821 = vshll.u32 %v1146, 16
      %v1823 = vrot.slane %v1821, 1
      %v1824 = vor.u32 %v1819, %v1823
      %v1826 = vshll.u32 %v1466, 16
      %v1828 = vrot.slane %v1826, 1
      %v1829 = vsel %vm1469, %v1824, %v1828
      %v1831 = vshrl.u32 %v1147, 16
      %v1833 = vshll.u32 %v1147, 16
      %v1835 = vrot.slane %v1833, 1
      %v1836 = vor.u32 %v1831, %v1835
      %v1838 = vshll.u32 %v1467, 16
      %v1840 = vrot.slane %v1838, 1
      %v1841 = vsel %vm1469, %v1836, %v1840
      %v1843 = vshrl.u32 %v1148, 16
      %v1845 = vshll.u32 %v1148, 16
      %v1847 = vrot.slane %v1845, 1
      %v1848 = vor.u32 %v1843, %v1847
      %v1850 = vshll.u32 %v1468, 16
      %v1852 = vrot.slane %v1850, 1
      %v1853 = vsel %vm1469, %v1848, %v1852
      %1854 = vrot.lane.b32.xlu0 %v1481, 16
      %v1855 = vpop.permute.xlu0 %1854
      %1856 = vrot.lane.b32.xlu0 %v1493, 16
      %v1857 = vpop.permute.xlu0 %1856
      %1858 = vrot.lane.b32.xlu0 %v1505, 16
      %v1859 = vpop.permute.xlu0 %1858
      %1860 = vrot.lane.b32.xlu0 %v1517, 16
      %v1861 = vpop.permute.xlu0 %1860
      %1862 = vrot.lane.b32.xlu0 %v1529, 16
      %v1863 = vpop.permute.xlu0 %1862
      %1864 = vrot.lane.b32.xlu0 %v1541, 16
      %v1865 = vpop.permute.xlu0 %1864
      %1866 = vrot.lane.b32.xlu0 %v1553, 16
      %v1867 = vpop.permute.xlu0 %1866
      %1868 = vrot.lane.b32.xlu0 %v1565, 16
      %v1869 = vpop.permute.xlu0 %1868
      %1870 = vrot.lane.b32.xlu0 %v1577, 16
      %v1871 = vpop.permute.xlu0 %1870
      %1872 = vrot.lane.b32.xlu0 %v1589, 16
      %v1873 = vpop.permute.xlu0 %1872
      %1874 = vrot.lane.b32.xlu0 %v1601, 16
      %v1875 = vpop.permute.xlu0 %1874
      %1876 = vrot.lane.b32.xlu0 %v1613, 16
      %v1877 = vpop.permute.xlu0 %1876
      %1878 = vrot.lane.b32.xlu0 %v1625, 16
      %v1879 = vpop.permute.xlu0 %1878
      %1880 = vrot.lane.b32.xlu0 %v1637, 16
      %v1881 = vpop.permute.xlu0 %1880
      %1882 = vrot.lane.b32.xlu0 %v1649, 16
      %v1883 = vpop.permute.xlu0 %1882
      %1884 = vrot.lane.b32.xlu0 %v1661, 16
      %v1885 = vpop.permute.xlu0 %1884
      %1886 = vrot.lane.b32.xlu0 %v1673, 16
      %v1887 = vpop.permute.xlu0 %1886
      %1888 = vrot.lane.b32.xlu0 %v1685, 16
      %v1889 = vpop.permute.xlu0 %1888
      %1890 = vrot.lane.b32.xlu0 %v1697, 16
      %v1891 = vpop.permute.xlu0 %1890
      %1892 = vrot.lane.b32.xlu0 %v1709, 16
      %v1893 = vpop.permute.xlu0 %1892
      %1894 = vrot.lane.b32.xlu0 %v1721, 16
      %v1895 = vpop.permute.xlu0 %1894
      %1896 = vrot.lane.b32.xlu0 %v1733, 16
      %v1897 = vpop.permute.xlu0 %1896
      %1898 = vrot.lane.b32.xlu0 %v1745, 16
      %v1899 = vpop.permute.xlu0 %1898
      %1900 = vrot.lane.b32.xlu0 %v1757, 16
      %v1901 = vpop.permute.xlu0 %1900
      %1902 = vrot.lane.b32.xlu0 %v1769, 16
      %v1903 = vpop.permute.xlu0 %1902
      %1904 = vrot.lane.b32.xlu0 %v1781, 16
      %v1905 = vpop.permute.xlu0 %1904
      %1906 = vrot.lane.b32.xlu0 %v1793, 16
      %v1907 = vpop.permute.xlu0 %1906
      %1908 = vrot.lane.b32.xlu0 %v1805, 16
      %v1909 = vpop.permute.xlu0 %1908
      %1910 = vrot.lane.b32.xlu0 %v1817, 16
      %v1911 = vpop.permute.xlu0 %1910
      %1912 = vrot.lane.b32.xlu0 %v1829, 16
      %v1913 = vpop.permute.xlu0 %1912
      %1914 = vrot.lane.b32.xlu0 %v1841, 16
      %v1915 = vpop.permute.xlu0 %1914
      %1916 = vrot.lane.b32.xlu0 %v1853, 16
      %v1917 = vpop.permute.xlu0 %1916
      %v1982 = vunpack.c.l.b16 %v829
      %v1983 = vunpack.c.l.b16 %v830
      %v1984 = vunpack.c.l.b16 %v832
      %v1985 = vunpack.c.l.b16 %v833
      %v1986 = vunpack.c.l.b16 %v835
      %v1987 = vunpack.c.l.b16 %v836
      %v1988 = vunpack.c.l.b16 %v838
      %v1989 = vunpack.c.l.b16 %v839
      %v1990 = vunpack.c.l.b16 %v841
      %v1991 = vunpack.c.l.b16 %v842
      %v1992 = vunpack.c.l.b16 %v844
      %v1993 = vunpack.c.l.b16 %v845
      %v1994 = vunpack.c.l.b16 %v847
      %v1995 = vunpack.c.l.b16 %v848
      %v1996 = vunpack.c.l.b16 %v850
      %v1997 = vunpack.c.l.b16 %v851
      %v1998 = vunpack.c.l.b16 %v853
      %v1999 = vunpack.c.l.b16 %v854
      %v2000 = vunpack.c.l.b16 %v856
      %v2001 = vunpack.c.l.b16 %v857
      %v2002 = vunpack.c.l.b16 %v859
      %v2003 = vunpack.c.l.b16 %v860
      %v2004 = vunpack.c.l.b16 %v862
      %v2005 = vunpack.c.l.b16 %v863
      %v2006 = vunpack.c.l.b16 %v865
      %v2007 = vunpack.c.l.b16 %v866
      %v2008 = vunpack.c.l.b16 %v868
      %v2009 = vunpack.c.l.b16 %v869
      %v2010 = vunpack.c.l.b16 %v871
      %v2011 = vunpack.c.l.b16 %v872
      %v2012 = vunpack.c.l.b16 %v874
      %v2013 = vunpack.c.l.b16 %v875
      %v2014 = vunpack.c.l.b16 %v877
      %v2015 = vunpack.c.l.b16 %v878
      %v2016 = vunpack.c.l.b16 %v880
      %v2017 = vunpack.c.l.b16 %v881
      %v2018 = vunpack.c.l.b16 %v883
      %v2019 = vunpack.c.l.b16 %v884
      %v2020 = vunpack.c.l.b16 %v886
      %v2021 = vunpack.c.l.b16 %v887
      %v2022 = vunpack.c.l.b16 %v889
      %v2023 = vunpack.c.l.b16 %v890
      %v2024 = vunpack.c.l.b16 %v892
      %v2025 = vunpack.c.l.b16 %v893
      %v2026 = vunpack.c.l.b16 %v895
      %v2027 = vunpack.c.l.b16 %v896
      %v2028 = vunpack.c.l.b16 %v898
      %v2029 = vunpack.c.l.b16 %v899
      %v2030 = vunpack.c.l.b16 %v901
      %v2031 = vunpack.c.l.b16 %v902
      %v2032 = vunpack.c.l.b16 %v904
      %v2033 = vunpack.c.l.b16 %v905
      %v2034 = vunpack.c.l.b16 %v907
      %v2035 = vunpack.c.l.b16 %v908
      %v2036 = vunpack.c.l.b16 %v910
      %v2037 = vunpack.c.l.b16 %v911
      %v2038 = vunpack.c.l.b16 %v913
      %v2039 = vunpack.c.l.b16 %v914
      %v2040 = vunpack.c.l.b16 %v916
      %v2041 = vunpack.c.l.b16 %v917
      %v2042 = vunpack.c.l.b16 %v919
      %v2043 = vunpack.c.l.b16 %v920
      %v2044 = vunpack.c.l.b16 %v922
      %v2045 = vunpack.c.l.b16 %v923
      %v2046 = vpack.c.b16 %v1983, %v1982
      %v2047 = vpack.c.b16 %v1985, %v1984
      %v2048 = vpack.c.b16 %v1987, %v1986
      %v2049 = vpack.c.b16 %v1989, %v1988
      %v2050 = vpack.c.b16 %v1991, %v1990
      %v2051 = vpack.c.b16 %v1993, %v1992
      %v2052 = vpack.c.b16 %v1995, %v1994
      %v2053 = vpack.c.b16 %v1997, %v1996
      %v2054 = vpack.c.b16 %v1999, %v1998
      %v2055 = vpack.c.b16 %v2001, %v2000
      %v2056 = vpack.c.b16 %v2003, %v2002
      %v2057 = vpack.c.b16 %v2005, %v2004
      %v2058 = vpack.c.b16 %v2007, %v2006
      %v2059 = vpack.c.b16 %v2009, %v2008
      %v2060 = vpack.c.b16 %v2011, %v2010
      %v2061 = vpack.c.b16 %v2013, %v2012
      %v2062 = vpack.c.b16 %v2015, %v2014
      %v2063 = vpack.c.b16 %v2017, %v2016
      %v2064 = vpack.c.b16 %v2019, %v2018
      %v2065 = vpack.c.b16 %v2021, %v2020
      %v2066 = vpack.c.b16 %v2023, %v2022
      %v2067 = vpack.c.b16 %v2025, %v2024
      %v2068 = vpack.c.b16 %v2027, %v2026
      %v2069 = vpack.c.b16 %v2029, %v2028
      %v2070 = vpack.c.b16 %v2031, %v2030
      %v2071 = vpack.c.b16 %v2033, %v2032
      %v2072 = vpack.c.b16 %v2035, %v2034
      %v2073 = vpack.c.b16 %v2037, %v2036
      %v2074 = vpack.c.b16 %v2039, %v2038
      %v2075 = vpack.c.b16 %v2041, %v2040
      %v2076 = vpack.c.b16 %v2043, %v2042
      %v2077 = vpack.c.b16 %v2045, %v2044
      %2078 = vrot.lane.b32.xlu0 %v2046, 24
      %v2079 = vpop.permute.xlu0 %2078
      %2080 = vrot.lane.b32.xlu0 %v2047, 24
      %v2081 = vpop.permute.xlu0 %2080
      %2082 = vrot.lane.b32.xlu0 %v2048, 24
      %v2083 = vpop.permute.xlu0 %2082
      %2084 = vrot.lane.b32.xlu0 %v2049, 24
      %v2085 = vpop.permute.xlu0 %2084
      %2086 = vrot.lane.b32.xlu0 %v2050, 24
      %v2087 = vpop.permute.xlu0 %2086
      %2088 = vrot.lane.b32.xlu0 %v2051, 24
      %v2089 = vpop.permute.xlu0 %2088
      %2090 = vrot.lane.b32.xlu0 %v2052, 24
      %v2091 = vpop.permute.xlu0 %2090
      %2092 = vrot.lane.b32.xlu0 %v2053, 24
      %v2093 = vpop.permute.xlu0 %2092
      %2094 = vrot.lane.b32.xlu0 %v2054, 24
      %v2095 = vpop.permute.xlu0 %2094
      %2096 = vrot.lane.b32.xlu0 %v2055, 24
      %v2097 = vpop.permute.xlu0 %2096
      %2098 = vrot.lane.b32.xlu0 %v2056, 24
      %v2099 = vpop.permute.xlu0 %2098
      %2100 = vrot.lane.b32.xlu0 %v2057, 24
      %v2101 = vpop.permute.xlu0 %2100
      %2102 = vrot.lane.b32.xlu0 %v2058, 24
      %v2103 = vpop.permute.xlu0 %2102
      %2104 = vrot.lane.b32.xlu0 %v2059, 24
      %v2105 = vpop.permute.xlu0 %2104
      %2106 = vrot.lane.b32.xlu0 %v2060, 24
      %v2107 = vpop.permute.xlu0 %2106
      %2108 = vrot.lane.b32.xlu0 %v2061, 24
      %v2109 = vpop.permute.xlu0 %2108
      %2110 = vrot.lane.b32.xlu0 %v2062, 24
      %v2111 = vpop.permute.xlu0 %2110
      %2112 = vrot.lane.b32.xlu0 %v2063, 24
      %v2113 = vpop.permute.xlu0 %2112
      %2114 = vrot.lane.b32.xlu0 %v2064, 24
      %v2115 = vpop.permute.xlu0 %2114
      %2116 = vrot.lane.b32.xlu0 %v2065, 24
      %v2117 = vpop.permute.xlu0 %2116
      %2118 = vrot.lane.b32.xlu0 %v2066, 24
      %v2119 = vpop.permute.xlu0 %2118
      %2120 = vrot.lane.b32.xlu0 %v2067, 24
      %v2121 = vpop.permute.xlu0 %2120
      %2122 = vrot.lane.b32.xlu0 %v2068, 24
      %v2123 = vpop.permute.xlu0 %2122
      %2124 = vrot.lane.b32.xlu0 %v2069, 24
      %v2125 = vpop.permute.xlu0 %2124
      %2126 = vrot.lane.b32.xlu0 %v2070, 24
      %v2127 = vpop.permute.xlu0 %2126
      %2128 = vrot.lane.b32.xlu0 %v2071, 24
      %v2129 = vpop.permute.xlu0 %2128
      %2130 = vrot.lane.b32.xlu0 %v2072, 24
      %v2131 = vpop.permute.xlu0 %2130
      %2132 = vrot.lane.b32.xlu0 %v2073, 24
      %v2133 = vpop.permute.xlu0 %2132
      %2134 = vrot.lane.b32.xlu0 %v2074, 24
      %v2135 = vpop.permute.xlu0 %2134
      %2136 = vrot.lane.b32.xlu0 %v2075, 24
      %v2137 = vpop.permute.xlu0 %2136
      %2138 = vrot.lane.b32.xlu0 %v2076, 24
      %v2139 = vpop.permute.xlu0 %2138
      %2140 = vrot.lane.b32.xlu0 %v2077, 24
      %v2141 = vpop.permute.xlu0 %2140
      %v2206 = vunpack.c.l.b16 %v925
      %v2207 = vunpack.c.l.b16 %v926
      %v2208 = vunpack.c.l.b16 %v927
      %v2209 = vunpack.c.l.b16 %v928
      %v2210 = vunpack.c.l.b16 %v929
      %v2211 = vunpack.c.l.b16 %v930
      %v2212 = vunpack.c.l.b16 %v931
      %v2213 = vunpack.c.l.b16 %v932
      %v2214 = vunpack.c.l.b16 %v933
      %v2215 = vunpack.c.l.b16 %v934
      %v2216 = vunpack.c.l.b16 %v935
      %v2217 = vunpack.c.l.b16 %v936
      %v2218 = vunpack.c.l.b16 %v937
      %v2219 = vunpack.c.l.b16 %v938
      %v2220 = vunpack.c.l.b16 %v939
      %v2221 = vunpack.c.l.b16 %v940
      %v2222 = vunpack.c.l.b16 %v941
      %v2223 = vunpack.c.l.b16 %v942
      %v2224 = vunpack.c.l.b16 %v943
      %v2225 = vunpack.c.l.b16 %v944
      %v2226 = vunpack.c.l.b16 %v945
      %v2227 = vunpack.c.l.b16 %v946
      %v2228 = vunpack.c.l.b16 %v947
      %v2229 = vunpack.c.l.b16 %v948
      %v2230 = vunpack.c.l.b16 %v949
      %v2231 = vunpack.c.l.b16 %v950
      %v2232 = vunpack.c.l.b16 %v951
      %v2233 = vunpack.c.l.b16 %v952
      %v2234 = vunpack.c.l.b16 %v953
      %v2235 = vunpack.c.l.b16 %v954
      %v2236 = vunpack.c.l.b16 %v955
      %v2237 = vunpack.c.l.b16 %v956
      %v2238 = vunpack.c.l.b16 %v957
      %v2239 = vunpack.c.l.b16 %v958
      %v2240 = vunpack.c.l.b16 %v959
      %v2241 = vunpack.c.l.b16 %v960
      %v2242 = vunpack.c.l.b16 %v961
      %v2243 = vunpack.c.l.b16 %v962
      %v2244 = vunpack.c.l.b16 %v963
      %v2245 = vunpack.c.l.b16 %v964
      %v2246 = vunpack.c.l.b16 %v965
      %v2247 = vunpack.c.l.b16 %v966
      %v2248 = vunpack.c.l.b16 %v967
      %v2249 = vunpack.c.l.b16 %v968
      %v2250 = vunpack.c.l.b16 %v969
      %v2251 = vunpack.c.l.b16 %v970
      %v2252 = vunpack.c.l.b16 %v971
      %v2253 = vunpack.c.l.b16 %v972
      %v2254 = vunpack.c.l.b16 %v973
      %v2255 = vunpack.c.l.b16 %v974
      %v2256 = vunpack.c.l.b16 %v975
      %v2257 = vunpack.c.l.b16 %v976
      %v2258 = vunpack.c.l.b16 %v977
      %v2259 = vunpack.c.l.b16 %v978
      %v2260 = vunpack.c.l.b16 %v979
      %v2261 = vunpack.c.l.b16 %v980
      %v2262 = vunpack.c.l.b16 %v981
      %v2263 = vunpack.c.l.b16 %v982
      %v2264 = vunpack.c.l.b16 %v983
      %v2265 = vunpack.c.l.b16 %v984
      %v2266 = vunpack.c.l.b16 %v985
      %v2267 = vunpack.c.l.b16 %v986
      %v2268 = vunpack.c.l.b16 %v987
      %v2269 = vunpack.c.l.b16 %v988
      %v2270 = vpack.c.b16 %v2207, %v2206
      %v2271 = vpack.c.b16 %v2209, %v2208
      %v2272 = vpack.c.b16 %v2211, %v2210
      %v2273 = vpack.c.b16 %v2213, %v2212
      %v2274 = vpack.c.b16 %v2215, %v2214
      %v2275 = vpack.c.b16 %v2217, %v2216
      %v2276 = vpack.c.b16 %v2219, %v2218
      %v2277 = vpack.c.b16 %v2221, %v2220
      %v2278 = vpack.c.b16 %v2223, %v2222
      %v2279 = vpack.c.b16 %v2225, %v2224
      %v2280 = vpack.c.b16 %v2227, %v2226
      %v2281 = vpack.c.b16 %v2229, %v2228
      %v2282 = vpack.c.b16 %v2231, %v2230
      %v2283 = vpack.c.b16 %v2233, %v2232
      %v2284 = vpack.c.b16 %v2235, %v2234
      %v2285 = vpack.c.b16 %v2237, %v2236
      %v2286 = vpack.c.b16 %v2239, %v2238
      %v2287 = vpack.c.b16 %v2241, %v2240
      %v2288 = vpack.c.b16 %v2243, %v2242
      %v2289 = vpack.c.b16 %v2245, %v2244
      %v2290 = vpack.c.b16 %v2247, %v2246
      %v2291 = vpack.c.b16 %v2249, %v2248
      %v2292 = vpack.c.b16 %v2251, %v2250
      %v2293 = vpack.c.b16 %v2253, %v2252
      %v2294 = vpack.c.b16 %v2255, %v2254
      %v2295 = vpack.c.b16 %v2257, %v2256
      %v2296 = vpack.c.b16 %v2259, %v2258
      %v2297 = vpack.c.b16 %v2261, %v2260
      %v2298 = vpack.c.b16 %v2263, %v2262
      %v2299 = vpack.c.b16 %v2265, %v2264
      %v2300 = vpack.c.b16 %v2267, %v2266
      %v2301 = vpack.c.b16 %v2269, %v2268
      %2302 = vrot.lane.b32.xlu0 %v2270, 32
      %v2303 = vpop.permute.xlu0 %2302
      %2304 = vrot.lane.b32.xlu0 %v2271, 32
      %v2305 = vpop.permute.xlu0 %2304
      %2306 = vrot.lane.b32.xlu0 %v2272, 32
      %v2307 = vpop.permute.xlu0 %2306
      %2308 = vrot.lane.b32.xlu0 %v2273, 32
      %v2309 = vpop.permute.xlu0 %2308
      %2310 = vrot.lane.b32.xlu0 %v2274, 32
      %v2311 = vpop.permute.xlu0 %2310
      %2312 = vrot.lane.b32.xlu0 %v2275, 32
      %v2313 = vpop.permute.xlu0 %2312
      %2314 = vrot.lane.b32.xlu0 %v2276, 32
      %v2315 = vpop.permute.xlu0 %2314
      %2316 = vrot.lane.b32.xlu0 %v2277, 32
      %v2317 = vpop.permute.xlu0 %2316
      %2318 = vrot.lane.b32.xlu0 %v2278, 32
      %v2319 = vpop.permute.xlu0 %2318
      %2320 = vrot.lane.b32.xlu0 %v2279, 32
      %v2321 = vpop.permute.xlu0 %2320
      %2322 = vrot.lane.b32.xlu0 %v2280, 32
      %v2323 = vpop.permute.xlu0 %2322
      %2324 = vrot.lane.b32.xlu0 %v2281, 32
      %v2325 = vpop.permute.xlu0 %2324
      %2326 = vrot.lane.b32.xlu0 %v2282, 32
      %v2327 = vpop.permute.xlu0 %2326
      %2328 = vrot.lane.b32.xlu0 %v2283, 32
      %v2329 = vpop.permute.xlu0 %2328
      %2330 = vrot.lane.b32.xlu0 %v2284, 32
      %v2331 = vpop.permute.xlu0 %2330
      %2332 = vrot.lane.b32.xlu0 %v2285, 32
      %v2333 = vpop.permute.xlu0 %2332
      %2334 = vrot.lane.b32.xlu0 %v2286, 32
      %v2335 = vpop.permute.xlu0 %2334
      %2336 = vrot.lane.b32.xlu0 %v2287, 32
      %v2337 = vpop.permute.xlu0 %2336
      %2338 = vrot.lane.b32.xlu0 %v2288, 32
      %v2339 = vpop.permute.xlu0 %2338
      %2340 = vrot.lane.b32.xlu0 %v2289, 32
      %v2341 = vpop.permute.xlu0 %2340
      %2342 = vrot.lane.b32.xlu0 %v2290, 32
      %v2343 = vpop.permute.xlu0 %2342
      %2344 = vrot.lane.b32.xlu0 %v2291, 32
      %v2345 = vpop.permute.xlu0 %2344
      %2346 = vrot.lane.b32.xlu0 %v2292, 32
      %v2347 = vpop.permute.xlu0 %2346
      %2348 = vrot.lane.b32.xlu0 %v2293, 32
      %v2349 = vpop.permute.xlu0 %2348
      %2350 = vrot.lane.b32.xlu0 %v2294, 32
      %v2351 = vpop.permute.xlu0 %2350
      %2352 = vrot.lane.b32.xlu0 %v2295, 32
      %v2353 = vpop.permute.xlu0 %2352
      %2354 = vrot.lane.b32.xlu0 %v2296, 32
      %v2355 = vpop.permute.xlu0 %2354
      %2356 = vrot.lane.b32.xlu0 %v2297, 32
      %v2357 = vpop.permute.xlu0 %2356
      %2358 = vrot.lane.b32.xlu0 %v2298, 32
      %v2359 = vpop.permute.xlu0 %2358
      %2360 = vrot.lane.b32.xlu0 %v2299, 32
      %v2361 = vpop.permute.xlu0 %2360
      %2362 = vrot.lane.b32.xlu0 %v2300, 32
      %v2363 = vpop.permute.xlu0 %2362
      %2364 = vrot.lane.b32.xlu0 %v2301, 32
      %v2365 = vpop.permute.xlu0 %2364
      %v2398 = vunpack.c.l.b16 %v831
      %v2399 = vunpack.c.l.b16 %v834
      %v2400 = vunpack.c.l.b16 %v837
      %v2401 = vunpack.c.l.b16 %v840
      %v2402 = vunpack.c.l.b16 %v843
      %v2403 = vunpack.c.l.b16 %v846
      %v2404 = vunpack.c.l.b16 %v849
      %v2405 = vunpack.c.l.b16 %v852
      %v2406 = vunpack.c.l.b16 %v855
      %v2407 = vunpack.c.l.b16 %v858
      %v2408 = vunpack.c.l.b16 %v861
      %v2409 = vunpack.c.l.b16 %v864
      %v2410 = vunpack.c.l.b16 %v867
      %v2411 = vunpack.c.l.b16 %v870
      %v2412 = vunpack.c.l.b16 %v873
      %v2413 = vunpack.c.l.b16 %v876
      %v2414 = vunpack.c.l.b16 %v879
      %v2415 = vunpack.c.l.b16 %v882
      %v2416 = vunpack.c.l.b16 %v885
      %v2417 = vunpack.c.l.b16 %v888
      %v2418 = vunpack.c.l.b16 %v891
      %v2419 = vunpack.c.l.b16 %v894
      %v2420 = vunpack.c.l.b16 %v897
      %v2421 = vunpack.c.l.b16 %v900
      %v2422 = vunpack.c.l.b16 %v903
      %v2423 = vunpack.c.l.b16 %v906
      %v2424 = vunpack.c.l.b16 %v909
      %v2425 = vunpack.c.l.b16 %v912
      %v2426 = vunpack.c.l.b16 %v915
      %v2427 = vunpack.c.l.b16 %v918
      %v2428 = vunpack.c.l.b16 %v921
      %v2429 = vunpack.c.l.b16 %v924
      %v2430 = vpack.c.b16 %v2398, %v2398
      %v2431 = vpack.c.b16 %v2399, %v2399
      %v2432 = vpack.c.b16 %v2400, %v2400
      %v2433 = vpack.c.b16 %v2401, %v2401
      %v2434 = vpack.c.b16 %v2402, %v2402
      %v2435 = vpack.c.b16 %v2403, %v2403
      %v2436 = vpack.c.b16 %v2404, %v2404
      %v2437 = vpack.c.b16 %v2405, %v2405
      %v2438 = vpack.c.b16 %v2406, %v2406
      %v2439 = vpack.c.b16 %v2407, %v2407
      %v2440 = vpack.c.b16 %v2408, %v2408
      %v2441 = vpack.c.b16 %v2409, %v2409
      %v2442 = vpack.c.b16 %v2410, %v2410
      %v2443 = vpack.c.b16 %v2411, %v2411
      %v2444 = vpack.c.b16 %v2412, %v2412
      %v2445 = vpack.c.b16 %v2413, %v2413
      %v2446 = vpack.c.b16 %v2414, %v2414
      %v2447 = vpack.c.b16 %v2415, %v2415
      %v2448 = vpack.c.b16 %v2416, %v2416
      %v2449 = vpack.c.b16 %v2417, %v2417
      %v2450 = vpack.c.b16 %v2418, %v2418
      %v2451 = vpack.c.b16 %v2419, %v2419
      %v2452 = vpack.c.b16 %v2420, %v2420
      %v2453 = vpack.c.b16 %v2421, %v2421
      %v2454 = vpack.c.b16 %v2422, %v2422
      %v2455 = vpack.c.b16 %v2423, %v2423
      %v2456 = vpack.c.b16 %v2424, %v2424
      %v2457 = vpack.c.b16 %v2425, %v2425
      %v2458 = vpack.c.b16 %v2426, %v2426
      %v2459 = vpack.c.b16 %v2427, %v2427
      %v2460 = vpack.c.b16 %v2428, %v2428
      %v2461 = vpack.c.b16 %v2429, %v2429
      %v2463 = vshrl.u32 %v2046, 16
      %v2465 = vshll.u32 %v2046, 16
      %v2467 = vrot.slane %v2465, 1
      %v2468 = vor.u32 %v2463, %v2467
      %v2470 = vshll.u32 %v2430, 16
      %v2472 = vrot.slane %v2470, 1
      %v2473 = vsel %vm1469, %v2468, %v2472
      %v2475 = vshrl.u32 %v2047, 16
      %v2477 = vshll.u32 %v2047, 16
      %v2479 = vrot.slane %v2477, 1
      %v2480 = vor.u32 %v2475, %v2479
      %v2482 = vshll.u32 %v2431, 16
      %v2484 = vrot.slane %v2482, 1
      %v2485 = vsel %vm1469, %v2480, %v2484
      %v2487 = vshrl.u32 %v2048, 16
      %v2489 = vshll.u32 %v2048, 16
      %v2491 = vrot.slane %v2489, 1
      %v2492 = vor.u32 %v2487, %v2491
      %v2494 = vshll.u32 %v2432, 16
      %v2496 = vrot.slane %v2494, 1
      %v2497 = vsel %vm1469, %v2492, %v2496
      %v2499 = vshrl.u32 %v2049, 16
      %v2501 = vshll.u32 %v2049, 16
      %v2503 = vrot.slane %v2501, 1
      %v2504 = vor.u32 %v2499, %v2503
      %v2506 = vshll.u32 %v2433, 16
      %v2508 = vrot.slane %v2506, 1
      %v2509 = vsel %vm1469, %v2504, %v2508
      %v2511 = vshrl.u32 %v2050, 16
      %v2513 = vshll.u32 %v2050, 16
      %v2515 = vrot.slane %v2513, 1
      %v2516 = vor.u32 %v2511, %v2515
      %v2518 = vshll.u32 %v2434, 16
      %v2520 = vrot.slane %v2518, 1
      %v2521 = vsel %vm1469, %v2516, %v2520
      %v2523 = vshrl.u32 %v2051, 16
      %v2525 = vshll.u32 %v2051, 16
      %v2527 = vrot.slane %v2525, 1
      %v2528 = vor.u32 %v2523, %v2527
      %v2530 = vshll.u32 %v2435, 16
      %v2532 = vrot.slane %v2530, 1
      %v2533 = vsel %vm1469, %v2528, %v2532
      %v2535 = vshrl.u32 %v2052, 16
      %v2537 = vshll.u32 %v2052, 16
      %v2539 = vrot.slane %v2537, 1
      %v2540 = vor.u32 %v2535, %v2539
      %v2542 = vshll.u32 %v2436, 16
      %v2544 = vrot.slane %v2542, 1
      %v2545 = vsel %vm1469, %v2540, %v2544
      %v2547 = vshrl.u32 %v2053, 16
      %v2549 = vshll.u32 %v2053, 16
      %v2551 = vrot.slane %v2549, 1
      %v2552 = vor.u32 %v2547, %v2551
      %v2554 = vshll.u32 %v2437, 16
      %v2556 = vrot.slane %v2554, 1
      %v2557 = vsel %vm1469, %v2552, %v2556
      %v2559 = vshrl.u32 %v2054, 16
      %v2561 = vshll.u32 %v2054, 16
      %v2563 = vrot.slane %v2561, 1
      %v2564 = vor.u32 %v2559, %v2563
      %v2566 = vshll.u32 %v2438, 16
      %v2568 = vrot.slane %v2566, 1
      %v2569 = vsel %vm1469, %v2564, %v2568
      %v2571 = vshrl.u32 %v2055, 16
      %v2573 = vshll.u32 %v2055, 16
      %v2575 = vrot.slane %v2573, 1
      %v2576 = vor.u32 %v2571, %v2575
      %v2578 = vshll.u32 %v2439, 16
      %v2580 = vrot.slane %v2578, 1
      %v2581 = vsel %vm1469, %v2576, %v2580
      %v2583 = vshrl.u32 %v2056, 16
      %v2585 = vshll.u32 %v2056, 16
      %v2587 = vrot.slane %v2585, 1
      %v2588 = vor.u32 %v2583, %v2587
      %v2590 = vshll.u32 %v2440, 16
      %v2592 = vrot.slane %v2590, 1
      %v2593 = vsel %vm1469, %v2588, %v2592
      %v2595 = vshrl.u32 %v2057, 16
      %v2597 = vshll.u32 %v2057, 16
      %v2599 = vrot.slane %v2597, 1
      %v2600 = vor.u32 %v2595, %v2599
      %v2602 = vshll.u32 %v2441, 16
      %v2604 = vrot.slane %v2602, 1
      %v2605 = vsel %vm1469, %v2600, %v2604
      %v2607 = vshrl.u32 %v2058, 16
      %v2609 = vshll.u32 %v2058, 16
      %v2611 = vrot.slane %v2609, 1
      %v2612 = vor.u32 %v2607, %v2611
      %v2614 = vshll.u32 %v2442, 16
      %v2616 = vrot.slane %v2614, 1
      %v2617 = vsel %vm1469, %v2612, %v2616
      %v2619 = vshrl.u32 %v2059, 16
      %v2621 = vshll.u32 %v2059, 16
      %v2623 = vrot.slane %v2621, 1
      %v2624 = vor.u32 %v2619, %v2623
      %v2626 = vshll.u32 %v2443, 16
      %v2628 = vrot.slane %v2626, 1
      %v2629 = vsel %vm1469, %v2624, %v2628
      %v2631 = vshrl.u32 %v2060, 16
      %v2633 = vshll.u32 %v2060, 16
      %v2635 = vrot.slane %v2633, 1
      %v2636 = vor.u32 %v2631, %v2635
      %v2638 = vshll.u32 %v2444, 16
      %v2640 = vrot.slane %v2638, 1
      %v2641 = vsel %vm1469, %v2636, %v2640
      %v2643 = vshrl.u32 %v2061, 16
      %v2645 = vshll.u32 %v2061, 16
      %v2647 = vrot.slane %v2645, 1
      %v2648 = vor.u32 %v2643, %v2647
      %v2650 = vshll.u32 %v2445, 16
      %v2652 = vrot.slane %v2650, 1
      %v2653 = vsel %vm1469, %v2648, %v2652
      %v2655 = vshrl.u32 %v2062, 16
      %v2657 = vshll.u32 %v2062, 16
      %v2659 = vrot.slane %v2657, 1
      %v2660 = vor.u32 %v2655, %v2659
      %v2662 = vshll.u32 %v2446, 16
      %v2664 = vrot.slane %v2662, 1
      %v2665 = vsel %vm1469, %v2660, %v2664
      %v2667 = vshrl.u32 %v2063, 16
      %v2669 = vshll.u32 %v2063, 16
      %v2671 = vrot.slane %v2669, 1
      %v2672 = vor.u32 %v2667, %v2671
      %v2674 = vshll.u32 %v2447, 16
      %v2676 = vrot.slane %v2674, 1
      %v2677 = vsel %vm1469, %v2672, %v2676
      %v2679 = vshrl.u32 %v2064, 16
      %v2681 = vshll.u32 %v2064, 16
      %v2683 = vrot.slane %v2681, 1
      %v2684 = vor.u32 %v2679, %v2683
      %v2686 = vshll.u32 %v2448, 16
      %v2688 = vrot.slane %v2686, 1
      %v2689 = vsel %vm1469, %v2684, %v2688
      %v2691 = vshrl.u32 %v2065, 16
      %v2693 = vshll.u32 %v2065, 16
      %v2695 = vrot.slane %v2693, 1
      %v2696 = vor.u32 %v2691, %v2695
      %v2698 = vshll.u32 %v2449, 16
      %v2700 = vrot.slane %v2698, 1
      %v2701 = vsel %vm1469, %v2696, %v2700
      %v2703 = vshrl.u32 %v2066, 16
      %v2705 = vshll.u32 %v2066, 16
      %v2707 = vrot.slane %v2705, 1
      %v2708 = vor.u32 %v2703, %v2707
      %v2710 = vshll.u32 %v2450, 16
      %v2712 = vrot.slane %v2710, 1
      %v2713 = vsel %vm1469, %v2708, %v2712
      %v2715 = vshrl.u32 %v2067, 16
      %v2717 = vshll.u32 %v2067, 16
      %v2719 = vrot.slane %v2717, 1
      %v2720 = vor.u32 %v2715, %v2719
      %v2722 = vshll.u32 %v2451, 16
      %v2724 = vrot.slane %v2722, 1
      %v2725 = vsel %vm1469, %v2720, %v2724
      %v2727 = vshrl.u32 %v2068, 16
      %v2729 = vshll.u32 %v2068, 16
      %v2731 = vrot.slane %v2729, 1
      %v2732 = vor.u32 %v2727, %v2731
      %v2734 = vshll.u32 %v2452, 16
      %v2736 = vrot.slane %v2734, 1
      %v2737 = vsel %vm1469, %v2732, %v2736
      %v2739 = vshrl.u32 %v2069, 16
      %v2741 = vshll.u32 %v2069, 16
      %v2743 = vrot.slane %v2741, 1
      %v2744 = vor.u32 %v2739, %v2743
      %v2746 = vshll.u32 %v2453, 16
      %v2748 = vrot.slane %v2746, 1
      %v2749 = vsel %vm1469, %v2744, %v2748
      %v2751 = vshrl.u32 %v2070, 16
      %v2753 = vshll.u32 %v2070, 16
      %v2755 = vrot.slane %v2753, 1
      %v2756 = vor.u32 %v2751, %v2755
      %v2758 = vshll.u32 %v2454, 16
      %v2760 = vrot.slane %v2758, 1
      %v2761 = vsel %vm1469, %v2756, %v2760
      %v2763 = vshrl.u32 %v2071, 16
      %v2765 = vshll.u32 %v2071, 16
      %v2767 = vrot.slane %v2765, 1
      %v2768 = vor.u32 %v2763, %v2767
      %v2770 = vshll.u32 %v2455, 16
      %v2772 = vrot.slane %v2770, 1
      %v2773 = vsel %vm1469, %v2768, %v2772
      %v2775 = vshrl.u32 %v2072, 16
      %v2777 = vshll.u32 %v2072, 16
      %v2779 = vrot.slane %v2777, 1
      %v2780 = vor.u32 %v2775, %v2779
      %v2782 = vshll.u32 %v2456, 16
      %v2784 = vrot.slane %v2782, 1
      %v2785 = vsel %vm1469, %v2780, %v2784
      %v2787 = vshrl.u32 %v2073, 16
      %v2789 = vshll.u32 %v2073, 16
      %v2791 = vrot.slane %v2789, 1
      %v2792 = vor.u32 %v2787, %v2791
      %v2794 = vshll.u32 %v2457, 16
      %v2796 = vrot.slane %v2794, 1
      %v2797 = vsel %vm1469, %v2792, %v2796
      %v2799 = vshrl.u32 %v2074, 16
      %v2801 = vshll.u32 %v2074, 16
      %v2803 = vrot.slane %v2801, 1
      %v2804 = vor.u32 %v2799, %v2803
      %v2806 = vshll.u32 %v2458, 16
      %v2808 = vrot.slane %v2806, 1
      %v2809 = vsel %vm1469, %v2804, %v2808
      %v2811 = vshrl.u32 %v2075, 16
      %v2813 = vshll.u32 %v2075, 16
      %v2815 = vrot.slane %v2813, 1
      %v2816 = vor.u32 %v2811, %v2815
      %v2818 = vshll.u32 %v2459, 16
      %v2820 = vrot.slane %v2818, 1
      %v2821 = vsel %vm1469, %v2816, %v2820
      %v2823 = vshrl.u32 %v2076, 16
      %v2825 = vshll.u32 %v2076, 16
      %v2827 = vrot.slane %v2825, 1
      %v2828 = vor.u32 %v2823, %v2827
      %v2830 = vshll.u32 %v2460, 16
      %v2832 = vrot.slane %v2830, 1
      %v2833 = vsel %vm1469, %v2828, %v2832
      %v2835 = vshrl.u32 %v2077, 16
      %v2837 = vshll.u32 %v2077, 16
      %v2839 = vrot.slane %v2837, 1
      %v2840 = vor.u32 %v2835, %v2839
      %v2842 = vshll.u32 %v2461, 16
      %v2844 = vrot.slane %v2842, 1
      %v2845 = vsel %vm1469, %v2840, %v2844
      %2846 = vrot.lane.b32.xlu0 %v2473, 40
      %v2847 = vpop.permute.xlu0 %2846
      %2848 = vrot.lane.b32.xlu0 %v2485, 40
      %v2849 = vpop.permute.xlu0 %2848
      %2850 = vrot.lane.b32.xlu0 %v2497, 40
      %v2851 = vpop.permute.xlu0 %2850
      %2852 = vrot.lane.b32.xlu0 %v2509, 40
      %v2853 = vpop.permute.xlu0 %2852
      %2854 = vrot.lane.b32.xlu0 %v2521, 40
      %v2855 = vpop.permute.xlu0 %2854
      %2856 = vrot.lane.b32.xlu0 %v2533, 40
      %v2857 = vpop.permute.xlu0 %2856
      %2858 = vrot.lane.b32.xlu0 %v2545, 40
      %v2859 = vpop.permute.xlu0 %2858
      %2860 = vrot.lane.b32.xlu0 %v2557, 40
      %v2861 = vpop.permute.xlu0 %2860
      %2862 = vrot.lane.b32.xlu0 %v2569, 40
      %v2863 = vpop.permute.xlu0 %2862
      %2864 = vrot.lane.b32.xlu0 %v2581, 40
      %v2865 = vpop.permute.xlu0 %2864
      %2866 = vrot.lane.b32.xlu0 %v2593, 40
      %v2867 = vpop.permute.xlu0 %2866
      %2868 = vrot.lane.b32.xlu0 %v2605, 40
      %v2869 = vpop.permute.xlu0 %2868
      %2870 = vrot.lane.b32.xlu0 %v2617, 40
      %v2871 = vpop.permute.xlu0 %2870
      %2872 = vrot.lane.b32.xlu0 %v2629, 40
      %v2873 = vpop.permute.xlu0 %2872
      %2874 = vrot.lane.b32.xlu0 %v2641, 40
      %v2875 = vpop.permute.xlu0 %2874
      %2876 = vrot.lane.b32.xlu0 %v2653, 40
      %v2877 = vpop.permute.xlu0 %2876
      %2878 = vrot.lane.b32.xlu0 %v2665, 40
      %v2879 = vpop.permute.xlu0 %2878
      %2880 = vrot.lane.b32.xlu0 %v2677, 40
      %v2881 = vpop.permute.xlu0 %2880
      %2882 = vrot.lane.b32.xlu0 %v2689, 40
      %v2883 = vpop.permute.xlu0 %2882
      %2884 = vrot.lane.b32.xlu0 %v2701, 40
      %v2885 = vpop.permute.xlu0 %2884
      %2886 = vrot.lane.b32.xlu0 %v2713, 40
      %v2887 = vpop.permute.xlu0 %2886
      %2888 = vrot.lane.b32.xlu0 %v2725, 40
      %v2889 = vpop.permute.xlu0 %2888
      %2890 = vrot.lane.b32.xlu0 %v2737, 40
      %v2891 = vpop.permute.xlu0 %2890
      %2892 = vrot.lane.b32.xlu0 %v2749, 40
      %v2893 = vpop.permute.xlu0 %2892
      %2894 = vrot.lane.b32.xlu0 %v2761, 40
      %v2895 = vpop.permute.xlu0 %2894
      %2896 = vrot.lane.b32.xlu0 %v2773, 40
      %v2897 = vpop.permute.xlu0 %2896
      %2898 = vrot.lane.b32.xlu0 %v2785, 40
      %v2899 = vpop.permute.xlu0 %2898
      %2900 = vrot.lane.b32.xlu0 %v2797, 40
      %v2901 = vpop.permute.xlu0 %2900
      %2902 = vrot.lane.b32.xlu0 %v2809, 40
      %v2903 = vpop.permute.xlu0 %2902
      %2904 = vrot.lane.b32.xlu0 %v2821, 40
      %v2905 = vpop.permute.xlu0 %2904
      %2906 = vrot.lane.b32.xlu0 %v2833, 40
      %v2907 = vpop.permute.xlu0 %2906
      %2908 = vrot.lane.b32.xlu0 %v2845, 40
      %v2909 = vpop.permute.xlu0 %2908
      %v2912 = vunpack.c.l.b16 %v760
      %v2913 = vunpack.c.l.b16 %v761
      %v2914 = vpack.c.b16 %v2913, %v2912
      %2915 = vrot.lane.b32.xlu0 %v1118, 48
      %v2916 = vpop.permute.xlu0 %2915
      %2917 = vrot.lane.b32.xlu0 %v1119, 48
      %v2918 = vpop.permute.xlu0 %2917
      %2919 = vrot.lane.b32.xlu0 %v1120, 48
      %v2920 = vpop.permute.xlu0 %2919
      %2921 = vrot.lane.b32.xlu0 %v1121, 48
      %v2922 = vpop.permute.xlu0 %2921
      %2923 = vrot.lane.b32.xlu0 %v1122, 48
      %v2924 = vpop.permute.xlu0 %2923
      %2925 = vrot.lane.b32.xlu0 %v1123, 48
      %v2926 = vpop.permute.xlu0 %2925
      %2927 = vrot.lane.b32.xlu0 %v1124, 48
      %v2928 = vpop.permute.xlu0 %2927
      %2929 = vrot.lane.b32.xlu0 %v1125, 48
      %v2930 = vpop.permute.xlu0 %2929
      %2931 = vrot.lane.b32.xlu0 %v1126, 48
      %v2932 = vpop.permute.xlu0 %2931
      %2933 = vrot.lane.b32.xlu0 %v1127, 48
      %v2934 = vpop.permute.xlu0 %2933
      %2935 = vrot.lane.b32.xlu0 %v1128, 48
      %v2936 = vpop.permute.xlu0 %2935
      %2937 = vrot.lane.b32.xlu0 %v1129, 48
      %v2938 = vpop.permute.xlu0 %2937
      %2939 = vrot.lane.b32.xlu0 %v1130, 48
      %v2940 = vpop.permute.xlu0 %2939
      %2941 = vrot.lane.b32.xlu0 %v1131, 48
      %v2942 = vpop.permute.xlu0 %2941
      %2943 = vrot.lane.b32.xlu0 %v1132, 48
      %v2944 = vpop.permute.xlu0 %2943
      %2945 = vrot.lane.b32.xlu0 %v1133, 48
      %v2946 = vpop.permute.xlu0 %2945
      %2947 = vrot.lane.b32.xlu0 %v1134, 48
      %v2948 = vpop.permute.xlu0 %2947
      %2949 = vrot.lane.b32.xlu0 %v1135, 48
      %v2950 = vpop.permute.xlu0 %2949
      %2951 = vrot.lane.b32.xlu0 %v1136, 48
      %v2952 = vpop.permute.xlu0 %2951
      %2953 = vrot.lane.b32.xlu0 %v1137, 48
      %v2954 = vpop.permute.xlu0 %2953
      %2955 = vrot.lane.b32.xlu0 %v1138, 48
      %v2956 = vpop.permute.xlu0 %2955
      %2957 = vrot.lane.b32.xlu0 %v1139, 48
      %v2958 = vpop.permute.xlu0 %2957
      %2959 = vrot.lane.b32.xlu0 %v1140, 48
      %v2960 = vpop.permute.xlu0 %2959
      %2961 = vrot.lane.b32.xlu0 %v1141, 48
      %v2962 = vpop.permute.xlu0 %2961
      %2963 = vrot.lane.b32.xlu0 %v1142, 48
      %v2964 = vpop.permute.xlu0 %2963
      %2965 = vrot.lane.b32.xlu0 %v1143, 48
      %v2966 = vpop.permute.xlu0 %2965
      %2967 = vrot.lane.b32.xlu0 %v1144, 48
      %v2968 = vpop.permute.xlu0 %2967
      %2969 = vrot.lane.b32.xlu0 %v1145, 48
      %v2970 = vpop.permute.xlu0 %2969
      %2971 = vrot.lane.b32.xlu0 %v1146, 48
      %v2972 = vpop.permute.xlu0 %2971
      %2973 = vrot.lane.b32.xlu0 %v1147, 48
      %v2974 = vpop.permute.xlu0 %2973
      %2975 = vrot.lane.b32.xlu0 %v1148, 48
      %v2976 = vpop.permute.xlu0 %2975
      %2977 = vrot.lane.b32.xlu0 %v2914, 48
      %v2978 = vpop.permute.xlu0 %2977
      %v2981 = vunpack.c.l.b16 %v827
      %v2982 = vunpack.c.l.b16 %v828
      %v2983 = vpack.c.b16 %v2982, %v2981
      %2984 = vrot.lane.b32.xlu0 %v1278, 56
      %v2985 = vpop.permute.xlu0 %2984
      %2986 = vrot.lane.b32.xlu0 %v1279, 56
      %v2987 = vpop.permute.xlu0 %2986
      %2988 = vrot.lane.b32.xlu0 %v1280, 56
      %v2989 = vpop.permute.xlu0 %2988
      %2990 = vrot.lane.b32.xlu0 %v1281, 56
      %v2991 = vpop.permute.xlu0 %2990
      %2992 = vrot.lane.b32.xlu0 %v1282, 56
      %v2993 = vpop.permute.xlu0 %2992
      %2994 = vrot.lane.b32.xlu0 %v1283, 56
      %v2995 = vpop.permute.xlu0 %2994
      %2996 = vrot.lane.b32.xlu0 %v1284, 56
      %v2997 = vpop.permute.xlu0 %2996
      %2998 = vrot.lane.b32.xlu0 %v1285, 56
      %v2999 = vpop.permute.xlu0 %2998
      %3000 = vrot.lane.b32.xlu0 %v1286, 56
      %v3001 = vpop.permute.xlu0 %3000
      %3002 = vrot.lane.b32.xlu0 %v1287, 56
      %v3003 = vpop.permute.xlu0 %3002
      %3004 = vrot.lane.b32.xlu0 %v1288, 56
      %v3005 = vpop.permute.xlu0 %3004
      %3006 = vrot.lane.b32.xlu0 %v1289, 56
      %v3007 = vpop.permute.xlu0 %3006
      %3008 = vrot.lane.b32.xlu0 %v1290, 56
      %v3009 = vpop.permute.xlu0 %3008
      %3010 = vrot.lane.b32.xlu0 %v1291, 56
      %v3011 = vpop.permute.xlu0 %3010
      %3012 = vrot.lane.b32.xlu0 %v1292, 56
      %v3013 = vpop.permute.xlu0 %3012
      %3014 = vrot.lane.b32.xlu0 %v1293, 56
      %v3015 = vpop.permute.xlu0 %3014
      %3016 = vrot.lane.b32.xlu0 %v1294, 56
      %v3017 = vpop.permute.xlu0 %3016
      %3018 = vrot.lane.b32.xlu0 %v1295, 56
      %v3019 = vpop.permute.xlu0 %3018
      %3020 = vrot.lane.b32.xlu0 %v1296, 56
      %v3021 = vpop.permute.xlu0 %3020
      %3022 = vrot.lane.b32.xlu0 %v1297, 56
      %v3023 = vpop.permute.xlu0 %3022
      %3024 = vrot.lane.b32.xlu0 %v1298, 56
      %v3025 = vpop.permute.xlu0 %3024
      %3026 = vrot.lane.b32.xlu0 %v1299, 56
      %v3027 = vpop.permute.xlu0 %3026
      %3028 = vrot.lane.b32.xlu0 %v1300, 56
      %v3029 = vpop.permute.xlu0 %3028
      %3030 = vrot.lane.b32.xlu0 %v1301, 56
      %v3031 = vpop.permute.xlu0 %3030
      %3032 = vrot.lane.b32.xlu0 %v1302, 56
      %v3033 = vpop.permute.xlu0 %3032
      %3034 = vrot.lane.b32.xlu0 %v1303, 56
      %v3035 = vpop.permute.xlu0 %3034
      %3036 = vrot.lane.b32.xlu0 %v1304, 56
      %v3037 = vpop.permute.xlu0 %3036
      %3038 = vrot.lane.b32.xlu0 %v1305, 56
      %v3039 = vpop.permute.xlu0 %3038
      %3040 = vrot.lane.b32.xlu0 %v1306, 56
      %v3041 = vpop.permute.xlu0 %3040
      %3042 = vrot.lane.b32.xlu0 %v1307, 56
      %v3043 = vpop.permute.xlu0 %3042
      %3044 = vrot.lane.b32.xlu0 %v1308, 56
      %v3045 = vpop.permute.xlu0 %3044
      %3046 = vrot.lane.b32.xlu0 %v2983, 56
      %v3047 = vpop.permute.xlu0 %3046
      %v3049 = vunpack.c.l.b16 %v762
      %v3050 = vpack.c.b16 %v3049, %v3049
      %v3052 = vshrl.u32 %v2914, 16
      %v3054 = vshll.u32 %v2914, 16
      %v3056 = vrot.slane %v3054, 1
      %v3057 = vor.u32 %v3052, %v3056
      %v3059 = vshll.u32 %v3050, 16
      %v3061 = vrot.slane %v3059, 1
      %v3062 = vsel %vm1469, %v3057, %v3061
      %3063 = vrot.lane.b32.xlu0 %v1493, 64
      %v3064 = vpop.permute.xlu0 %3063
      %3065 = vrot.lane.b32.xlu0 %v1505, 64
      %v3066 = vpop.permute.xlu0 %3065
      %3067 = vrot.lane.b32.xlu0 %v1517, 64
      %v3068 = vpop.permute.xlu0 %3067
      %3069 = vrot.lane.b32.xlu0 %v1529, 64
      %v3070 = vpop.permute.xlu0 %3069
      %3071 = vrot.lane.b32.xlu0 %v1541, 64
      %v3072 = vpop.permute.xlu0 %3071
      %3073 = vrot.lane.b32.xlu0 %v1553, 64
      %v3074 = vpop.permute.xlu0 %3073
      %3075 = vrot.lane.b32.xlu0 %v1565, 64
      %v3076 = vpop.permute.xlu0 %3075
      %3077 = vrot.lane.b32.xlu0 %v1577, 64
      %v3078 = vpop.permute.xlu0 %3077
      %3079 = vrot.lane.b32.xlu0 %v1589, 64
      %v3080 = vpop.permute.xlu0 %3079
      %3081 = vrot.lane.b32.xlu0 %v1601, 64
      %v3082 = vpop.permute.xlu0 %3081
      %3083 = vrot.lane.b32.xlu0 %v1613, 64
      %v3084 = vpop.permute.xlu0 %3083
      %3085 = vrot.lane.b32.xlu0 %v1625, 64
      %v3086 = vpop.permute.xlu0 %3085
      %3087 = vrot.lane.b32.xlu0 %v1637, 64
      %v3088 = vpop.permute.xlu0 %3087
      %3089 = vrot.lane.b32.xlu0 %v1649, 64
      %v3090 = vpop.permute.xlu0 %3089
      %3091 = vrot.lane.b32.xlu0 %v1661, 64
      %v3092 = vpop.permute.xlu0 %3091
      %3093 = vrot.lane.b32.xlu0 %v1673, 64
      %v3094 = vpop.permute.xlu0 %3093
      %3095 = vrot.lane.b32.xlu0 %v1685, 64
      %v3096 = vpop.permute.xlu0 %3095
      %3097 = vrot.lane.b32.xlu0 %v1697, 64
      %v3098 = vpop.permute.xlu0 %3097
      %3099 = vrot.lane.b32.xlu0 %v1709, 64
      %v3100 = vpop.permute.xlu0 %3099
      %3101 = vrot.lane.b32.xlu0 %v1721, 64
      %v3102 = vpop.permute.xlu0 %3101
      %3103 = vrot.lane.b32.xlu0 %v1733, 64
      %v3104 = vpop.permute.xlu0 %3103
      %3105 = vrot.lane.b32.xlu0 %v1745, 64
      %v3106 = vpop.permute.xlu0 %3105
      %3107 = vrot.lane.b32.xlu0 %v1757, 64
      %v3108 = vpop.permute.xlu0 %3107
      %3109 = vrot.lane.b32.xlu0 %v1769, 64
      %v3110 = vpop.permute.xlu0 %3109
      %3111 = vrot.lane.b32.xlu0 %v1781, 64
      %v3112 = vpop.permute.xlu0 %3111
      %3113 = vrot.lane.b32.xlu0 %v1793, 64
      %v3114 = vpop.permute.xlu0 %3113
      %3115 = vrot.lane.b32.xlu0 %v1805, 64
      %v3116 = vpop.permute.xlu0 %3115
      %3117 = vrot.lane.b32.xlu0 %v1817, 64
      %v3118 = vpop.permute.xlu0 %3117
      %3119 = vrot.lane.b32.xlu0 %v1829, 64
      %v3120 = vpop.permute.xlu0 %3119
      %3121 = vrot.lane.b32.xlu0 %v1841, 64
      %v3122 = vpop.permute.xlu0 %3121
      %3123 = vrot.lane.b32.xlu0 %v1853, 64
      %v3124 = vpop.permute.xlu0 %3123
      %3125 = vrot.lane.b32.xlu0 %v3062, 64
      %v3126 = vpop.permute.xlu0 %3125
      %vm3127 = vcmask 64512
      %v3129 = vsel %vm3127, %v1117, %v1310
      %v3131 = vsel %vm3127, %v1118, %v1312
      %v3133 = vsel %vm3127, %v1119, %v1314
      %v3135 = vsel %vm3127, %v1120, %v1316
      %v3137 = vsel %vm3127, %v1121, %v1318
      %v3139 = vsel %vm3127, %v1122, %v1320
      %v3141 = vsel %vm3127, %v1123, %v1322
      %v3143 = vsel %vm3127, %v1124, %v1324
      %v3145 = vsel %vm3127, %v1125, %v1326
      %v3147 = vsel %vm3127, %v1126, %v1328
      %v3149 = vsel %vm3127, %v1127, %v1330
      %v3151 = vsel %vm3127, %v1128, %v1332
      %v3153 = vsel %vm3127, %v1129, %v1334
      %v3155 = vsel %vm3127, %v1130, %v1336
      %v3157 = vsel %vm3127, %v1131, %v1338
      %v3159 = vsel %vm3127, %v1132, %v1340
      %v3161 = vsel %vm3127, %v1133, %v1342
      %v3163 = vsel %vm3127, %v1134, %v1344
      %v3165 = vsel %vm3127, %v1135, %v1346
      %v3167 = vsel %vm3127, %v1136, %v1348
      %v3169 = vsel %vm3127, %v1137, %v1350
      %v3171 = vsel %vm3127, %v1138, %v1352
      %v3173 = vsel %vm3127, %v1139, %v1354
      %v3175 = vsel %vm3127, %v1140, %v1356
      %v3177 = vsel %vm3127, %v1141, %v1358
      %v3179 = vsel %vm3127, %v1142, %v1360
      %v3181 = vsel %vm3127, %v1143, %v1362
      %v3183 = vsel %vm3127, %v1144, %v1364
      %v3185 = vsel %vm3127, %v1145, %v1366
      %v3187 = vsel %vm3127, %v1146, %v1368
      %v3189 = vsel %vm3127, %v1147, %v1370
      %v3191 = vsel %vm3127, %v1148, %v1372
      %vm3192 = vcmask 130048
      %v3194 = vsel %vm3192, %v3129, %v1855
      %v3196 = vsel %vm3192, %v3131, %v1857
      %v3198 = vsel %vm3192, %v3133, %v1859
      %v3200 = vsel %vm3192, %v3135, %v1861
      %v3202 = vsel %vm3192, %v3137, %v1863
      %v3204 = vsel %vm3192, %v3139, %v1865
      %v3206 = vsel %vm3192, %v3141, %v1867
      %v3208 = vsel %vm3192, %v3143, %v1869
      %v3210 = vsel %vm3192, %v3145, %v1871
      %v3212 = vsel %vm3192, %v3147, %v1873
      %v3214 = vsel %vm3192, %v3149, %v1875
      %v3216 = vsel %vm3192, %v3151, %v1877
      %v3218 = vsel %vm3192, %v3153, %v1879
      %v3220 = vsel %vm3192, %v3155, %v1881
      %v3222 = vsel %vm3192, %v3157, %v1883
      %v3224 = vsel %vm3192, %v3159, %v1885
      %v3226 = vsel %vm3192, %v3161, %v1887
      %v3228 = vsel %vm3192, %v3163, %v1889
      %v3230 = vsel %vm3192, %v3165, %v1891
      %v3232 = vsel %vm3192, %v3167, %v1893
      %v3234 = vsel %vm3192, %v3169, %v1895
      %v3236 = vsel %vm3192, %v3171, %v1897
      %v3238 = vsel %vm3192, %v3173, %v1899
      %v3240 = vsel %vm3192, %v3175, %v1901
      %v3242 = vsel %vm3192, %v3177, %v1903
      %v3244 = vsel %vm3192, %v3179, %v1905
      %v3246 = vsel %vm3192, %v3181, %v1907
      %v3248 = vsel %vm3192, %v3183, %v1909
      %v3250 = vsel %vm3192, %v3185, %v1911
      %v3252 = vsel %vm3192, %v3187, %v1913
      %v3254 = vsel %vm3192, %v3189, %v1915
      %v3256 = vsel %vm3192, %v3191, %v1917
      %vm3257 = vcmask 195584
      %v3259 = vsel %vm3257, %v3194, %v2079
      %v3261 = vsel %vm3257, %v3196, %v2081
      %v3263 = vsel %vm3257, %v3198, %v2083
      %v3265 = vsel %vm3257, %v3200, %v2085
      %v3267 = vsel %vm3257, %v3202, %v2087
      %v3269 = vsel %vm3257, %v3204, %v2089
      %v3271 = vsel %vm3257, %v3206, %v2091
      %v3273 = vsel %vm3257, %v3208, %v2093
      %v3275 = vsel %vm3257, %v3210, %v2095
      %v3277 = vsel %vm3257, %v3212, %v2097
      %v3279 = vsel %vm3257, %v3214, %v2099
      %v3281 = vsel %vm3257, %v3216, %v2101
      %v3283 = vsel %vm3257, %v3218, %v2103
      %v3285 = vsel %vm3257, %v3220, %v2105
      %v3287 = vsel %vm3257, %v3222, %v2107
      %v3289 = vsel %vm3257, %v3224, %v2109
      %v3291 = vsel %vm3257, %v3226, %v2111
      %v3293 = vsel %vm3257, %v3228, %v2113
      %v3295 = vsel %vm3257, %v3230, %v2115
      %v3297 = vsel %vm3257, %v3232, %v2117
      %v3299 = vsel %vm3257, %v3234, %v2119
      %v3301 = vsel %vm3257, %v3236, %v2121
      %v3303 = vsel %vm3257, %v3238, %v2123
      %v3305 = vsel %vm3257, %v3240, %v2125
      %v3307 = vsel %vm3257, %v3242, %v2127
      %v3309 = vsel %vm3257, %v3244, %v2129
      %v3311 = vsel %vm3257, %v3246, %v2131
      %v3313 = vsel %vm3257, %v3248, %v2133
      %v3315 = vsel %vm3257, %v3250, %v2135
      %v3317 = vsel %vm3257, %v3252, %v2137
      %v3319 = vsel %vm3257, %v3254, %v2139
      %v3321 = vsel %vm3257, %v3256, %v2141
      %vm3322 = vcmask 261120
      %v3324 = vsel %vm3322, %v3259, %v2303
      %v3326 = vsel %vm3322, %v3261, %v2305
      %v3328 = vsel %vm3322, %v3263, %v2307
      %v3330 = vsel %vm3322, %v3265, %v2309
      %v3332 = vsel %vm3322, %v3267, %v2311
      %v3334 = vsel %vm3322, %v3269, %v2313
      %v3336 = vsel %vm3322, %v3271, %v2315
      %v3338 = vsel %vm3322, %v3273, %v2317
      %v3340 = vsel %vm3322, %v3275, %v2319
      %v3342 = vsel %vm3322, %v3277, %v2321
      %v3344 = vsel %vm3322, %v3279, %v2323
      %v3346 = vsel %vm3322, %v3281, %v2325
      %v3348 = vsel %vm3322, %v3283, %v2327
      %v3350 = vsel %vm3322, %v3285, %v2329
      %v3352 = vsel %vm3322, %v3287, %v2331
      %v3354 = vsel %vm3322, %v3289, %v2333
      %v3356 = vsel %vm3322, %v3291, %v2335
      %v3358 = vsel %vm3322, %v3293, %v2337
      %v3360 = vsel %vm3322, %v3295, %v2339
      %v3362 = vsel %vm3322, %v3297, %v2341
      %v3364 = vsel %vm3322, %v3299, %v2343
      %v3366 = vsel %vm3322, %v3301, %v2345
      %v3368 = vsel %vm3322, %v3303, %v2347
      %v3370 = vsel %vm3322, %v3305, %v2349
      %v3372 = vsel %vm3322, %v3307, %v2351
      %v3374 = vsel %vm3322, %v3309, %v2353
      %v3376 = vsel %vm3322, %v3311, %v2355
      %v3378 = vsel %vm3322, %v3313, %v2357
      %v3380 = vsel %vm3322, %v3315, %v2359
      %v3382 = vsel %vm3322, %v3317, %v2361
      %v3384 = vsel %vm3322, %v3319, %v2363
      %v3386 = vsel %vm3322, %v3321, %v2365
      %vm3387 = vcmask 326656
      %v3389 = vsel %vm3387, %v3324, %v2847
      %v3391 = vsel %vm3387, %v3326, %v2849
      %v3393 = vsel %vm3387, %v3328, %v2851
      %v3395 = vsel %vm3387, %v3330, %v2853
      %v3397 = vsel %vm3387, %v3332, %v2855
      %v3399 = vsel %vm3387, %v3334, %v2857
      %v3401 = vsel %vm3387, %v3336, %v2859
      %v3403 = vsel %vm3387, %v3338, %v2861
      %v3405 = vsel %vm3387, %v3340, %v2863
      %v3407 = vsel %vm3387, %v3342, %v2865
      %v3409 = vsel %vm3387, %v3344, %v2867
      %v3411 = vsel %vm3387, %v3346, %v2869
      %v3413 = vsel %vm3387, %v3348, %v2871
      %v3415 = vsel %vm3387, %v3350, %v2873
      %v3417 = vsel %vm3387, %v3352, %v2875
      %v3419 = vsel %vm3387, %v3354, %v2877
      %v3421 = vsel %vm3387, %v3356, %v2879
      %v3423 = vsel %vm3387, %v3358, %v2881
      %v3425 = vsel %vm3387, %v3360, %v2883
      %v3427 = vsel %vm3387, %v3362, %v2885
      %v3429 = vsel %vm3387, %v3364, %v2887
      %v3431 = vsel %vm3387, %v3366, %v2889
      %v3433 = vsel %vm3387, %v3368, %v2891
      %v3435 = vsel %vm3387, %v3370, %v2893
      %v3437 = vsel %vm3387, %v3372, %v2895
      %v3439 = vsel %vm3387, %v3374, %v2897
      %v3441 = vsel %vm3387, %v3376, %v2899
      %v3443 = vsel %vm3387, %v3378, %v2901
      %v3445 = vsel %vm3387, %v3380, %v2903
      %v3447 = vsel %vm3387, %v3382, %v2905
      %v3449 = vsel %vm3387, %v3384, %v2907
      %v3451 = vsel %vm3387, %v3386, %v2909
      %vm3452 = vcmask 392192
      %v3454 = vsel %vm3452, %v3389, %v2916
      %v3456 = vsel %vm3452, %v3391, %v2918
      %v3458 = vsel %vm3452, %v3393, %v2920
      %v3460 = vsel %vm3452, %v3395, %v2922
      %v3462 = vsel %vm3452, %v3397, %v2924
      %v3464 = vsel %vm3452, %v3399, %v2926
      %v3466 = vsel %vm3452, %v3401, %v2928
      %v3468 = vsel %vm3452, %v3403, %v2930
      %v3470 = vsel %vm3452, %v3405, %v2932
      %v3472 = vsel %vm3452, %v3407, %v2934
      %v3474 = vsel %vm3452, %v3409, %v2936
      %v3476 = vsel %vm3452, %v3411, %v2938
      %v3478 = vsel %vm3452, %v3413, %v2940
      %v3480 = vsel %vm3452, %v3415, %v2942
      %v3482 = vsel %vm3452, %v3417, %v2944
      %v3484 = vsel %vm3452, %v3419, %v2946
      %v3486 = vsel %vm3452, %v3421, %v2948
      %v3488 = vsel %vm3452, %v3423, %v2950
      %v3490 = vsel %vm3452, %v3425, %v2952
      %v3492 = vsel %vm3452, %v3427, %v2954
      %v3494 = vsel %vm3452, %v3429, %v2956
      %v3496 = vsel %vm3452, %v3431, %v2958
      %v3498 = vsel %vm3452, %v3433, %v2960
      %v3500 = vsel %vm3452, %v3435, %v2962
      %v3502 = vsel %vm3452, %v3437, %v2964
      %v3504 = vsel %vm3452, %v3439, %v2966
      %v3506 = vsel %vm3452, %v3441, %v2968
      %v3508 = vsel %vm3452, %v3443, %v2970
      %v3510 = vsel %vm3452, %v3445, %v2972
      %v3512 = vsel %vm3452, %v3447, %v2974
      %v3514 = vsel %vm3452, %v3449, %v2976
      %v3516 = vsel %vm3452, %v3451, %v2978
      %vm3517 = vcmask 457728
      %v3519 = vsel %vm3517, %v3454, %v2985
      %v3521 = vsel %vm3517, %v3456, %v2987
      %v3523 = vsel %vm3517, %v3458, %v2989
      %v3525 = vsel %vm3517, %v3460, %v2991
      %v3527 = vsel %vm3517, %v3462, %v2993
      %v3529 = vsel %vm3517, %v3464, %v2995
      %v3531 = vsel %vm3517, %v3466, %v2997
      %v3533 = vsel %vm3517, %v3468, %v2999
      %v3535 = vsel %vm3517, %v3470, %v3001
      %v3537 = vsel %vm3517, %v3472, %v3003
      %v3539 = vsel %vm3517, %v3474, %v3005
      %v3541 = vsel %vm3517, %v3476, %v3007
      %v3543 = vsel %vm3517, %v3478, %v3009
      %v3545 = vsel %vm3517, %v3480, %v3011
      %v3547 = vsel %vm3517, %v3482, %v3013
      %v3549 = vsel %vm3517, %v3484, %v3015
      %v3551 = vsel %vm3517, %v3486, %v3017
      %v3553 = vsel %vm3517, %v3488, %v3019
      %v3555 = vsel %vm3517, %v3490, %v3021
      %v3557 = vsel %vm3517, %v3492, %v3023
      %v3559 = vsel %vm3517, %v3494, %v3025
      %v3561 = vsel %vm3517, %v3496, %v3027
      %v3563 = vsel %vm3517, %v3498, %v3029
      %v3565 = vsel %vm3517, %v3500, %v3031
      %v3567 = vsel %vm3517, %v3502, %v3033
      %v3569 = vsel %vm3517, %v3504, %v3035
      %v3571 = vsel %vm3517, %v3506, %v3037
      %v3573 = vsel %vm3517, %v3508, %v3039
      %v3575 = vsel %vm3517, %v3510, %v3041
      %v3577 = vsel %vm3517, %v3512, %v3043
      %v3579 = vsel %vm3517, %v3514, %v3045
      %v3581 = vsel %vm3517, %v3516, %v3047
      %vm3582 = vcmask 523264
      %v3584 = vsel %vm3582, %v3519, %v3064
      %v3586 = vsel %vm3582, %v3521, %v3066
      %v3588 = vsel %vm3582, %v3523, %v3068
      %v3590 = vsel %vm3582, %v3525, %v3070
      %v3592 = vsel %vm3582, %v3527, %v3072
      %v3594 = vsel %vm3582, %v3529, %v3074
      %v3596 = vsel %vm3582, %v3531, %v3076
      %v3598 = vsel %vm3582, %v3533, %v3078
      %v3600 = vsel %vm3582, %v3535, %v3080
      %v3602 = vsel %vm3582, %v3537, %v3082
      %v3604 = vsel %vm3582, %v3539, %v3084
      %v3606 = vsel %vm3582, %v3541, %v3086
      %v3608 = vsel %vm3582, %v3543, %v3088
      %v3610 = vsel %vm3582, %v3545, %v3090
      %v3612 = vsel %vm3582, %v3547, %v3092
      %v3614 = vsel %vm3582, %v3549, %v3094
      %v3616 = vsel %vm3582, %v3551, %v3096
      %v3618 = vsel %vm3582, %v3553, %v3098
      %v3620 = vsel %vm3582, %v3555, %v3100
      %v3622 = vsel %vm3582, %v3557, %v3102
      %v3624 = vsel %vm3582, %v3559, %v3104
      %v3626 = vsel %vm3582, %v3561, %v3106
      %v3628 = vsel %vm3582, %v3563, %v3108
      %v3630 = vsel %vm3582, %v3565, %v3110
      %v3632 = vsel %vm3582, %v3567, %v3112
      %v3634 = vsel %vm3582, %v3569, %v3114
      %v3636 = vsel %vm3582, %v3571, %v3116
      %v3638 = vsel %vm3582, %v3573, %v3118
      %v3640 = vsel %vm3582, %v3575, %v3120
      %v3642 = vsel %vm3582, %v3577, %v3122
      %v3644 = vsel %vm3582, %v3579, %v3124
      %v3646 = vsel %vm3582, %v3581, %v3126
      %v3647 = vld [vmem:[%s6] sm:$0xf]
      %v3648 = vld [vmem:[%s6 + $0x4] sm:$0xf]
      %v3649 = vld [vmem:[%s6 + $0x8] sm:$0xf]
      %v3650 = vld [vmem:[%s6 + $0xc] sm:$0xf]
      %v3651 = vld [vmem:[%s6 + $0x10] sm:$0xf]
      %v3652 = vld [vmem:[%s6 + $0x14] sm:$0xf]
      %v3653 = vld [vmem:[%s6 + $0x18] sm:$0xf]
      %v3654 = vld [vmem:[%s6 + $0x1c] sm:$0xf]
      %v3655 = vld [vmem:[%s6 + $0x20] sm:$0xf]
      %v3656 = vld [vmem:[%s7] sm:$0x1]
      %v3658 = vlaneseq
      %v3659 = vshrl.u32 %v3658, 7
      %v3660 = vsub.s32 0, %v3659
      %v3661 = vrot.slane %v3656, %v3660
      %v3672 = vunpack.c.l.b16 %v3647
      %v3673 = vunpack.c.l.b16 %v3648
      %v3674 = vunpack.c.l.b16 %v3649
      %v3675 = vunpack.c.l.b16 %v3650
      %v3676 = vunpack.c.l.b16 %v3651
      %v3677 = vunpack.c.l.b16 %v3652
      %v3678 = vunpack.c.l.b16 %v3653
      %v3679 = vunpack.c.l.b16 %v3654
      %v3680 = vunpack.c.l.b16 %v3655
      %v3681 = vpack.c.b16 %v3673, %v3672
      %v3682 = vpack.c.b16 %v3675, %v3674
      %v3683 = vpack.c.b16 %v3677, %v3676
      %v3684 = vpack.c.b16 %v3679, %v3678
      %v3685 = vpack.c.b16 %v3680, %v3680
      %vm3690 = vcmask 588800
      %v3691 = vsel %vm3690, %v3584, 0
      %v3693 = vsel %vm3690, %v3586, 0
      %v3695 = vsel %vm3690, %v3588, 0
      %v3697 = vsel %vm3690, %v3590, 0
      %v3699 = vsel %vm3690, %v3592, 0
      %v3701 = vsel %vm3690, %v3594, 0
      %v3703 = vsel %vm3690, %v3596, 0
      %v3705 = vsel %vm3690, %v3598, 0
      %v3707 = vsel %vm3690, %v3600, 0
      %v3709 = vsel %vm3690, %v3602, 0
      %v3711 = vsel %vm3690, %v3604, 0
      %v3713 = vsel %vm3690, %v3606, 0
      %v3715 = vsel %vm3690, %v3608, 0
      %v3717 = vsel %vm3690, %v3610, 0
      %v3719 = vsel %vm3690, %v3612, 0
      %v3721 = vsel %vm3690, %v3614, 0
      %v3723 = vsel %vm3690, %v3616, 0
      %v3725 = vsel %vm3690, %v3618, 0
      %v3727 = vsel %vm3690, %v3620, 0
      %v3729 = vsel %vm3690, %v3622, 0
      %v3731 = vsel %vm3690, %v3624, 0
      %v3733 = vsel %vm3690, %v3626, 0
      %v3735 = vsel %vm3690, %v3628, 0
      %v3737 = vsel %vm3690, %v3630, 0
      %v3739 = vsel %vm3690, %v3632, 0
      %v3741 = vsel %vm3690, %v3634, 0
      %v3743 = vsel %vm3690, %v3636, 0
      %v3745 = vsel %vm3690, %v3638, 0
      %v3747 = vsel %vm3690, %v3640, 0
      %v3749 = vsel %vm3690, %v3642, 0
      %v3751 = vsel %vm3690, %v3644, 0
      %v3753 = vsel %vm3690, %v3646, 0
      %vm3755 = vcmask 1043456
      %v3757 = vsel %vm3755, %v3685, 0
      %3759 = vmatprep.subr.bf16.mxu0 0
      %3760 = vmatpush1.bf16.msra.mxu0 0
      %3761 = vmatprep.subr.bf16.mxu0 0
      %3762 = vmatpush1.bf16.msra.mxu0 0
      %3763 = vmatprep.subr.bf16.mxu0 0
      %3764 = vmatpush1.bf16.msra.mxu0 0
      %3765 = vmatprep.subr.bf16.mxu0 0
      %3766 = vmatpush1.bf16.msra.mxu0 %v3757
      %3767 = vmatprep.subr.bf16.mxu0 0
      %3768 = vmatpush1.bf16.msra.mxu0 %v3684
      %3769 = vmatprep.subr.bf16.mxu0 0
      %3770 = vmatpush1.bf16.msra.mxu0 %v3683
      %3771 = vmatprep.subr.bf16.mxu0 0
      %3772 = vmatpush1.bf16.msra.mxu0 %v3682
      %3773 = vmatprep.subr.bf16.mxu0 0
      %3774 = vmatpush1.bf16.msra.mxu0 %v3681
      %3775 = vmatprep.subr.bf16.mxu0 0
      %3776 = vmatpush2.bf16.msra.mxu0 0
      %3777 = vmatprep.subr.bf16.mxu0 0
      %3778 = vmatpush2.bf16.msra.mxu0 0
      %3779 = vmatprep.subr.bf16.mxu0 0
      %3780 = vmatpush2.bf16.msra.mxu0 0
      %3781 = vmatprep.subr.bf16.mxu0 0
      %3782 = vmatpush2.bf16.msra.mxu0 0
      %3783 = vmatprep.subr.bf16.mxu0 0
      %3784 = vmatpush2.bf16.msra.mxu0 0
      %3785 = vmatprep.subr.bf16.mxu0 0
      %3786 = vmatpush2.bf16.msra.mxu0 0
      %3787 = vmatprep.subr.bf16.mxu0 0
      %3788 = vmatpush2.bf16.msra.mxu0 0
      %3789 = vmatprep.subr.bf16.mxu0 0
      %3790 = vmatpush2.bf16.msra.mxu0 0
      %3791 = vmatprep.mubr.bf16.mxu0 0
      %3792 = vmatmul.mubr.bf16.gmra.mxu0 %v3691
      %v3793 = vpop.f32.mrf.mxu0
      %v3794 = vadd.f32 %v3661, %v3793
      %v3795 = vpop.f32.mrf.mxu0
      %v3796 = vpop.f32.mrf.mxu0
      %v3797 = vadd.f32 %v3661, %v3796
      %v3798 = vpop.f32.mrf.mxu0
      %3799 = vmatprep.mubr.bf16.mxu0 0
      %3800 = vmatmul.mubr.bf16.gmra.mxu0 %v3693
      %v3801 = vpop.f32.mrf.mxu0
      %v3802 = vadd.f32 %v3661, %v3801
      %v3803 = vpop.f32.mrf.mxu0
      %v3804 = vpop.f32.mrf.mxu0
      %v3805 = vadd.f32 %v3661, %v3804
      %v3806 = vpop.f32.mrf.mxu0
      %3807 = vmatprep.mubr.bf16.mxu0 0
      %3808 = vmatmul.mubr.bf16.gmra.mxu0 %v3695
      %v3809 = vpop.f32.mrf.mxu0
      %v3810 = vadd.f32 %v3661, %v3809
      %v3811 = vpop.f32.mrf.mxu0
      %v3812 = vpop.f32.mrf.mxu0
      %v3813 = vadd.f32 %v3661, %v3812
      %v3814 = vpop.f32.mrf.mxu0
      %3815 = vmatprep.mubr.bf16.mxu0 0
      %3816 = vmatmul.mubr.bf16.gmra.mxu0 %v3697
      %v3817 = vpop.f32.mrf.mxu0
      %v3818 = vadd.f32 %v3661, %v3817
      %v3819 = vpop.f32.mrf.mxu0
      %v3820 = vpop.f32.mrf.mxu0
      %v3821 = vadd.f32 %v3661, %v3820
      %v3822 = vpop.f32.mrf.mxu0
      %3823 = vmatprep.mubr.bf16.mxu0 0
      %3824 = vmatmul.mubr.bf16.gmra.mxu0 %v3699
      %v3825 = vpop.f32.mrf.mxu0
      %v3826 = vadd.f32 %v3661, %v3825
      %v3827 = vpop.f32.mrf.mxu0
      %v3828 = vpop.f32.mrf.mxu0
      %v3829 = vadd.f32 %v3661, %v3828
      %v3830 = vpop.f32.mrf.mxu0
      %3831 = vmatprep.mubr.bf16.mxu0 0
      %3832 = vmatmul.mubr.bf16.gmra.mxu0 %v3701
      %v3833 = vpop.f32.mrf.mxu0
      %v3834 = vadd.f32 %v3661, %v3833
      %v3835 = vpop.f32.mrf.mxu0
      %v3836 = vpop.f32.mrf.mxu0
      %v3837 = vadd.f32 %v3661, %v3836
      %v3838 = vpop.f32.mrf.mxu0
      %3839 = vmatprep.mubr.bf16.mxu0 0
      %3840 = vmatmul.mubr.bf16.gmra.mxu0 %v3703
      %v3841 = vpop.f32.mrf.mxu0
      %v3842 = vadd.f32 %v3661, %v3841
      %v3843 = vpop.f32.mrf.mxu0
      %v3844 = vpop.f32.mrf.mxu0
      %v3845 = vadd.f32 %v3661, %v3844
      %v3846 = vpop.f32.mrf.mxu0
      %3847 = vmatprep.mubr.bf16.mxu0 0
      %3848 = vmatmul.mubr.bf16.gmra.mxu0 %v3705
      %v3849 = vpop.f32.mrf.mxu0
      %v3850 = vadd.f32 %v3661, %v3849
      %v3851 = vpop.f32.mrf.mxu0
      %v3852 = vpop.f32.mrf.mxu0
      %v3853 = vadd.f32 %v3661, %v3852
      %v3854 = vpop.f32.mrf.mxu0
      %3855 = vmatprep.mubr.bf16.mxu0 0
      %3856 = vmatmul.mubr.bf16.gmra.mxu0 %v3707
      %v3857 = vpop.f32.mrf.mxu0
      %v3858 = vadd.f32 %v3661, %v3857
      %v3859 = vpop.f32.mrf.mxu0
      %v3860 = vpop.f32.mrf.mxu0
      %v3861 = vadd.f32 %v3661, %v3860
      %v3862 = vpop.f32.mrf.mxu0
      %3863 = vmatprep.mubr.bf16.mxu0 0
      %3864 = vmatmul.mubr.bf16.gmra.mxu0 %v3709
      %v3865 = vpop.f32.mrf.mxu0
      %v3866 = vadd.f32 %v3661, %v3865
      %v3867 = vpop.f32.mrf.mxu0
      %v3868 = vpop.f32.mrf.mxu0
      %v3869 = vadd.f32 %v3661, %v3868
      %v3870 = vpop.f32.mrf.mxu0
      %3871 = vmatprep.mubr.bf16.mxu0 0
      %3872 = vmatmul.mubr.bf16.gmra.mxu0 %v3711
      %v3873 = vpop.f32.mrf.mxu0
      %v3874 = vadd.f32 %v3661, %v3873
      %v3875 = vpop.f32.mrf.mxu0
      %v3876 = vpop.f32.mrf.mxu0
      %v3877 = vadd.f32 %v3661, %v3876
      %v3878 = vpop.f32.mrf.mxu0
      %3879 = vmatprep.mubr.bf16.mxu0 0
      %3880 = vmatmul.mubr.bf16.gmra.mxu0 %v3713
      %v3881 = vpop.f32.mrf.mxu0
      %v3882 = vadd.f32 %v3661, %v3881
      %v3883 = vpop.f32.mrf.mxu0
      %v3884 = vpop.f32.mrf.mxu0
      %v3885 = vadd.f32 %v3661, %v3884
      %v3886 = vpop.f32.mrf.mxu0
      %3887 = vmatprep.mubr.bf16.mxu0 0
      %3888 = vmatmul.mubr.bf16.gmra.mxu0 %v3715
      %v3889 = vpop.f32.mrf.mxu0
      %v3890 = vadd.f32 %v3661, %v3889
      %v3891 = vpop.f32.mrf.mxu0
      %v3892 = vpop.f32.mrf.mxu0
      %v3893 = vadd.f32 %v3661, %v3892
      %v3894 = vpop.f32.mrf.mxu0
      %3895 = vmatprep.mubr.bf16.mxu0 0
      %3896 = vmatmul.mubr.bf16.gmra.mxu0 %v3717
      %v3897 = vpop.f32.mrf.mxu0
      %v3898 = vadd.f32 %v3661, %v3897
      %v3899 = vpop.f32.mrf.mxu0
      %v3900 = vpop.f32.mrf.mxu0
      %v3901 = vadd.f32 %v3661, %v3900
      %v3902 = vpop.f32.mrf.mxu0
      %3903 = vmatprep.mubr.bf16.mxu0 0
      %3904 = vmatmul.mubr.bf16.gmra.mxu0 %v3719
      %v3905 = vpop.f32.mrf.mxu0
      %v3906 = vadd.f32 %v3661, %v3905
      %v3907 = vpop.f32.mrf.mxu0
      %v3908 = vpop.f32.mrf.mxu0
      %v3909 = vadd.f32 %v3661, %v3908
      %v3910 = vpop.f32.mrf.mxu0
      %3911 = vmatprep.mubr.bf16.mxu0 0
      %3912 = vmatmul.mubr.bf16.gmra.mxu0 %v3721
      %v3913 = vpop.f32.mrf.mxu0
      %v3914 = vadd.f32 %v3661, %v3913
      %v3915 = vpop.f32.mrf.mxu0
      %v3916 = vpop.f32.mrf.mxu0
      %v3917 = vadd.f32 %v3661, %v3916
      %v3918 = vpop.f32.mrf.mxu0
      %3919 = vmatprep.mubr.bf16.mxu0 0
      %3920 = vmatmul.mubr.bf16.gmra.mxu0 %v3723
      %v3921 = vpop.f32.mrf.mxu0
      %v3922 = vadd.f32 %v3661, %v3921
      %v3923 = vpop.f32.mrf.mxu0
      %v3924 = vpop.f32.mrf.mxu0
      %v3925 = vadd.f32 %v3661, %v3924
      %v3926 = vpop.f32.mrf.mxu0
      %3927 = vmatprep.mubr.bf16.mxu0 0
      %3928 = vmatmul.mubr.bf16.gmra.mxu0 %v3725
      %v3929 = vpop.f32.mrf.mxu0
      %v3930 = vadd.f32 %v3661, %v3929
      %v3931 = vpop.f32.mrf.mxu0
      %v3932 = vpop.f32.mrf.mxu0
      %v3933 = vadd.f32 %v3661, %v3932
      %v3934 = vpop.f32.mrf.mxu0
      %3935 = vmatprep.mubr.bf16.mxu0 0
      %3936 = vmatmul.mubr.bf16.gmra.mxu0 %v3727
      %v3937 = vpop.f32.mrf.mxu0
      %v3938 = vadd.f32 %v3661, %v3937
      %v3939 = vpop.f32.mrf.mxu0
      %v3940 = vpop.f32.mrf.mxu0
      %v3941 = vadd.f32 %v3661, %v3940
      %v3942 = vpop.f32.mrf.mxu0
      %3943 = vmatprep.mubr.bf16.mxu0 0
      %3944 = vmatmul.mubr.bf16.gmra.mxu0 %v3729
      %v3945 = vpop.f32.mrf.mxu0
      %v3946 = vadd.f32 %v3661, %v3945
      %v3947 = vpop.f32.mrf.mxu0
      %v3948 = vpop.f32.mrf.mxu0
      %v3949 = vadd.f32 %v3661, %v3948
      %v3950 = vpop.f32.mrf.mxu0
      %3951 = vmatprep.mubr.bf16.mxu0 0
      %3952 = vmatmul.mubr.bf16.gmra.mxu0 %v3731
      %v3953 = vpop.f32.mrf.mxu0
      %v3954 = vadd.f32 %v3661, %v3953
      %v3955 = vpop.f32.mrf.mxu0
      %v3956 = vpop.f32.mrf.mxu0
      %v3957 = vadd.f32 %v3661, %v3956
      %v3958 = vpop.f32.mrf.mxu0
      %3959 = vmatprep.mubr.bf16.mxu0 0
      %3960 = vmatmul.mubr.bf16.gmra.mxu0 %v3733
      %v3961 = vpop.f32.mrf.mxu0
      %v3962 = vadd.f32 %v3661, %v3961
      %v3963 = vpop.f32.mrf.mxu0
      %v3964 = vpop.f32.mrf.mxu0
      %v3965 = vadd.f32 %v3661, %v3964
      %v3966 = vpop.f32.mrf.mxu0
      %3967 = vmatprep.mubr.bf16.mxu0 0
      %3968 = vmatmul.mubr.bf16.gmra.mxu0 %v3735
      %v3969 = vpop.f32.mrf.mxu0
      %v3970 = vadd.f32 %v3661, %v3969
      %v3971 = vpop.f32.mrf.mxu0
      %v3972 = vpop.f32.mrf.mxu0
      %v3973 = vadd.f32 %v3661, %v3972
      %v3974 = vpop.f32.mrf.mxu0
      %3975 = vmatprep.mubr.bf16.mxu0 0
      %3976 = vmatmul.mubr.bf16.gmra.mxu0 %v3737
      %v3977 = vpop.f32.mrf.mxu0
      %v3978 = vadd.f32 %v3661, %v3977
      %v3979 = vpop.f32.mrf.mxu0
      %v3980 = vpop.f32.mrf.mxu0
      %v3981 = vadd.f32 %v3661, %v3980
      %v3982 = vpop.f32.mrf.mxu0
      %3983 = vmatprep.mubr.bf16.mxu0 0
      %3984 = vmatmul.mubr.bf16.gmra.mxu0 %v3739
      %v3985 = vpop.f32.mrf.mxu0
      %v3986 = vadd.f32 %v3661, %v3985
      %v3987 = vpop.f32.mrf.mxu0
      %v3988 = vpop.f32.mrf.mxu0
      %v3989 = vadd.f32 %v3661, %v3988
      %v3990 = vpop.f32.mrf.mxu0
      %3991 = vmatprep.mubr.bf16.mxu0 0
      %3992 = vmatmul.mubr.bf16.gmra.mxu0 %v3741
      %v3993 = vpop.f32.mrf.mxu0
      %v3994 = vadd.f32 %v3661, %v3993
      %v3995 = vpop.f32.mrf.mxu0
      %v3996 = vpop.f32.mrf.mxu0
      %v3997 = vadd.f32 %v3661, %v3996
      %v3998 = vpop.f32.mrf.mxu0
      %3999 = vmatprep.mubr.bf16.mxu0 0
      %4000 = vmatmul.mubr.bf16.gmra.mxu0 %v3743
      %v4001 = vpop.f32.mrf.mxu0
      %v4002 = vadd.f32 %v3661, %v4001
      %v4003 = vpop.f32.mrf.mxu0
      %v4004 = vpop.f32.mrf.mxu0
      %v4005 = vadd.f32 %v3661, %v4004
      %v4006 = vpop.f32.mrf.mxu0
      %4007 = vmatprep.mubr.bf16.mxu0 0
      %4008 = vmatmul.mubr.bf16.gmra.mxu0 %v3745
      %v4009 = vpop.f32.mrf.mxu0
      %v4010 = vadd.f32 %v3661, %v4009
      %v4011 = vpop.f32.mrf.mxu0
      %v4012 = vpop.f32.mrf.mxu0
      %v4013 = vadd.f32 %v3661, %v4012
      %v4014 = vpop.f32.mrf.mxu0
      %4015 = vmatprep.mubr.bf16.mxu0 0
      %4016 = vmatmul.mubr.bf16.gmra.mxu0 %v3747
      %v4017 = vpop.f32.mrf.mxu0
      %v4018 = vadd.f32 %v3661, %v4017
      %v4019 = vpop.f32.mrf.mxu0
      %v4020 = vpop.f32.mrf.mxu0
      %v4021 = vadd.f32 %v3661, %v4020
      %v4022 = vpop.f32.mrf.mxu0
      %4023 = vmatprep.mubr.bf16.mxu0 0
      %4024 = vmatmul.mubr.bf16.gmra.mxu0 %v3749
      %v4025 = vpop.f32.mrf.mxu0
      %v4026 = vadd.f32 %v3661, %v4025
      %v4027 = vpop.f32.mrf.mxu0
      %v4028 = vpop.f32.mrf.mxu0
      %v4029 = vadd.f32 %v3661, %v4028
      %v4030 = vpop.f32.mrf.mxu0
      %4031 = vmatprep.mubr.bf16.mxu0 0
      %4032 = vmatmul.mubr.bf16.gmra.mxu0 %v3751
      %v4033 = vpop.f32.mrf.mxu0
      %v4034 = vadd.f32 %v3661, %v4033
      %v4035 = vpop.f32.mrf.mxu0
      %v4036 = vpop.f32.mrf.mxu0
      %v4037 = vadd.f32 %v3661, %v4036
      %v4038 = vpop.f32.mrf.mxu0
      %4039 = vmatprep.mubr.bf16.mxu0 0
      %4040 = vmatmul.mubr.bf16.gmra.mxu0 %v3753
      %v4041 = vpop.f32.mrf.mxu0
      %v4042 = vadd.f32 %v3661, %v4041
      %v4043 = vpop.f32.mrf.mxu0
      %v4044 = vpop.f32.mrf.mxu0
      %v4045 = vadd.f32 %v3661, %v4044
      %v4046 = vpop.f32.mrf.mxu0
      %4047 = vdwg.mxu0
      %v4048 = vmax.f32 %v3794, 0.0
      %v4049 = vmax.f32 %v3797, 0.0
      %v4050 = vmax.f32 %v3802, 0.0
      %v4051 = vmax.f32 %v3805, 0.0
      %v4052 = vmax.f32 %v3810, 0.0
      %v4053 = vmax.f32 %v3813, 0.0
      %v4054 = vmax.f32 %v3818, 0.0
      %v4055 = vmax.f32 %v3821, 0.0
      %v4056 = vmax.f32 %v3826, 0.0
      %v4057 = vmax.f32 %v3829, 0.0
      %v4058 = vmax.f32 %v3834, 0.0
      %v4059 = vmax.f32 %v3837, 0.0
      %v4060 = vmax.f32 %v3842, 0.0
      %v4061 = vmax.f32 %v3845, 0.0
      %v4062 = vmax.f32 %v3850, 0.0
      %v4063 = vmax.f32 %v3853, 0.0
      %v4064 = vmax.f32 %v3858, 0.0
      %v4065 = vmax.f32 %v3861, 0.0
      %v4066 = vmax.f32 %v3866, 0.0
      %v4067 = vmax.f32 %v3869, 0.0
      %v4068 = vmax.f32 %v3874, 0.0
      %v4069 = vmax.f32 %v3877, 0.0
      %v4070 = vmax.f32 %v3882, 0.0
      %v4071 = vmax.f32 %v3885, 0.0
      %v4072 = vmax.f32 %v3890, 0.0
      %v4073 = vmax.f32 %v3893, 0.0
      %v4074 = vmax.f32 %v3898, 0.0
      %v4075 = vmax.f32 %v3901, 0.0
      %v4076 = vmax.f32 %v3906, 0.0
      %v4077 = vmax.f32 %v3909, 0.0
      %v4078 = vmax.f32 %v3914, 0.0
      %v4079 = vmax.f32 %v3917, 0.0
      %v4080 = vmax.f32 %v3922, 0.0
      %v4081 = vmax.f32 %v3925, 0.0
      %v4082 = vmax.f32 %v3930, 0.0
      %v4083 = vmax.f32 %v3933, 0.0
      %v4084 = vmax.f32 %v3938, 0.0
      %v4085 = vmax.f32 %v3941, 0.0
      %v4086 = vmax.f32 %v3946, 0.0
      %v4087 = vmax.f32 %v3949, 0.0
      %v4088 = vmax.f32 %v3954, 0.0
      %v4089 = vmax.f32 %v3957, 0.0
      %v4090 = vmax.f32 %v3962, 0.0
      %v4091 = vmax.f32 %v3965, 0.0
      %v4092 = vmax.f32 %v3970, 0.0
      %v4093 = vmax.f32 %v3973, 0.0
      %v4094 = vmax.f32 %v3978, 0.0
      %v4095 = vmax.f32 %v3981, 0.0
      %v4096 = vmax.f32 %v3986, 0.0
      %v4097 = vmax.f32 %v3989, 0.0
      %v4098 = vmax.f32 %v3994, 0.0
      %v4099 = vmax.f32 %v3997, 0.0
      %v4100 = vmax.f32 %v4002, 0.0
      %v4101 = vmax.f32 %v4005, 0.0
      %v4102 = vmax.f32 %v4010, 0.0
      %v4103 = vmax.f32 %v4013, 0.0
      %v4104 = vmax.f32 %v4018, 0.0
      %v4105 = vmax.f32 %v4021, 0.0
      %v4106 = vmax.f32 %v4026, 0.0
      %v4107 = vmax.f32 %v4029, 0.0
      %v4108 = vmax.f32 %v4034, 0.0
      %v4109 = vmax.f32 %v4037, 0.0
      %v4110 = vmax.f32 %v4042, 0.0
      %v4111 = vmax.f32 %v4045, 0.0
      %v4112 = vpack.c.bf16 %v4049, %v4048
      %v4113 = vpack.c.bf16 %v4051, %v4050
      %v4114 = vpack.c.bf16 %v4053, %v4052
      %v4115 = vpack.c.bf16 %v4055, %v4054
      %v4116 = vpack.c.bf16 %v4057, %v4056
      %v4117 = vpack.c.bf16 %v4059, %v4058
      %v4118 = vpack.c.bf16 %v4061, %v4060
      %v4119 = vpack.c.bf16 %v4063, %v4062
      %v4120 = vpack.c.bf16 %v4065, %v4064
      %v4121 = vpack.c.bf16 %v4067, %v4066
      %v4122 = vpack.c.bf16 %v4069, %v4068
      %v4123 = vpack.c.bf16 %v4071, %v4070
      %v4124 = vpack.c.bf16 %v4073, %v4072
      %v4125 = vpack.c.bf16 %v4075, %v4074
      %v4126 = vpack.c.bf16 %v4077, %v4076
      %v4127 = vpack.c.bf16 %v4079, %v4078
      %v4128 = vpack.c.bf16 %v4081, %v4080
      %v4129 = vpack.c.bf16 %v4083, %v4082
      %v4130 = vpack.c.bf16 %v4085, %v4084
      %v4131 = vpack.c.bf16 %v4087, %v4086
      %v4132 = vpack.c.bf16 %v4089, %v4088
      %v4133 = vpack.c.bf16 %v4091, %v4090
      %v4134 = vpack.c.bf16 %v4093, %v4092
      %v4135 = vpack.c.bf16 %v4095, %v4094
      %v4136 = vpack.c.bf16 %v4097, %v4096
      %v4137 = vpack.c.bf16 %v4099, %v4098
      %v4138 = vpack.c.bf16 %v4101, %v4100
      %v4139 = vpack.c.bf16 %v4103, %v4102
      %v4140 = vpack.c.bf16 %v4105, %v4104
      %v4141 = vpack.c.bf16 %v4107, %v4106
      %v4142 = vpack.c.bf16 %v4109, %v4108
      %v4143 = vpack.c.bf16 %v4111, %v4110
      %v4176 = vunpack.c.l.b16 %v4112
      %v4177 = vunpack.c.h.b16 %v4112
      %v4178 = vunpack.c.l.b16 %v4113
      %v4179 = vunpack.c.h.b16 %v4113
      %v4180 = vunpack.c.l.b16 %v4114
      %v4181 = vunpack.c.h.b16 %v4114
      %v4182 = vunpack.c.l.b16 %v4115
      %v4183 = vunpack.c.h.b16 %v4115
      %v4184 = vunpack.c.l.b16 %v4116
      %v4185 = vunpack.c.h.b16 %v4116
      %v4186 = vunpack.c.l.b16 %v4117
      %v4187 = vunpack.c.h.b16 %v4117
      %v4188 = vunpack.c.l.b16 %v4118
      %v4189 = vunpack.c.h.b16 %v4118
      %v4190 = vunpack.c.l.b16 %v4119
      %v4191 = vunpack.c.h.b16 %v4119
      %v4192 = vunpack.c.l.b16 %v4120
      %v4193 = vunpack.c.h.b16 %v4120
      %v4194 = vunpack.c.l.b16 %v4121
      %v4195 = vunpack.c.h.b16 %v4121
      %v4196 = vunpack.c.l.b16 %v4122
      %v4197 = vunpack.c.h.b16 %v4122
      %v4198 = vunpack.c.l.b16 %v4123
      %v4199 = vunpack.c.h.b16 %v4123
      %v4200 = vunpack.c.l.b16 %v4124
      %v4201 = vunpack.c.h.b16 %v4124
      %v4202 = vunpack.c.l.b16 %v4125
      %v4203 = vunpack.c.h.b16 %v4125
      %v4204 = vunpack.c.l.b16 %v4126
      %v4205 = vunpack.c.h.b16 %v4126
      %v4206 = vunpack.c.l.b16 %v4127
      %v4207 = vunpack.c.h.b16 %v4127
      %v4208 = vunpack.c.l.b16 %v4128
      %v4209 = vunpack.c.h.b16 %v4128
      %v4210 = vunpack.c.l.b16 %v4129
      %v4211 = vunpack.c.h.b16 %v4129
      %v4212 = vunpack.c.l.b16 %v4130
      %v4213 = vunpack.c.h.b16 %v4130
      %v4214 = vunpack.c.l.b16 %v4131
      %v4215 = vunpack.c.h.b16 %v4131
      %v4216 = vunpack.c.l.b16 %v4132
      %v4217 = vunpack.c.h.b16 %v4132
      %v4218 = vunpack.c.l.b16 %v4133
      %v4219 = vunpack.c.h.b16 %v4133
      %v4220 = vunpack.c.l.b16 %v4134
      %v4221 = vunpack.c.h.b16 %v4134
      %v4222 = vunpack.c.l.b16 %v4135
      %v4223 = vunpack.c.h.b16 %v4135
      %v4224 = vunpack.c.l.b16 %v4136
      %v4225 = vunpack.c.h.b16 %v4136
      %v4226 = vunpack.c.l.b16 %v4137
      %v4227 = vunpack.c.h.b16 %v4137
      %v4228 = vunpack.c.l.b16 %v4138
      %v4229 = vunpack.c.h.b16 %v4138
      %v4230 = vunpack.c.l.b16 %v4139
      %v4231 = vunpack.c.h.b16 %v4139
      %v4232 = vunpack.c.l.b16 %v4140
      %v4233 = vunpack.c.h.b16 %v4140
      %v4234 = vunpack.c.l.b16 %v4141
      %v4235 = vunpack.c.h.b16 %v4141
      %v4236 = vunpack.c.l.b16 %v4142
      %v4237 = vunpack.c.h.b16 %v4142
      %v4238 = vunpack.c.l.b16 %v4143
      %v4239 = vunpack.c.h.b16 %v4143
      %v4240 = vpack.c.b16 %v4176, %v4176
      %v4241 = vpack.c.b16 %v4177, %v4177
      %v4242 = vpack.c.b16 %v4178, %v4178
      %v4243 = vpack.c.b16 %v4179, %v4179
      %v4244 = vpack.c.b16 %v4180, %v4180
      %v4245 = vpack.c.b16 %v4181, %v4181
      %v4246 = vpack.c.b16 %v4182, %v4182
      %v4247 = vpack.c.b16 %v4183, %v4183
      %v4248 = vpack.c.b16 %v4184, %v4184
      %v4249 = vpack.c.b16 %v4185, %v4185
      %v4250 = vpack.c.b16 %v4186, %v4186
      %v4251 = vpack.c.b16 %v4187, %v4187
      %v4252 = vpack.c.b16 %v4188, %v4188
      %v4253 = vpack.c.b16 %v4189, %v4189
      %v4254 = vpack.c.b16 %v4190, %v4190
      %v4255 = vpack.c.b16 %v4191, %v4191
      %v4256 = vpack.c.b16 %v4192, %v4192
      %v4257 = vpack.c.b16 %v4193, %v4193
      %v4258 = vpack.c.b16 %v4194, %v4194
      %v4259 = vpack.c.b16 %v4195, %v4195
      %v4260 = vpack.c.b16 %v4196, %v4196
      %v4261 = vpack.c.b16 %v4197, %v4197
      %v4262 = vpack.c.b16 %v4198, %v4198
      %v4263 = vpack.c.b16 %v4199, %v4199
      %v4264 = vpack.c.b16 %v4200, %v4200
      %v4265 = vpack.c.b16 %v4201, %v4201
      %v4266 = vpack.c.b16 %v4202, %v4202
      %v4267 = vpack.c.b16 %v4203, %v4203
      %v4268 = vpack.c.b16 %v4204, %v4204
      %v4269 = vpack.c.b16 %v4205, %v4205
      %v4270 = vpack.c.b16 %v4206, %v4206
      %v4271 = vpack.c.b16 %v4207, %v4207
      %v4272 = vpack.c.b16 %v4208, %v4208
      %v4273 = vpack.c.b16 %v4209, %v4209
      %v4274 = vpack.c.b16 %v4210, %v4210
      %v4275 = vpack.c.b16 %v4211, %v4211
      %v4276 = vpack.c.b16 %v4212, %v4212
      %v4277 = vpack.c.b16 %v4213, %v4213
      %v4278 = vpack.c.b16 %v4214, %v4214
      %v4279 = vpack.c.b16 %v4215, %v4215
      %v4280 = vpack.c.b16 %v4216, %v4216
      %v4281 = vpack.c.b16 %v4217, %v4217
      %v4282 = vpack.c.b16 %v4218, %v4218
      %v4283 = vpack.c.b16 %v4219, %v4219
      %v4284 = vpack.c.b16 %v4220, %v4220
      %v4285 = vpack.c.b16 %v4221, %v4221
      %v4286 = vpack.c.b16 %v4222, %v4222
      %v4287 = vpack.c.b16 %v4223, %v4223
      %v4288 = vpack.c.b16 %v4224, %v4224
      %v4289 = vpack.c.b16 %v4225, %v4225
      %v4290 = vpack.c.b16 %v4226, %v4226
      %v4291 = vpack.c.b16 %v4227, %v4227
      %v4292 = vpack.c.b16 %v4228, %v4228
      %v4293 = vpack.c.b16 %v4229, %v4229
      %v4294 = vpack.c.b16 %v4230, %v4230
      %v4295 = vpack.c.b16 %v4231, %v4231
      %v4296 = vpack.c.b16 %v4232, %v4232
      %v4297 = vpack.c.b16 %v4233, %v4233
      %v4298 = vpack.c.b16 %v4234, %v4234
      %v4299 = vpack.c.b16 %v4235, %v4235
      %v4300 = vpack.c.b16 %v4236, %v4236
      %v4301 = vpack.c.b16 %v4237, %v4237
      %v4302 = vpack.c.b16 %v4238, %v4238
      %v4303 = vpack.c.b16 %v4239, %v4239
      %vm4368 = vcmask 60416
      %4369 = vst.msk [vmem:[%s661] sm:$0xf] %vm4368, %v4240
      %4370 = vst.msk [vmem:[%s661 + $0x4] sm:$0xf] %vm4368, %v4241
      %4371 = vst.msk [vmem:[%s661 + $0x8] sm:$0xf] %vm4368, %v4242
      %4372 = vst.msk [vmem:[%s661 + $0xc] sm:$0xf] %vm4368, %v4243
      %4373 = vst.msk [vmem:[%s661 + $0x10] sm:$0xf] %vm4368, %v4244
      %4374 = vst.msk [vmem:[%s661 + $0x14] sm:$0xf] %vm4368, %v4245
      %4375 = vst.msk [vmem:[%s661 + $0x18] sm:$0xf] %vm4368, %v4246
      %4376 = vst.msk [vmem:[%s661 + $0x1c] sm:$0xf] %vm4368, %v4247
      %4377 = vst.msk [vmem:[%s661 + $0x20] sm:$0xf] %vm4368, %v4248
      %4378 = vst.msk [vmem:[%s661 + $0x24] sm:$0xf] %vm4368, %v4249
      %4379 = vst.msk [vmem:[%s661 + $0x28] sm:$0xf] %vm4368, %v4250
      %4380 = vst.msk [vmem:[%s661 + $0x2c] sm:$0xf] %vm4368, %v4251
      %4381 = vst.msk [vmem:[%s661 + $0x30] sm:$0xf] %vm4368, %v4252
      %4382 = vst.msk [vmem:[%s661 + $0x34] sm:$0xf] %vm4368, %v4253
      %4383 = vst.msk [vmem:[%s661 + $0x38] sm:$0xf] %vm4368, %v4254
      %4384 = vst.msk [vmem:[%s661 + $0x3c] sm:$0xf] %vm4368, %v4255
      %4385 = vst.msk [vmem:[%s661 + $0x40] sm:$0xf] %vm4368, %v4256
      %4386 = vst.msk [vmem:[%s661 + $0x44] sm:$0xf] %vm4368, %v4257
      %4387 = vst.msk [vmem:[%s661 + $0x48] sm:$0xf] %vm4368, %v4258
      %4388 = vst.msk [vmem:[%s661 + $0x4c] sm:$0xf] %vm4368, %v4259
      %4389 = vst.msk [vmem:[%s661 + $0x50] sm:$0xf] %vm4368, %v4260
      %4390 = vst.msk [vmem:[%s661 + $0x54] sm:$0xf] %vm4368, %v4261
      %4391 = vst.msk [vmem:[%s661 + $0x58] sm:$0xf] %vm4368, %v4262
      %4392 = vst.msk [vmem:[%s661 + $0x5c] sm:$0xf] %vm4368, %v4263
      %4393 = vst.msk [vmem:[%s661 + $0x60] sm:$0xf] %vm4368, %v4264
      %4394 = vst.msk [vmem:[%s661 + $0x64] sm:$0xf] %vm4368, %v4265
      %4395 = vst.msk [vmem:[%s661 + $0x68] sm:$0xf] %vm4368, %v4266
      %4396 = vst.msk [vmem:[%s661 + $0x6c] sm:$0xf] %vm4368, %v4267
      %4397 = vst.msk [vmem:[%s661 + $0x70] sm:$0xf] %vm4368, %v4268
      %4398 = vst.msk [vmem:[%s661 + $0x74] sm:$0xf] %vm4368, %v4269
      %4399 = vst.msk [vmem:[%s661 + $0x78] sm:$0xf] %vm4368, %v4270
      %4400 = vst.msk [vmem:[%s661 + $0x7c] sm:$0xf] %vm4368, %v4271
      %4401 = vst.msk [vmem:[%s661 + $0x80] sm:$0xf] %vm4368, %v4272
      %4402 = vst.msk [vmem:[%s661 + $0x84] sm:$0xf] %vm4368, %v4273
      %4403 = vst.msk [vmem:[%s661 + $0x88] sm:$0xf] %vm4368, %v4274
      %4404 = vst.msk [vmem:[%s661 + $0x8c] sm:$0xf] %vm4368, %v4275
      %4405 = vst.msk [vmem:[%s661 + $0x90] sm:$0xf] %vm4368, %v4276
      %4406 = vst.msk [vmem:[%s661 + $0x94] sm:$0xf] %vm4368, %v4277
      %4407 = vst.msk [vmem:[%s661 + $0x98] sm:$0xf] %vm4368, %v4278
      %4408 = vst.msk [vmem:[%s661 + $0x9c] sm:$0xf] %vm4368, %v4279
      %4409 = vst.msk [vmem:[%s661 + $0xa0] sm:$0xf] %vm4368, %v4280
      %4410 = vst.msk [vmem:[%s661 + $0xa4] sm:$0xf] %vm4368, %v4281
      %4411 = vst.msk [vmem:[%s661 + $0xa8] sm:$0xf] %vm4368, %v4282
      %4412 = vst.msk [vmem:[%s661 + $0xac] sm:$0xf] %vm4368, %v4283
      %4413 = vst.msk [vmem:[%s661 + $0xb0] sm:$0xf] %vm4368, %v4284
      %4414 = vst.msk [vmem:[%s661 + $0xb4] sm:$0xf] %vm4368, %v4285
      %4415 = vst.msk [vmem:[%s661 + $0xb8] sm:$0xf] %vm4368, %v4286
      %4416 = vst.msk [vmem:[%s661 + $0xbc] sm:$0xf] %vm4368, %v4287
      %4417 = vst.msk [vmem:[%s661 + $0xc0] sm:$0xf] %vm4368, %v4288
      %4418 = vst.msk [vmem:[%s661 + $0xc4] sm:$0xf] %vm4368, %v4289
      %4419 = vst.msk [vmem:[%s661 + $0xc8] sm:$0xf] %vm4368, %v4290
      %4420 = vst.msk [vmem:[%s661 + $0xcc] sm:$0xf] %vm4368, %v4291
      %4421 = vst.msk [vmem:[%s661 + $0xd0] sm:$0xf] %vm4368, %v4292
      %4422 = vst.msk [vmem:[%s661 + $0xd4] sm:$0xf] %vm4368, %v4293
      %4423 = vst.msk [vmem:[%s661 + $0xd8] sm:$0xf] %vm4368, %v4294
      %4424 = vst.msk [vmem:[%s661 + $0xdc] sm:$0xf] %vm4368, %v4295
      %4425 = vst.msk [vmem:[%s661 + $0xe0] sm:$0xf] %vm4368, %v4296
      %4426 = vst.msk [vmem:[%s661 + $0xe4] sm:$0xf] %vm4368, %v4297
      %4427 = vst.msk [vmem:[%s661 + $0xe8] sm:$0xf] %vm4368, %v4298
      %4428 = vst.msk [vmem:[%s661 + $0xec] sm:$0xf] %vm4368, %v4299
      %4429 = vst.msk [vmem:[%s661 + $0xf0] sm:$0xf] %vm4368, %v4300
      %4430 = vst.msk [vmem:[%s661 + $0xf4] sm:$0xf] %vm4368, %v4301
      %4431 = vst.msk [vmem:[%s661 + $0xf8] sm:$0xf] %vm4368, %v4302
      %4432 = vst.msk [vmem:[%s661 + $0xfc] sm:$0xf] %vm4368, %v4303
      %s4433 = smul.u32 32, %s24
      %p4434 = scmp.lt.s32.totalorder %s23, 1
      %s4435 = scalar_select %p4434, %s23, 1
      %p4436 = scmp.lt.s32.totalorder %s4433, 63
      %s4437 = scalar_select %p4436, %s4433, 63
      %s4438 = smul.addr %s4437, 2
      %s4439 = smul.addr %s4435, 128
      %s4440 = sadd.s32 %s4438, %s4439
      %s4441 = smul.addr %s4440, 4
      %s4442 = scalar_lea.vmem %s8, %s4441
      // Predicated region
      $region53: #{conv2d_subsampling_forward.3} parent=51 // pred_check
        %p4443 = pneg %p269
      $region54: #{conv2d_subsampling_forward.3} parent=51 // pred_check_branch
        %4445 = sbr.rel (%p4443) target = $region56
      $region55: #{conv2d_subsampling_forward.3} parent=51 // pred_region
        %s4446 = smul.u32 32, %s24
      $region56: #{conv2d_subsampling_forward.3} parent=51 // pred_fallthru
        _
    $region52: #{conv2d_subsampling_forward.3} parent=5 // pred_fallthru
      _
    %p4447 = scmp.le.s32.totalorder 2, %s14
    // Predicated region
    $region57: #{conv2d_subsampling_forward.3} parent=5 // pred_check
      %p4448 = pneg %p4447
    $region58: #{conv2d_subsampling_forward.3} parent=5 // pred_check_branch
      %4450 = sbr.rel (%p4448) target = $region60
    $region59: #{conv2d_subsampling_forward.3} parent=5 // pred_region
      %s4451 = ssub.s32 %s14, 2
      // Predicated region
      $region61: #{conv2d_subsampling_forward.3} parent=59 // pred_check
        %p4452 = pneg %p275
      $region62: #{conv2d_subsampling_forward.3} parent=59 // pred_check_branch
        %4454 = sbr.rel (%p4452) target = $region64
      $region63: #{conv2d_subsampling_forward.3} parent=59 // pred_region
        %s4455 = smul.u32 32, %s26
        %p4456 = scmp.lt.s32.totalorder %s25, 1
        %s4457 = scalar_select %p4456, %s25, 1
        %p4458 = scmp.lt.s32.totalorder %s4455, 63
        %s4459 = scalar_select %p4458, %s4455, 63
        %s4460 = smul.addr %s4459, 2
        %s4461 = smul.addr %s4457, 128
        %s4462 = sadd.s32 %s4460, %s4461
        %s4463 = smul.addr %s4462, 4
        %s4464 = scalar_lea.vmem %s8, %s4463
      $region64: #{conv2d_subsampling_forward.3} parent=59 // pred_fallthru
        _
    $region60: #{conv2d_subsampling_forward.3} parent=5 // pred_fallthru
      _
  $region6: #{conv2d_subsampling_forward.3} parent=0 // loop_footer
    %s18 = sadd.s32 1, %s14
  $region7: #{conv2d_subsampling_forward.3} parent=0 // loop_footer_branch
    %13 = sbr.rel target = $region3
  $region8: #{conv2d_subsampling_forward.3} parent=0 // loop_exit
    _

// kernel: conv2d_subsampling_forward.4
$region0: #{conv2d_subsampling_forward.4}
  #allocation0 [shape = 'u32[]', space=smem, size = 0x4, offset = 0x4, fixed_abs, tag = 'smem constant byte address 0x4 - core index']
  #allocation1 [shape = 'u32[144,128]{1,0:T(1,128)}', space=vmem, size = 0x12000, scoped, tag = 'internal scratch']
  %s0 = inlined_call_operand.vmem [shape: bf16[2,33,9,8], index: 0, kind: input, shape index: {}, may-alias: {0,4}]
  %s1 = inlined_call_operand.vmem [shape: bf16[2,33,9,8], index: 1, kind: input, shape index: {}, may-alias: {1,5}]
  %s2 = inlined_call_operand.vmem [shape: bf16[2,33,9,8], index: 2, kind: input, shape index: {}]
  %s3 = inlined_call_operand.vmem [shape: bf16[2,33,9,8], index: 3, kind: input, shape index: {}]
  %s4 = inlined_call_operand.vmem [shape: bf16[2,33,9,8], index: 4, kind: input, shape index: {}, may-alias: {0,4}]
  %s5 = inlined_call_operand.vmem [shape: bf16[2,33,9,8], index: 5, kind: input, shape index: {}, may-alias: {1,5}]
  %s6 = inlined_call_operand.vmem [shape: bf16[72,8], index: 6, kind: input, shape index: {}]
  %s7 = inlined_call_operand.vmem [shape: f32[1,8], index: 7, kind: input, shape index: {}]
  %s8 = inlined_call_operand.vmem [shape: bf16[2,32,8,8], index: 8, kind: output, shape index: {}]
  %s9 = sld [smem:[#allocation0]]
  $region65: #{conv2d_subsampling_forward.4} parent=0
    _
  %s11 = ssub.s32 1, %s9
  %s12 = scalar_select 0, %s11, %s9
  loop: start=0, step=1, limit=4
  $region2: #{conv2d_subsampling_forward.4} parent=0 // loop_pre_header
    _
  $region3: #{conv2d_subsampling_forward.4} parent=0 // loop_header
    %s14 = sphi 0, %s18
    %p15 = scmp.ge.s32.totalorder %s14, 4
    %s21 = sphi 0, %s33
    %s22 = sphi 0, %s29
    %s23 = sphi 0, %s21
    %s24 = sphi 0, %s22
    %s25 = sphi 0, %s23
    %s26 = sphi 0, %s24
    %s38 = sphi 0, %s40
    %s41 = sphi 0, %s38
    %s42 = sphi 0, %s41
    %s58 = sphi 0, %s42
    %s66 = sphi 0, %s68
    %s69 = sphi 0, %s66
    %s70 = sphi 0, %s69
    %s86 = sphi 0, %s70
    %s94 = sphi 0, %s96
    %s97 = sphi 0, %s94
    %s98 = sphi 0, %s97
    %s114 = sphi 0, %s98
    %s122 = sphi 0, %s124
    %s125 = sphi 0, %s122
    %s126 = sphi 0, %s125
    %s142 = sphi 0, %s126
    %s154 = sphi 0, %s156
    %s157 = sphi 0, %s154
    %s158 = sphi 0, %s157
    %s174 = sphi 0, %s158
    %s186 = sphi 0, %s188
    %s189 = sphi 0, %s186
    %s190 = sphi 0, %s189
    %s206 = sphi 0, %s190
    %s210 = sphi 0, %s210
    %s212 = sphi 0, %s210
    %s213 = sphi 0, %s212
    %s227 = sphi 0, %s213
    %s231 = sphi 0, %s231
    %s233 = sphi 0, %s231
    %s234 = sphi 0, %s233
    %s248 = sphi 0, %s234
    %s256 = sphi 0, %s258
    %s259 = sphi 0, %s256
    %s260 = sphi 0, %s259
    %s276 = sphi 0, %s260
  $region4: #{conv2d_subsampling_forward.4} parent=0 // loop_header_branch
    %17 = sbr.rel (%p15) target = $region8
  $region5: #{conv2d_subsampling_forward.4} parent=0 // loop_body
    %s19 = ssub.s32 %s14, 1
    %s20 = ssub.s32 %s14, 2
    %s27 = sadd.s32 1, %s22
    %p28 = scmp.ge.s32.totalorder %s27, 1
    %s29 = scalar_select %p28, 0, %s27
    %s30 = sadd.s32 1, %s21
    %s31 = scalar_select %p28, %s30, %s21
    %p32 = scmp.ge.s32.totalorder %s31, 2
    %s33 = scalar_select %p32, 0, %s31
    %s34 = ssub.s32 %s21, %s33
    %s35 = ssub.s32 %s22, %s29
    %s36 = sor.u32 %s34, %s35
    %p37 = scmp.eq.s32.totalorder %s36, 0
    %s39 = sadd.s32 %s38, 1
    %s40 = scalar_select %p37, %s38, %s39
    %p43 = pneg %p37
    %p44 = scmp.eq.s32.totalorder %s14, 1
    %p45 = por %p43, %p44
    %p46 = scmp.ne.s32.totalorder %s38, %s41
    %p47 = scmp.eq.s32.totalorder %s14, 0
    %p48 = por %p46, %p47
    %p49 = scmp.ne.s32.totalorder %s38, %s41
    %p50 = scmp.eq.s32.totalorder %s19, 1
    %p51 = por %p49, %p50
    %p52 = scmp.ne.s32.totalorder %s41, %s42
    %p53 = scmp.eq.s32.totalorder %s19, 0
    %p54 = por %p52, %p53
    %p55 = scmp.ne.s32.totalorder %s41, %s42
    %p56 = scmp.eq.s32.totalorder %s20, 1
    %p57 = por %p55, %p56
    %p59 = scmp.ne.s32.totalorder %s42, %s58
    %p60 = scmp.eq.s32.totalorder %s20, 0
    %p61 = por %p59, %p60
    %s62 = ssub.s32 %s21, %s33
    %s63 = ssub.s32 %s22, %s29
    %s64 = sor.u32 %s62, %s63
    %p65 = scmp.eq.s32.totalorder %s64, 0
    %s67 = sadd.s32 %s66, 1
    %s68 = scalar_select %p65, %s66, %s67
    %p71 = pneg %p65
    %p72 = scmp.eq.s32.totalorder %s14, 1
    %p73 = por %p71, %p72
    %p74 = scmp.ne.s32.totalorder %s66, %s69
    %p75 = scmp.eq.s32.totalorder %s14, 0
    %p76 = por %p74, %p75
    %p77 = scmp.ne.s32.totalorder %s66, %s69
    %p78 = scmp.eq.s32.totalorder %s19, 1
    %p79 = por %p77, %p78
    %p80 = scmp.ne.s32.totalorder %s69, %s70
    %p81 = scmp.eq.s32.totalorder %s19, 0
    %p82 = por %p80, %p81
    %p83 = scmp.ne.s32.totalorder %s69, %s70
    %p84 = scmp.eq.s32.totalorder %s20, 1
    %p85 = por %p83, %p84
    %p87 = scmp.ne.s32.totalorder %s70, %s86
    %p88 = scmp.eq.s32.totalorder %s20, 0
    %p89 = por %p87, %p88
    %s90 = ssub.s32 %s21, %s33
    %s91 = ssub.s32 %s22, %s29
    %s92 = sor.u32 %s90, %s91
    %p93 = scmp.eq.s32.totalorder %s92, 0
    %s95 = sadd.s32 %s94, 1
    %s96 = scalar_select %p93, %s94, %s95
    %p99 = pneg %p93
    %p100 = scmp.eq.s32.totalorder %s14, 1
    %p101 = por %p99, %p100
    %p102 = scmp.ne.s32.totalorder %s94, %s97
    %p103 = scmp.eq.s32.totalorder %s14, 0
    %p104 = por %p102, %p103
    %p105 = scmp.ne.s32.totalorder %s94, %s97
    %p106 = scmp.eq.s32.totalorder %s19, 1
    %p107 = por %p105, %p106
    %p108 = scmp.ne.s32.totalorder %s97, %s98
    %p109 = scmp.eq.s32.totalorder %s19, 0
    %p110 = por %p108, %p109
    %p111 = scmp.ne.s32.totalorder %s97, %s98
    %p112 = scmp.eq.s32.totalorder %s20, 1
    %p113 = por %p111, %p112
    %p115 = scmp.ne.s32.totalorder %s98, %s114
    %p116 = scmp.eq.s32.totalorder %s20, 0
    %p117 = por %p115, %p116
    %s118 = ssub.s32 %s21, %s33
    %s119 = ssub.s32 %s22, %s29
    %s120 = sor.u32 %s118, %s119
    %p121 = scmp.eq.s32.totalorder %s120, 0
    %s123 = sadd.s32 %s122, 1
    %s124 = scalar_select %p121, %s122, %s123
    %p127 = pneg %p121
    %p128 = scmp.eq.s32.totalorder %s14, 1
    %p129 = por %p127, %p128
    %p130 = scmp.ne.s32.totalorder %s122, %s125
    %p131 = scmp.eq.s32.totalorder %s14, 0
    %p132 = por %p130, %p131
    %p133 = scmp.ne.s32.totalorder %s122, %s125
    %p134 = scmp.eq.s32.totalorder %s19, 1
    %p135 = por %p133, %p134
    %p136 = scmp.ne.s32.totalorder %s125, %s126
    %p137 = scmp.eq.s32.totalorder %s19, 0
    %p138 = por %p136, %p137
    %p139 = scmp.ne.s32.totalorder %s125, %s126
    %p140 = scmp.eq.s32.totalorder %s20, 1
    %p141 = por %p139, %p140
    %p143 = scmp.ne.s32.totalorder %s126, %s142
    %p144 = scmp.eq.s32.totalorder %s20, 0
    %p145 = por %p143, %p144
    %s146 = sadd.s32 %s22, 1
    %s147 = smul.u32 %s146, 32
    %s148 = sadd.s32 %s29, 1
    %s149 = smul.u32 %s148, 32
    %s150 = ssub.s32 %s21, %s33
    %s151 = ssub.s32 %s147, %s149
    %s152 = sor.u32 %s150, %s151
    %p153 = scmp.eq.s32.totalorder %s152, 0
    %s155 = sadd.s32 %s154, 1
    %s156 = scalar_select %p153, %s154, %s155
    %p159 = pneg %p153
    %p160 = scmp.eq.s32.totalorder %s14, 1
    %p161 = por %p159, %p160
    %p162 = scmp.ne.s32.totalorder %s154, %s157
    %p163 = scmp.eq.s32.totalorder %s14, 0
    %p164 = por %p162, %p163
    %p165 = scmp.ne.s32.totalorder %s154, %s157
    %p166 = scmp.eq.s32.totalorder %s19, 1
    %p167 = por %p165, %p166
    %p168 = scmp.ne.s32.totalorder %s157, %s158
    %p169 = scmp.eq.s32.totalorder %s19, 0
    %p170 = por %p168, %p169
    %p171 = scmp.ne.s32.totalorder %s157, %s158
    %p172 = scmp.eq.s32.totalorder %s20, 1
    %p173 = por %p171, %p172
    %p175 = scmp.ne.s32.totalorder %s158, %s174
    %p176 = scmp.eq.s32.totalorder %s20, 0
    %p177 = por %p175, %p176
    %s178 = sadd.s32 %s22, 1
    %s179 = smul.u32 %s178, 32
    %s180 = sadd.s32 %s29, 1
    %s181 = smul.u32 %s180, 32
    %s182 = ssub.s32 %s21, %s33
    %s183 = ssub.s32 %s179, %s181
    %s184 = sor.u32 %s182, %s183
    %p185 = scmp.eq.s32.totalorder %s184, 0
    %s187 = sadd.s32 %s186, 1
    %s188 = scalar_select %p185, %s186, %s187
    %p191 = pneg %p185
    %p192 = scmp.eq.s32.totalorder %s14, 1
    %p193 = por %p191, %p192
    %p194 = scmp.ne.s32.totalorder %s186, %s189
    %p195 = scmp.eq.s32.totalorder %s14, 0
    %p196 = por %p194, %p195
    %p197 = scmp.ne.s32.totalorder %s186, %s189
    %p198 = scmp.eq.s32.totalorder %s19, 1
    %p199 = por %p197, %p198
    %p200 = scmp.ne.s32.totalorder %s189, %s190
    %p201 = scmp.eq.s32.totalorder %s19, 0
    %p202 = por %p200, %p201
    %p203 = scmp.ne.s32.totalorder %s189, %s190
    %p204 = scmp.eq.s32.totalorder %s20, 1
    %p205 = por %p203, %p204
    %p207 = scmp.ne.s32.totalorder %s190, %s206
    %p208 = scmp.eq.s32.totalorder %s20, 0
    %p209 = por %p207, %p208
    %s211 = sadd.s32 %s210, 1
    %p214 = scmp.eq.s32.totalorder %s14, 1
    %p215 = scmp.ne.s32.totalorder %s210, %s212
    %p216 = scmp.eq.s32.totalorder %s14, 0
    %p217 = por %p215, %p216
    %p218 = scmp.ne.s32.totalorder %s210, %s212
    %p219 = scmp.eq.s32.totalorder %s19, 1
    %p220 = por %p218, %p219
    %p221 = scmp.ne.s32.totalorder %s212, %s213
    %p222 = scmp.eq.s32.totalorder %s19, 0
    %p223 = por %p221, %p222
    %p224 = scmp.ne.s32.totalorder %s212, %s213
    %p225 = scmp.eq.s32.totalorder %s20, 1
    %p226 = por %p224, %p225
    %p228 = scmp.ne.s32.totalorder %s213, %s227
    %p229 = scmp.eq.s32.totalorder %s20, 0
    %p230 = por %p228, %p229
    %s232 = sadd.s32 %s231, 1
    %p235 = scmp.eq.s32.totalorder %s14, 1
    %p236 = scmp.ne.s32.totalorder %s231, %s233
    %p237 = scmp.eq.s32.totalorder %s14, 0
    %p238 = por %p236, %p237
    %p239 = scmp.ne.s32.totalorder %s231, %s233
    %p240 = scmp.eq.s32.totalorder %s19, 1
    %p241 = por %p239, %p240
    %p242 = scmp.ne.s32.totalorder %s233, %s234
    %p243 = scmp.eq.s32.totalorder %s19, 0
    %p244 = por %p242, %p243
    %p245 = scmp.ne.s32.totalorder %s233, %s234
    %p246 = scmp.eq.s32.totalorder %s20, 1
    %p247 = por %p245, %p246
    %p249 = scmp.ne.s32.totalorder %s234, %s248
    %p250 = scmp.eq.s32.totalorder %s20, 0
    %p251 = por %p249, %p250
    %s252 = ssub.s32 %s21, %s33
    %s253 = ssub.s32 %s22, %s29
    %s254 = sor.u32 %s252, %s253
    %p255 = scmp.eq.s32.totalorder %s254, 0
    %s257 = sadd.s32 %s256, 1
    %s258 = scalar_select %p255, %s256, %s257
    %p261 = pneg %p255
    %p262 = scmp.eq.s32.totalorder %s14, 1
    %p263 = por %p261, %p262
    %p264 = scmp.ne.s32.totalorder %s256, %s259
    %p265 = scmp.eq.s32.totalorder %s14, 0
    %p266 = por %p264, %p265
    %p267 = scmp.ne.s32.totalorder %s256, %s259
    %p268 = scmp.eq.s32.totalorder %s19, 1
    %p269 = por %p267, %p268
    %p270 = scmp.ne.s32.totalorder %s259, %s260
    %p271 = scmp.eq.s32.totalorder %s19, 0
    %p272 = por %p270, %p271
    %p273 = scmp.ne.s32.totalorder %s259, %s260
    %p274 = scmp.eq.s32.totalorder %s20, 1
    %p275 = por %p273, %p274
    %p277 = scmp.ne.s32.totalorder %s260, %s276
    %p278 = scmp.eq.s32.totalorder %s20, 0
    %p279 = por %p277, %p278
    %p280 = scmp.le.s32.totalorder 1, %s14
    %p281 = scmp.lt.s32.totalorder %s14, 3
    %p282 = pnand %p280, %p281
    %p283 = pneg %p282
    // Predicated region
    $region9: #{conv2d_subsampling_forward.4} parent=5 // pred_check
      _
    $region10: #{conv2d_subsampling_forward.4} parent=5 // pred_check_branch
      %285 = sbr.rel (%p282) target = $region12
    $region11: #{conv2d_subsampling_forward.4} parent=5 // pred_region
      %s286 = ssub.s32 %s14, 1
      // Predicated region
      $region13: #{conv2d_subsampling_forward.4} parent=11 // pred_check
        %p287 = pneg %p223
      $region14: #{conv2d_subsampling_forward.4} parent=11 // pred_check_branch
        %289 = sbr.rel (%p287) target = $region16
      $region15: #{conv2d_subsampling_forward.4} parent=11 // pred_region
        _
      $region16: #{conv2d_subsampling_forward.4} parent=11 // pred_fallthru
        _
      // Predicated region
      $region17: #{conv2d_subsampling_forward.4} parent=11 // pred_check
        %p290 = pneg %p244
      $region18: #{conv2d_subsampling_forward.4} parent=11 // pred_check_branch
        %292 = sbr.rel (%p290) target = $region20
      $region19: #{conv2d_subsampling_forward.4} parent=11 // pred_region
        _
      $region20: #{conv2d_subsampling_forward.4} parent=11 // pred_fallthru
        _
    $region12: #{conv2d_subsampling_forward.4} parent=5 // pred_fallthru
      _
    %p293 = scmp.lt.s32.totalorder %s14, 2
    // Predicated region
    $region21: #{conv2d_subsampling_forward.4} parent=5 // pred_check
      %p294 = pneg %p293
    $region22: #{conv2d_subsampling_forward.4} parent=5 // pred_check_branch
      %296 = sbr.rel (%p294) target = $region24
    $region23: #{conv2d_subsampling_forward.4} parent=5 // pred_region
      // Predicated region
      $region25: #{conv2d_subsampling_forward.4} parent=23 // pred_check
        %p297 = pneg %p48
      $region26: #{conv2d_subsampling_forward.4} parent=23 // pred_check_branch
        %299 = sbr.rel (%p297) target = $region28
      $region27: #{conv2d_subsampling_forward.4} parent=23 // pred_region
        %s300 = smul.u32 32, %s22
        %s301 = ssub.s32 33, %s300
        %p302 = scmp.lt.s32.totalorder %s301, 32
        %s303 = scalar_select %p302, %s301, 32
        %s304 = smul.u32 64, %s303
        %s305 = smul.u32 %s304, 2
        %p306 = scmp.lt.s32.totalorder %s21, 1
        %s307 = scalar_select %p306, %s21, 1
        %p308 = scmp.lt.s32.totalorder %s300, 32
        %s309 = scalar_select %p308, %s300, 32
        %s310 = smul.addr %s309, 2
        %s311 = smul.addr %s307, 66
        %s312 = sadd.s32 %s310, %s311
        %s313 = smul.addr %s312, 4
        %s314 = scalar_lea.vmem %s0, %s313
        %s315 = smul.u32 32, %s22
        %s316 = ssub.s32 33, %s315
        %p317 = scmp.lt.s32.totalorder %s316, 32
        %s318 = scalar_select %p317, %s316, 32
        %s319 = smul.u32 64, %s318
        %s320 = smul.u32 %s319, 2
      $region28: #{conv2d_subsampling_forward.4} parent=23 // pred_fallthru
        _
      // Predicated region
      $region29: #{conv2d_subsampling_forward.4} parent=23 // pred_check
        %p321 = pneg %p76
      $region30: #{conv2d_subsampling_forward.4} parent=23 // pred_check_branch
        %323 = sbr.rel (%p321) target = $region32
      $region31: #{conv2d_subsampling_forward.4} parent=23 // pred_region
        %s324 = smul.u32 32, %s22
        %s325 = ssub.s32 33, %s324
        %p326 = scmp.lt.s32.totalorder %s325, 32
        %s327 = scalar_select %p326, %s325, 32
        %s328 = smul.u32 64, %s327
        %s329 = smul.u32 %s328, 2
        %p330 = scmp.lt.s32.totalorder %s21, 1
        %s331 = scalar_select %p330, %s21, 1
        %p332 = scmp.lt.s32.totalorder %s324, 32
        %s333 = scalar_select %p332, %s324, 32
        %s334 = smul.addr %s333, 2
        %s335 = smul.addr %s331, 66
        %s336 = sadd.s32 %s334, %s335
        %s337 = smul.addr %s336, 4
        %s338 = scalar_lea.vmem %s1, %s337
        %s339 = smul.u32 32, %s22
        %s340 = ssub.s32 33, %s339
        %p341 = scmp.lt.s32.totalorder %s340, 32
        %s342 = scalar_select %p341, %s340, 32
        %s343 = smul.u32 64, %s342
        %s344 = smul.u32 %s343, 2
      $region32: #{conv2d_subsampling_forward.4} parent=23 // pred_fallthru
        _
      // Predicated region
      $region33: #{conv2d_subsampling_forward.4} parent=23 // pred_check
        %p345 = pneg %p104
      $region34: #{conv2d_subsampling_forward.4} parent=23 // pred_check_branch
        %347 = sbr.rel (%p345) target = $region36
      $region35: #{conv2d_subsampling_forward.4} parent=23 // pred_region
        %s348 = smul.u32 32, %s22
        %s349 = ssub.s32 33, %s348
        %p350 = scmp.lt.s32.totalorder %s349, 32
        %s351 = scalar_select %p350, %s349, 32
        %s352 = smul.u32 64, %s351
        %s353 = smul.u32 %s352, 2
        %p354 = scmp.lt.s32.totalorder %s21, 1
        %s355 = scalar_select %p354, %s21, 1
        %p356 = scmp.lt.s32.totalorder %s348, 32
        %s357 = scalar_select %p356, %s348, 32
        %s358 = smul.addr %s357, 2
        %s359 = smul.addr %s355, 66
        %s360 = sadd.s32 %s358, %s359
        %s361 = smul.addr %s360, 4
        %s362 = scalar_lea.vmem %s2, %s361
        %s363 = smul.u32 32, %s22
        %s364 = ssub.s32 33, %s363
        %p365 = scmp.lt.s32.totalorder %s364, 32
        %s366 = scalar_select %p365, %s364, 32
        %s367 = smul.u32 64, %s366
        %s368 = smul.u32 %s367, 2
      $region36: #{conv2d_subsampling_forward.4} parent=23 // pred_fallthru
        _
      // Predicated region
      $region37: #{conv2d_subsampling_forward.4} parent=23 // pred_check
        %p369 = pneg %p132
      $region38: #{conv2d_subsampling_forward.4} parent=23 // pred_check_branch
        %371 = sbr.rel (%p369) target = $region40
      $region39: #{conv2d_subsampling_forward.4} parent=23 // pred_region
        %s372 = smul.u32 32, %s22
        %s373 = ssub.s32 33, %s372
        %p374 = scmp.lt.s32.totalorder %s373, 32
        %s375 = scalar_select %p374, %s373, 32
        %s376 = smul.u32 64, %s375
        %s377 = smul.u32 %s376, 2
        %p378 = scmp.lt.s32.totalorder %s21, 1
        %s379 = scalar_select %p378, %s21, 1
        %p380 = scmp.lt.s32.totalorder %s372, 32
        %s381 = scalar_select %p380, %s372, 32
        %s382 = smul.addr %s381, 2
        %s383 = smul.addr %s379, 66
        %s384 = sadd.s32 %s382, %s383
        %s385 = smul.addr %s384, 4
        %s386 = scalar_lea.vmem %s3, %s385
        %s387 = smul.u32 32, %s22
        %s388 = ssub.s32 33, %s387
        %p389 = scmp.lt.s32.totalorder %s388, 32
        %s390 = scalar_select %p389, %s388, 32
        %s391 = smul.u32 64, %s390
        %s392 = smul.u32 %s391, 2
      $region40: #{conv2d_subsampling_forward.4} parent=23 // pred_fallthru
        _
      // Predicated region
      $region41: #{conv2d_subsampling_forward.4} parent=23 // pred_check
        %p393 = pneg %p164
      $region42: #{conv2d_subsampling_forward.4} parent=23 // pred_check_branch
        %395 = sbr.rel (%p393) target = $region44
      $region43: #{conv2d_subsampling_forward.4} parent=23 // pred_region
        %s396 = sadd.s32 %s22, 1
        %s397 = smul.u32 %s396, 32
        %p398 = scmp.lt.s32.totalorder %s21, 1
        %s399 = scalar_select %p398, %s21, 1
        %p400 = scmp.lt.s32.totalorder %s397, 32
        %s401 = scalar_select %p400, %s397, 32
        %s402 = smul.addr %s401, 2
        %s403 = smul.addr %s399, 66
        %s404 = sadd.s32 %s402, %s403
        %s405 = smul.addr %s404, 4
        %s406 = scalar_lea.vmem %s4, %s405
        %s407 = sadd.s32 %s22, 1
        %s408 = smul.u32 %s407, 32
      $region44: #{conv2d_subsampling_forward.4} parent=23 // pred_fallthru
        _
      // Predicated region
      $region45: #{conv2d_subsampling_forward.4} parent=23 // pred_check
        %p409 = pneg %p196
      $region46: #{conv2d_subsampling_forward.4} parent=23 // pred_check_branch
        %411 = sbr.rel (%p409) target = $region48
      $region47: #{conv2d_subsampling_forward.4} parent=23 // pred_region
        %s412 = sadd.s32 %s22, 1
        %s413 = smul.u32 %s412, 32
        %p414 = scmp.lt.s32.totalorder %s21, 1
        %s415 = scalar_select %p414, %s21, 1
        %p416 = scmp.lt.s32.totalorder %s413, 32
        %s417 = scalar_select %p416, %s413, 32
        %s418 = smul.addr %s417, 2
        %s419 = smul.addr %s415, 66
        %s420 = sadd.s32 %s418, %s419
        %s421 = smul.addr %s420, 4
        %s422 = scalar_lea.vmem %s5, %s421
        %s423 = sadd.s32 %s22, 1
        %s424 = smul.u32 %s423, 32
      $region48: #{conv2d_subsampling_forward.4} parent=23 // pred_fallthru
        _
    $region24: #{conv2d_subsampling_forward.4} parent=5 // pred_fallthru
      _
    %p425 = scmp.le.s32.totalorder 1, %s14
    %p426 = scmp.lt.s32.totalorder %s14, 3
    %p427 = pnand %p425, %p426
    %p428 = pneg %p427
    // Predicated region
    $region49: #{conv2d_subsampling_forward.4} parent=5 // pred_check
      _
    $region50: #{conv2d_subsampling_forward.4} parent=5 // pred_check_branch
      %430 = sbr.rel (%p427) target = $region52
    $region51: #{conv2d_subsampling_forward.4} parent=5 // pred_region
      %s431 = ssub.s32 %s14, 1
      %s432 = smul.u32 32, %s24
      %s433 = ssub.s32 33, %s432
      %p434 = scmp.lt.s32.totalorder %s433, 32
      %s435 = scalar_select %p434, %s433, 32
      %s436 = smul.u32 64, %s435
      %s437 = smul.u32 %s436, 2
      %p438 = scmp.lt.s32.totalorder %s23, 1
      %s439 = scalar_select %p438, %s23, 1
      %p440 = scmp.lt.s32.totalorder %s432, 32
      %s441 = scalar_select %p440, %s432, 32
      %s442 = smul.addr %s441, 2
      %s443 = smul.addr %s439, 66
      %s444 = sadd.s32 %s442, %s443
      %s445 = smul.addr %s444, 4
      %s446 = scalar_lea.vmem %s0, %s445
      %p447 = pneg %p54
      %p448 = pneg %p51
      %s449 = smul.u32 32, %s24
      %s450 = ssub.s32 33, %s449
      %p451 = scmp.lt.s32.totalorder %s450, 32
      %s452 = scalar_select %p451, %s450, 32
      %s453 = smul.u32 64, %s452
      %s454 = smul.u32 %s453, 2
      %p455 = scmp.lt.s32.totalorder %s23, 1
      %s456 = scalar_select %p455, %s23, 1
      %p457 = scmp.lt.s32.totalorder %s449, 32
      %s458 = scalar_select %p457, %s449, 32
      %s459 = smul.addr %s458, 2
      %s460 = smul.addr %s456, 66
      %s461 = sadd.s32 %s459, %s460
      %s462 = smul.addr %s461, 4
      %s463 = scalar_lea.vmem %s1, %s462
      %p464 = pneg %p82
      %p465 = pneg %p79
      %s466 = smul.u32 32, %s24
      %s467 = ssub.s32 33, %s466
      %p468 = scmp.lt.s32.totalorder %s467, 32
      %s469 = scalar_select %p468, %s467, 32
      %s470 = smul.u32 64, %s469
      %s471 = smul.u32 %s470, 2
      %p472 = scmp.lt.s32.totalorder %s23, 1
      %s473 = scalar_select %p472, %s23, 1
      %p474 = scmp.lt.s32.totalorder %s466, 32
      %s475 = scalar_select %p474, %s466, 32
      %s476 = smul.addr %s475, 2
      %s477 = smul.addr %s473, 66
      %s478 = sadd.s32 %s476, %s477
      %s479 = smul.addr %s478, 4
      %s480 = scalar_lea.vmem %s2, %s479
      %p481 = pneg %p110
      %p482 = pneg %p107
      %s483 = smul.u32 32, %s24
      %s484 = ssub.s32 33, %s483
      %p485 = scmp.lt.s32.totalorder %s484, 32
      %s486 = scalar_select %p485, %s484, 32
      %s487 = smul.u32 64, %s486
      %s488 = smul.u32 %s487, 2
      %p489 = scmp.lt.s32.totalorder %s23, 1
      %s490 = scalar_select %p489, %s23, 1
      %p491 = scmp.lt.s32.totalorder %s483, 32
      %s492 = scalar_select %p491, %s483, 32
      %s493 = smul.addr %s492, 2
      %s494 = smul.addr %s490, 66
      %s495 = sadd.s32 %s493, %s494
      %s496 = smul.addr %s495, 4
      %s497 = scalar_lea.vmem %s3, %s496
      %p498 = pneg %p138
      %p499 = pneg %p135
      %s500 = sadd.s32 %s24, 1
      %s501 = smul.u32 %s500, 32
      %p502 = scmp.lt.s32.totalorder %s23, 1
      %s503 = scalar_select %p502, %s23, 1
      %p504 = scmp.lt.s32.totalorder %s501, 32
      %s505 = scalar_select %p504, %s501, 32
      %s506 = smul.addr %s505, 2
      %s507 = smul.addr %s503, 66
      %s508 = sadd.s32 %s506, %s507
      %s509 = smul.addr %s508, 4
      %s510 = scalar_lea.vmem %s4, %s509
      %p511 = pneg %p170
      %p512 = pneg %p167
      %s513 = sadd.s32 %s24, 1
      %s514 = smul.u32 %s513, 32
      %p515 = scmp.lt.s32.totalorder %s23, 1
      %s516 = scalar_select %p515, %s23, 1
      %p517 = scmp.lt.s32.totalorder %s514, 32
      %s518 = scalar_select %p517, %s514, 32
      %s519 = smul.addr %s518, 2
      %s520 = smul.addr %s516, 66
      %s521 = sadd.s32 %s519, %s520
      %s522 = smul.addr %s521, 4
      %s523 = scalar_lea.vmem %s5, %s522
      %p524 = pneg %p202
      %p525 = pneg %p199
      %p526 = pneg %p223
      %p527 = pneg %p220
      %p528 = pneg %p244
      %p529 = pneg %p241
      %p530 = pneg %p272
      %p531 = pneg %p269
      %s532 = smul.u32 32, %s24
      %p533 = scmp.lt.s32.totalorder %s23, 1
      %s534 = scalar_select %p533, %s23, 1
      %p535 = scmp.lt.s32.totalorder %s532, 31
      %s536 = scalar_select %p535, %s532, 31
      %s537 = smul.addr %s534, 32
      %s538 = sadd.s32 %s536, %s537
      %s539 = smul.addr %s538, 4
      %s540 = scalar_lea.vmem %s8, %s539
      %s541 = smul.u32 32, %s24
      %s542 = ssub.s32 33, %s541
      %p543 = scmp.lt.s32.totalorder %s542, 32
      %s544 = scalar_select %p543, %s542, 32
      %s545 = smul.u32 64, %s544
      %s546 = smul.u32 %s545, 2
      %p547 = scmp.lt.s32.totalorder %s23, 1
      %s548 = scalar_select %p547, %s23, 1
      %p549 = scmp.lt.s32.totalorder %s541, 32
      %s550 = scalar_select %p549, %s541, 32
      %s551 = smul.addr %s550, 2
      %s552 = smul.addr %s548, 66
      %s553 = sadd.s32 %s551, %s552
      %s554 = smul.addr %s553, 4
      %s555 = scalar_lea.vmem %s0, %s554
      %s556 = smul.u32 32, %s24
      %s557 = ssub.s32 33, %s556
      %p558 = scmp.lt.s32.totalorder %s557, 32
      %s559 = scalar_select %p558, %s557, 32
      %s560 = smul.u32 64, %s559
      %s561 = smul.u32 %s560, 2
      %s562 = smul.u32 32, %s24
      %s563 = ssub.s32 33, %s562
      %p564 = scmp.lt.s32.totalorder %s563, 32
      %s565 = scalar_select %p564, %s563, 32
      %s566 = smul.u32 64, %s565
      %s567 = smul.u32 %s566, 2
      %p568 = scmp.lt.s32.totalorder %s23, 1
      %s569 = scalar_select %p568, %s23, 1
      %p570 = scmp.lt.s32.totalorder %s562, 32
      %s571 = scalar_select %p570, %s562, 32
      %s572 = smul.addr %s571, 2
      %s573 = smul.addr %s569, 66
      %s574 = sadd.s32 %s572, %s573
      %s575 = smul.addr %s574, 4
      %s576 = scalar_lea.vmem %s1, %s575
      %s577 = smul.u32 32, %s24
      %s578 = ssub.s32 33, %s577
      %p579 = scmp.lt.s32.totalorder %s578, 32
      %s580 = scalar_select %p579, %s578, 32
      %s581 = smul.u32 64, %s580
      %s582 = smul.u32 %s581, 2
      %s583 = smul.u32 32, %s24
      %s584 = ssub.s32 33, %s583
      %p585 = scmp.lt.s32.totalorder %s584, 32
      %s586 = scalar_select %p585, %s584, 32
      %s587 = smul.u32 64, %s586
      %s588 = smul.u32 %s587, 2
      %p589 = scmp.lt.s32.totalorder %s23, 1
      %s590 = scalar_select %p589, %s23, 1
      %p591 = scmp.lt.s32.totalorder %s583, 32
      %s592 = scalar_select %p591, %s583, 32
      %s593 = smul.addr %s592, 2
      %s594 = smul.addr %s590, 66
      %s595 = sadd.s32 %s593, %s594
      %s596 = smul.addr %s595, 4
      %s597 = scalar_lea.vmem %s2, %s596
      %s598 = smul.u32 32, %s24
      %s599 = ssub.s32 33, %s598
      %p600 = scmp.lt.s32.totalorder %s599, 32
      %s601 = scalar_select %p600, %s599, 32
      %s602 = smul.u32 64, %s601
      %s603 = smul.u32 %s602, 2
      %s604 = smul.u32 32, %s24
      %s605 = ssub.s32 33, %s604
      %p606 = scmp.lt.s32.totalorder %s605, 32
      %s607 = scalar_select %p606, %s605, 32
      %s608 = smul.u32 64, %s607
      %s609 = smul.u32 %s608, 2
      %p610 = scmp.lt.s32.totalorder %s23, 1
      %s611 = scalar_select %p610, %s23, 1
      %p612 = scmp.lt.s32.totalorder %s604, 32
      %s613 = scalar_select %p612, %s604, 32
      %s614 = smul.addr %s613, 2
      %s615 = smul.addr %s611, 66
      %s616 = sadd.s32 %s614, %s615
      %s617 = smul.addr %s616, 4
      %s618 = scalar_lea.vmem %s3, %s617
      %s619 = smul.u32 32, %s24
      %s620 = ssub.s32 33, %s619
      %p621 = scmp.lt.s32.totalorder %s620, 32
      %s622 = scalar_select %p621, %s620, 32
      %s623 = smul.u32 64, %s622
      %s624 = smul.u32 %s623, 2
      %s625 = sadd.s32 %s24, 1
      %s626 = smul.u32 %s625, 32
      %p627 = scmp.lt.s32.totalorder %s23, 1
      %s628 = scalar_select %p627, %s23, 1
      %p629 = scmp.lt.s32.totalorder %s626, 32
      %s630 = scalar_select %p629, %s626, 32
      %s631 = smul.addr %s630, 2
      %s632 = smul.addr %s628, 66
      %s633 = sadd.s32 %s631, %s632
      %s634 = smul.addr %s633, 4
      %s635 = scalar_lea.vmem %s4, %s634
      %s636 = sadd.s32 %s24, 1
      %s637 = smul.u32 %s636, 32
      %s638 = sadd.s32 %s24, 1
      %s639 = smul.u32 %s638, 32
      %p640 = scmp.lt.s32.totalorder %s23, 1
      %s641 = scalar_select %p640, %s23, 1
      %p642 = scmp.lt.s32.totalorder %s639, 32
      %s643 = scalar_select %p642, %s639, 32
      %s644 = smul.addr %s643, 2
      %s645 = smul.addr %s641, 66
      %s646 = sadd.s32 %s644, %s645
      %s647 = smul.addr %s646, 4
      %s648 = scalar_lea.vmem %s5, %s647
      %s649 = sadd.s32 %s24, 1
      %s650 = smul.u32 %s649, 32
      %s651 = smul.u32 32, %s24
      %p652 = scmp.lt.s32.totalorder %s23, 1
      %s653 = scalar_select %p652, %s23, 1
      %p654 = scmp.lt.s32.totalorder %s651, 31
      %s655 = scalar_select %p654, %s651, 31
      %s656 = smul.addr %s653, 32
      %s657 = sadd.s32 %s655, %s656
      %s658 = smul.addr %s657, 4
      %s659 = scalar_lea.vmem %s8, %s658
      %s660 = smul.u32 32, %s24
      %v662 = vld [vmem:[%s555] sm:$0xf]
      %v663 = vld [vmem:[%s555 + $0x4] sm:$0x1]
      %v664 = vld [vmem:[%s555 + $0x8] sm:$0xf]
      %v665 = vld [vmem:[%s555 + $0xc] sm:$0x1]
      %v666 = vld [vmem:[%s555 + $0x10] sm:$0xf]
      %v667 = vld [vmem:[%s555 + $0x14] sm:$0x1]
      %v668 = vld [vmem:[%s555 + $0x18] sm:$0xf]
      %v669 = vld [vmem:[%s555 + $0x1c] sm:$0x1]
      %v670 = vld [vmem:[%s555 + $0x20] sm:$0xf]
      %v671 = vld [vmem:[%s555 + $0x24] sm:$0x1]
      %v672 = vld [vmem:[%s555 + $0x28] sm:$0xf]
      %v673 = vld [vmem:[%s555 + $0x2c] sm:$0x1]
      %v674 = vld [vmem:[%s555 + $0x30] sm:$0xf]
      %v675 = vld [vmem:[%s555 + $0x34] sm:$0x1]
      %v676 = vld [vmem:[%s555 + $0x38] sm:$0xf]
      %v677 = vld [vmem:[%s555 + $0x3c] sm:$0x1]
      %v678 = vld [vmem:[%s555 + $0x40] sm:$0xf]
      %v679 = vld [vmem:[%s555 + $0x44] sm:$0x1]
      %v680 = vld [vmem:[%s555 + $0x48] sm:$0xf]
      %v681 = vld [vmem:[%s555 + $0x4c] sm:$0x1]
      %v682 = vld [vmem:[%s555 + $0x50] sm:$0xf]
      %v683 = vld [vmem:[%s555 + $0x54] sm:$0x1]
      %v684 = vld [vmem:[%s555 + $0x58] sm:$0xf]
      %v685 = vld [vmem:[%s555 + $0x5c] sm:$0x1]
      %v686 = vld [vmem:[%s555 + $0x60] sm:$0xf]
      %v687 = vld [vmem:[%s555 + $0x64] sm:$0x1]
      %v688 = vld [vmem:[%s555 + $0x68] sm:$0xf]
      %v689 = vld [vmem:[%s555 + $0x6c] sm:$0x1]
      %v690 = vld [vmem:[%s555 + $0x70] sm:$0xf]
      %v691 = vld [vmem:[%s555 + $0x74] sm:$0x1]
      %v692 = vld [vmem:[%s555 + $0x78] sm:$0xf]
      %v693 = vld [vmem:[%s555 + $0x7c] sm:$0x1]
      %v694 = vld [vmem:[%s555 + $0x80] sm:$0xf]
      %v695 = vld [vmem:[%s555 + $0x84] sm:$0x1]
      %v696 = vld [vmem:[%s555 + $0x88] sm:$0xf]
      %v697 = vld [vmem:[%s555 + $0x8c] sm:$0x1]
      %v698 = vld [vmem:[%s555 + $0x90] sm:$0xf]
      %v699 = vld [vmem:[%s555 + $0x94] sm:$0x1]
      %v700 = vld [vmem:[%s555 + $0x98] sm:$0xf]
      %v701 = vld [vmem:[%s555 + $0x9c] sm:$0x1]
      %v702 = vld [vmem:[%s555 + $0xa0] sm:$0xf]
      %v703 = vld [vmem:[%s555 + $0xa4] sm:$0x1]
      %v704 = vld [vmem:[%s555 + $0xa8] sm:$0xf]
      %v705 = vld [vmem:[%s555 + $0xac] sm:$0x1]
      %v706 = vld [vmem:[%s555 + $0xb0] sm:$0xf]
      %v707 = vld [vmem:[%s555 + $0xb4] sm:$0x1]
      %v708 = vld [vmem:[%s555 + $0xb8] sm:$0xf]
      %v709 = vld [vmem:[%s555 + $0xbc] sm:$0x1]
      %v710 = vld [vmem:[%s555 + $0xc0] sm:$0xf]
      %v711 = vld [vmem:[%s555 + $0xc4] sm:$0x1]
      %v712 = vld [vmem:[%s555 + $0xc8] sm:$0xf]
      %v713 = vld [vmem:[%s555 + $0xcc] sm:$0x1]
      %v714 = vld [vmem:[%s555 + $0xd0] sm:$0xf]
      %v715 = vld [vmem:[%s555 + $0xd4] sm:$0x1]
      %v716 = vld [vmem:[%s555 + $0xd8] sm:$0xf]
      %v717 = vld [vmem:[%s555 + $0xdc] sm:$0x1]
      %v718 = vld [vmem:[%s555 + $0xe0] sm:$0xf]
      %v719 = vld [vmem:[%s555 + $0xe4] sm:$0x1]
      %v720 = vld [vmem:[%s555 + $0xe8] sm:$0xf]
      %v721 = vld [vmem:[%s555 + $0xec] sm:$0x1]
      %v722 = vld [vmem:[%s555 + $0xf0] sm:$0xf]
      %v723 = vld [vmem:[%s555 + $0xf4] sm:$0x1]
      %v724 = vld [vmem:[%s555 + $0xf8] sm:$0xf]
      %v725 = vld [vmem:[%s555 + $0xfc] sm:$0x1]
      %v726 = vld [vmem:[%s635] sm:$0xf]
      %v727 = vld [vmem:[%s635 + $0x4] sm:$0x1]
      %v728 = vld [vmem:[%s576] sm:$0xf]
      %v729 = vld [vmem:[%s576 + $0x8] sm:$0xf]
      %v730 = vld [vmem:[%s576 + $0x10] sm:$0xf]
      %v731 = vld [vmem:[%s576 + $0x18] sm:$0xf]
      %v732 = vld [vmem:[%s576 + $0x20] sm:$0xf]
      %v733 = vld [vmem:[%s576 + $0x28] sm:$0xf]
      %v734 = vld [vmem:[%s576 + $0x30] sm:$0xf]
      %v735 = vld [vmem:[%s576 + $0x38] sm:$0xf]
      %v736 = vld [vmem:[%s576 + $0x40] sm:$0xf]
      %v737 = vld [vmem:[%s576 + $0x48] sm:$0xf]
      %v738 = vld [vmem:[%s576 + $0x50] sm:$0xf]
      %v739 = vld [vmem:[%s576 + $0x58] sm:$0xf]
      %v740 = vld [vmem:[%s576 + $0x60] sm:$0xf]
      %v741 = vld [vmem:[%s576 + $0x68] sm:$0xf]
      %v742 = vld [vmem:[%s576 + $0x70] sm:$0xf]
      %v743 = vld [vmem:[%s576 + $0x78] sm:$0xf]
      %v744 = vld [vmem:[%s576 + $0x80] sm:$0xf]
      %v745 = vld [vmem:[%s576 + $0x88] sm:$0xf]
      %v746 = vld [vmem:[%s576 + $0x90] sm:$0xf]
      %v747 = vld [vmem:[%s576 + $0x98] sm:$0xf]
      %v748 = vld [vmem:[%s576 + $0xa0] sm:$0xf]
      %v749 = vld [vmem:[%s576 + $0xa8] sm:$0xf]
      %v750 = vld [vmem:[%s576 + $0xb0] sm:$0xf]
      %v751 = vld [vmem:[%s576 + $0xb8] sm:$0xf]
      %v752 = vld [vmem:[%s576 + $0xc0] sm:$0xf]
      %v753 = vld [vmem:[%s576 + $0xc8] sm:$0xf]
      %v754 = vld [vmem:[%s576 + $0xd0] sm:$0xf]
      %v755 = vld [vmem:[%s576 + $0xd8] sm:$0xf]
      %v756 = vld [vmem:[%s576 + $0xe0] sm:$0xf]
      %v757 = vld [vmem:[%s576 + $0xe8] sm:$0xf]
      %v758 = vld [vmem:[%s576 + $0xf0] sm:$0xf]
      %v759 = vld [vmem:[%s576 + $0xf8] sm:$0xf]
      %v760 = vld [vmem:[%s648] sm:$0xf]
      %v761 = vld [vmem:[%s597] sm:$0xf]
      %v762 = vld [vmem:[%s597 + $0x4] sm:$0x1]
      %v763 = vld [vmem:[%s597 + $0x8] sm:$0xf]
      %v764 = vld [vmem:[%s597 + $0xc] sm:$0x1]
      %v765 = vld [vmem:[%s597 + $0x10] sm:$0xf]
      %v766 = vld [vmem:[%s597 + $0x14] sm:$0x1]
      %v767 = vld [vmem:[%s597 + $0x18] sm:$0xf]
      %v768 = vld [vmem:[%s597 + $0x1c] sm:$0x1]
      %v769 = vld [vmem:[%s597 + $0x20] sm:$0xf]
      %v770 = vld [vmem:[%s597 + $0x24] sm:$0x1]
      %v771 = vld [vmem:[%s597 + $0x28] sm:$0xf]
      %v772 = vld [vmem:[%s597 + $0x2c] sm:$0x1]
      %v773 = vld [vmem:[%s597 + $0x30] sm:$0xf]
      %v774 = vld [vmem:[%s597 + $0x34] sm:$0x1]
      %v775 = vld [vmem:[%s597 + $0x38] sm:$0xf]
      %v776 = vld [vmem:[%s597 + $0x3c] sm:$0x1]
      %v777 = vld [vmem:[%s597 + $0x40] sm:$0xf]
      %v778 = vld [vmem:[%s597 + $0x44] sm:$0x1]
      %v779 = vld [vmem:[%s597 + $0x48] sm:$0xf]
      %v780 = vld [vmem:[%s597 + $0x4c] sm:$0x1]
      %v781 = vld [vmem:[%s597 + $0x50] sm:$0xf]
      %v782 = vld [vmem:[%s597 + $0x54] sm:$0x1]
      %v783 = vld [vmem:[%s597 + $0x58] sm:$0xf]
      %v784 = vld [vmem:[%s597 + $0x5c] sm:$0x1]
      %v785 = vld [vmem:[%s597 + $0x60] sm:$0xf]
      %v786 = vld [vmem:[%s597 + $0x64] sm:$0x1]
      %v787 = vld [vmem:[%s597 + $0x68] sm:$0xf]
      %v788 = vld [vmem:[%s597 + $0x6c] sm:$0x1]
      %v789 = vld [vmem:[%s597 + $0x70] sm:$0xf]
      %v790 = vld [vmem:[%s597 + $0x74] sm:$0x1]
      %v791 = vld [vmem:[%s597 + $0x78] sm:$0xf]
      %v792 = vld [vmem:[%s597 + $0x7c] sm:$0x1]
      %v793 = vld [vmem:[%s597 + $0x80] sm:$0xf]
      %v794 = vld [vmem:[%s597 + $0x84] sm:$0x1]
      %v795 = vld [vmem:[%s597 + $0x88] sm:$0xf]
      %v796 = vld [vmem:[%s597 + $0x8c] sm:$0x1]
      %v797 = vld [vmem:[%s597 + $0x90] sm:$0xf]
      %v798 = vld [vmem:[%s597 + $0x94] sm:$0x1]
      %v799 = vld [vmem:[%s597 + $0x98] sm:$0xf]
      %v800 = vld [vmem:[%s597 + $0x9c] sm:$0x1]
      %v801 = vld [vmem:[%s597 + $0xa0] sm:$0xf]
      %v802 = vld [vmem:[%s597 + $0xa4] sm:$0x1]
      %v803 = vld [vmem:[%s597 + $0xa8] sm:$0xf]
      %v804 = vld [vmem:[%s597 + $0xac] sm:$0x1]
      %v805 = vld [vmem:[%s597 + $0xb0] sm:$0xf]
      %v806 = vld [vmem:[%s597 + $0xb4] sm:$0x1]
      %v807 = vld [vmem:[%s597 + $0xb8] sm:$0xf]
      %v808 = vld [vmem:[%s597 + $0xbc] sm:$0x1]
      %v809 = vld [vmem:[%s597 + $0xc0] sm:$0xf]
      %v810 = vld [vmem:[%s597 + $0xc4] sm:$0x1]
      %v811 = vld [vmem:[%s597 + $0xc8] sm:$0xf]
      %v812 = vld [vmem:[%s597 + $0xcc] sm:$0x1]
      %v813 = vld [vmem:[%s597 + $0xd0] sm:$0xf]
      %v814 = vld [vmem:[%s597 + $0xd4] sm:$0x1]
      %v815 = vld [vmem:[%s597 + $0xd8] sm:$0xf]
      %v816 = vld [vmem:[%s597 + $0xdc] sm:$0x1]
      %v817 = vld [vmem:[%s597 + $0xe0] sm:$0xf]
      %v818 = vld [vmem:[%s597 + $0xe4] sm:$0x1]
      %v819 = vld [vmem:[%s597 + $0xe8] sm:$0xf]
      %v820 = vld [vmem:[%s597 + $0xec] sm:$0x1]
      %v821 = vld [vmem:[%s597 + $0xf0] sm:$0xf]
      %v822 = vld [vmem:[%s597 + $0xf4] sm:$0x1]
      %v823 = vld [vmem:[%s597 + $0xf8] sm:$0xf]
      %v824 = vld [vmem:[%s597 + $0xfc] sm:$0x1]
      %v825 = vld [vmem:[%s618] sm:$0xf]
      %v826 = vld [vmem:[%s618 + $0x8] sm:$0xf]
      %v827 = vld [vmem:[%s618 + $0x10] sm:$0xf]
      %v828 = vld [vmem:[%s618 + $0x18] sm:$0xf]
      %v829 = vld [vmem:[%s618 + $0x20] sm:$0xf]
      %v830 = vld [vmem:[%s618 + $0x28] sm:$0xf]
      %v831 = vld [vmem:[%s618 + $0x30] sm:$0xf]
      %v832 = vld [vmem:[%s618 + $0x38] sm:$0xf]
      %v833 = vld [vmem:[%s618 + $0x40] sm:$0xf]
      %v834 = vld [vmem:[%s618 + $0x48] sm:$0xf]
      %v835 = vld [vmem:[%s618 + $0x50] sm:$0xf]
      %v836 = vld [vmem:[%s618 + $0x58] sm:$0xf]
      %v837 = vld [vmem:[%s618 + $0x60] sm:$0xf]
      %v838 = vld [vmem:[%s618 + $0x68] sm:$0xf]
      %v839 = vld [vmem:[%s618 + $0x70] sm:$0xf]
      %v840 = vld [vmem:[%s618 + $0x78] sm:$0xf]
      %v841 = vld [vmem:[%s618 + $0x80] sm:$0xf]
      %v842 = vld [vmem:[%s618 + $0x88] sm:$0xf]
      %v843 = vld [vmem:[%s618 + $0x90] sm:$0xf]
      %v844 = vld [vmem:[%s618 + $0x98] sm:$0xf]
      %v845 = vld [vmem:[%s618 + $0xa0] sm:$0xf]
      %v846 = vld [vmem:[%s618 + $0xa8] sm:$0xf]
      %v847 = vld [vmem:[%s618 + $0xb0] sm:$0xf]
      %v848 = vld [vmem:[%s618 + $0xb8] sm:$0xf]
      %v849 = vld [vmem:[%s618 + $0xc0] sm:$0xf]
      %v850 = vld [vmem:[%s618 + $0xc8] sm:$0xf]
      %v851 = vld [vmem:[%s618 + $0xd0] sm:$0xf]
      %v852 = vld [vmem:[%s618 + $0xd8] sm:$0xf]
      %v853 = vld [vmem:[%s618 + $0xe0] sm:$0xf]
      %v854 = vld [vmem:[%s618 + $0xe8] sm:$0xf]
      %v855 = vld [vmem:[%s618 + $0xf0] sm:$0xf]
      %v856 = vld [vmem:[%s618 + $0xf8] sm:$0xf]
      %v889 = vunpack.c.l.b16 %v728
      %v890 = vunpack.c.l.b16 %v729
      %v891 = vunpack.c.l.b16 %v730
      %v892 = vunpack.c.l.b16 %v731
      %v893 = vunpack.c.l.b16 %v732
      %v894 = vunpack.c.l.b16 %v733
      %v895 = vunpack.c.l.b16 %v734
      %v896 = vunpack.c.l.b16 %v735
      %v897 = vunpack.c.l.b16 %v736
      %v898 = vunpack.c.l.b16 %v737
      %v899 = vunpack.c.l.b16 %v738
      %v900 = vunpack.c.l.b16 %v739
      %v901 = vunpack.c.l.b16 %v740
      %v902 = vunpack.c.l.b16 %v741
      %v903 = vunpack.c.l.b16 %v742
      %v904 = vunpack.c.l.b16 %v743
      %v905 = vunpack.c.l.b16 %v744
      %v906 = vunpack.c.l.b16 %v745
      %v907 = vunpack.c.l.b16 %v746
      %v908 = vunpack.c.l.b16 %v747
      %v909 = vunpack.c.l.b16 %v748
      %v910 = vunpack.c.l.b16 %v749
      %v911 = vunpack.c.l.b16 %v750
      %v912 = vunpack.c.l.b16 %v751
      %v913 = vunpack.c.l.b16 %v752
      %v914 = vunpack.c.l.b16 %v753
      %v915 = vunpack.c.l.b16 %v754
      %v916 = vunpack.c.l.b16 %v755
      %v917 = vunpack.c.l.b16 %v756
      %v918 = vunpack.c.l.b16 %v757
      %v919 = vunpack.c.l.b16 %v758
      %v920 = vunpack.c.l.b16 %v759
      %v921 = vpack.c.b16 %v889, %v889
      %v922 = vpack.c.b16 %v890, %v890
      %v923 = vpack.c.b16 %v891, %v891
      %v924 = vpack.c.b16 %v892, %v892
      %v925 = vpack.c.b16 %v893, %v893
      %v926 = vpack.c.b16 %v894, %v894
      %v927 = vpack.c.b16 %v895, %v895
      %v928 = vpack.c.b16 %v896, %v896
      %v929 = vpack.c.b16 %v897, %v897
      %v930 = vpack.c.b16 %v898, %v898
      %v931 = vpack.c.b16 %v899, %v899
      %v932 = vpack.c.b16 %v900, %v900
      %v933 = vpack.c.b16 %v901, %v901
      %v934 = vpack.c.b16 %v902, %v902
      %v935 = vpack.c.b16 %v903, %v903
      %v936 = vpack.c.b16 %v904, %v904
      %v937 = vpack.c.b16 %v905, %v905
      %v938 = vpack.c.b16 %v906, %v906
      %v939 = vpack.c.b16 %v907, %v907
      %v940 = vpack.c.b16 %v908, %v908
      %v941 = vpack.c.b16 %v909, %v909
      %v942 = vpack.c.b16 %v910, %v910
      %v943 = vpack.c.b16 %v911, %v911
      %v944 = vpack.c.b16 %v912, %v912
      %v945 = vpack.c.b16 %v913, %v913
      %v946 = vpack.c.b16 %v914, %v914
      %v947 = vpack.c.b16 %v915, %v915
      %v948 = vpack.c.b16 %v916, %v916
      %v949 = vpack.c.b16 %v917, %v917
      %v950 = vpack.c.b16 %v918, %v918
      %v951 = vpack.c.b16 %v919, %v919
      %v952 = vpack.c.b16 %v920, %v920
      %953 = vrot.lane.b32.xlu0 %v921, 8
      %v954 = vpop.permute.xlu0 %953
      %955 = vrot.lane.b32.xlu0 %v922, 8
      %v956 = vpop.permute.xlu0 %955
      %957 = vrot.lane.b32.xlu0 %v923, 8
      %v958 = vpop.permute.xlu0 %957
      %959 = vrot.lane.b32.xlu0 %v924, 8
      %v960 = vpop.permute.xlu0 %959
      %961 = vrot.lane.b32.xlu0 %v925, 8
      %v962 = vpop.permute.xlu0 %961
      %963 = vrot.lane.b32.xlu0 %v926, 8
      %v964 = vpop.permute.xlu0 %963
      %965 = vrot.lane.b32.xlu0 %v927, 8
      %v966 = vpop.permute.xlu0 %965
      %967 = vrot.lane.b32.xlu0 %v928, 8
      %v968 = vpop.permute.xlu0 %967
      %969 = vrot.lane.b32.xlu0 %v929, 8
      %v970 = vpop.permute.xlu0 %969
      %971 = vrot.lane.b32.xlu0 %v930, 8
      %v972 = vpop.permute.xlu0 %971
      %973 = vrot.lane.b32.xlu0 %v931, 8
      %v974 = vpop.permute.xlu0 %973
      %975 = vrot.lane.b32.xlu0 %v932, 8
      %v976 = vpop.permute.xlu0 %975
      %977 = vrot.lane.b32.xlu0 %v933, 8
      %v978 = vpop.permute.xlu0 %977
      %979 = vrot.lane.b32.xlu0 %v934, 8
      %v980 = vpop.permute.xlu0 %979
      %981 = vrot.lane.b32.xlu0 %v935, 8
      %v982 = vpop.permute.xlu0 %981
      %983 = vrot.lane.b32.xlu0 %v936, 8
      %v984 = vpop.permute.xlu0 %983
      %985 = vrot.lane.b32.xlu0 %v937, 8
      %v986 = vpop.permute.xlu0 %985
      %987 = vrot.lane.b32.xlu0 %v938, 8
      %v988 = vpop.permute.xlu0 %987
      %989 = vrot.lane.b32.xlu0 %v939, 8
      %v990 = vpop.permute.xlu0 %989
      %991 = vrot.lane.b32.xlu0 %v940, 8
      %v992 = vpop.permute.xlu0 %991
      %993 = vrot.lane.b32.xlu0 %v941, 8
      %v994 = vpop.permute.xlu0 %993
      %995 = vrot.lane.b32.xlu0 %v942, 8
      %v996 = vpop.permute.xlu0 %995
      %997 = vrot.lane.b32.xlu0 %v943, 8
      %v998 = vpop.permute.xlu0 %997
      %999 = vrot.lane.b32.xlu0 %v944, 8
      %v1000 = vpop.permute.xlu0 %999
      %1001 = vrot.lane.b32.xlu0 %v945, 8
      %v1002 = vpop.permute.xlu0 %1001
      %1003 = vrot.lane.b32.xlu0 %v946, 8
      %v1004 = vpop.permute.xlu0 %1003
      %1005 = vrot.lane.b32.xlu0 %v947, 8
      %v1006 = vpop.permute.xlu0 %1005
      %1007 = vrot.lane.b32.xlu0 %v948, 8
      %v1008 = vpop.permute.xlu0 %1007
      %1009 = vrot.lane.b32.xlu0 %v949, 8
      %v1010 = vpop.permute.xlu0 %1009
      %1011 = vrot.lane.b32.xlu0 %v950, 8
      %v1012 = vpop.permute.xlu0 %1011
      %1013 = vrot.lane.b32.xlu0 %v951, 8
      %v1014 = vpop.permute.xlu0 %1013
      %1015 = vrot.lane.b32.xlu0 %v952, 8
      %v1016 = vpop.permute.xlu0 %1015
      %v1081 = vunpack.c.l.b16 %v662
      %v1082 = vunpack.c.l.b16 %v663
      %v1083 = vunpack.c.l.b16 %v664
      %v1084 = vunpack.c.l.b16 %v665
      %v1085 = vunpack.c.l.b16 %v666
      %v1086 = vunpack.c.l.b16 %v667
      %v1087 = vunpack.c.l.b16 %v668
      %v1088 = vunpack.c.l.b16 %v669
      %v1089 = vunpack.c.l.b16 %v670
      %v1090 = vunpack.c.l.b16 %v671
      %v1091 = vunpack.c.l.b16 %v672
      %v1092 = vunpack.c.l.b16 %v673
      %v1093 = vunpack.c.l.b16 %v674
      %v1094 = vunpack.c.l.b16 %v675
      %v1095 = vunpack.c.l.b16 %v676
      %v1096 = vunpack.c.l.b16 %v677
      %v1097 = vunpack.c.l.b16 %v678
      %v1098 = vunpack.c.l.b16 %v679
      %v1099 = vunpack.c.l.b16 %v680
      %v1100 = vunpack.c.l.b16 %v681
      %v1101 = vunpack.c.l.b16 %v682
      %v1102 = vunpack.c.l.b16 %v683
      %v1103 = vunpack.c.l.b16 %v684
      %v1104 = vunpack.c.l.b16 %v685
      %v1105 = vunpack.c.l.b16 %v686
      %v1106 = vunpack.c.l.b16 %v687
      %v1107 = vunpack.c.l.b16 %v688
      %v1108 = vunpack.c.l.b16 %v689
      %v1109 = vunpack.c.l.b16 %v690
      %v1110 = vunpack.c.l.b16 %v691
      %v1111 = vunpack.c.l.b16 %v692
      %v1112 = vunpack.c.l.b16 %v693
      %v1113 = vunpack.c.l.b16 %v694
      %v1114 = vunpack.c.l.b16 %v695
      %v1115 = vunpack.c.l.b16 %v696
      %v1116 = vunpack.c.l.b16 %v697
      %v1117 = vunpack.c.l.b16 %v698
      %v1118 = vunpack.c.l.b16 %v699
      %v1119 = vunpack.c.l.b16 %v700
      %v1120 = vunpack.c.l.b16 %v701
      %v1121 = vunpack.c.l.b16 %v702
      %v1122 = vunpack.c.l.b16 %v703
      %v1123 = vunpack.c.l.b16 %v704
      %v1124 = vunpack.c.l.b16 %v705
      %v1125 = vunpack.c.l.b16 %v706
      %v1126 = vunpack.c.l.b16 %v707
      %v1127 = vunpack.c.l.b16 %v708
      %v1128 = vunpack.c.l.b16 %v709
      %v1129 = vunpack.c.l.b16 %v710
      %v1130 = vunpack.c.l.b16 %v711
      %v1131 = vunpack.c.l.b16 %v712
      %v1132 = vunpack.c.l.b16 %v713
      %v1133 = vunpack.c.l.b16 %v714
      %v1134 = vunpack.c.l.b16 %v715
      %v1135 = vunpack.c.l.b16 %v716
      %v1136 = vunpack.c.l.b16 %v717
      %v1137 = vunpack.c.l.b16 %v718
      %v1138 = vunpack.c.l.b16 %v719
      %v1139 = vunpack.c.l.b16 %v720
      %v1140 = vunpack.c.l.b16 %v721
      %v1141 = vunpack.c.l.b16 %v722
      %v1142 = vunpack.c.l.b16 %v723
      %v1143 = vunpack.c.l.b16 %v724
      %v1144 = vunpack.c.l.b16 %v725
      %v1145 = vpack.c.b16 %v1082, %v1081
      %v1146 = vpack.c.b16 %v1084, %v1083
      %v1147 = vpack.c.b16 %v1086, %v1085
      %v1148 = vpack.c.b16 %v1088, %v1087
      %v1149 = vpack.c.b16 %v1090, %v1089
      %v1150 = vpack.c.b16 %v1092, %v1091
      %v1151 = vpack.c.b16 %v1094, %v1093
      %v1152 = vpack.c.b16 %v1096, %v1095
      %v1153 = vpack.c.b16 %v1098, %v1097
      %v1154 = vpack.c.b16 %v1100, %v1099
      %v1155 = vpack.c.b16 %v1102, %v1101
      %v1156 = vpack.c.b16 %v1104, %v1103
      %v1157 = vpack.c.b16 %v1106, %v1105
      %v1158 = vpack.c.b16 %v1108, %v1107
      %v1159 = vpack.c.b16 %v1110, %v1109
      %v1160 = vpack.c.b16 %v1112, %v1111
      %v1161 = vpack.c.b16 %v1114, %v1113
      %v1162 = vpack.c.b16 %v1116, %v1115
      %v1163 = vpack.c.b16 %v1118, %v1117
      %v1164 = vpack.c.b16 %v1120, %v1119
      %v1165 = vpack.c.b16 %v1122, %v1121
      %v1166 = vpack.c.b16 %v1124, %v1123
      %v1167 = vpack.c.b16 %v1126, %v1125
      %v1168 = vpack.c.b16 %v1128, %v1127
      %v1169 = vpack.c.b16 %v1130, %v1129
      %v1170 = vpack.c.b16 %v1132, %v1131
      %v1171 = vpack.c.b16 %v1134, %v1133
      %v1172 = vpack.c.b16 %v1136, %v1135
      %v1173 = vpack.c.b16 %v1138, %v1137
      %v1174 = vpack.c.b16 %v1140, %v1139
      %v1175 = vpack.c.b16 %v1142, %v1141
      %v1176 = vpack.c.b16 %v1144, %v1143
      %v1178 = vshrl.u32 %v1145, 16
      %v1180 = vshll.u32 %v1145, 16
      %v1182 = vrot.slane %v1180, 1
      %v1183 = vor.u32 %v1178, %v1182
      %v1185 = vshrl.u32 %v1146, 16
      %v1187 = vshll.u32 %v1146, 16
      %v1189 = vrot.slane %v1187, 1
      %v1190 = vor.u32 %v1185, %v1189
      %v1192 = vshrl.u32 %v1147, 16
      %v1194 = vshll.u32 %v1147, 16
      %v1196 = vrot.slane %v1194, 1
      %v1197 = vor.u32 %v1192, %v1196
      %v1199 = vshrl.u32 %v1148, 16
      %v1201 = vshll.u32 %v1148, 16
      %v1203 = vrot.slane %v1201, 1
      %v1204 = vor.u32 %v1199, %v1203
      %v1206 = vshrl.u32 %v1149, 16
      %v1208 = vshll.u32 %v1149, 16
      %v1210 = vrot.slane %v1208, 1
      %v1211 = vor.u32 %v1206, %v1210
      %v1213 = vshrl.u32 %v1150, 16
      %v1215 = vshll.u32 %v1150, 16
      %v1217 = vrot.slane %v1215, 1
      %v1218 = vor.u32 %v1213, %v1217
      %v1220 = vshrl.u32 %v1151, 16
      %v1222 = vshll.u32 %v1151, 16
      %v1224 = vrot.slane %v1222, 1
      %v1225 = vor.u32 %v1220, %v1224
      %v1227 = vshrl.u32 %v1152, 16
      %v1229 = vshll.u32 %v1152, 16
      %v1231 = vrot.slane %v1229, 1
      %v1232 = vor.u32 %v1227, %v1231
      %v1234 = vshrl.u32 %v1153, 16
      %v1236 = vshll.u32 %v1153, 16
      %v1238 = vrot.slane %v1236, 1
      %v1239 = vor.u32 %v1234, %v1238
      %v1241 = vshrl.u32 %v1154, 16
      %v1243 = vshll.u32 %v1154, 16
      %v1245 = vrot.slane %v1243, 1
      %v1246 = vor.u32 %v1241, %v1245
      %v1248 = vshrl.u32 %v1155, 16
      %v1250 = vshll.u32 %v1155, 16
      %v1252 = vrot.slane %v1250, 1
      %v1253 = vor.u32 %v1248, %v1252
      %v1255 = vshrl.u32 %v1156, 16
      %v1257 = vshll.u32 %v1156, 16
      %v1259 = vrot.slane %v1257, 1
      %v1260 = vor.u32 %v1255, %v1259
      %v1262 = vshrl.u32 %v1157, 16
      %v1264 = vshll.u32 %v1157, 16
      %v1266 = vrot.slane %v1264, 1
      %v1267 = vor.u32 %v1262, %v1266
      %v1269 = vshrl.u32 %v1158, 16
      %v1271 = vshll.u32 %v1158, 16
      %v1273 = vrot.slane %v1271, 1
      %v1274 = vor.u32 %v1269, %v1273
      %v1276 = vshrl.u32 %v1159, 16
      %v1278 = vshll.u32 %v1159, 16
      %v1280 = vrot.slane %v1278, 1
      %v1281 = vor.u32 %v1276, %v1280
      %v1283 = vshrl.u32 %v1160, 16
      %v1285 = vshll.u32 %v1160, 16
      %v1287 = vrot.slane %v1285, 1
      %v1288 = vor.u32 %v1283, %v1287
      %v1290 = vshrl.u32 %v1161, 16
      %v1292 = vshll.u32 %v1161, 16
      %v1294 = vrot.slane %v1292, 1
      %v1295 = vor.u32 %v1290, %v1294
      %v1297 = vshrl.u32 %v1162, 16
      %v1299 = vshll.u32 %v1162, 16
      %v1301 = vrot.slane %v1299, 1
      %v1302 = vor.u32 %v1297, %v1301
      %v1304 = vshrl.u32 %v1163, 16
      %v1306 = vshll.u32 %v1163, 16
      %v1308 = vrot.slane %v1306, 1
      %v1309 = vor.u32 %v1304, %v1308
      %v1311 = vshrl.u32 %v1164, 16
      %v1313 = vshll.u32 %v1164, 16
      %v1315 = vrot.slane %v1313, 1
      %v1316 = vor.u32 %v1311, %v1315
      %v1318 = vshrl.u32 %v1165, 16
      %v1320 = vshll.u32 %v1165, 16
      %v1322 = vrot.slane %v1320, 1
      %v1323 = vor.u32 %v1318, %v1322
      %v1325 = vshrl.u32 %v1166, 16
      %v1327 = vshll.u32 %v1166, 16
      %v1329 = vrot.slane %v1327, 1
      %v1330 = vor.u32 %v1325, %v1329
      %v1332 = vshrl.u32 %v1167, 16
      %v1334 = vshll.u32 %v1167, 16
      %v1336 = vrot.slane %v1334, 1
      %v1337 = vor.u32 %v1332, %v1336
      %v1339 = vshrl.u32 %v1168, 16
      %v1341 = vshll.u32 %v1168, 16
      %v1343 = vrot.slane %v1341, 1
      %v1344 = vor.u32 %v1339, %v1343
      %v1346 = vshrl.u32 %v1169, 16
      %v1348 = vshll.u32 %v1169, 16
      %v1350 = vrot.slane %v1348, 1
      %v1351 = vor.u32 %v1346, %v1350
      %v1353 = vshrl.u32 %v1170, 16
      %v1355 = vshll.u32 %v1170, 16
      %v1357 = vrot.slane %v1355, 1
      %v1358 = vor.u32 %v1353, %v1357
      %v1360 = vshrl.u32 %v1171, 16
      %v1362 = vshll.u32 %v1171, 16
      %v1364 = vrot.slane %v1362, 1
      %v1365 = vor.u32 %v1360, %v1364
      %v1367 = vshrl.u32 %v1172, 16
      %v1369 = vshll.u32 %v1172, 16
      %v1371 = vrot.slane %v1369, 1
      %v1372 = vor.u32 %v1367, %v1371
      %v1374 = vshrl.u32 %v1173, 16
      %v1376 = vshll.u32 %v1173, 16
      %v1378 = vrot.slane %v1376, 1
      %v1379 = vor.u32 %v1374, %v1378
      %v1381 = vshrl.u32 %v1174, 16
      %v1383 = vshll.u32 %v1174, 16
      %v1385 = vrot.slane %v1383, 1
      %v1386 = vor.u32 %v1381, %v1385
      %v1388 = vshrl.u32 %v1175, 16
      %v1390 = vshll.u32 %v1175, 16
      %v1392 = vrot.slane %v1390, 1
      %v1393 = vor.u32 %v1388, %v1392
      %v1395 = vshrl.u32 %v1176, 16
      %v1397 = vshll.u32 %v1176, 16
      %v1399 = vrot.slane %v1397, 1
      %v1400 = vor.u32 %v1395, %v1399
      %1401 = vrot.lane.b32.xlu0 %v1183, 16
      %v1402 = vpop.permute.xlu0 %1401
      %1403 = vrot.lane.b32.xlu0 %v1190, 16
      %v1404 = vpop.permute.xlu0 %1403
      %1405 = vrot.lane.b32.xlu0 %v1197, 16
      %v1406 = vpop.permute.xlu0 %1405
      %1407 = vrot.lane.b32.xlu0 %v1204, 16
      %v1408 = vpop.permute.xlu0 %1407
      %1409 = vrot.lane.b32.xlu0 %v1211, 16
      %v1410 = vpop.permute.xlu0 %1409
      %1411 = vrot.lane.b32.xlu0 %v1218, 16
      %v1412 = vpop.permute.xlu0 %1411
      %1413 = vrot.lane.b32.xlu0 %v1225, 16
      %v1414 = vpop.permute.xlu0 %1413
      %1415 = vrot.lane.b32.xlu0 %v1232, 16
      %v1416 = vpop.permute.xlu0 %1415
      %1417 = vrot.lane.b32.xlu0 %v1239, 16
      %v1418 = vpop.permute.xlu0 %1417
      %1419 = vrot.lane.b32.xlu0 %v1246, 16
      %v1420 = vpop.permute.xlu0 %1419
      %1421 = vrot.lane.b32.xlu0 %v1253, 16
      %v1422 = vpop.permute.xlu0 %1421
      %1423 = vrot.lane.b32.xlu0 %v1260, 16
      %v1424 = vpop.permute.xlu0 %1423
      %1425 = vrot.lane.b32.xlu0 %v1267, 16
      %v1426 = vpop.permute.xlu0 %1425
      %1427 = vrot.lane.b32.xlu0 %v1274, 16
      %v1428 = vpop.permute.xlu0 %1427
      %1429 = vrot.lane.b32.xlu0 %v1281, 16
      %v1430 = vpop.permute.xlu0 %1429
      %1431 = vrot.lane.b32.xlu0 %v1288, 16
      %v1432 = vpop.permute.xlu0 %1431
      %1433 = vrot.lane.b32.xlu0 %v1295, 16
      %v1434 = vpop.permute.xlu0 %1433
      %1435 = vrot.lane.b32.xlu0 %v1302, 16
      %v1436 = vpop.permute.xlu0 %1435
      %1437 = vrot.lane.b32.xlu0 %v1309, 16
      %v1438 = vpop.permute.xlu0 %1437
      %1439 = vrot.lane.b32.xlu0 %v1316, 16
      %v1440 = vpop.permute.xlu0 %1439
      %1441 = vrot.lane.b32.xlu0 %v1323, 16
      %v1442 = vpop.permute.xlu0 %1441
      %1443 = vrot.lane.b32.xlu0 %v1330, 16
      %v1444 = vpop.permute.xlu0 %1443
      %1445 = vrot.lane.b32.xlu0 %v1337, 16
      %v1446 = vpop.permute.xlu0 %1445
      %1447 = vrot.lane.b32.xlu0 %v1344, 16
      %v1448 = vpop.permute.xlu0 %1447
      %1449 = vrot.lane.b32.xlu0 %v1351, 16
      %v1450 = vpop.permute.xlu0 %1449
      %1451 = vrot.lane.b32.xlu0 %v1358, 16
      %v1452 = vpop.permute.xlu0 %1451
      %1453 = vrot.lane.b32.xlu0 %v1365, 16
      %v1454 = vpop.permute.xlu0 %1453
      %1455 = vrot.lane.b32.xlu0 %v1372, 16
      %v1456 = vpop.permute.xlu0 %1455
      %1457 = vrot.lane.b32.xlu0 %v1379, 16
      %v1458 = vpop.permute.xlu0 %1457
      %1459 = vrot.lane.b32.xlu0 %v1386, 16
      %v1460 = vpop.permute.xlu0 %1459
      %1461 = vrot.lane.b32.xlu0 %v1393, 16
      %v1462 = vpop.permute.xlu0 %1461
      %1463 = vrot.lane.b32.xlu0 %v1400, 16
      %v1464 = vpop.permute.xlu0 %1463
      %v1497 = vunpack.c.l.b16 %v761
      %v1498 = vunpack.c.l.b16 %v763
      %v1499 = vunpack.c.l.b16 %v765
      %v1500 = vunpack.c.l.b16 %v767
      %v1501 = vunpack.c.l.b16 %v769
      %v1502 = vunpack.c.l.b16 %v771
      %v1503 = vunpack.c.l.b16 %v773
      %v1504 = vunpack.c.l.b16 %v775
      %v1505 = vunpack.c.l.b16 %v777
      %v1506 = vunpack.c.l.b16 %v779
      %v1507 = vunpack.c.l.b16 %v781
      %v1508 = vunpack.c.l.b16 %v783
      %v1509 = vunpack.c.l.b16 %v785
      %v1510 = vunpack.c.l.b16 %v787
      %v1511 = vunpack.c.l.b16 %v789
      %v1512 = vunpack.c.l.b16 %v791
      %v1513 = vunpack.c.l.b16 %v793
      %v1514 = vunpack.c.l.b16 %v795
      %v1515 = vunpack.c.l.b16 %v797
      %v1516 = vunpack.c.l.b16 %v799
      %v1517 = vunpack.c.l.b16 %v801
      %v1518 = vunpack.c.l.b16 %v803
      %v1519 = vunpack.c.l.b16 %v805
      %v1520 = vunpack.c.l.b16 %v807
      %v1521 = vunpack.c.l.b16 %v809
      %v1522 = vunpack.c.l.b16 %v811
      %v1523 = vunpack.c.l.b16 %v813
      %v1524 = vunpack.c.l.b16 %v815
      %v1525 = vunpack.c.l.b16 %v817
      %v1526 = vunpack.c.l.b16 %v819
      %v1527 = vunpack.c.l.b16 %v821
      %v1528 = vunpack.c.l.b16 %v823
      %v1529 = vpack.c.b16 %v1497, %v1497
      %v1530 = vpack.c.b16 %v1498, %v1498
      %v1531 = vpack.c.b16 %v1499, %v1499
      %v1532 = vpack.c.b16 %v1500, %v1500
      %v1533 = vpack.c.b16 %v1501, %v1501
      %v1534 = vpack.c.b16 %v1502, %v1502
      %v1535 = vpack.c.b16 %v1503, %v1503
      %v1536 = vpack.c.b16 %v1504, %v1504
      %v1537 = vpack.c.b16 %v1505, %v1505
      %v1538 = vpack.c.b16 %v1506, %v1506
      %v1539 = vpack.c.b16 %v1507, %v1507
      %v1540 = vpack.c.b16 %v1508, %v1508
      %v1541 = vpack.c.b16 %v1509, %v1509
      %v1542 = vpack.c.b16 %v1510, %v1510
      %v1543 = vpack.c.b16 %v1511, %v1511
      %v1544 = vpack.c.b16 %v1512, %v1512
      %v1545 = vpack.c.b16 %v1513, %v1513
      %v1546 = vpack.c.b16 %v1514, %v1514
      %v1547 = vpack.c.b16 %v1515, %v1515
      %v1548 = vpack.c.b16 %v1516, %v1516
      %v1549 = vpack.c.b16 %v1517, %v1517
      %v1550 = vpack.c.b16 %v1518, %v1518
      %v1551 = vpack.c.b16 %v1519, %v1519
      %v1552 = vpack.c.b16 %v1520, %v1520
      %v1553 = vpack.c.b16 %v1521, %v1521
      %v1554 = vpack.c.b16 %v1522, %v1522
      %v1555 = vpack.c.b16 %v1523, %v1523
      %v1556 = vpack.c.b16 %v1524, %v1524
      %v1557 = vpack.c.b16 %v1525, %v1525
      %v1558 = vpack.c.b16 %v1526, %v1526
      %v1559 = vpack.c.b16 %v1527, %v1527
      %v1560 = vpack.c.b16 %v1528, %v1528
      %1561 = vrot.lane.b32.xlu0 %v1529, 24
      %v1562 = vpop.permute.xlu0 %1561
      %1563 = vrot.lane.b32.xlu0 %v1530, 24
      %v1564 = vpop.permute.xlu0 %1563
      %1565 = vrot.lane.b32.xlu0 %v1531, 24
      %v1566 = vpop.permute.xlu0 %1565
      %1567 = vrot.lane.b32.xlu0 %v1532, 24
      %v1568 = vpop.permute.xlu0 %1567
      %1569 = vrot.lane.b32.xlu0 %v1533, 24
      %v1570 = vpop.permute.xlu0 %1569
      %1571 = vrot.lane.b32.xlu0 %v1534, 24
      %v1572 = vpop.permute.xlu0 %1571
      %1573 = vrot.lane.b32.xlu0 %v1535, 24
      %v1574 = vpop.permute.xlu0 %1573
      %1575 = vrot.lane.b32.xlu0 %v1536, 24
      %v1576 = vpop.permute.xlu0 %1575
      %1577 = vrot.lane.b32.xlu0 %v1537, 24
      %v1578 = vpop.permute.xlu0 %1577
      %1579 = vrot.lane.b32.xlu0 %v1538, 24
      %v1580 = vpop.permute.xlu0 %1579
      %1581 = vrot.lane.b32.xlu0 %v1539, 24
      %v1582 = vpop.permute.xlu0 %1581
      %1583 = vrot.lane.b32.xlu0 %v1540, 24
      %v1584 = vpop.permute.xlu0 %1583
      %1585 = vrot.lane.b32.xlu0 %v1541, 24
      %v1586 = vpop.permute.xlu0 %1585
      %1587 = vrot.lane.b32.xlu0 %v1542, 24
      %v1588 = vpop.permute.xlu0 %1587
      %1589 = vrot.lane.b32.xlu0 %v1543, 24
      %v1590 = vpop.permute.xlu0 %1589
      %1591 = vrot.lane.b32.xlu0 %v1544, 24
      %v1592 = vpop.permute.xlu0 %1591
      %1593 = vrot.lane.b32.xlu0 %v1545, 24
      %v1594 = vpop.permute.xlu0 %1593
      %1595 = vrot.lane.b32.xlu0 %v1546, 24
      %v1596 = vpop.permute.xlu0 %1595
      %1597 = vrot.lane.b32.xlu0 %v1547, 24
      %v1598 = vpop.permute.xlu0 %1597
      %1599 = vrot.lane.b32.xlu0 %v1548, 24
      %v1600 = vpop.permute.xlu0 %1599
      %1601 = vrot.lane.b32.xlu0 %v1549, 24
      %v1602 = vpop.permute.xlu0 %1601
      %1603 = vrot.lane.b32.xlu0 %v1550, 24
      %v1604 = vpop.permute.xlu0 %1603
      %1605 = vrot.lane.b32.xlu0 %v1551, 24
      %v1606 = vpop.permute.xlu0 %1605
      %1607 = vrot.lane.b32.xlu0 %v1552, 24
      %v1608 = vpop.permute.xlu0 %1607
      %1609 = vrot.lane.b32.xlu0 %v1553, 24
      %v1610 = vpop.permute.xlu0 %1609
      %1611 = vrot.lane.b32.xlu0 %v1554, 24
      %v1612 = vpop.permute.xlu0 %1611
      %1613 = vrot.lane.b32.xlu0 %v1555, 24
      %v1614 = vpop.permute.xlu0 %1613
      %1615 = vrot.lane.b32.xlu0 %v1556, 24
      %v1616 = vpop.permute.xlu0 %1615
      %1617 = vrot.lane.b32.xlu0 %v1557, 24
      %v1618 = vpop.permute.xlu0 %1617
      %1619 = vrot.lane.b32.xlu0 %v1558, 24
      %v1620 = vpop.permute.xlu0 %1619
      %1621 = vrot.lane.b32.xlu0 %v1559, 24
      %v1622 = vpop.permute.xlu0 %1621
      %1623 = vrot.lane.b32.xlu0 %v1560, 24
      %v1624 = vpop.permute.xlu0 %1623
      %v1657 = vunpack.c.l.b16 %v825
      %v1658 = vunpack.c.l.b16 %v826
      %v1659 = vunpack.c.l.b16 %v827
      %v1660 = vunpack.c.l.b16 %v828
      %v1661 = vunpack.c.l.b16 %v829
      %v1662 = vunpack.c.l.b16 %v830
      %v1663 = vunpack.c.l.b16 %v831
      %v1664 = vunpack.c.l.b16 %v832
      %v1665 = vunpack.c.l.b16 %v833
      %v1666 = vunpack.c.l.b16 %v834
      %v1667 = vunpack.c.l.b16 %v835
      %v1668 = vunpack.c.l.b16 %v836
      %v1669 = vunpack.c.l.b16 %v837
      %v1670 = vunpack.c.l.b16 %v838
      %v1671 = vunpack.c.l.b16 %v839
      %v1672 = vunpack.c.l.b16 %v840
      %v1673 = vunpack.c.l.b16 %v841
      %v1674 = vunpack.c.l.b16 %v842
      %v1675 = vunpack.c.l.b16 %v843
      %v1676 = vunpack.c.l.b16 %v844
      %v1677 = vunpack.c.l.b16 %v845
      %v1678 = vunpack.c.l.b16 %v846
      %v1679 = vunpack.c.l.b16 %v847
      %v1680 = vunpack.c.l.b16 %v848
      %v1681 = vunpack.c.l.b16 %v849
      %v1682 = vunpack.c.l.b16 %v850
      %v1683 = vunpack.c.l.b16 %v851
      %v1684 = vunpack.c.l.b16 %v852
      %v1685 = vunpack.c.l.b16 %v853
      %v1686 = vunpack.c.l.b16 %v854
      %v1687 = vunpack.c.l.b16 %v855
      %v1688 = vunpack.c.l.b16 %v856
      %v1689 = vpack.c.b16 %v1657, %v1657
      %v1690 = vpack.c.b16 %v1658, %v1658
      %v1691 = vpack.c.b16 %v1659, %v1659
      %v1692 = vpack.c.b16 %v1660, %v1660
      %v1693 = vpack.c.b16 %v1661, %v1661
      %v1694 = vpack.c.b16 %v1662, %v1662
      %v1695 = vpack.c.b16 %v1663, %v1663
      %v1696 = vpack.c.b16 %v1664, %v1664
      %v1697 = vpack.c.b16 %v1665, %v1665
      %v1698 = vpack.c.b16 %v1666, %v1666
      %v1699 = vpack.c.b16 %v1667, %v1667
      %v1700 = vpack.c.b16 %v1668, %v1668
      %v1701 = vpack.c.b16 %v1669, %v1669
      %v1702 = vpack.c.b16 %v1670, %v1670
      %v1703 = vpack.c.b16 %v1671, %v1671
      %v1704 = vpack.c.b16 %v1672, %v1672
      %v1705 = vpack.c.b16 %v1673, %v1673
      %v1706 = vpack.c.b16 %v1674, %v1674
      %v1707 = vpack.c.b16 %v1675, %v1675
      %v1708 = vpack.c.b16 %v1676, %v1676
      %v1709 = vpack.c.b16 %v1677, %v1677
      %v1710 = vpack.c.b16 %v1678, %v1678
      %v1711 = vpack.c.b16 %v1679, %v1679
      %v1712 = vpack.c.b16 %v1680, %v1680
      %v1713 = vpack.c.b16 %v1681, %v1681
      %v1714 = vpack.c.b16 %v1682, %v1682
      %v1715 = vpack.c.b16 %v1683, %v1683
      %v1716 = vpack.c.b16 %v1684, %v1684
      %v1717 = vpack.c.b16 %v1685, %v1685
      %v1718 = vpack.c.b16 %v1686, %v1686
      %v1719 = vpack.c.b16 %v1687, %v1687
      %v1720 = vpack.c.b16 %v1688, %v1688
      %1721 = vrot.lane.b32.xlu0 %v1689, 32
      %v1722 = vpop.permute.xlu0 %1721
      %1723 = vrot.lane.b32.xlu0 %v1690, 32
      %v1724 = vpop.permute.xlu0 %1723
      %1725 = vrot.lane.b32.xlu0 %v1691, 32
      %v1726 = vpop.permute.xlu0 %1725
      %1727 = vrot.lane.b32.xlu0 %v1692, 32
      %v1728 = vpop.permute.xlu0 %1727
      %1729 = vrot.lane.b32.xlu0 %v1693, 32
      %v1730 = vpop.permute.xlu0 %1729
      %1731 = vrot.lane.b32.xlu0 %v1694, 32
      %v1732 = vpop.permute.xlu0 %1731
      %1733 = vrot.lane.b32.xlu0 %v1695, 32
      %v1734 = vpop.permute.xlu0 %1733
      %1735 = vrot.lane.b32.xlu0 %v1696, 32
      %v1736 = vpop.permute.xlu0 %1735
      %1737 = vrot.lane.b32.xlu0 %v1697, 32
      %v1738 = vpop.permute.xlu0 %1737
      %1739 = vrot.lane.b32.xlu0 %v1698, 32
      %v1740 = vpop.permute.xlu0 %1739
      %1741 = vrot.lane.b32.xlu0 %v1699, 32
      %v1742 = vpop.permute.xlu0 %1741
      %1743 = vrot.lane.b32.xlu0 %v1700, 32
      %v1744 = vpop.permute.xlu0 %1743
      %1745 = vrot.lane.b32.xlu0 %v1701, 32
      %v1746 = vpop.permute.xlu0 %1745
      %1747 = vrot.lane.b32.xlu0 %v1702, 32
      %v1748 = vpop.permute.xlu0 %1747
      %1749 = vrot.lane.b32.xlu0 %v1703, 32
      %v1750 = vpop.permute.xlu0 %1749
      %1751 = vrot.lane.b32.xlu0 %v1704, 32
      %v1752 = vpop.permute.xlu0 %1751
      %1753 = vrot.lane.b32.xlu0 %v1705, 32
      %v1754 = vpop.permute.xlu0 %1753
      %1755 = vrot.lane.b32.xlu0 %v1706, 32
      %v1756 = vpop.permute.xlu0 %1755
      %1757 = vrot.lane.b32.xlu0 %v1707, 32
      %v1758 = vpop.permute.xlu0 %1757
      %1759 = vrot.lane.b32.xlu0 %v1708, 32
      %v1760 = vpop.permute.xlu0 %1759
      %1761 = vrot.lane.b32.xlu0 %v1709, 32
      %v1762 = vpop.permute.xlu0 %1761
      %1763 = vrot.lane.b32.xlu0 %v1710, 32
      %v1764 = vpop.permute.xlu0 %1763
      %1765 = vrot.lane.b32.xlu0 %v1711, 32
      %v1766 = vpop.permute.xlu0 %1765
      %1767 = vrot.lane.b32.xlu0 %v1712, 32
      %v1768 = vpop.permute.xlu0 %1767
      %1769 = vrot.lane.b32.xlu0 %v1713, 32
      %v1770 = vpop.permute.xlu0 %1769
      %1771 = vrot.lane.b32.xlu0 %v1714, 32
      %v1772 = vpop.permute.xlu0 %1771
      %1773 = vrot.lane.b32.xlu0 %v1715, 32
      %v1774 = vpop.permute.xlu0 %1773
      %1775 = vrot.lane.b32.xlu0 %v1716, 32
      %v1776 = vpop.permute.xlu0 %1775
      %1777 = vrot.lane.b32.xlu0 %v1717, 32
      %v1778 = vpop.permute.xlu0 %1777
      %1779 = vrot.lane.b32.xlu0 %v1718, 32
      %v1780 = vpop.permute.xlu0 %1779
      %1781 = vrot.lane.b32.xlu0 %v1719, 32
      %v1782 = vpop.permute.xlu0 %1781
      %1783 = vrot.lane.b32.xlu0 %v1720, 32
      %v1784 = vpop.permute.xlu0 %1783
      %v1817 = vunpack.c.l.b16 %v762
      %v1818 = vunpack.c.l.b16 %v764
      %v1819 = vunpack.c.l.b16 %v766
      %v1820 = vunpack.c.l.b16 %v768
      %v1821 = vunpack.c.l.b16 %v770
      %v1822 = vunpack.c.l.b16 %v772
      %v1823 = vunpack.c.l.b16 %v774
      %v1824 = vunpack.c.l.b16 %v776
      %v1825 = vunpack.c.l.b16 %v778
      %v1826 = vunpack.c.l.b16 %v780
      %v1827 = vunpack.c.l.b16 %v782
      %v1828 = vunpack.c.l.b16 %v784
      %v1829 = vunpack.c.l.b16 %v786
      %v1830 = vunpack.c.l.b16 %v788
      %v1831 = vunpack.c.l.b16 %v790
      %v1832 = vunpack.c.l.b16 %v792
      %v1833 = vunpack.c.l.b16 %v794
      %v1834 = vunpack.c.l.b16 %v796
      %v1835 = vunpack.c.l.b16 %v798
      %v1836 = vunpack.c.l.b16 %v800
      %v1837 = vunpack.c.l.b16 %v802
      %v1838 = vunpack.c.l.b16 %v804
      %v1839 = vunpack.c.l.b16 %v806
      %v1840 = vunpack.c.l.b16 %v808
      %v1841 = vunpack.c.l.b16 %v810
      %v1842 = vunpack.c.l.b16 %v812
      %v1843 = vunpack.c.l.b16 %v814
      %v1844 = vunpack.c.l.b16 %v816
      %v1845 = vunpack.c.l.b16 %v818
      %v1846 = vunpack.c.l.b16 %v820
      %v1847 = vunpack.c.l.b16 %v822
      %v1848 = vunpack.c.l.b16 %v824
      %v1849 = vpack.c.b16 %v1817, %v1497
      %v1850 = vpack.c.b16 %v1818, %v1498
      %v1851 = vpack.c.b16 %v1819, %v1499
      %v1852 = vpack.c.b16 %v1820, %v1500
      %v1853 = vpack.c.b16 %v1821, %v1501
      %v1854 = vpack.c.b16 %v1822, %v1502
      %v1855 = vpack.c.b16 %v1823, %v1503
      %v1856 = vpack.c.b16 %v1824, %v1504
      %v1857 = vpack.c.b16 %v1825, %v1505
      %v1858 = vpack.c.b16 %v1826, %v1506
      %v1859 = vpack.c.b16 %v1827, %v1507
      %v1860 = vpack.c.b16 %v1828, %v1508
      %v1861 = vpack.c.b16 %v1829, %v1509
      %v1862 = vpack.c.b16 %v1830, %v1510
      %v1863 = vpack.c.b16 %v1831, %v1511
      %v1864 = vpack.c.b16 %v1832, %v1512
      %v1865 = vpack.c.b16 %v1833, %v1513
      %v1866 = vpack.c.b16 %v1834, %v1514
      %v1867 = vpack.c.b16 %v1835, %v1515
      %v1868 = vpack.c.b16 %v1836, %v1516
      %v1869 = vpack.c.b16 %v1837, %v1517
      %v1870 = vpack.c.b16 %v1838, %v1518
      %v1871 = vpack.c.b16 %v1839, %v1519
      %v1872 = vpack.c.b16 %v1840, %v1520
      %v1873 = vpack.c.b16 %v1841, %v1521
      %v1874 = vpack.c.b16 %v1842, %v1522
      %v1875 = vpack.c.b16 %v1843, %v1523
      %v1876 = vpack.c.b16 %v1844, %v1524
      %v1877 = vpack.c.b16 %v1845, %v1525
      %v1878 = vpack.c.b16 %v1846, %v1526
      %v1879 = vpack.c.b16 %v1847, %v1527
      %v1880 = vpack.c.b16 %v1848, %v1528
      %v1882 = vshrl.u32 %v1849, 16
      %v1884 = vshll.u32 %v1849, 16
      %v1886 = vrot.slane %v1884, 1
      %v1887 = vor.u32 %v1882, %v1886
      %v1889 = vshrl.u32 %v1850, 16
      %v1891 = vshll.u32 %v1850, 16
      %v1893 = vrot.slane %v1891, 1
      %v1894 = vor.u32 %v1889, %v1893
      %v1896 = vshrl.u32 %v1851, 16
      %v1898 = vshll.u32 %v1851, 16
      %v1900 = vrot.slane %v1898, 1
      %v1901 = vor.u32 %v1896, %v1900
      %v1903 = vshrl.u32 %v1852, 16
      %v1905 = vshll.u32 %v1852, 16
      %v1907 = vrot.slane %v1905, 1
      %v1908 = vor.u32 %v1903, %v1907
      %v1910 = vshrl.u32 %v1853, 16
      %v1912 = vshll.u32 %v1853, 16
      %v1914 = vrot.slane %v1912, 1
      %v1915 = vor.u32 %v1910, %v1914
      %v1917 = vshrl.u32 %v1854, 16
      %v1919 = vshll.u32 %v1854, 16
      %v1921 = vrot.slane %v1919, 1
      %v1922 = vor.u32 %v1917, %v1921
      %v1924 = vshrl.u32 %v1855, 16
      %v1926 = vshll.u32 %v1855, 16
      %v1928 = vrot.slane %v1926, 1
      %v1929 = vor.u32 %v1924, %v1928
      %v1931 = vshrl.u32 %v1856, 16
      %v1933 = vshll.u32 %v1856, 16
      %v1935 = vrot.slane %v1933, 1
      %v1936 = vor.u32 %v1931, %v1935
      %v1938 = vshrl.u32 %v1857, 16
      %v1940 = vshll.u32 %v1857, 16
      %v1942 = vrot.slane %v1940, 1
      %v1943 = vor.u32 %v1938, %v1942
      %v1945 = vshrl.u32 %v1858, 16
      %v1947 = vshll.u32 %v1858, 16
      %v1949 = vrot.slane %v1947, 1
      %v1950 = vor.u32 %v1945, %v1949
      %v1952 = vshrl.u32 %v1859, 16
      %v1954 = vshll.u32 %v1859, 16
      %v1956 = vrot.slane %v1954, 1
      %v1957 = vor.u32 %v1952, %v1956
      %v1959 = vshrl.u32 %v1860, 16
      %v1961 = vshll.u32 %v1860, 16
      %v1963 = vrot.slane %v1961, 1
      %v1964 = vor.u32 %v1959, %v1963
      %v1966 = vshrl.u32 %v1861, 16
      %v1968 = vshll.u32 %v1861, 16
      %v1970 = vrot.slane %v1968, 1
      %v1971 = vor.u32 %v1966, %v1970
      %v1973 = vshrl.u32 %v1862, 16
      %v1975 = vshll.u32 %v1862, 16
      %v1977 = vrot.slane %v1975, 1
      %v1978 = vor.u32 %v1973, %v1977
      %v1980 = vshrl.u32 %v1863, 16
      %v1982 = vshll.u32 %v1863, 16
      %v1984 = vrot.slane %v1982, 1
      %v1985 = vor.u32 %v1980, %v1984
      %v1987 = vshrl.u32 %v1864, 16
      %v1989 = vshll.u32 %v1864, 16
      %v1991 = vrot.slane %v1989, 1
      %v1992 = vor.u32 %v1987, %v1991
      %v1994 = vshrl.u32 %v1865, 16
      %v1996 = vshll.u32 %v1865, 16
      %v1998 = vrot.slane %v1996, 1
      %v1999 = vor.u32 %v1994, %v1998
      %v2001 = vshrl.u32 %v1866, 16
      %v2003 = vshll.u32 %v1866, 16
      %v2005 = vrot.slane %v2003, 1
      %v2006 = vor.u32 %v2001, %v2005
      %v2008 = vshrl.u32 %v1867, 16
      %v2010 = vshll.u32 %v1867, 16
      %v2012 = vrot.slane %v2010, 1
      %v2013 = vor.u32 %v2008, %v2012
      %v2015 = vshrl.u32 %v1868, 16
      %v2017 = vshll.u32 %v1868, 16
      %v2019 = vrot.slane %v2017, 1
      %v2020 = vor.u32 %v2015, %v2019
      %v2022 = vshrl.u32 %v1869, 16
      %v2024 = vshll.u32 %v1869, 16
      %v2026 = vrot.slane %v2024, 1
      %v2027 = vor.u32 %v2022, %v2026
      %v2029 = vshrl.u32 %v1870, 16
      %v2031 = vshll.u32 %v1870, 16
      %v2033 = vrot.slane %v2031, 1
      %v2034 = vor.u32 %v2029, %v2033
      %v2036 = vshrl.u32 %v1871, 16
      %v2038 = vshll.u32 %v1871, 16
      %v2040 = vrot.slane %v2038, 1
      %v2041 = vor.u32 %v2036, %v2040
      %v2043 = vshrl.u32 %v1872, 16
      %v2045 = vshll.u32 %v1872, 16
      %v2047 = vrot.slane %v2045, 1
      %v2048 = vor.u32 %v2043, %v2047
      %v2050 = vshrl.u32 %v1873, 16
      %v2052 = vshll.u32 %v1873, 16
      %v2054 = vrot.slane %v2052, 1
      %v2055 = vor.u32 %v2050, %v2054
      %v2057 = vshrl.u32 %v1874, 16
      %v2059 = vshll.u32 %v1874, 16
      %v2061 = vrot.slane %v2059, 1
      %v2062 = vor.u32 %v2057, %v2061
      %v2064 = vshrl.u32 %v1875, 16
      %v2066 = vshll.u32 %v1875, 16
      %v2068 = vrot.slane %v2066, 1
      %v2069 = vor.u32 %v2064, %v2068
      %v2071 = vshrl.u32 %v1876, 16
      %v2073 = vshll.u32 %v1876, 16
      %v2075 = vrot.slane %v2073, 1
      %v2076 = vor.u32 %v2071, %v2075
      %v2078 = vshrl.u32 %v1877, 16
      %v2080 = vshll.u32 %v1877, 16
      %v2082 = vrot.slane %v2080, 1
      %v2083 = vor.u32 %v2078, %v2082
      %v2085 = vshrl.u32 %v1878, 16
      %v2087 = vshll.u32 %v1878, 16
      %v2089 = vrot.slane %v2087, 1
      %v2090 = vor.u32 %v2085, %v2089
      %v2092 = vshrl.u32 %v1879, 16
      %v2094 = vshll.u32 %v1879, 16
      %v2096 = vrot.slane %v2094, 1
      %v2097 = vor.u32 %v2092, %v2096
      %v2099 = vshrl.u32 %v1880, 16
      %v2101 = vshll.u32 %v1880, 16
      %v2103 = vrot.slane %v2101, 1
      %v2104 = vor.u32 %v2099, %v2103
      %2105 = vrot.lane.b32.xlu0 %v1887, 40
      %v2106 = vpop.permute.xlu0 %2105
      %2107 = vrot.lane.b32.xlu0 %v1894, 40
      %v2108 = vpop.permute.xlu0 %2107
      %2109 = vrot.lane.b32.xlu0 %v1901, 40
      %v2110 = vpop.permute.xlu0 %2109
      %2111 = vrot.lane.b32.xlu0 %v1908, 40
      %v2112 = vpop.permute.xlu0 %2111
      %2113 = vrot.lane.b32.xlu0 %v1915, 40
      %v2114 = vpop.permute.xlu0 %2113
      %2115 = vrot.lane.b32.xlu0 %v1922, 40
      %v2116 = vpop.permute.xlu0 %2115
      %2117 = vrot.lane.b32.xlu0 %v1929, 40
      %v2118 = vpop.permute.xlu0 %2117
      %2119 = vrot.lane.b32.xlu0 %v1936, 40
      %v2120 = vpop.permute.xlu0 %2119
      %2121 = vrot.lane.b32.xlu0 %v1943, 40
      %v2122 = vpop.permute.xlu0 %2121
      %2123 = vrot.lane.b32.xlu0 %v1950, 40
      %v2124 = vpop.permute.xlu0 %2123
      %2125 = vrot.lane.b32.xlu0 %v1957, 40
      %v2126 = vpop.permute.xlu0 %2125
      %2127 = vrot.lane.b32.xlu0 %v1964, 40
      %v2128 = vpop.permute.xlu0 %2127
      %2129 = vrot.lane.b32.xlu0 %v1971, 40
      %v2130 = vpop.permute.xlu0 %2129
      %2131 = vrot.lane.b32.xlu0 %v1978, 40
      %v2132 = vpop.permute.xlu0 %2131
      %2133 = vrot.lane.b32.xlu0 %v1985, 40
      %v2134 = vpop.permute.xlu0 %2133
      %2135 = vrot.lane.b32.xlu0 %v1992, 40
      %v2136 = vpop.permute.xlu0 %2135
      %2137 = vrot.lane.b32.xlu0 %v1999, 40
      %v2138 = vpop.permute.xlu0 %2137
      %2139 = vrot.lane.b32.xlu0 %v2006, 40
      %v2140 = vpop.permute.xlu0 %2139
      %2141 = vrot.lane.b32.xlu0 %v2013, 40
      %v2142 = vpop.permute.xlu0 %2141
      %2143 = vrot.lane.b32.xlu0 %v2020, 40
      %v2144 = vpop.permute.xlu0 %2143
      %2145 = vrot.lane.b32.xlu0 %v2027, 40
      %v2146 = vpop.permute.xlu0 %2145
      %2147 = vrot.lane.b32.xlu0 %v2034, 40
      %v2148 = vpop.permute.xlu0 %2147
      %2149 = vrot.lane.b32.xlu0 %v2041, 40
      %v2150 = vpop.permute.xlu0 %2149
      %2151 = vrot.lane.b32.xlu0 %v2048, 40
      %v2152 = vpop.permute.xlu0 %2151
      %2153 = vrot.lane.b32.xlu0 %v2055, 40
      %v2154 = vpop.permute.xlu0 %2153
      %2155 = vrot.lane.b32.xlu0 %v2062, 40
      %v2156 = vpop.permute.xlu0 %2155
      %2157 = vrot.lane.b32.xlu0 %v2069, 40
      %v2158 = vpop.permute.xlu0 %2157
      %2159 = vrot.lane.b32.xlu0 %v2076, 40
      %v2160 = vpop.permute.xlu0 %2159
      %2161 = vrot.lane.b32.xlu0 %v2083, 40
      %v2162 = vpop.permute.xlu0 %2161
      %2163 = vrot.lane.b32.xlu0 %v2090, 40
      %v2164 = vpop.permute.xlu0 %2163
      %2165 = vrot.lane.b32.xlu0 %v2097, 40
      %v2166 = vpop.permute.xlu0 %2165
      %2167 = vrot.lane.b32.xlu0 %v2104, 40
      %v2168 = vpop.permute.xlu0 %2167
      %v2170 = vunpack.c.l.b16 %v726
      %v2171 = vpack.c.b16 %v1083, %v1083
      %v2172 = vpack.c.b16 %v1085, %v1085
      %v2173 = vpack.c.b16 %v1087, %v1087
      %v2174 = vpack.c.b16 %v1089, %v1089
      %v2175 = vpack.c.b16 %v1091, %v1091
      %v2176 = vpack.c.b16 %v1093, %v1093
      %v2177 = vpack.c.b16 %v1095, %v1095
      %v2178 = vpack.c.b16 %v1097, %v1097
      %v2179 = vpack.c.b16 %v1099, %v1099
      %v2180 = vpack.c.b16 %v1101, %v1101
      %v2181 = vpack.c.b16 %v1103, %v1103
      %v2182 = vpack.c.b16 %v1105, %v1105
      %v2183 = vpack.c.b16 %v1107, %v1107
      %v2184 = vpack.c.b16 %v1109, %v1109
      %v2185 = vpack.c.b16 %v1111, %v1111
      %v2186 = vpack.c.b16 %v1113, %v1113
      %v2187 = vpack.c.b16 %v1115, %v1115
      %v2188 = vpack.c.b16 %v1117, %v1117
      %v2189 = vpack.c.b16 %v1119, %v1119
      %v2190 = vpack.c.b16 %v1121, %v1121
      %v2191 = vpack.c.b16 %v1123, %v1123
      %v2192 = vpack.c.b16 %v1125, %v1125
      %v2193 = vpack.c.b16 %v1127, %v1127
      %v2194 = vpack.c.b16 %v1129, %v1129
      %v2195 = vpack.c.b16 %v1131, %v1131
      %v2196 = vpack.c.b16 %v1133, %v1133
      %v2197 = vpack.c.b16 %v1135, %v1135
      %v2198 = vpack.c.b16 %v1137, %v1137
      %v2199 = vpack.c.b16 %v1139, %v1139
      %v2200 = vpack.c.b16 %v1141, %v1141
      %v2201 = vpack.c.b16 %v1143, %v1143
      %v2202 = vpack.c.b16 %v2170, %v2170
      %2203 = vrot.lane.b32.xlu0 %v2171, 48
      %v2204 = vpop.permute.xlu0 %2203
      %2205 = vrot.lane.b32.xlu0 %v2172, 48
      %v2206 = vpop.permute.xlu0 %2205
      %2207 = vrot.lane.b32.xlu0 %v2173, 48
      %v2208 = vpop.permute.xlu0 %2207
      %2209 = vrot.lane.b32.xlu0 %v2174, 48
      %v2210 = vpop.permute.xlu0 %2209
      %2211 = vrot.lane.b32.xlu0 %v2175, 48
      %v2212 = vpop.permute.xlu0 %2211
      %2213 = vrot.lane.b32.xlu0 %v2176, 48
      %v2214 = vpop.permute.xlu0 %2213
      %2215 = vrot.lane.b32.xlu0 %v2177, 48
      %v2216 = vpop.permute.xlu0 %2215
      %2217 = vrot.lane.b32.xlu0 %v2178, 48
      %v2218 = vpop.permute.xlu0 %2217
      %2219 = vrot.lane.b32.xlu0 %v2179, 48
      %v2220 = vpop.permute.xlu0 %2219
      %2221 = vrot.lane.b32.xlu0 %v2180, 48
      %v2222 = vpop.permute.xlu0 %2221
      %2223 = vrot.lane.b32.xlu0 %v2181, 48
      %v2224 = vpop.permute.xlu0 %2223
      %2225 = vrot.lane.b32.xlu0 %v2182, 48
      %v2226 = vpop.permute.xlu0 %2225
      %2227 = vrot.lane.b32.xlu0 %v2183, 48
      %v2228 = vpop.permute.xlu0 %2227
      %2229 = vrot.lane.b32.xlu0 %v2184, 48
      %v2230 = vpop.permute.xlu0 %2229
      %2231 = vrot.lane.b32.xlu0 %v2185, 48
      %v2232 = vpop.permute.xlu0 %2231
      %2233 = vrot.lane.b32.xlu0 %v2186, 48
      %v2234 = vpop.permute.xlu0 %2233
      %2235 = vrot.lane.b32.xlu0 %v2187, 48
      %v2236 = vpop.permute.xlu0 %2235
      %2237 = vrot.lane.b32.xlu0 %v2188, 48
      %v2238 = vpop.permute.xlu0 %2237
      %2239 = vrot.lane.b32.xlu0 %v2189, 48
      %v2240 = vpop.permute.xlu0 %2239
      %2241 = vrot.lane.b32.xlu0 %v2190, 48
      %v2242 = vpop.permute.xlu0 %2241
      %2243 = vrot.lane.b32.xlu0 %v2191, 48
      %v2244 = vpop.permute.xlu0 %2243
      %2245 = vrot.lane.b32.xlu0 %v2192, 48
      %v2246 = vpop.permute.xlu0 %2245
      %2247 = vrot.lane.b32.xlu0 %v2193, 48
      %v2248 = vpop.permute.xlu0 %2247
      %2249 = vrot.lane.b32.xlu0 %v2194, 48
      %v2250 = vpop.permute.xlu0 %2249
      %2251 = vrot.lane.b32.xlu0 %v2195, 48
      %v2252 = vpop.permute.xlu0 %2251
      %2253 = vrot.lane.b32.xlu0 %v2196, 48
      %v2254 = vpop.permute.xlu0 %2253
      %2255 = vrot.lane.b32.xlu0 %v2197, 48
      %v2256 = vpop.permute.xlu0 %2255
      %2257 = vrot.lane.b32.xlu0 %v2198, 48
      %v2258 = vpop.permute.xlu0 %2257
      %2259 = vrot.lane.b32.xlu0 %v2199, 48
      %v2260 = vpop.permute.xlu0 %2259
      %2261 = vrot.lane.b32.xlu0 %v2200, 48
      %v2262 = vpop.permute.xlu0 %2261
      %2263 = vrot.lane.b32.xlu0 %v2201, 48
      %v2264 = vpop.permute.xlu0 %2263
      %2265 = vrot.lane.b32.xlu0 %v2202, 48
      %v2266 = vpop.permute.xlu0 %2265
      %v2268 = vunpack.c.l.b16 %v760
      %v2269 = vpack.c.b16 %v2268, %v2268
      %2270 = vrot.lane.b32.xlu0 %v922, 56
      %v2271 = vpop.permute.xlu0 %2270
      %2272 = vrot.lane.b32.xlu0 %v923, 56
      %v2273 = vpop.permute.xlu0 %2272
      %2274 = vrot.lane.b32.xlu0 %v924, 56
      %v2275 = vpop.permute.xlu0 %2274
      %2276 = vrot.lane.b32.xlu0 %v925, 56
      %v2277 = vpop.permute.xlu0 %2276
      %2278 = vrot.lane.b32.xlu0 %v926, 56
      %v2279 = vpop.permute.xlu0 %2278
      %2280 = vrot.lane.b32.xlu0 %v927, 56
      %v2281 = vpop.permute.xlu0 %2280
      %2282 = vrot.lane.b32.xlu0 %v928, 56
      %v2283 = vpop.permute.xlu0 %2282
      %2284 = vrot.lane.b32.xlu0 %v929, 56
      %v2285 = vpop.permute.xlu0 %2284
      %2286 = vrot.lane.b32.xlu0 %v930, 56
      %v2287 = vpop.permute.xlu0 %2286
      %2288 = vrot.lane.b32.xlu0 %v931, 56
      %v2289 = vpop.permute.xlu0 %2288
      %2290 = vrot.lane.b32.xlu0 %v932, 56
      %v2291 = vpop.permute.xlu0 %2290
      %2292 = vrot.lane.b32.xlu0 %v933, 56
      %v2293 = vpop.permute.xlu0 %2292
      %2294 = vrot.lane.b32.xlu0 %v934, 56
      %v2295 = vpop.permute.xlu0 %2294
      %2296 = vrot.lane.b32.xlu0 %v935, 56
      %v2297 = vpop.permute.xlu0 %2296
      %2298 = vrot.lane.b32.xlu0 %v936, 56
      %v2299 = vpop.permute.xlu0 %2298
      %2300 = vrot.lane.b32.xlu0 %v937, 56
      %v2301 = vpop.permute.xlu0 %2300
      %2302 = vrot.lane.b32.xlu0 %v938, 56
      %v2303 = vpop.permute.xlu0 %2302
      %2304 = vrot.lane.b32.xlu0 %v939, 56
      %v2305 = vpop.permute.xlu0 %2304
      %2306 = vrot.lane.b32.xlu0 %v940, 56
      %v2307 = vpop.permute.xlu0 %2306
      %2308 = vrot.lane.b32.xlu0 %v941, 56
      %v2309 = vpop.permute.xlu0 %2308
      %2310 = vrot.lane.b32.xlu0 %v942, 56
      %v2311 = vpop.permute.xlu0 %2310
      %2312 = vrot.lane.b32.xlu0 %v943, 56
      %v2313 = vpop.permute.xlu0 %2312
      %2314 = vrot.lane.b32.xlu0 %v944, 56
      %v2315 = vpop.permute.xlu0 %2314
      %2316 = vrot.lane.b32.xlu0 %v945, 56
      %v2317 = vpop.permute.xlu0 %2316
      %2318 = vrot.lane.b32.xlu0 %v946, 56
      %v2319 = vpop.permute.xlu0 %2318
      %2320 = vrot.lane.b32.xlu0 %v947, 56
      %v2321 = vpop.permute.xlu0 %2320
      %2322 = vrot.lane.b32.xlu0 %v948, 56
      %v2323 = vpop.permute.xlu0 %2322
      %2324 = vrot.lane.b32.xlu0 %v949, 56
      %v2325 = vpop.permute.xlu0 %2324
      %2326 = vrot.lane.b32.xlu0 %v950, 56
      %v2327 = vpop.permute.xlu0 %2326
      %2328 = vrot.lane.b32.xlu0 %v951, 56
      %v2329 = vpop.permute.xlu0 %2328
      %2330 = vrot.lane.b32.xlu0 %v952, 56
      %v2331 = vpop.permute.xlu0 %2330
      %2332 = vrot.lane.b32.xlu0 %v2269, 56
      %v2333 = vpop.permute.xlu0 %2332
      %v2335 = vunpack.c.l.b16 %v727
      %v2336 = vpack.c.b16 %v2335, %v2170
      %v2338 = vshrl.u32 %v2336, 16
      %v2340 = vshll.u32 %v2336, 16
      %v2342 = vrot.slane %v2340, 1
      %v2343 = vor.u32 %v2338, %v2342
      %2344 = vrot.lane.b32.xlu0 %v1190, 64
      %v2345 = vpop.permute.xlu0 %2344
      %2346 = vrot.lane.b32.xlu0 %v1197, 64
      %v2347 = vpop.permute.xlu0 %2346
      %2348 = vrot.lane.b32.xlu0 %v1204, 64
      %v2349 = vpop.permute.xlu0 %2348
      %2350 = vrot.lane.b32.xlu0 %v1211, 64
      %v2351 = vpop.permute.xlu0 %2350
      %2352 = vrot.lane.b32.xlu0 %v1218, 64
      %v2353 = vpop.permute.xlu0 %2352
      %2354 = vrot.lane.b32.xlu0 %v1225, 64
      %v2355 = vpop.permute.xlu0 %2354
      %2356 = vrot.lane.b32.xlu0 %v1232, 64
      %v2357 = vpop.permute.xlu0 %2356
      %2358 = vrot.lane.b32.xlu0 %v1239, 64
      %v2359 = vpop.permute.xlu0 %2358
      %2360 = vrot.lane.b32.xlu0 %v1246, 64
      %v2361 = vpop.permute.xlu0 %2360
      %2362 = vrot.lane.b32.xlu0 %v1253, 64
      %v2363 = vpop.permute.xlu0 %2362
      %2364 = vrot.lane.b32.xlu0 %v1260, 64
      %v2365 = vpop.permute.xlu0 %2364
      %2366 = vrot.lane.b32.xlu0 %v1267, 64
      %v2367 = vpop.permute.xlu0 %2366
      %2368 = vrot.lane.b32.xlu0 %v1274, 64
      %v2369 = vpop.permute.xlu0 %2368
      %2370 = vrot.lane.b32.xlu0 %v1281, 64
      %v2371 = vpop.permute.xlu0 %2370
      %2372 = vrot.lane.b32.xlu0 %v1288, 64
      %v2373 = vpop.permute.xlu0 %2372
      %2374 = vrot.lane.b32.xlu0 %v1295, 64
      %v2375 = vpop.permute.xlu0 %2374
      %2376 = vrot.lane.b32.xlu0 %v1302, 64
      %v2377 = vpop.permute.xlu0 %2376
      %2378 = vrot.lane.b32.xlu0 %v1309, 64
      %v2379 = vpop.permute.xlu0 %2378
      %2380 = vrot.lane.b32.xlu0 %v1316, 64
      %v2381 = vpop.permute.xlu0 %2380
      %2382 = vrot.lane.b32.xlu0 %v1323, 64
      %v2383 = vpop.permute.xlu0 %2382
      %2384 = vrot.lane.b32.xlu0 %v1330, 64
      %v2385 = vpop.permute.xlu0 %2384
      %2386 = vrot.lane.b32.xlu0 %v1337, 64
      %v2387 = vpop.permute.xlu0 %2386
      %2388 = vrot.lane.b32.xlu0 %v1344, 64
      %v2389 = vpop.permute.xlu0 %2388
      %2390 = vrot.lane.b32.xlu0 %v1351, 64
      %v2391 = vpop.permute.xlu0 %2390
      %2392 = vrot.lane.b32.xlu0 %v1358, 64
      %v2393 = vpop.permute.xlu0 %2392
      %2394 = vrot.lane.b32.xlu0 %v1365, 64
      %v2395 = vpop.permute.xlu0 %2394
      %2396 = vrot.lane.b32.xlu0 %v1372, 64
      %v2397 = vpop.permute.xlu0 %2396
      %2398 = vrot.lane.b32.xlu0 %v1379, 64
      %v2399 = vpop.permute.xlu0 %2398
      %2400 = vrot.lane.b32.xlu0 %v1386, 64
      %v2401 = vpop.permute.xlu0 %2400
      %2402 = vrot.lane.b32.xlu0 %v1393, 64
      %v2403 = vpop.permute.xlu0 %2402
      %2404 = vrot.lane.b32.xlu0 %v1400, 64
      %v2405 = vpop.permute.xlu0 %2404
      %2406 = vrot.lane.b32.xlu0 %v2343, 64
      %v2407 = vpop.permute.xlu0 %2406
      %vm2408 = vcmask 64512
      %v2411 = vsel %vm2408, %v662, %v954
      %v2414 = vsel %vm2408, %v664, %v956
      %v2417 = vsel %vm2408, %v666, %v958
      %v2420 = vsel %vm2408, %v668, %v960
      %v2423 = vsel %vm2408, %v670, %v962
      %v2426 = vsel %vm2408, %v672, %v964
      %v2429 = vsel %vm2408, %v674, %v966
      %v2432 = vsel %vm2408, %v676, %v968
      %v2435 = vsel %vm2408, %v678, %v970
      %v2438 = vsel %vm2408, %v680, %v972
      %v2441 = vsel %vm2408, %v682, %v974
      %v2444 = vsel %vm2408, %v684, %v976
      %v2447 = vsel %vm2408, %v686, %v978
      %v2450 = vsel %vm2408, %v688, %v980
      %v2453 = vsel %vm2408, %v690, %v982
      %v2456 = vsel %vm2408, %v692, %v984
      %v2459 = vsel %vm2408, %v694, %v986
      %v2462 = vsel %vm2408, %v696, %v988
      %v2465 = vsel %vm2408, %v698, %v990
      %v2468 = vsel %vm2408, %v700, %v992
      %v2471 = vsel %vm2408, %v702, %v994
      %v2474 = vsel %vm2408, %v704, %v996
      %v2477 = vsel %vm2408, %v706, %v998
      %v2480 = vsel %vm2408, %v708, %v1000
      %v2483 = vsel %vm2408, %v710, %v1002
      %v2486 = vsel %vm2408, %v712, %v1004
      %v2489 = vsel %vm2408, %v714, %v1006
      %v2492 = vsel %vm2408, %v716, %v1008
      %v2495 = vsel %vm2408, %v718, %v1010
      %v2498 = vsel %vm2408, %v720, %v1012
      %v2501 = vsel %vm2408, %v722, %v1014
      %v2504 = vsel %vm2408, %v724, %v1016
      %vm2505 = vcmask 130048
      %v2507 = vsel %vm2505, %v2411, %v1402
      %v2509 = vsel %vm2505, %v2414, %v1404
      %v2511 = vsel %vm2505, %v2417, %v1406
      %v2513 = vsel %vm2505, %v2420, %v1408
      %v2515 = vsel %vm2505, %v2423, %v1410
      %v2517 = vsel %vm2505, %v2426, %v1412
      %v2519 = vsel %vm2505, %v2429, %v1414
      %v2521 = vsel %vm2505, %v2432, %v1416
      %v2523 = vsel %vm2505, %v2435, %v1418
      %v2525 = vsel %vm2505, %v2438, %v1420
      %v2527 = vsel %vm2505, %v2441, %v1422
      %v2529 = vsel %vm2505, %v2444, %v1424
      %v2531 = vsel %vm2505, %v2447, %v1426
      %v2533 = vsel %vm2505, %v2450, %v1428
      %v2535 = vsel %vm2505, %v2453, %v1430
      %v2537 = vsel %vm2505, %v2456, %v1432
      %v2539 = vsel %vm2505, %v2459, %v1434
      %v2541 = vsel %vm2505, %v2462, %v1436
      %v2543 = vsel %vm2505, %v2465, %v1438
      %v2545 = vsel %vm2505, %v2468, %v1440
      %v2547 = vsel %vm2505, %v2471, %v1442
      %v2549 = vsel %vm2505, %v2474, %v1444
      %v2551 = vsel %vm2505, %v2477, %v1446
      %v2553 = vsel %vm2505, %v2480, %v1448
      %v2555 = vsel %vm2505, %v2483, %v1450
      %v2557 = vsel %vm2505, %v2486, %v1452
      %v2559 = vsel %vm2505, %v2489, %v1454
      %v2561 = vsel %vm2505, %v2492, %v1456
      %v2563 = vsel %vm2505, %v2495, %v1458
      %v2565 = vsel %vm2505, %v2498, %v1460
      %v2567 = vsel %vm2505, %v2501, %v1462
      %v2569 = vsel %vm2505, %v2504, %v1464
      %vm2570 = vcmask 195584
      %v2572 = vsel %vm2570, %v2507, %v1562
      %v2574 = vsel %vm2570, %v2509, %v1564
      %v2576 = vsel %vm2570, %v2511, %v1566
      %v2578 = vsel %vm2570, %v2513, %v1568
      %v2580 = vsel %vm2570, %v2515, %v1570
      %v2582 = vsel %vm2570, %v2517, %v1572
      %v2584 = vsel %vm2570, %v2519, %v1574
      %v2586 = vsel %vm2570, %v2521, %v1576
      %v2588 = vsel %vm2570, %v2523, %v1578
      %v2590 = vsel %vm2570, %v2525, %v1580
      %v2592 = vsel %vm2570, %v2527, %v1582
      %v2594 = vsel %vm2570, %v2529, %v1584
      %v2596 = vsel %vm2570, %v2531, %v1586
      %v2598 = vsel %vm2570, %v2533, %v1588
      %v2600 = vsel %vm2570, %v2535, %v1590
      %v2602 = vsel %vm2570, %v2537, %v1592
      %v2604 = vsel %vm2570, %v2539, %v1594
      %v2606 = vsel %vm2570, %v2541, %v1596
      %v2608 = vsel %vm2570, %v2543, %v1598
      %v2610 = vsel %vm2570, %v2545, %v1600
      %v2612 = vsel %vm2570, %v2547, %v1602
      %v2614 = vsel %vm2570, %v2549, %v1604
      %v2616 = vsel %vm2570, %v2551, %v1606
      %v2618 = vsel %vm2570, %v2553, %v1608
      %v2620 = vsel %vm2570, %v2555, %v1610
      %v2622 = vsel %vm2570, %v2557, %v1612
      %v2624 = vsel %vm2570, %v2559, %v1614
      %v2626 = vsel %vm2570, %v2561, %v1616
      %v2628 = vsel %vm2570, %v2563, %v1618
      %v2630 = vsel %vm2570, %v2565, %v1620
      %v2632 = vsel %vm2570, %v2567, %v1622
      %v2634 = vsel %vm2570, %v2569, %v1624
      %vm2635 = vcmask 261120
      %v2637 = vsel %vm2635, %v2572, %v1722
      %v2639 = vsel %vm2635, %v2574, %v1724
      %v2641 = vsel %vm2635, %v2576, %v1726
      %v2643 = vsel %vm2635, %v2578, %v1728
      %v2645 = vsel %vm2635, %v2580, %v1730
      %v2647 = vsel %vm2635, %v2582, %v1732
      %v2649 = vsel %vm2635, %v2584, %v1734
      %v2651 = vsel %vm2635, %v2586, %v1736
      %v2653 = vsel %vm2635, %v2588, %v1738
      %v2655 = vsel %vm2635, %v2590, %v1740
      %v2657 = vsel %vm2635, %v2592, %v1742
      %v2659 = vsel %vm2635, %v2594, %v1744
      %v2661 = vsel %vm2635, %v2596, %v1746
      %v2663 = vsel %vm2635, %v2598, %v1748
      %v2665 = vsel %vm2635, %v2600, %v1750
      %v2667 = vsel %vm2635, %v2602, %v1752
      %v2669 = vsel %vm2635, %v2604, %v1754
      %v2671 = vsel %vm2635, %v2606, %v1756
      %v2673 = vsel %vm2635, %v2608, %v1758
      %v2675 = vsel %vm2635, %v2610, %v1760
      %v2677 = vsel %vm2635, %v2612, %v1762
      %v2679 = vsel %vm2635, %v2614, %v1764
      %v2681 = vsel %vm2635, %v2616, %v1766
      %v2683 = vsel %vm2635, %v2618, %v1768
      %v2685 = vsel %vm2635, %v2620, %v1770
      %v2687 = vsel %vm2635, %v2622, %v1772
      %v2689 = vsel %vm2635, %v2624, %v1774
      %v2691 = vsel %vm2635, %v2626, %v1776
      %v2693 = vsel %vm2635, %v2628, %v1778
      %v2695 = vsel %vm2635, %v2630, %v1780
      %v2697 = vsel %vm2635, %v2632, %v1782
      %v2699 = vsel %vm2635, %v2634, %v1784
      %vm2700 = vcmask 326656
      %v2702 = vsel %vm2700, %v2637, %v2106
      %v2704 = vsel %vm2700, %v2639, %v2108
      %v2706 = vsel %vm2700, %v2641, %v2110
      %v2708 = vsel %vm2700, %v2643, %v2112
      %v2710 = vsel %vm2700, %v2645, %v2114
      %v2712 = vsel %vm2700, %v2647, %v2116
      %v2714 = vsel %vm2700, %v2649, %v2118
      %v2716 = vsel %vm2700, %v2651, %v2120
      %v2718 = vsel %vm2700, %v2653, %v2122
      %v2720 = vsel %vm2700, %v2655, %v2124
      %v2722 = vsel %vm2700, %v2657, %v2126
      %v2724 = vsel %vm2700, %v2659, %v2128
      %v2726 = vsel %vm2700, %v2661, %v2130
      %v2728 = vsel %vm2700, %v2663, %v2132
      %v2730 = vsel %vm2700, %v2665, %v2134
      %v2732 = vsel %vm2700, %v2667, %v2136
      %v2734 = vsel %vm2700, %v2669, %v2138
      %v2736 = vsel %vm2700, %v2671, %v2140
      %v2738 = vsel %vm2700, %v2673, %v2142
      %v2740 = vsel %vm2700, %v2675, %v2144
      %v2742 = vsel %vm2700, %v2677, %v2146
      %v2744 = vsel %vm2700, %v2679, %v2148
      %v2746 = vsel %vm2700, %v2681, %v2150
      %v2748 = vsel %vm2700, %v2683, %v2152
      %v2750 = vsel %vm2700, %v2685, %v2154
      %v2752 = vsel %vm2700, %v2687, %v2156
      %v2754 = vsel %vm2700, %v2689, %v2158
      %v2756 = vsel %vm2700, %v2691, %v2160
      %v2758 = vsel %vm2700, %v2693, %v2162
      %v2760 = vsel %vm2700, %v2695, %v2164
      %v2762 = vsel %vm2700, %v2697, %v2166
      %v2764 = vsel %vm2700, %v2699, %v2168
      %vm2765 = vcmask 392192
      %v2767 = vsel %vm2765, %v2702, %v2204
      %v2769 = vsel %vm2765, %v2704, %v2206
      %v2771 = vsel %vm2765, %v2706, %v2208
      %v2773 = vsel %vm2765, %v2708, %v2210
      %v2775 = vsel %vm2765, %v2710, %v2212
      %v2777 = vsel %vm2765, %v2712, %v2214
      %v2779 = vsel %vm2765, %v2714, %v2216
      %v2781 = vsel %vm2765, %v2716, %v2218
      %v2783 = vsel %vm2765, %v2718, %v2220
      %v2785 = vsel %vm2765, %v2720, %v2222
      %v2787 = vsel %vm2765, %v2722, %v2224
      %v2789 = vsel %vm2765, %v2724, %v2226
      %v2791 = vsel %vm2765, %v2726, %v2228
      %v2793 = vsel %vm2765, %v2728, %v2230
      %v2795 = vsel %vm2765, %v2730, %v2232
      %v2797 = vsel %vm2765, %v2732, %v2234
      %v2799 = vsel %vm2765, %v2734, %v2236
      %v2801 = vsel %vm2765, %v2736, %v2238
      %v2803 = vsel %vm2765, %v2738, %v2240
      %v2805 = vsel %vm2765, %v2740, %v2242
      %v2807 = vsel %vm2765, %v2742, %v2244
      %v2809 = vsel %vm2765, %v2744, %v2246
      %v2811 = vsel %vm2765, %v2746, %v2248
      %v2813 = vsel %vm2765, %v2748, %v2250
      %v2815 = vsel %vm2765, %v2750, %v2252
      %v2817 = vsel %vm2765, %v2752, %v2254
      %v2819 = vsel %vm2765, %v2754, %v2256
      %v2821 = vsel %vm2765, %v2756, %v2258
      %v2823 = vsel %vm2765, %v2758, %v2260
      %v2825 = vsel %vm2765, %v2760, %v2262
      %v2827 = vsel %vm2765, %v2762, %v2264
      %v2829 = vsel %vm2765, %v2764, %v2266
      %vm2830 = vcmask 457728
      %v2832 = vsel %vm2830, %v2767, %v2271
      %v2834 = vsel %vm2830, %v2769, %v2273
      %v2836 = vsel %vm2830, %v2771, %v2275
      %v2838 = vsel %vm2830, %v2773, %v2277
      %v2840 = vsel %vm2830, %v2775, %v2279
      %v2842 = vsel %vm2830, %v2777, %v2281
      %v2844 = vsel %vm2830, %v2779, %v2283
      %v2846 = vsel %vm2830, %v2781, %v2285
      %v2848 = vsel %vm2830, %v2783, %v2287
      %v2850 = vsel %vm2830, %v2785, %v2289
      %v2852 = vsel %vm2830, %v2787, %v2291
      %v2854 = vsel %vm2830, %v2789, %v2293
      %v2856 = vsel %vm2830, %v2791, %v2295
      %v2858 = vsel %vm2830, %v2793, %v2297
      %v2860 = vsel %vm2830, %v2795, %v2299
      %v2862 = vsel %vm2830, %v2797, %v2301
      %v2864 = vsel %vm2830, %v2799, %v2303
      %v2866 = vsel %vm2830, %v2801, %v2305
      %v2868 = vsel %vm2830, %v2803, %v2307
      %v2870 = vsel %vm2830, %v2805, %v2309
      %v2872 = vsel %vm2830, %v2807, %v2311
      %v2874 = vsel %vm2830, %v2809, %v2313
      %v2876 = vsel %vm2830, %v2811, %v2315
      %v2878 = vsel %vm2830, %v2813, %v2317
      %v2880 = vsel %vm2830, %v2815, %v2319
      %v2882 = vsel %vm2830, %v2817, %v2321
      %v2884 = vsel %vm2830, %v2819, %v2323
      %v2886 = vsel %vm2830, %v2821, %v2325
      %v2888 = vsel %vm2830, %v2823, %v2327
      %v2890 = vsel %vm2830, %v2825, %v2329
      %v2892 = vsel %vm2830, %v2827, %v2331
      %v2894 = vsel %vm2830, %v2829, %v2333
      %vm2895 = vcmask 523264
      %v2897 = vsel %vm2895, %v2832, %v2345
      %v2899 = vsel %vm2895, %v2834, %v2347
      %v2901 = vsel %vm2895, %v2836, %v2349
      %v2903 = vsel %vm2895, %v2838, %v2351
      %v2905 = vsel %vm2895, %v2840, %v2353
      %v2907 = vsel %vm2895, %v2842, %v2355
      %v2909 = vsel %vm2895, %v2844, %v2357
      %v2911 = vsel %vm2895, %v2846, %v2359
      %v2913 = vsel %vm2895, %v2848, %v2361
      %v2915 = vsel %vm2895, %v2850, %v2363
      %v2917 = vsel %vm2895, %v2852, %v2365
      %v2919 = vsel %vm2895, %v2854, %v2367
      %v2921 = vsel %vm2895, %v2856, %v2369
      %v2923 = vsel %vm2895, %v2858, %v2371
      %v2925 = vsel %vm2895, %v2860, %v2373
      %v2927 = vsel %vm2895, %v2862, %v2375
      %v2929 = vsel %vm2895, %v2864, %v2377
      %v2931 = vsel %vm2895, %v2866, %v2379
      %v2933 = vsel %vm2895, %v2868, %v2381
      %v2935 = vsel %vm2895, %v2870, %v2383
      %v2937 = vsel %vm2895, %v2872, %v2385
      %v2939 = vsel %vm2895, %v2874, %v2387
      %v2941 = vsel %vm2895, %v2876, %v2389
      %v2943 = vsel %vm2895, %v2878, %v2391
      %v2945 = vsel %vm2895, %v2880, %v2393
      %v2947 = vsel %vm2895, %v2882, %v2395
      %v2949 = vsel %vm2895, %v2884, %v2397
      %v2951 = vsel %vm2895, %v2886, %v2399
      %v2953 = vsel %vm2895, %v2888, %v2401
      %v2955 = vsel %vm2895, %v2890, %v2403
      %v2957 = vsel %vm2895, %v2892, %v2405
      %v2959 = vsel %vm2895, %v2894, %v2407
      %v2960 = vld [vmem:[%s6] sm:$0xf]
      %v2961 = vld [vmem:[%s6 + $0x4] sm:$0xf]
      %v2962 = vld [vmem:[%s6 + $0x8] sm:$0xf]
      %v2963 = vld [vmem:[%s6 + $0xc] sm:$0xf]
      %v2964 = vld [vmem:[%s6 + $0x10] sm:$0xf]
      %v2965 = vld [vmem:[%s6 + $0x14] sm:$0xf]
      %v2966 = vld [vmem:[%s6 + $0x18] sm:$0xf]
      %v2967 = vld [vmem:[%s6 + $0x1c] sm:$0xf]
      %v2968 = vld [vmem:[%s6 + $0x20] sm:$0xf]
      %v2969 = vld [vmem:[%s7] sm:$0x1]
      %v2971 = vlaneseq
      %v2972 = vshrl.u32 %v2971, 7
      %v2973 = vsub.s32 0, %v2972
      %v2974 = vrot.slane %v2969, %v2973
      %v3008 = vunpack.c.l.b16 %v2897
      %v3009 = vunpack.c.l.b16 %v2899
      %v3010 = vunpack.c.l.b16 %v2901
      %v3011 = vunpack.c.l.b16 %v2903
      %v3012 = vunpack.c.l.b16 %v2905
      %v3013 = vunpack.c.l.b16 %v2907
      %v3014 = vunpack.c.l.b16 %v2909
      %v3015 = vunpack.c.l.b16 %v2911
      %v3016 = vunpack.c.l.b16 %v2913
      %v3017 = vunpack.c.l.b16 %v2915
      %v3018 = vunpack.c.l.b16 %v2917
      %v3019 = vunpack.c.l.b16 %v2919
      %v3020 = vunpack.c.l.b16 %v2921
      %v3021 = vunpack.c.l.b16 %v2923
      %v3022 = vunpack.c.l.b16 %v2925
      %v3023 = vunpack.c.l.b16 %v2927
      %v3024 = vunpack.c.l.b16 %v2929
      %v3025 = vunpack.c.l.b16 %v2931
      %v3026 = vunpack.c.l.b16 %v2933
      %v3027 = vunpack.c.l.b16 %v2935
      %v3028 = vunpack.c.l.b16 %v2937
      %v3029 = vunpack.c.l.b16 %v2939
      %v3030 = vunpack.c.l.b16 %v2941
      %v3031 = vunpack.c.l.b16 %v2943
      %v3032 = vunpack.c.l.b16 %v2945
      %v3033 = vunpack.c.l.b16 %v2947
      %v3034 = vunpack.c.l.b16 %v2949
      %v3035 = vunpack.c.l.b16 %v2951
      %v3036 = vunpack.c.l.b16 %v2953
      %v3037 = vunpack.c.l.b16 %v2955
      %v3038 = vunpack.c.l.b16 %v2957
      %v3039 = vunpack.c.l.b16 %v2959
      %v3040 = vpack.c.b16 %v3009, %v3008
      %v3041 = vpack.c.b16 %v3011, %v3010
      %v3042 = vpack.c.b16 %v3013, %v3012
      %v3043 = vpack.c.b16 %v3015, %v3014
      %v3044 = vpack.c.b16 %v3017, %v3016
      %v3045 = vpack.c.b16 %v3019, %v3018
      %v3046 = vpack.c.b16 %v3021, %v3020
      %v3047 = vpack.c.b16 %v3023, %v3022
      %v3048 = vpack.c.b16 %v3025, %v3024
      %v3049 = vpack.c.b16 %v3027, %v3026
      %v3050 = vpack.c.b16 %v3029, %v3028
      %v3051 = vpack.c.b16 %v3031, %v3030
      %v3052 = vpack.c.b16 %v3033, %v3032
      %v3053 = vpack.c.b16 %v3035, %v3034
      %v3054 = vpack.c.b16 %v3037, %v3036
      %v3055 = vpack.c.b16 %v3039, %v3038
      %v3065 = vunpack.c.l.b16 %v2960
      %v3066 = vunpack.c.l.b16 %v2961
      %v3067 = vunpack.c.l.b16 %v2962
      %v3068 = vunpack.c.l.b16 %v2963
      %v3069 = vunpack.c.l.b16 %v2964
      %v3070 = vunpack.c.l.b16 %v2965
      %v3071 = vunpack.c.l.b16 %v2966
      %v3072 = vunpack.c.l.b16 %v2967
      %v3073 = vunpack.c.l.b16 %v2968
      %v3074 = vpack.c.b16 %v3066, %v3065
      %v3075 = vpack.c.b16 %v3068, %v3067
      %v3076 = vpack.c.b16 %v3070, %v3069
      %v3077 = vpack.c.b16 %v3072, %v3071
      %v3078 = vpack.c.b16 %v3073, %v3073
      %vm3083 = vcmask 588800
      %v3085 = vsel %vm3083, %v3040, 0
      %v3088 = vsel %vm3083, %v3041, 0
      %v3091 = vsel %vm3083, %v3042, 0
      %v3094 = vsel %vm3083, %v3043, 0
      %v3097 = vsel %vm3083, %v3044, 0
      %v3100 = vsel %vm3083, %v3045, 0
      %v3103 = vsel %vm3083, %v3046, 0
      %v3106 = vsel %vm3083, %v3047, 0
      %v3109 = vsel %vm3083, %v3048, 0
      %v3112 = vsel %vm3083, %v3049, 0
      %v3115 = vsel %vm3083, %v3050, 0
      %v3118 = vsel %vm3083, %v3051, 0
      %v3121 = vsel %vm3083, %v3052, 0
      %v3124 = vsel %vm3083, %v3053, 0
      %v3127 = vsel %vm3083, %v3054, 0
      %v3130 = vsel %vm3083, %v3055, 0
      %vm3132 = vcmask 1043456
      %v3134 = vsel %vm3132, %v3078, 0
      %3136 = vmatprep.subr.bf16.mxu0 0
      %3137 = vmatpush1.bf16.msra.mxu0 0
      %3138 = vmatprep.subr.bf16.mxu0 0
      %3139 = vmatpush1.bf16.msra.mxu0 0
      %3140 = vmatprep.subr.bf16.mxu0 0
      %3141 = vmatpush1.bf16.msra.mxu0 0
      %3142 = vmatprep.subr.bf16.mxu0 0
      %3143 = vmatpush1.bf16.msra.mxu0 %v3134
      %3144 = vmatprep.subr.bf16.mxu0 0
      %3145 = vmatpush1.bf16.msra.mxu0 %v3077
      %3146 = vmatprep.subr.bf16.mxu0 0
      %3147 = vmatpush1.bf16.msra.mxu0 %v3076
      %3148 = vmatprep.subr.bf16.mxu0 0
      %3149 = vmatpush1.bf16.msra.mxu0 %v3075
      %3150 = vmatprep.subr.bf16.mxu0 0
      %3151 = vmatpush1.bf16.msra.mxu0 %v3074
      %3152 = vmatprep.subr.bf16.mxu0 0
      %3153 = vmatpush2.bf16.msra.mxu0 0
      %3154 = vmatprep.subr.bf16.mxu0 0
      %3155 = vmatpush2.bf16.msra.mxu0 0
      %3156 = vmatprep.subr.bf16.mxu0 0
      %3157 = vmatpush2.bf16.msra.mxu0 0
      %3158 = vmatprep.subr.bf16.mxu0 0
      %3159 = vmatpush2.bf16.msra.mxu0 0
      %3160 = vmatprep.subr.bf16.mxu0 0
      %3161 = vmatpush2.bf16.msra.mxu0 0
      %3162 = vmatprep.subr.bf16.mxu0 0
      %3163 = vmatpush2.bf16.msra.mxu0 0
      %3164 = vmatprep.subr.bf16.mxu0 0
      %3165 = vmatpush2.bf16.msra.mxu0 0
      %3166 = vmatprep.subr.bf16.mxu0 0
      %3167 = vmatpush2.bf16.msra.mxu0 0
      %3168 = vmatprep.mubr.bf16.mxu0 0
      %3169 = vmatmul.mubr.bf16.gmra.mxu0 %v3085
      %v3170 = vpop.f32.mrf.mxu0
      %v3171 = vadd.f32 %v2974, %v3170
      %v3172 = vpop.f32.mrf.mxu0
      %v3173 = vpop.f32.mrf.mxu0
      %v3174 = vadd.f32 %v2974, %v3173
      %v3175 = vpop.f32.mrf.mxu0
      %3176 = vmatprep.mubr.bf16.mxu0 0
      %3177 = vmatmul.mubr.bf16.gmra.mxu0 %v3088
      %v3178 = vpop.f32.mrf.mxu0
      %v3179 = vadd.f32 %v2974, %v3178
      %v3180 = vpop.f32.mrf.mxu0
      %v3181 = vpop.f32.mrf.mxu0
      %v3182 = vadd.f32 %v2974, %v3181
      %v3183 = vpop.f32.mrf.mxu0
      %3184 = vmatprep.mubr.bf16.mxu0 0
      %3185 = vmatmul.mubr.bf16.gmra.mxu0 %v3091
      %v3186 = vpop.f32.mrf.mxu0
      %v3187 = vadd.f32 %v2974, %v3186
      %v3188 = vpop.f32.mrf.mxu0
      %v3189 = vpop.f32.mrf.mxu0
      %v3190 = vadd.f32 %v2974, %v3189
      %v3191 = vpop.f32.mrf.mxu0
      %3192 = vmatprep.mubr.bf16.mxu0 0
      %3193 = vmatmul.mubr.bf16.gmra.mxu0 %v3094
      %v3194 = vpop.f32.mrf.mxu0
      %v3195 = vadd.f32 %v2974, %v3194
      %v3196 = vpop.f32.mrf.mxu0
      %v3197 = vpop.f32.mrf.mxu0
      %v3198 = vadd.f32 %v2974, %v3197
      %v3199 = vpop.f32.mrf.mxu0
      %3200 = vmatprep.mubr.bf16.mxu0 0
      %3201 = vmatmul.mubr.bf16.gmra.mxu0 %v3097
      %v3202 = vpop.f32.mrf.mxu0
      %v3203 = vadd.f32 %v2974, %v3202
      %v3204 = vpop.f32.mrf.mxu0
      %v3205 = vpop.f32.mrf.mxu0
      %v3206 = vadd.f32 %v2974, %v3205
      %v3207 = vpop.f32.mrf.mxu0
      %3208 = vmatprep.mubr.bf16.mxu0 0
      %3209 = vmatmul.mubr.bf16.gmra.mxu0 %v3100
      %v3210 = vpop.f32.mrf.mxu0
      %v3211 = vadd.f32 %v2974, %v3210
      %v3212 = vpop.f32.mrf.mxu0
      %v3213 = vpop.f32.mrf.mxu0
      %v3214 = vadd.f32 %v2974, %v3213
      %v3215 = vpop.f32.mrf.mxu0
      %3216 = vmatprep.mubr.bf16.mxu0 0
      %3217 = vmatmul.mubr.bf16.gmra.mxu0 %v3103
      %v3218 = vpop.f32.mrf.mxu0
      %v3219 = vadd.f32 %v2974, %v3218
      %v3220 = vpop.f32.mrf.mxu0
      %v3221 = vpop.f32.mrf.mxu0
      %v3222 = vadd.f32 %v2974, %v3221
      %v3223 = vpop.f32.mrf.mxu0
      %3224 = vmatprep.mubr.bf16.mxu0 0
      %3225 = vmatmul.mubr.bf16.gmra.mxu0 %v3106
      %v3226 = vpop.f32.mrf.mxu0
      %v3227 = vadd.f32 %v2974, %v3226
      %v3228 = vpop.f32.mrf.mxu0
      %v3229 = vpop.f32.mrf.mxu0
      %v3230 = vadd.f32 %v2974, %v3229
      %v3231 = vpop.f32.mrf.mxu0
      %3232 = vmatprep.mubr.bf16.mxu0 0
      %3233 = vmatmul.mubr.bf16.gmra.mxu0 %v3109
      %v3234 = vpop.f32.mrf.mxu0
      %v3235 = vadd.f32 %v2974, %v3234
      %v3236 = vpop.f32.mrf.mxu0
      %v3237 = vpop.f32.mrf.mxu0
      %v3238 = vadd.f32 %v2974, %v3237
      %v3239 = vpop.f32.mrf.mxu0
      %3240 = vmatprep.mubr.bf16.mxu0 0
      %3241 = vmatmul.mubr.bf16.gmra.mxu0 %v3112
      %v3242 = vpop.f32.mrf.mxu0
      %v3243 = vadd.f32 %v2974, %v3242
      %v3244 = vpop.f32.mrf.mxu0
      %v3245 = vpop.f32.mrf.mxu0
      %v3246 = vadd.f32 %v2974, %v3245
      %v3247 = vpop.f32.mrf.mxu0
      %3248 = vmatprep.mubr.bf16.mxu0 0
      %3249 = vmatmul.mubr.bf16.gmra.mxu0 %v3115
      %v3250 = vpop.f32.mrf.mxu0
      %v3251 = vadd.f32 %v2974, %v3250
      %v3252 = vpop.f32.mrf.mxu0
      %v3253 = vpop.f32.mrf.mxu0
      %v3254 = vadd.f32 %v2974, %v3253
      %v3255 = vpop.f32.mrf.mxu0
      %3256 = vmatprep.mubr.bf16.mxu0 0
      %3257 = vmatmul.mubr.bf16.gmra.mxu0 %v3118
      %v3258 = vpop.f32.mrf.mxu0
      %v3259 = vadd.f32 %v2974, %v3258
      %v3260 = vpop.f32.mrf.mxu0
      %v3261 = vpop.f32.mrf.mxu0
      %v3262 = vadd.f32 %v2974, %v3261
      %v3263 = vpop.f32.mrf.mxu0
      %3264 = vmatprep.mubr.bf16.mxu0 0
      %3265 = vmatmul.mubr.bf16.gmra.mxu0 %v3121
      %v3266 = vpop.f32.mrf.mxu0
      %v3267 = vadd.f32 %v2974, %v3266
      %v3268 = vpop.f32.mrf.mxu0
      %v3269 = vpop.f32.mrf.mxu0
      %v3270 = vadd.f32 %v2974, %v3269
      %v3271 = vpop.f32.mrf.mxu0
      %3272 = vmatprep.mubr.bf16.mxu0 0
      %3273 = vmatmul.mubr.bf16.gmra.mxu0 %v3124
      %v3274 = vpop.f32.mrf.mxu0
      %v3275 = vadd.f32 %v2974, %v3274
      %v3276 = vpop.f32.mrf.mxu0
      %v3277 = vpop.f32.mrf.mxu0
      %v3278 = vadd.f32 %v2974, %v3277
      %v3279 = vpop.f32.mrf.mxu0
      %3280 = vmatprep.mubr.bf16.mxu0 0
      %3281 = vmatmul.mubr.bf16.gmra.mxu0 %v3127
      %v3282 = vpop.f32.mrf.mxu0
      %v3283 = vadd.f32 %v2974, %v3282
      %v3284 = vpop.f32.mrf.mxu0
      %v3285 = vpop.f32.mrf.mxu0
      %v3286 = vadd.f32 %v2974, %v3285
      %v3287 = vpop.f32.mrf.mxu0
      %3288 = vmatprep.mubr.bf16.mxu0 0
      %3289 = vmatmul.mubr.bf16.gmra.mxu0 %v3130
      %v3290 = vpop.f32.mrf.mxu0
      %v3291 = vadd.f32 %v2974, %v3290
      %v3292 = vpop.f32.mrf.mxu0
      %v3293 = vpop.f32.mrf.mxu0
      %v3294 = vadd.f32 %v2974, %v3293
      %v3295 = vpop.f32.mrf.mxu0
      %3296 = vdwg.mxu0
      %v3297 = vmax.f32 %v3171, 0.0
      %v3298 = vmax.f32 %v3174, 0.0
      %v3299 = vmax.f32 %v3179, 0.0
      %v3300 = vmax.f32 %v3182, 0.0
      %v3301 = vmax.f32 %v3187, 0.0
      %v3302 = vmax.f32 %v3190, 0.0
      %v3303 = vmax.f32 %v3195, 0.0
      %v3304 = vmax.f32 %v3198, 0.0
      %v3305 = vmax.f32 %v3203, 0.0
      %v3306 = vmax.f32 %v3206, 0.0
      %v3307 = vmax.f32 %v3211, 0.0
      %v3308 = vmax.f32 %v3214, 0.0
      %v3309 = vmax.f32 %v3219, 0.0
      %v3310 = vmax.f32 %v3222, 0.0
      %v3311 = vmax.f32 %v3227, 0.0
      %v3312 = vmax.f32 %v3230, 0.0
      %v3313 = vmax.f32 %v3235, 0.0
      %v3314 = vmax.f32 %v3238, 0.0
      %v3315 = vmax.f32 %v3243, 0.0
      %v3316 = vmax.f32 %v3246, 0.0
      %v3317 = vmax.f32 %v3251, 0.0
      %v3318 = vmax.f32 %v3254, 0.0
      %v3319 = vmax.f32 %v3259, 0.0
      %v3320 = vmax.f32 %v3262, 0.0
      %v3321 = vmax.f32 %v3267, 0.0
      %v3322 = vmax.f32 %v3270, 0.0
      %v3323 = vmax.f32 %v3275, 0.0
      %v3324 = vmax.f32 %v3278, 0.0
      %v3325 = vmax.f32 %v3283, 0.0
      %v3326 = vmax.f32 %v3286, 0.0
      %v3327 = vmax.f32 %v3291, 0.0
      %v3328 = vmax.f32 %v3294, 0.0
      %v3329 = vpack.c.bf16 %v3297, %v3297
      %v3330 = vpack.c.bf16 %v3298, %v3298
      %v3331 = vpack.c.bf16 %v3299, %v3299
      %v3332 = vpack.c.bf16 %v3300, %v3300
      %v3333 = vpack.c.bf16 %v3301, %v3301
      %v3334 = vpack.c.bf16 %v3302, %v3302
      %v3335 = vpack.c.bf16 %v3303, %v3303
      %v3336 = vpack.c.bf16 %v3304, %v3304
      %v3337 = vpack.c.bf16 %v3305, %v3305
      %v3338 = vpack.c.bf16 %v3306, %v3306
      %v3339 = vpack.c.bf16 %v3307, %v3307
      %v3340 = vpack.c.bf16 %v3308, %v3308
      %v3341 = vpack.c.bf16 %v3309, %v3309
      %v3342 = vpack.c.bf16 %v3310, %v3310
      %v3343 = vpack.c.bf16 %v3311, %v3311
      %v3344 = vpack.c.bf16 %v3312, %v3312
      %v3345 = vpack.c.bf16 %v3313, %v3313
      %v3346 = vpack.c.bf16 %v3314, %v3314
      %v3347 = vpack.c.bf16 %v3315, %v3315
      %v3348 = vpack.c.bf16 %v3316, %v3316
      %v3349 = vpack.c.bf16 %v3317, %v3317
      %v3350 = vpack.c.bf16 %v3318, %v3318
      %v3351 = vpack.c.bf16 %v3319, %v3319
      %v3352 = vpack.c.bf16 %v3320, %v3320
      %v3353 = vpack.c.bf16 %v3321, %v3321
      %v3354 = vpack.c.bf16 %v3322, %v3322
      %v3355 = vpack.c.bf16 %v3323, %v3323
      %v3356 = vpack.c.bf16 %v3324, %v3324
      %v3357 = vpack.c.bf16 %v3325, %v3325
      %v3358 = vpack.c.bf16 %v3326, %v3326
      %v3359 = vpack.c.bf16 %v3327, %v3327
      %v3360 = vpack.c.bf16 %v3328, %v3328
      %vm3361 = vcmask 60416
      %3362 = vst.msk [vmem:[%s659] sm:$0xf] %vm3361, %v3329
      %3363 = vst.msk [vmem:[%s659 + $0x4] sm:$0xf] %vm3361, %v3330
      %3364 = vst.msk [vmem:[%s659 + $0x8] sm:$0xf] %vm3361, %v3331
      %3365 = vst.msk [vmem:[%s659 + $0xc] sm:$0xf] %vm3361, %v3332
      %3366 = vst.msk [vmem:[%s659 + $0x10] sm:$0xf] %vm3361, %v3333
      %3367 = vst.msk [vmem:[%s659 + $0x14] sm:$0xf] %vm3361, %v3334
      %3368 = vst.msk [vmem:[%s659 + $0x18] sm:$0xf] %vm3361, %v3335
      %3369 = vst.msk [vmem:[%s659 + $0x1c] sm:$0xf] %vm3361, %v3336
      %3370 = vst.msk [vmem:[%s659 + $0x20] sm:$0xf] %vm3361, %v3337
      %3371 = vst.msk [vmem:[%s659 + $0x24] sm:$0xf] %vm3361, %v3338
      %3372 = vst.msk [vmem:[%s659 + $0x28] sm:$0xf] %vm3361, %v3339
      %3373 = vst.msk [vmem:[%s659 + $0x2c] sm:$0xf] %vm3361, %v3340
      %3374 = vst.msk [vmem:[%s659 + $0x30] sm:$0xf] %vm3361, %v3341
      %3375 = vst.msk [vmem:[%s659 + $0x34] sm:$0xf] %vm3361, %v3342
      %3376 = vst.msk [vmem:[%s659 + $0x38] sm:$0xf] %vm3361, %v3343
      %3377 = vst.msk [vmem:[%s659 + $0x3c] sm:$0xf] %vm3361, %v3344
      %3378 = vst.msk [vmem:[%s659 + $0x40] sm:$0xf] %vm3361, %v3345
      %3379 = vst.msk [vmem:[%s659 + $0x44] sm:$0xf] %vm3361, %v3346
      %3380 = vst.msk [vmem:[%s659 + $0x48] sm:$0xf] %vm3361, %v3347
      %3381 = vst.msk [vmem:[%s659 + $0x4c] sm:$0xf] %vm3361, %v3348
      %3382 = vst.msk [vmem:[%s659 + $0x50] sm:$0xf] %vm3361, %v3349
      %3383 = vst.msk [vmem:[%s659 + $0x54] sm:$0xf] %vm3361, %v3350
      %3384 = vst.msk [vmem:[%s659 + $0x58] sm:$0xf] %vm3361, %v3351
      %3385 = vst.msk [vmem:[%s659 + $0x5c] sm:$0xf] %vm3361, %v3352
      %3386 = vst.msk [vmem:[%s659 + $0x60] sm:$0xf] %vm3361, %v3353
      %3387 = vst.msk [vmem:[%s659 + $0x64] sm:$0xf] %vm3361, %v3354
      %3388 = vst.msk [vmem:[%s659 + $0x68] sm:$0xf] %vm3361, %v3355
      %3389 = vst.msk [vmem:[%s659 + $0x6c] sm:$0xf] %vm3361, %v3356
      %3390 = vst.msk [vmem:[%s659 + $0x70] sm:$0xf] %vm3361, %v3357
      %3391 = vst.msk [vmem:[%s659 + $0x74] sm:$0xf] %vm3361, %v3358
      %3392 = vst.msk [vmem:[%s659 + $0x78] sm:$0xf] %vm3361, %v3359
      %3393 = vst.msk [vmem:[%s659 + $0x7c] sm:$0xf] %vm3361, %v3360
      %s3394 = smul.u32 32, %s24
      %p3395 = scmp.lt.s32.totalorder %s23, 1
      %s3396 = scalar_select %p3395, %s23, 1
      %p3397 = scmp.lt.s32.totalorder %s3394, 31
      %s3398 = scalar_select %p3397, %s3394, 31
      %s3399 = smul.addr %s3396, 32
      %s3400 = sadd.s32 %s3398, %s3399
      %s3401 = smul.addr %s3400, 4
      %s3402 = scalar_lea.vmem %s8, %s3401
      // Predicated region
      $region53: #{conv2d_subsampling_forward.4} parent=51 // pred_check
        %p3403 = pneg %p269
      $region54: #{conv2d_subsampling_forward.4} parent=51 // pred_check_branch
        %3405 = sbr.rel (%p3403) target = $region56
      $region55: #{conv2d_subsampling_forward.4} parent=51 // pred_region
        %s3406 = smul.u32 32, %s24
      $region56: #{conv2d_subsampling_forward.4} parent=51 // pred_fallthru
        _
    $region52: #{conv2d_subsampling_forward.4} parent=5 // pred_fallthru
      _
    %p3407 = scmp.le.s32.totalorder 2, %s14
    // Predicated region
    $region57: #{conv2d_subsampling_forward.4} parent=5 // pred_check
      %p3408 = pneg %p3407
    $region58: #{conv2d_subsampling_forward.4} parent=5 // pred_check_branch
      %3410 = sbr.rel (%p3408) target = $region60
    $region59: #{conv2d_subsampling_forward.4} parent=5 // pred_region
      %s3411 = ssub.s32 %s14, 2
      // Predicated region
      $region61: #{conv2d_subsampling_forward.4} parent=59 // pred_check
        %p3412 = pneg %p275
      $region62: #{conv2d_subsampling_forward.4} parent=59 // pred_check_branch
        %3414 = sbr.rel (%p3412) target = $region64
      $region63: #{conv2d_subsampling_forward.4} parent=59 // pred_region
        %s3415 = smul.u32 32, %s26
        %p3416 = scmp.lt.s32.totalorder %s25, 1
        %s3417 = scalar_select %p3416, %s25, 1
        %p3418 = scmp.lt.s32.totalorder %s3415, 31
        %s3419 = scalar_select %p3418, %s3415, 31
        %s3420 = smul.addr %s3417, 32
        %s3421 = sadd.s32 %s3419, %s3420
        %s3422 = smul.addr %s3421, 4
        %s3423 = scalar_lea.vmem %s8, %s3422
      $region64: #{conv2d_subsampling_forward.4} parent=59 // pred_fallthru
        _
    $region60: #{conv2d_subsampling_forward.4} parent=5 // pred_fallthru
      _
  $region6: #{conv2d_subsampling_forward.4} parent=0 // loop_footer
    %s18 = sadd.s32 1, %s14
  $region7: #{conv2d_subsampling_forward.4} parent=0 // loop_footer_branch
    %13 = sbr.rel target = $region3
  $region8: #{conv2d_subsampling_forward.4} parent=0 // loop_exit
    _

// kernel: conv2d_subsampling_forward.5
$region0: #{conv2d_subsampling_forward.5}
  #allocation0 [shape = 'u32[]', space=smem, size = 0x4, offset = 0x4, fixed_abs, tag = 'smem constant byte address 0x4 - core index']
  #allocation1 [shape = 'u32[144,128]{1,0:T(1,128)}', space=vmem, size = 0x12000, scoped, tag = 'internal scratch']
  %s0 = inlined_call_operand.vmem [shape: bf16[64,64], index: 0, kind: input, shape index: {}]
  %s1 = inlined_call_operand.vmem [shape: bf16[64,128], index: 1, kind: input, shape index: {}]
  %s2 = inlined_call_operand.vmem [shape: f32[1,128], index: 2, kind: input, shape index: {}]
  %s3 = inlined_call_operand.hbm [shape: f32[64,128], index: 3, kind: output, shape index: {}]
  %s4 = sld [smem:[#allocation0]]
  $region22: #{conv2d_subsampling_forward.5} parent=0
    _
  %s6 = ssub.s32 1, %s4
  %s7 = scalar_select 0, %s6, %s4
  $region1: #{conv2d_subsampling_forward.5} parent=0
    #allocation2 [shape = 'u8[32768]{0}', space=vmem, size = 0x8000, scoped, tag = 'output window, operand 0, single buffered']
    #allocation3 [shape = 's32[1]{0}', space=sflag, size = 0x4, scoped, tag = 'scoped memory for conv2d_subsampling_forward.5']
    %8 = vsyncpa [#allocation3], 0
    // Predicated region
    $region2: #{conv2d_subsampling_forward.5} parent=1 // pred_check
      _
    $region3: #{conv2d_subsampling_forward.5} parent=1 // pred_check_branch
      %10 = sbr.rel (0) target = $region5
    $region4: #{conv2d_subsampling_forward.5} parent=1 // pred_region
      _
    $region5: #{conv2d_subsampling_forward.5} parent=1 // pred_fallthru
      _
    // Predicated region
    $region6: #{conv2d_subsampling_forward.5} parent=1 // pred_check
      _
    $region7: #{conv2d_subsampling_forward.5} parent=1 // pred_check_branch
      %12 = sbr.rel (0) target = $region9
    $region8: #{conv2d_subsampling_forward.5} parent=1 // pred_region
      _
    $region9: #{conv2d_subsampling_forward.5} parent=1 // pred_fallthru
      _
    // Predicated region
    $region10: #{conv2d_subsampling_forward.5} parent=1 // pred_check
      _
    $region11: #{conv2d_subsampling_forward.5} parent=1 // pred_check_branch
      %14 = sbr.rel (0) target = $region13
    $region12: #{conv2d_subsampling_forward.5} parent=1 // pred_region
      _
    $region13: #{conv2d_subsampling_forward.5} parent=1 // pred_fallthru
      _
    %v16 = vld [vmem:[%s0] sm:$0xf]
    %v17 = vld [vmem:[%s0 + $0x4] sm:$0xf]
    %v18 = vld [vmem:[%s0 + $0x8] sm:$0xf]
    %v19 = vld [vmem:[%s0 + $0xc] sm:$0xf]
    %v20 = vld [vmem:[%s0 + $0x10] sm:$0xf]
    %v21 = vld [vmem:[%s0 + $0x14] sm:$0xf]
    %v22 = vld [vmem:[%s0 + $0x18] sm:$0xf]
    %v23 = vld [vmem:[%s0 + $0x1c] sm:$0xf]
    %v24 = vld [vmem:[%s1] sm:$0xf]
    %v25 = vld [vmem:[%s1 + $0x4] sm:$0xf]
    %v26 = vld [vmem:[%s1 + $0x8] sm:$0xf]
    %v27 = vld [vmem:[%s1 + $0xc] sm:$0xf]
    %v28 = vld [vmem:[%s1 + $0x10] sm:$0xf]
    %v29 = vld [vmem:[%s1 + $0x14] sm:$0xf]
    %v30 = vld [vmem:[%s1 + $0x18] sm:$0xf]
    %v31 = vld [vmem:[%s1 + $0x1c] sm:$0xf]
    %v32 = vld [vmem:[%s2] sm:$0x1]
    %v34 = vlaneseq
    %v35 = vshrl.u32 %v34, 7
    %v36 = vsub.s32 0, %v35
    %v37 = vrot.slane %v32, %v36
    %v47 = vunpack.c.l.b16 %v16
    %v48 = vunpack.c.l.b16 %v17
    %v49 = vunpack.c.l.b16 %v18
    %v50 = vunpack.c.l.b16 %v19
    %v51 = vunpack.c.l.b16 %v20
    %v52 = vunpack.c.l.b16 %v21
    %v53 = vunpack.c.l.b16 %v22
    %v54 = vunpack.c.l.b16 %v23
    %v55 = vpack.c.b16 %v48, %v47
    %v56 = vpack.c.b16 %v50, %v49
    %v57 = vpack.c.b16 %v52, %v51
    %v58 = vpack.c.b16 %v54, %v53
    %v67 = vunpack.c.l.b16 %v24
    %v68 = vunpack.c.l.b16 %v25
    %v69 = vunpack.c.l.b16 %v26
    %v70 = vunpack.c.l.b16 %v27
    %v71 = vunpack.c.l.b16 %v28
    %v72 = vunpack.c.l.b16 %v29
    %v73 = vunpack.c.l.b16 %v30
    %v74 = vunpack.c.l.b16 %v31
    %v75 = vpack.c.b16 %v68, %v67
    %v76 = vpack.c.b16 %v70, %v69
    %v77 = vpack.c.b16 %v72, %v71
    %v78 = vpack.c.b16 %v74, %v73
    %vm83 = vcmask 523264
    %v85 = vsel %vm83, %v55, 0
    %v88 = vsel %vm83, %v56, 0
    %v91 = vsel %vm83, %v57, 0
    %v94 = vsel %vm83, %v58, 0
    %96 = vmatprep.subr.bf16.mxu0 0
    %97 = vmatpush1.bf16.msra.mxu0 0
    %98 = vmatprep.subr.bf16.mxu0 0
    %99 = vmatpush1.bf16.msra.mxu0 0
    %100 = vmatprep.subr.bf16.mxu0 0
    %101 = vmatpush1.bf16.msra.mxu0 0
    %102 = vmatprep.subr.bf16.mxu0 0
    %103 = vmatpush1.bf16.msra.mxu0 0
    %104 = vmatprep.subr.bf16.mxu0 0
    %105 = vmatpush1.bf16.msra.mxu0 %v78
    %106 = vmatprep.subr.bf16.mxu0 0
    %107 = vmatpush1.bf16.msra.mxu0 %v77
    %108 = vmatprep.subr.bf16.mxu0 0
    %109 = vmatpush1.bf16.msra.mxu0 %v76
    %110 = vmatprep.subr.bf16.mxu0 0
    %111 = vmatpush1.bf16.msra.mxu0 %v75
    %112 = vmatprep.subr.bf16.mxu0 0
    %113 = vmatpush2.bf16.msra.mxu0 0
    %114 = vmatprep.subr.bf16.mxu0 0
    %115 = vmatpush2.bf16.msra.mxu0 0
    %116 = vmatprep.subr.bf16.mxu0 0
    %117 = vmatpush2.bf16.msra.mxu0 0
    %118 = vmatprep.subr.bf16.mxu0 0
    %119 = vmatpush2.bf16.msra.mxu0 0
    %120 = vmatprep.subr.bf16.mxu0 0
    %121 = vmatpush2.bf16.msra.mxu0 0
    %122 = vmatprep.subr.bf16.mxu0 0
    %123 = vmatpush2.bf16.msra.mxu0 0
    %124 = vmatprep.subr.bf16.mxu0 0
    %125 = vmatpush2.bf16.msra.mxu0 0
    %126 = vmatprep.subr.bf16.mxu0 0
    %127 = vmatpush2.bf16.msra.mxu0 0
    %128 = vmatprep.mubr.bf16.mxu0 0
    %129 = vmatmul.mubr.bf16.gmra.mxu0 %v85
    %v130 = vpop.f32.mrf.mxu0
    %v131 = vadd.f32 %v37, %v130
    %v132 = vpop.f32.mrf.mxu0
    %v133 = vpop.f32.mrf.mxu0
    %v134 = vadd.f32 %v37, %v133
    %v135 = vpop.f32.mrf.mxu0
    %136 = vmatprep.mubr.bf16.mxu0 0
    %137 = vmatmul.mubr.bf16.gmra.mxu0 %v88
    %v138 = vpop.f32.mrf.mxu0
    %v139 = vadd.f32 %v37, %v138
    %v140 = vpop.f32.mrf.mxu0
    %v141 = vpop.f32.mrf.mxu0
    %v142 = vadd.f32 %v37, %v141
    %v143 = vpop.f32.mrf.mxu0
    %144 = vmatprep.mubr.bf16.mxu0 0
    %145 = vmatmul.mubr.bf16.gmra.mxu0 %v91
    %v146 = vpop.f32.mrf.mxu0
    %v147 = vadd.f32 %v37, %v146
    %v148 = vpop.f32.mrf.mxu0
    %v149 = vpop.f32.mrf.mxu0
    %v150 = vadd.f32 %v37, %v149
    %v151 = vpop.f32.mrf.mxu0
    %152 = vmatprep.mubr.bf16.mxu0 0
    %153 = vmatmul.mubr.bf16.gmra.mxu0 %v94
    %v154 = vpop.f32.mrf.mxu0
    %v155 = vadd.f32 %v37, %v154
    %v156 = vpop.f32.mrf.mxu0
    %v157 = vpop.f32.mrf.mxu0
    %v158 = vadd.f32 %v37, %v157
    %v159 = vpop.f32.mrf.mxu0
    %160 = vdwg.mxu0
    %161 = vst [vmem:[#allocation2] sm:$0xff] %v131
    %162 = vst [vmem:[#allocation2 + $0x8] sm:$0xff] %v134
    %163 = vst [vmem:[#allocation2 + $0x10] sm:$0xff] %v139
    %164 = vst [vmem:[#allocation2 + $0x18] sm:$0xff] %v142
    %165 = vst [vmem:[#allocation2 + $0x20] sm:$0xff] %v147
    %166 = vst [vmem:[#allocation2 + $0x28] sm:$0xff] %v150
    %167 = vst [vmem:[#allocation2 + $0x30] sm:$0xff] %v155
    %168 = vst [vmem:[#allocation2 + $0x38] sm:$0xff] %v158
    // Predicated region
    $region14: #{conv2d_subsampling_forward.5} parent=1 // pred_check
      _
    $region15: #{conv2d_subsampling_forward.5} parent=1 // pred_check_branch
      %170 = sbr.rel (0) target = $region17
    $region16: #{conv2d_subsampling_forward.5} parent=1 // pred_region
      %s172 = ssub.s32 1024, 1024
      %173 = vsyncadd [#allocation3], %s172
      %s174 = sshll.u32 [#allocation2], 4
      %s175 = int_to_ptr.vmem [resolvable:$true] %s174
      %180 = dma.vmem_to_hbm [thread:$0]  %s175, 1024, %s3, [#allocation3], 128, 128, 8
    $region17: #{conv2d_subsampling_forward.5} parent=1 // pred_fallthru
      _
    // Predicated region
    $region18: #{conv2d_subsampling_forward.5} parent=1 // pred_check
      _
    $region19: #{conv2d_subsampling_forward.5} parent=1 // pred_check_branch
      %182 = sbr.rel (0) target = $region21
    $region20: #{conv2d_subsampling_forward.5} parent=1 // pred_region
      %183 = dma.done [#allocation3], 1024
    $region21: #{conv2d_subsampling_forward.5} parent=1 // pred_fallthru
      _
    %184 = vsyncpa [#allocation3], 1

</llo_original>
